<compile_context>
chip_gen: v7x
topology: tpu7x:2x2x1
jax: 0.10.0
libtpu: 0.0.40
codegen_flags: <defaults>
</compile_context>

<pallas_src>
import functools
import math

import jax
import jax.numpy as jnp
from jax.experimental import pallas as pl
from jax.experimental.pallas import tpu as pltpu


# ----------------------------------------------------------------------------
# Fused kernel: whole forward pass (all batches) in a single invocation
# ----------------------------------------------------------------------------
def _fused_forward_kernel(
    x_ref,
    in_w_ref, in_b_ref,
    qkv_w_ref, qkv_b_ref,
    attn_w_ref, attn_b_ref,
    lin1_w_ref, lin1_b_ref,
    lin2_w_ref, lin2_b_ref,
    ln1_g_ref, ln1_beta_ref,
    ln2_g_ref, ln2_beta_ref,
    fc_w_ref, fc_b_ref,
    o_ref,
    *, batch, seq, num_layers, nhead, eps):
    D = in_w_ref.shape[1]
    Dh = D // nhead
    rows = batch * seq

    def layernorm(y, g, b):
        # one-pass stats; biased variance, matching PyTorch LayerNorm
        inv_d = 1.0 / y.shape[-1]
        mean = jnp.sum(y, axis=-1, keepdims=True) * inv_d
        msq = jnp.sum(y * y, axis=-1, keepdims=True) * inv_d
        var = msq - mean * mean
        return (y - mean) * jax.lax.rsqrt(var + eps) * g + b

    x = x_ref[...]                                      # (B*S, F)
    # input_linear
    h = jnp.dot(x, in_w_ref[...], preferred_element_type=jnp.float32) + in_b_ref[...]

    for l in range(num_layers):                         # static unroll (2 layers)
        # --- self-attention block (batched over B per head) ---
        qkv = jnp.dot(h, qkv_w_ref[l], preferred_element_type=jnp.float32) + qkv_b_ref[l]
        head_outs = []
        for hh in range(nhead):                         # static unroll (4 heads)
            lo, hi = hh * Dh, (hh + 1) * Dh
            qh = qkv[:, lo:hi].reshape(batch, seq, Dh)          # (B, S, Dh)
            kh = qkv[:, D + lo:D + hi].reshape(batch, seq, Dh)
            vh = qkv[:, 2 * D + lo:2 * D + hi].reshape(batch, seq, Dh)
            # 1/sqrt(Dh) is pre-folded into the Q weights/bias at pack time.
            s = jnp.einsum('bqd,bkd->bqk', qh, kh,
                           preferred_element_type=jnp.float32)  # (B, S, S)
            m = jnp.max(s, axis=-1, keepdims=True)
            p = jnp.exp(s - m)
            p = p / jnp.sum(p, axis=-1, keepdims=True)          # exact division
            oh = jnp.einsum('bqk,bkd->bqd', p, vh,
                            preferred_element_type=jnp.float32)  # (B, S, Dh)
            head_outs.append(oh.reshape(rows, Dh))
        # single fused out-projection over the concatenated heads
        attn = jnp.concatenate(head_outs, axis=-1)              # (B*S, D)
        attn = jnp.dot(attn, attn_w_ref[l],
                       preferred_element_type=jnp.float32) + attn_b_ref[l]
        # TODO(synk): dropout (p=0.1) is identity in eval mode and is omitted.
        h1 = layernorm(h + attn, ln1_g_ref[l], ln1_beta_ref[l])

        # --- feed-forward block (bf16-stored weights, f32 math) ---
        w1 = lin1_w_ref[l].astype(jnp.float32)          # (D, FF)
        w2 = lin2_w_ref[l].astype(jnp.float32)          # (FF, D)
        ff = jnp.dot(h1, w1, preferred_element_type=jnp.float32) + lin1_b_ref[l]
        ff = jnp.maximum(ff, 0.0)
        ff = jnp.dot(ff, w2, preferred_element_type=jnp.float32) + lin2_b_ref[l]
        h = layernorm(h1 + ff, ln2_g_ref[l], ln2_beta_ref[l])

    # last sequence position of each batch (== x[-1] in PyTorch's (S,B,D) layout)
    last = jnp.concatenate(
        [h[(b + 1) * seq - 1:(b + 1) * seq, :] for b in range(batch)], axis=0)  # (B, D)
    o_ref[...] = (jnp.dot(last, fc_w_ref[...],
                          preferred_element_type=jnp.float32) + fc_b_ref[...])   # (B, 1)


# ----------------------------------------------------------------------------
# Wrapper: pack params (pre-transpose, fold softmax scale, bf16 FF weights)
# ----------------------------------------------------------------------------
def pack_params(params, *, nhead):
    f32 = lambda a: jnp.asarray(a, jnp.float32)
    t = lambda w: f32(w).T
    row = lambda b: f32(b).reshape(1, -1)
    layers = params["layers"]
    D = params["input_linear"]["w"].shape[0]
    scale = 1.0 / math.sqrt(D // nhead)

    def qkv_wT(l):
        w = f32(l["in_proj_w"])              # (3D, D); rows [0:D] produce Q
        w = w.at[:D, :].multiply(scale)      # fold softmax scale into Q
        return w.T                           # (D, 3D)

    def qkv_brow(l):
        b = f32(l["in_proj_b"])
        b = b.at[:D].multiply(scale)
        return b.reshape(1, -1)              # (1, 3D)

    bf16 = lambda a: a.astype(jnp.bfloat16)
    return {
        "in_w":  t(params["input_linear"]["w"]),                        # (F, D)
        "in_b":  row(params["input_linear"]["b"]),                      # (1, D)
        "qkv_w": jnp.stack([qkv_wT(l) for l in layers]),                # (L, D, 3D)
        "qkv_b": jnp.stack([qkv_brow(l) for l in layers]),              # (L, 1, 3D)
        "attn_w": jnp.stack([t(l["out_proj_w"]) for l in layers]),      # (L, D, D)
        "attn_b": jnp.stack([row(l["out_proj_b"]) for l in layers]),    # (L, 1, D)
        # bf16 storage halves the dominant weight DMA (~2 MiB of ~2.25 MiB);
        # cast back to f32 inside the kernel, activations stay f32.
        "lin1_w": bf16(jnp.stack([t(l["lin1_w"]) for l in layers])),    # (L, D, FF) bf16
        "lin1_b": jnp.stack([row(l["lin1_b"]) for l in layers]),        # (L, 1, FF)
        "lin2_w": bf16(jnp.stack([t(l["lin2_w"]) for l in layers])),    # (L, FF, D) bf16
        "lin2_b": jnp.stack([row(l["lin2_b"]) for l in layers]),        # (L, 1, D)
        "ln1_g": jnp.stack([row(l["ln1_g"]) for l in layers]),          # (L, 1, D)
        "ln1_b": jnp.stack([row(l["ln1_b"]) for l in layers]),
        "ln2_g": jnp.stack([row(l["ln2_g"]) for l in layers]),
        "ln2_b": jnp.stack([row(l["ln2_b"]) for l in layers]),
        "fc_w":  t(params["fc"]["w"]),                                  # (D, 1)
        "fc_b":  row(params["fc"]["b"]),                                # (1, 1)
    }


def transformer_forward(x, packed, *, nhead, num_layers, eps=1e-5):
    # x: (B, S, input_size) float32
    B, S, F = x.shape
    x2 = x.reshape(B * S, F)   # fold batch into rows; attention is per-batch in-kernel

    order = ["in_w", "in_b", "qkv_w", "qkv_b", "attn_w", "attn_b",
             "lin1_w", "lin1_b", "lin2_w", "lin2_b",
             "ln1_g", "ln1_b", "ln2_g", "ln2_b", "fc_w", "fc_b"]
    weight_args = [packed[k] for k in order]

    kernel = functools.partial(_fused_forward_kernel, batch=B, seq=S,
                               num_layers=num_layers, nhead=nhead, eps=eps)

    # Grid-less call: every operand lives whole in VMEM (single buffer, no
    # per-step pipeline overhead, one weight DMA total).
    out = pl.pallas_call(
        kernel,
        out_shape=jax.ShapeDtypeStruct((B, 1), jnp.float32),
        compiler_params=pltpu.CompilerParams(vmem_limit_bytes=32 * 1024 * 1024),
    )(x2, *weight_args)
    return out


# ----------------------------------------------------------------------------
# Parameter init (PyTorch layout) + pure-JAX reference for a sanity check
# ----------------------------------------------------------------------------
def init_params(key, input_size, d_model=64, nhead=4, num_layers=2,
                dim_feedforward=2048, output_size=1):
    def nrm(k, shape, scale=0.05):
        return (scale * jax.random.normal(k, shape)).astype(jnp.float32)

    keys = jax.random.split(key, 2 + num_layers)
    params = {
        "input_linear": {
            "w": nrm(jax.random.fold_in(keys[0], 0), (d_model, input_size)),
            "b": nrm(jax.random.fold_in(keys[0], 1), (d_model,)),
        },
        "fc": {
            "w": nrm(jax.random.fold_in(keys[1], 0), (output_size, d_model)),
            "b": nrm(jax.random.fold_in(keys[1], 1), (output_size,)),
        },
        "layers": [],
    }
    for l in range(num_layers):
        k = keys[2 + l]
        params["layers"].append({
            "in_proj_w": nrm(jax.random.fold_in(k, 0), (3 * d_model, d_model)),
            "in_proj_b": nrm(jax.random.fold_in(k, 1), (3 * d_model,)),
            "out_proj_w": nrm(jax.random.fold_in(k, 2), (d_model, d_model)),
            "out_proj_b": nrm(jax.random.fold_in(k, 3), (d_model,)),
            "lin1_w": nrm(jax.random.fold_in(k, 4), (dim_feedforward, d_model)),
            "lin1_b": nrm(jax.random.fold_in(k, 5), (dim_feedforward,)),
            "lin2_w": nrm(jax.random.fold_in(k, 6), (d_model, dim_feedforward)),
            "lin2_b": nrm(jax.random.fold_in(k, 7), (d_model,)),
            "ln1_g": jnp.ones((d_model,), jnp.float32),
            "ln1_b": jnp.zeros((d_model,), jnp.float32),
            "ln2_g": jnp.ones((d_model,), jnp.float32),
            "ln2_b": jnp.zeros((d_model,), jnp.float32),
        })
    return params


def reference_forward(x, params, nhead):
    def lin(x2d, w, b, relu=False):
        y = x2d @ w.T + b
        return jnp.maximum(y, 0.0) if relu else y

    def ln(y, g, b, eps=1e-5):
        m = y.mean(-1, keepdims=True)
        v = ((y - m) ** 2).mean(-1, keepdims=True)
        return (y - m) / jnp.sqrt(v + eps) * g + b

    B, S, F = x.shape
    D = params["input_linear"]["w"].shape[0]
    H = nhead
    Dh = D // H
    h = lin(x.reshape(B * S, F), params["input_linear"]["w"],
            params["input_linear"]["b"])
    for layer in params["layers"]:
        x2d = h
        qkv = lin(x2d, layer["in_proj_w"], layer["in_proj_b"]).reshape(B, S, 3, H, Dh)
        q = qkv[:, :, 0].transpose(0, 2, 1, 3)
        k = qkv[:, :, 1].transpose(0, 2, 1, 3)
        v = qkv[:, :, 2].transpose(0, 2, 1, 3)
        s = jnp.einsum("bhqd,bhkd->bhqk", q, k) / math.sqrt(Dh)
        p = jax.nn.softmax(s, axis=-1)
        a = jnp.einsum("bhqk,bhkd->bhqd", p, v).transpose(0, 2, 1, 3).reshape(B * S, D)
        a = lin(a, layer["out_proj_w"], layer["out_proj_b"])
        h1 = ln(x2d + a, layer["ln1_g"], layer["ln1_b"])
        ff = lin(h1, layer["lin1_w"], layer["lin1_b"], relu=True)
        ff = lin(ff, layer["lin2_w"], layer["lin2_b"])
        h = ln(h1 + ff, layer["ln2_g"], layer["ln2_b"])
    last = h.reshape(B, S, D)[:, -1, :]
    return lin(last, params["fc"]["w"], params["fc"]["b"])


# ----------------------------------------------------------------------------
if __name__ == "__main__":
    B, S, INPUT_SIZE = 2, 8, 16
    D_MODEL, NHEAD, NUM_LAYERS, FF = 64, 4, 2, 2048  # PyTorch defaults

    key = jax.random.PRNGKey(0)
    kx, kp = jax.random.split(key)
    x = jax.random.normal(kx, (B, S, INPUT_SIZE), dtype=jnp.float32)
    params = init_params(kp, INPUT_SIZE, d_model=D_MODEL, nhead=NHEAD,
                         num_layers=NUM_LAYERS, dim_feedforward=FF, output_size=1)
    packed = pack_params(params, nhead=NHEAD)

    out = transformer_forward(x, packed, nhead=NHEAD, num_layers=NUM_LAYERS)
    out = jax.block_until_ready(out)
    assert out.shape == (B, 1), out.shape

    # Reference uses the same bf16-rounded FF weights as the kernel so that the
    # check isolates kernel math from the (intentional) bf16 weight storage.
    rt = lambda w: w.astype(jnp.bfloat16).astype(jnp.float32)
    ref_params = {
        "input_linear": params["input_linear"],
        "fc": params["fc"],
        "layers": [dict(l, lin1_w=rt(l["lin1_w"]), lin2_w=rt(l["lin2_w"]))
                   for l in params["layers"]],
    }
    ref = jax.block_until_ready(reference_forward(x, ref_params, NHEAD))
    assert jnp.allclose(out, ref, rtol=2e-3, atol=2e-3), (out, ref)

    print("KERNEL_OK")
</pallas_src>

<mosaic_0001>
module attributes {stable_mosaic.version = 11 : i64} {
  func.func @_fused_forward_kernel(%arg0: memref<16x16xf32, #tpu.memory_space<vmem>>, %arg1: memref<16x64xf32, #tpu.memory_space<vmem>>, %arg2: memref<1x64xf32, #tpu.memory_space<vmem>>, %arg3: memref<2x64x192xf32, #tpu.memory_space<vmem>>, %arg4: memref<2x1x192xf32, #tpu.memory_space<vmem>>, %arg5: memref<2x64x64xf32, #tpu.memory_space<vmem>>, %arg6: memref<2x1x64xf32, #tpu.memory_space<vmem>>, %arg7: memref<2x64x2048xbf16, #tpu.memory_space<vmem>>, %arg8: memref<2x1x2048xf32, #tpu.memory_space<vmem>>, %arg9: memref<2x2048x64xbf16, #tpu.memory_space<vmem>>, %arg10: memref<2x1x64xf32, #tpu.memory_space<vmem>>, %arg11: memref<2x1x64xf32, #tpu.memory_space<vmem>>, %arg12: memref<2x1x64xf32, #tpu.memory_space<vmem>>, %arg13: memref<2x1x64xf32, #tpu.memory_space<vmem>>, %arg14: memref<2x1x64xf32, #tpu.memory_space<vmem>>, %arg15: memref<64x1xf32, #tpu.memory_space<vmem>>, %arg16: memref<1x1xf32, #tpu.memory_space<vmem>>, %arg17: memref<2x1xf32, #tpu.memory_space<vmem>>) attributes {dimension_semantics = [], scalar_prefetch = 0 : i64, scratch_operands = 0 : i64, tpu.core_type = #tpu.core_type<tc>} {
    %c0 = arith.constant 0 : index
    %c0_0 = arith.constant 0 : index
    %0 = vector.load %arg0[%c0, %c0_0] : memref<16x16xf32, #tpu.memory_space<vmem>>, vector<16x16xf32>
    %c0_1 = arith.constant 0 : index
    %c0_2 = arith.constant 0 : index
    %1 = vector.load %arg1[%c0_1, %c0_2] : memref<16x64xf32, #tpu.memory_space<vmem>>, vector<16x64xf32>
    %cst = arith.constant dense<0.000000e+00> : vector<16x64xf32>
    %2 = tpu.matmul %0, %1, %cst {dimension_numbers = #tpu.dot_dimension_numbers<[1], [0], [0], [1], [0, 0, 1, 1], [], []>} : vector<16x16xf32>, vector<16x64xf32>, vector<16x64xf32> -> vector<16x64xf32>
    %c0_3 = arith.constant 0 : index
    %c0_4 = arith.constant 0 : index
    %3 = vector.load %arg2[%c0_3, %c0_4] : memref<1x64xf32, #tpu.memory_space<vmem>>, vector<1x64xf32>
    %4 = vector.broadcast %3 : vector<1x64xf32> to vector<16x64xf32>
    %5 = arith.addf %2, %4 : vector<16x64xf32>
    %c0_5 = arith.constant 0 : index
    %c0_6 = arith.constant 0 : index
    %c0_7 = arith.constant 0 : index
    %6 = vector.load %arg3[%c0_5, %c0_6, %c0_7] : memref<2x64x192xf32, #tpu.memory_space<vmem>>, vector<1x64x192xf32>
    %7 = vector.shape_cast %6 : vector<1x64x192xf32> to vector<64x192xf32>
    %cst_8 = arith.constant dense<0.000000e+00> : vector<16x192xf32>
    %8 = tpu.matmul %5, %7, %cst_8 {dimension_numbers = #tpu.dot_dimension_numbers<[1], [0], [0], [1], [0, 0, 1, 1], [], []>} : vector<16x64xf32>, vector<64x192xf32>, vector<16x192xf32> -> vector<16x192xf32>
    %c0_9 = arith.constant 0 : index
    %c0_10 = arith.constant 0 : index
    %c0_11 = arith.constant 0 : index
    %9 = vector.load %arg4[%c0_9, %c0_10, %c0_11] : memref<2x1x192xf32, #tpu.memory_space<vmem>>, vector<1x1x192xf32>
    %10 = vector.shape_cast %9 : vector<1x1x192xf32> to vector<1x192xf32>
    %11 = vector.broadcast %10 : vector<1x192xf32> to vector<16x192xf32>
    %12 = arith.addf %8, %11 : vector<16x192xf32>
    %13 = vector.extract_strided_slice %12 {offsets = [0, 0], sizes = [16, 16], strides = [1, 1]} : vector<16x192xf32> to vector<16x16xf32>
    %14 = vector.shape_cast %13 : vector<16x16xf32> to vector<2x8x16xf32>
    %15 = vector.extract_strided_slice %12 {offsets = [0, 64], sizes = [16, 16], strides = [1, 1]} : vector<16x192xf32> to vector<16x16xf32>
    %16 = vector.shape_cast %15 : vector<16x16xf32> to vector<2x8x16xf32>
    %17 = vector.extract_strided_slice %12 {offsets = [0, 128], sizes = [16, 16], strides = [1, 1]} : vector<16x192xf32> to vector<16x16xf32>
    %18 = vector.shape_cast %17 : vector<16x16xf32> to vector<2x8x16xf32>
    "tpu.trace_start"() <{level = 10 : i32, message = "bqd,bkd->bqk"}> : () -> ()
    %cst_12 = arith.constant dense<0.000000e+00> : vector<2x8x8xf32>
    %19 = tpu.matmul %14, %16, %cst_12 {dimension_numbers = #tpu.dot_dimension_numbers<[2], [2], [1], [1], [0, 0, 0, 1, 1, 1], [0], [0]>} : vector<2x8x16xf32>, vector<2x8x16xf32>, vector<2x8x8xf32> -> vector<2x8x8xf32>
    "tpu.trace_stop"() : () -> ()
    %cst_13 = arith.constant dense<0xFF800000> : vector<2x8xf32>
    %20 = vector.multi_reduction <maximumf>, %19, %cst_13 [2] : vector<2x8x8xf32> to vector<2x8xf32>
    %21 = vector.shape_cast %20 : vector<2x8xf32> to vector<2x8x1xf32>
    %22 = vector.broadcast %21 : vector<2x8x1xf32> to vector<2x8x8xf32>
    %23 = arith.subf %19, %22 : vector<2x8x8xf32>
    %24 = math.exp %23 : vector<2x8x8xf32>
    %cst_14 = arith.constant dense<0.000000e+00> : vector<2x8xf32>
    %25 = vector.multi_reduction <add>, %24, %cst_14 [2] : vector<2x8x8xf32> to vector<2x8xf32>
    %26 = vector.shape_cast %25 : vector<2x8xf32> to vector<2x8x1xf32>
    %27 = vector.broadcast %26 : vector<2x8x1xf32> to vector<2x8x8xf32>
    %28 = arith.divf %24, %27 : vector<2x8x8xf32>
    "tpu.trace_start"() <{level = 10 : i32, message = "bqk,bkd->bqd"}> : () -> ()
    %cst_15 = arith.constant dense<0.000000e+00> : vector<2x8x16xf32>
    %29 = tpu.matmul %28, %18, %cst_15 {dimension_numbers = #tpu.dot_dimension_numbers<[2], [1], [1], [2], [0, 0, 0, 1, 1, 2], [0], [0]>} : vector<2x8x8xf32>, vector<2x8x16xf32>, vector<2x8x16xf32> -> vector<2x8x16xf32>
    "tpu.trace_stop"() : () -> ()
    %30 = vector.shape_cast %29 : vector<2x8x16xf32> to vector<16x16xf32>
    %31 = vector.extract_strided_slice %12 {offsets = [0, 16], sizes = [16, 16], strides = [1, 1]} : vector<16x192xf32> to vector<16x16xf32>
    %32 = vector.shape_cast %31 : vector<16x16xf32> to vector<2x8x16xf32>
    %33 = vector.extract_strided_slice %12 {offsets = [0, 80], sizes = [16, 16], strides = [1, 1]} : vector<16x192xf32> to vector<16x16xf32>
    %34 = vector.shape_cast %33 : vector<16x16xf32> to vector<2x8x16xf32>
    %35 = vector.extract_strided_slice %12 {offsets = [0, 144], sizes = [16, 16], strides = [1, 1]} : vector<16x192xf32> to vector<16x16xf32>
    %36 = vector.shape_cast %35 : vector<16x16xf32> to vector<2x8x16xf32>
    "tpu.trace_start"() <{level = 10 : i32, message = "bqd,bkd->bqk"}> : () -> ()
    %cst_16 = arith.constant dense<0.000000e+00> : vector<2x8x8xf32>
    %37 = tpu.matmul %32, %34, %cst_16 {dimension_numbers = #tpu.dot_dimension_numbers<[2], [2], [1], [1], [0, 0, 0, 1, 1, 1], [0], [0]>} : vector<2x8x16xf32>, vector<2x8x16xf32>, vector<2x8x8xf32> -> vector<2x8x8xf32>
    "tpu.trace_stop"() : () -> ()
    %cst_17 = arith.constant dense<0xFF800000> : vector<2x8xf32>
    %38 = vector.multi_reduction <maximumf>, %37, %cst_17 [2] : vector<2x8x8xf32> to vector<2x8xf32>
    %39 = vector.shape_cast %38 : vector<2x8xf32> to vector<2x8x1xf32>
    %40 = vector.broadcast %39 : vector<2x8x1xf32> to vector<2x8x8xf32>
    %41 = arith.subf %37, %40 : vector<2x8x8xf32>
    %42 = math.exp %41 : vector<2x8x8xf32>
    %cst_18 = arith.constant dense<0.000000e+00> : vector<2x8xf32>
    %43 = vector.multi_reduction <add>, %42, %cst_18 [2] : vector<2x8x8xf32> to vector<2x8xf32>
    %44 = vector.shape_cast %43 : vector<2x8xf32> to vector<2x8x1xf32>
    %45 = vector.broadcast %44 : vector<2x8x1xf32> to vector<2x8x8xf32>
    %46 = arith.divf %42, %45 : vector<2x8x8xf32>
    "tpu.trace_start"() <{level = 10 : i32, message = "bqk,bkd->bqd"}> : () -> ()
    %cst_19 = arith.constant dense<0.000000e+00> : vector<2x8x16xf32>
    %47 = tpu.matmul %46, %36, %cst_19 {dimension_numbers = #tpu.dot_dimension_numbers<[2], [1], [1], [2], [0, 0, 0, 1, 1, 2], [0], [0]>} : vector<2x8x8xf32>, vector<2x8x16xf32>, vector<2x8x16xf32> -> vector<2x8x16xf32>
    "tpu.trace_stop"() : () -> ()
    %48 = vector.shape_cast %47 : vector<2x8x16xf32> to vector<16x16xf32>
    %49 = vector.extract_strided_slice %12 {offsets = [0, 32], sizes = [16, 16], strides = [1, 1]} : vector<16x192xf32> to vector<16x16xf32>
    %50 = vector.shape_cast %49 : vector<16x16xf32> to vector<2x8x16xf32>
    %51 = vector.extract_strided_slice %12 {offsets = [0, 96], sizes = [16, 16], strides = [1, 1]} : vector<16x192xf32> to vector<16x16xf32>
    %52 = vector.shape_cast %51 : vector<16x16xf32> to vector<2x8x16xf32>
    %53 = vector.extract_strided_slice %12 {offsets = [0, 160], sizes = [16, 16], strides = [1, 1]} : vector<16x192xf32> to vector<16x16xf32>
    %54 = vector.shape_cast %53 : vector<16x16xf32> to vector<2x8x16xf32>
    "tpu.trace_start"() <{level = 10 : i32, message = "bqd,bkd->bqk"}> : () -> ()
    %cst_20 = arith.constant dense<0.000000e+00> : vector<2x8x8xf32>
    %55 = tpu.matmul %50, %52, %cst_20 {dimension_numbers = #tpu.dot_dimension_numbers<[2], [2], [1], [1], [0, 0, 0, 1, 1, 1], [0], [0]>} : vector<2x8x16xf32>, vector<2x8x16xf32>, vector<2x8x8xf32> -> vector<2x8x8xf32>
    "tpu.trace_stop"() : () -> ()
    %cst_21 = arith.constant dense<0xFF800000> : vector<2x8xf32>
    %56 = vector.multi_reduction <maximumf>, %55, %cst_21 [2] : vector<2x8x8xf32> to vector<2x8xf32>
    %57 = vector.shape_cast %56 : vector<2x8xf32> to vector<2x8x1xf32>
    %58 = vector.broadcast %57 : vector<2x8x1xf32> to vector<2x8x8xf32>
    %59 = arith.subf %55, %58 : vector<2x8x8xf32>
    %60 = math.exp %59 : vector<2x8x8xf32>
    %cst_22 = arith.constant dense<0.000000e+00> : vector<2x8xf32>
    %61 = vector.multi_reduction <add>, %60, %cst_22 [2] : vector<2x8x8xf32> to vector<2x8xf32>
    %62 = vector.shape_cast %61 : vector<2x8xf32> to vector<2x8x1xf32>
    %63 = vector.broadcast %62 : vector<2x8x1xf32> to vector<2x8x8xf32>
    %64 = arith.divf %60, %63 : vector<2x8x8xf32>
    "tpu.trace_start"() <{level = 10 : i32, message = "bqk,bkd->bqd"}> : () -> ()
    %cst_23 = arith.constant dense<0.000000e+00> : vector<2x8x16xf32>
    %65 = tpu.matmul %64, %54, %cst_23 {dimension_numbers = #tpu.dot_dimension_numbers<[2], [1], [1], [2], [0, 0, 0, 1, 1, 2], [0], [0]>} : vector<2x8x8xf32>, vector<2x8x16xf32>, vector<2x8x16xf32> -> vector<2x8x16xf32>
    "tpu.trace_stop"() : () -> ()
    %66 = vector.shape_cast %65 : vector<2x8x16xf32> to vector<16x16xf32>
    %67 = vector.extract_strided_slice %12 {offsets = [0, 48], sizes = [16, 16], strides = [1, 1]} : vector<16x192xf32> to vector<16x16xf32>
    %68 = vector.shape_cast %67 : vector<16x16xf32> to vector<2x8x16xf32>
    %69 = vector.extract_strided_slice %12 {offsets = [0, 112], sizes = [16, 16], strides = [1, 1]} : vector<16x192xf32> to vector<16x16xf32>
    %70 = vector.shape_cast %69 : vector<16x16xf32> to vector<2x8x16xf32>
    %71 = vector.extract_strided_slice %12 {offsets = [0, 176], sizes = [16, 16], strides = [1, 1]} : vector<16x192xf32> to vector<16x16xf32>
    %72 = vector.shape_cast %71 : vector<16x16xf32> to vector<2x8x16xf32>
    "tpu.trace_start"() <{level = 10 : i32, message = "bqd,bkd->bqk"}> : () -> ()
    %cst_24 = arith.constant dense<0.000000e+00> : vector<2x8x8xf32>
    %73 = tpu.matmul %68, %70, %cst_24 {dimension_numbers = #tpu.dot_dimension_numbers<[2], [2], [1], [1], [0, 0, 0, 1, 1, 1], [0], [0]>} : vector<2x8x16xf32>, vector<2x8x16xf32>, vector<2x8x8xf32> -> vector<2x8x8xf32>
    "tpu.trace_stop"() : () -> ()
    %cst_25 = arith.constant dense<0xFF800000> : vector<2x8xf32>
    %74 = vector.multi_reduction <maximumf>, %73, %cst_25 [2] : vector<2x8x8xf32> to vector<2x8xf32>
    %75 = vector.shape_cast %74 : vector<2x8xf32> to vector<2x8x1xf32>
    %76 = vector.broadcast %75 : vector<2x8x1xf32> to vector<2x8x8xf32>
    %77 = arith.subf %73, %76 : vector<2x8x8xf32>
    %78 = math.exp %77 : vector<2x8x8xf32>
    %cst_26 = arith.constant dense<0.000000e+00> : vector<2x8xf32>
    %79 = vector.multi_reduction <add>, %78, %cst_26 [2] : vector<2x8x8xf32> to vector<2x8xf32>
    %80 = vector.shape_cast %79 : vector<2x8xf32> to vector<2x8x1xf32>
    %81 = vector.broadcast %80 : vector<2x8x1xf32> to vector<2x8x8xf32>
    %82 = arith.divf %78, %81 : vector<2x8x8xf32>
    "tpu.trace_start"() <{level = 10 : i32, message = "bqk,bkd->bqd"}> : () -> ()
    %cst_27 = arith.constant dense<0.000000e+00> : vector<2x8x16xf32>
    %83 = tpu.matmul %82, %72, %cst_27 {dimension_numbers = #tpu.dot_dimension_numbers<[2], [1], [1], [2], [0, 0, 0, 1, 1, 2], [0], [0]>} : vector<2x8x8xf32>, vector<2x8x16xf32>, vector<2x8x16xf32> -> vector<2x8x16xf32>
    "tpu.trace_stop"() : () -> ()
    %84 = vector.shape_cast %83 : vector<2x8x16xf32> to vector<16x16xf32>
    %85 = tpu.concatenate %30, %48, %66, %84 in 1 : vector<16x16xf32>, vector<16x16xf32>, vector<16x16xf32>, vector<16x16xf32> -> vector<16x64xf32>
    %c0_28 = arith.constant 0 : index
    %c0_29 = arith.constant 0 : index
    %c0_30 = arith.constant 0 : index
    %86 = vector.load %arg5[%c0_28, %c0_29, %c0_30] : memref<2x64x64xf32, #tpu.memory_space<vmem>>, vector<1x64x64xf32>
    %87 = vector.shape_cast %86 : vector<1x64x64xf32> to vector<64x64xf32>
    %cst_31 = arith.constant dense<0.000000e+00> : vector<16x64xf32>
    %88 = tpu.matmul %85, %87, %cst_31 {dimension_numbers = #tpu.dot_dimension_numbers<[1], [0], [0], [1], [0, 0, 1, 1], [], []>} : vector<16x64xf32>, vector<64x64xf32>, vector<16x64xf32> -> vector<16x64xf32>
    %c0_32 = arith.constant 0 : index
    %c0_33 = arith.constant 0 : index
    %c0_34 = arith.constant 0 : index
    %89 = vector.load %arg6[%c0_32, %c0_33, %c0_34] : memref<2x1x64xf32, #tpu.memory_space<vmem>>, vector<1x1x64xf32>
    %90 = vector.shape_cast %89 : vector<1x1x64xf32> to vector<1x64xf32>
    %91 = vector.broadcast %90 : vector<1x64xf32> to vector<16x64xf32>
    %92 = arith.addf %88, %91 : vector<16x64xf32>
    %93 = arith.addf %5, %92 : vector<16x64xf32>
    %c0_35 = arith.constant 0 : index
    %c0_36 = arith.constant 0 : index
    %c0_37 = arith.constant 0 : index
    %94 = vector.load %arg11[%c0_35, %c0_36, %c0_37] : memref<2x1x64xf32, #tpu.memory_space<vmem>>, vector<1x1x64xf32>
    %95 = vector.shape_cast %94 : vector<1x1x64xf32> to vector<1x64xf32>
    %c0_38 = arith.constant 0 : index
    %c0_39 = arith.constant 0 : index
    %c0_40 = arith.constant 0 : index
    %96 = vector.load %arg12[%c0_38, %c0_39, %c0_40] : memref<2x1x64xf32, #tpu.memory_space<vmem>>, vector<1x1x64xf32>
    %97 = vector.shape_cast %96 : vector<1x1x64xf32> to vector<1x64xf32>
    %cst_41 = arith.constant dense<0.000000e+00> : vector<16xf32>
    %98 = vector.multi_reduction <add>, %93, %cst_41 [1] : vector<16x64xf32> to vector<16xf32>
    %99 = vector.shape_cast %98 : vector<16xf32> to vector<16x1xf32>
    %cst_42 = arith.constant 1.562500e-02 : f32
    %100 = vector.broadcast %cst_42 : f32 to vector<16x1xf32>
    %101 = arith.mulf %99, %100 : vector<16x1xf32>
    %102 = arith.mulf %93, %93 : vector<16x64xf32>
    %cst_43 = arith.constant dense<0.000000e+00> : vector<16xf32>
    %103 = vector.multi_reduction <add>, %102, %cst_43 [1] : vector<16x64xf32> to vector<16xf32>
    %104 = vector.shape_cast %103 : vector<16xf32> to vector<16x1xf32>
    %cst_44 = arith.constant 1.562500e-02 : f32
    %105 = vector.broadcast %cst_44 : f32 to vector<16x1xf32>
    %106 = arith.mulf %104, %105 : vector<16x1xf32>
    %107 = arith.mulf %101, %101 : vector<16x1xf32>
    %108 = arith.subf %106, %107 : vector<16x1xf32>
    %109 = vector.broadcast %101 : vector<16x1xf32> to vector<16x64xf32>
    %110 = arith.subf %93, %109 : vector<16x64xf32>
    %cst_45 = arith.constant 9.99999974E-6 : f32
    %111 = vector.broadcast %cst_45 : f32 to vector<16x1xf32>
    %112 = arith.addf %108, %111 : vector<16x1xf32>
    %113 = math.rsqrt %112 : vector<16x1xf32>
    %114 = vector.broadcast %113 : vector<16x1xf32> to vector<16x64xf32>
    %115 = arith.mulf %110, %114 : vector<16x64xf32>
    %116 = vector.broadcast %95 : vector<1x64xf32> to vector<16x64xf32>
    %117 = arith.mulf %115, %116 : vector<16x64xf32>
    %118 = vector.broadcast %97 : vector<1x64xf32> to vector<16x64xf32>
    %119 = arith.addf %117, %118 : vector<16x64xf32>
    %c0_46 = arith.constant 0 : index
    %c0_47 = arith.constant 0 : index
    %c0_48 = arith.constant 0 : index
    %120 = vector.load %arg7[%c0_46, %c0_47, %c0_48] : memref<2x64x2048xbf16, #tpu.memory_space<vmem>>, vector<1x64x2048xbf16>
    %121 = vector.shape_cast %120 : vector<1x64x2048xbf16> to vector<64x2048xbf16>
    %122 = arith.extf %121 : vector<64x2048xbf16> to vector<64x2048xf32>
    %c0_49 = arith.constant 0 : index
    %c0_50 = arith.constant 0 : index
    %c0_51 = arith.constant 0 : index
    %123 = vector.load %arg9[%c0_49, %c0_50, %c0_51] : memref<2x2048x64xbf16, #tpu.memory_space<vmem>>, vector<1x2048x64xbf16>
    %124 = vector.shape_cast %123 : vector<1x2048x64xbf16> to vector<2048x64xbf16>
    %125 = arith.extf %124 : vector<2048x64xbf16> to vector<2048x64xf32>
    %cst_52 = arith.constant dense<0.000000e+00> : vector<16x2048xf32>
    %126 = tpu.matmul %119, %122, %cst_52 {dimension_numbers = #tpu.dot_dimension_numbers<[1], [0], [0], [1], [0, 0, 1, 1], [], []>} : vector<16x64xf32>, vector<64x2048xf32>, vector<16x2048xf32> -> vector<16x2048xf32>
    %c0_53 = arith.constant 0 : index
    %c0_54 = arith.constant 0 : index
    %c0_55 = arith.constant 0 : index
    %127 = vector.load %arg8[%c0_53, %c0_54, %c0_55] : memref<2x1x2048xf32, #tpu.memory_space<vmem>>, vector<1x1x2048xf32>
    %128 = vector.shape_cast %127 : vector<1x1x2048xf32> to vector<1x2048xf32>
    %129 = vector.broadcast %128 : vector<1x2048xf32> to vector<16x2048xf32>
    %130 = arith.addf %126, %129 : vector<16x2048xf32>
    %cst_56 = arith.constant 0.000000e+00 : f32
    %131 = vector.broadcast %cst_56 : f32 to vector<16x2048xf32>
    %132 = arith.maximumf %130, %131 : vector<16x2048xf32>
    %cst_57 = arith.constant dense<0.000000e+00> : vector<16x64xf32>
    %133 = tpu.matmul %132, %125, %cst_57 {dimension_numbers = #tpu.dot_dimension_numbers<[1], [0], [0], [1], [0, 0, 1, 1], [], []>} : vector<16x2048xf32>, vector<2048x64xf32>, vector<16x64xf32> -> vector<16x64xf32>
    %c0_58 = arith.constant 0 : index
    %c0_59 = arith.constant 0 : index
    %c0_60 = arith.constant 0 : index
    %134 = vector.load %arg10[%c0_58, %c0_59, %c0_60] : memref<2x1x64xf32, #tpu.memory_space<vmem>>, vector<1x1x64xf32>
    %135 = vector.shape_cast %134 : vector<1x1x64xf32> to vector<1x64xf32>
    %136 = vector.broadcast %135 : vector<1x64xf32> to vector<16x64xf32>
    %137 = arith.addf %133, %136 : vector<16x64xf32>
    %138 = arith.addf %119, %137 : vector<16x64xf32>
    %c0_61 = arith.constant 0 : index
    %c0_62 = arith.constant 0 : index
    %c0_63 = arith.constant 0 : index
    %139 = vector.load %arg13[%c0_61, %c0_62, %c0_63] : memref<2x1x64xf32, #tpu.memory_space<vmem>>, vector<1x1x64xf32>
    %140 = vector.shape_cast %139 : vector<1x1x64xf32> to vector<1x64xf32>
    %c0_64 = arith.constant 0 : index
    %c0_65 = arith.constant 0 : index
    %c0_66 = arith.constant 0 : index
    %141 = vector.load %arg14[%c0_64, %c0_65, %c0_66] : memref<2x1x64xf32, #tpu.memory_space<vmem>>, vector<1x1x64xf32>
    %142 = vector.shape_cast %141 : vector<1x1x64xf32> to vector<1x64xf32>
    %cst_67 = arith.constant dense<0.000000e+00> : vector<16xf32>
    %143 = vector.multi_reduction <add>, %138, %cst_67 [1] : vector<16x64xf32> to vector<16xf32>
    %144 = vector.shape_cast %143 : vector<16xf32> to vector<16x1xf32>
    %cst_68 = arith.constant 1.562500e-02 : f32
    %145 = vector.broadcast %cst_68 : f32 to vector<16x1xf32>
    %146 = arith.mulf %144, %145 : vector<16x1xf32>
    %147 = arith.mulf %138, %138 : vector<16x64xf32>
    %cst_69 = arith.constant dense<0.000000e+00> : vector<16xf32>
    %148 = vector.multi_reduction <add>, %147, %cst_69 [1] : vector<16x64xf32> to vector<16xf32>
    %149 = vector.shape_cast %148 : vector<16xf32> to vector<16x1xf32>
    %cst_70 = arith.constant 1.562500e-02 : f32
    %150 = vector.broadcast %cst_70 : f32 to vector<16x1xf32>
    %151 = arith.mulf %149, %150 : vector<16x1xf32>
    %152 = arith.mulf %146, %146 : vector<16x1xf32>
    %153 = arith.subf %151, %152 : vector<16x1xf32>
    %154 = vector.broadcast %146 : vector<16x1xf32> to vector<16x64xf32>
    %155 = arith.subf %138, %154 : vector<16x64xf32>
    %cst_71 = arith.constant 9.99999974E-6 : f32
    %156 = vector.broadcast %cst_71 : f32 to vector<16x1xf32>
    %157 = arith.addf %153, %156 : vector<16x1xf32>
    %158 = math.rsqrt %157 : vector<16x1xf32>
    %159 = vector.broadcast %158 : vector<16x1xf32> to vector<16x64xf32>
    %160 = arith.mulf %155, %159 : vector<16x64xf32>
    %161 = vector.broadcast %140 : vector<1x64xf32> to vector<16x64xf32>
    %162 = arith.mulf %160, %161 : vector<16x64xf32>
    %163 = vector.broadcast %142 : vector<1x64xf32> to vector<16x64xf32>
    %164 = arith.addf %162, %163 : vector<16x64xf32>
    %c1 = arith.constant 1 : index
    %c0_72 = arith.constant 0 : index
    %c0_73 = arith.constant 0 : index
    %165 = vector.load %arg3[%c1, %c0_72, %c0_73] : memref<2x64x192xf32, #tpu.memory_space<vmem>>, vector<1x64x192xf32>
    %166 = vector.shape_cast %165 : vector<1x64x192xf32> to vector<64x192xf32>
    %cst_74 = arith.constant dense<0.000000e+00> : vector<16x192xf32>
    %167 = tpu.matmul %164, %166, %cst_74 {dimension_numbers = #tpu.dot_dimension_numbers<[1], [0], [0], [1], [0, 0, 1, 1], [], []>} : vector<16x64xf32>, vector<64x192xf32>, vector<16x192xf32> -> vector<16x192xf32>
    %c1_75 = arith.constant 1 : index
    %c0_76 = arith.constant 0 : index
    %c0_77 = arith.constant 0 : index
    %168 = vector.load %arg4[%c1_75, %c0_76, %c0_77] : memref<2x1x192xf32, #tpu.memory_space<vmem>>, vector<1x1x192xf32>
    %169 = vector.shape_cast %168 : vector<1x1x192xf32> to vector<1x192xf32>
    %170 = vector.broadcast %169 : vector<1x192xf32> to vector<16x192xf32>
    %171 = arith.addf %167, %170 : vector<16x192xf32>
    %172 = vector.extract_strided_slice %171 {offsets = [0, 0], sizes = [16, 16], strides = [1, 1]} : vector<16x192xf32> to vector<16x16xf32>
    %173 = vector.shape_cast %172 : vector<16x16xf32> to vector<2x8x16xf32>
    %174 = vector.extract_strided_slice %171 {offsets = [0, 64], sizes = [16, 16], strides = [1, 1]} : vector<16x192xf32> to vector<16x16xf32>
    %175 = vector.shape_cast %174 : vector<16x16xf32> to vector<2x8x16xf32>
    %176 = vector.extract_strided_slice %171 {offsets = [0, 128], sizes = [16, 16], strides = [1, 1]} : vector<16x192xf32> to vector<16x16xf32>
    %177 = vector.shape_cast %176 : vector<16x16xf32> to vector<2x8x16xf32>
    "tpu.trace_start"() <{level = 10 : i32, message = "bqd,bkd->bqk"}> : () -> ()
    %cst_78 = arith.constant dense<0.000000e+00> : vector<2x8x8xf32>
    %178 = tpu.matmul %173, %175, %cst_78 {dimension_numbers = #tpu.dot_dimension_numbers<[2], [2], [1], [1], [0, 0, 0, 1, 1, 1], [0], [0]>} : vector<2x8x16xf32>, vector<2x8x16xf32>, vector<2x8x8xf32> -> vector<2x8x8xf32>
    "tpu.trace_stop"() : () -> ()
    %cst_79 = arith.constant dense<0xFF800000> : vector<2x8xf32>
    %179 = vector.multi_reduction <maximumf>, %178, %cst_79 [2] : vector<2x8x8xf32> to vector<2x8xf32>
    %180 = vector.shape_cast %179 : vector<2x8xf32> to vector<2x8x1xf32>
    %181 = vector.broadcast %180 : vector<2x8x1xf32> to vector<2x8x8xf32>
    %182 = arith.subf %178, %181 : vector<2x8x8xf32>
    %183 = math.exp %182 : vector<2x8x8xf32>
    %cst_80 = arith.constant dense<0.000000e+00> : vector<2x8xf32>
    %184 = vector.multi_reduction <add>, %183, %cst_80 [2] : vector<2x8x8xf32> to vector<2x8xf32>
    %185 = vector.shape_cast %184 : vector<2x8xf32> to vector<2x8x1xf32>
    %186 = vector.broadcast %185 : vector<2x8x1xf32> to vector<2x8x8xf32>
    %187 = arith.divf %183, %186 : vector<2x8x8xf32>
    "tpu.trace_start"() <{level = 10 : i32, message = "bqk,bkd->bqd"}> : () -> ()
    %cst_81 = arith.constant dense<0.000000e+00> : vector<2x8x16xf32>
    %188 = tpu.matmul %187, %177, %cst_81 {dimension_numbers = #tpu.dot_dimension_numbers<[2], [1], [1], [2], [0, 0, 0, 1, 1, 2], [0], [0]>} : vector<2x8x8xf32>, vector<2x8x16xf32>, vector<2x8x16xf32> -> vector<2x8x16xf32>
    "tpu.trace_stop"() : () -> ()
    %189 = vector.shape_cast %188 : vector<2x8x16xf32> to vector<16x16xf32>
    %190 = vector.extract_strided_slice %171 {offsets = [0, 16], sizes = [16, 16], strides = [1, 1]} : vector<16x192xf32> to vector<16x16xf32>
    %191 = vector.shape_cast %190 : vector<16x16xf32> to vector<2x8x16xf32>
    %192 = vector.extract_strided_slice %171 {offsets = [0, 80], sizes = [16, 16], strides = [1, 1]} : vector<16x192xf32> to vector<16x16xf32>
    %193 = vector.shape_cast %192 : vector<16x16xf32> to vector<2x8x16xf32>
    %194 = vector.extract_strided_slice %171 {offsets = [0, 144], sizes = [16, 16], strides = [1, 1]} : vector<16x192xf32> to vector<16x16xf32>
    %195 = vector.shape_cast %194 : vector<16x16xf32> to vector<2x8x16xf32>
    "tpu.trace_start"() <{level = 10 : i32, message = "bqd,bkd->bqk"}> : () -> ()
    %cst_82 = arith.constant dense<0.000000e+00> : vector<2x8x8xf32>
    %196 = tpu.matmul %191, %193, %cst_82 {dimension_numbers = #tpu.dot_dimension_numbers<[2], [2], [1], [1], [0, 0, 0, 1, 1, 1], [0], [0]>} : vector<2x8x16xf32>, vector<2x8x16xf32>, vector<2x8x8xf32> -> vector<2x8x8xf32>
    "tpu.trace_stop"() : () -> ()
    %cst_83 = arith.constant dense<0xFF800000> : vector<2x8xf32>
    %197 = vector.multi_reduction <maximumf>, %196, %cst_83 [2] : vector<2x8x8xf32> to vector<2x8xf32>
    %198 = vector.shape_cast %197 : vector<2x8xf32> to vector<2x8x1xf32>
    %199 = vector.broadcast %198 : vector<2x8x1xf32> to vector<2x8x8xf32>
    %200 = arith.subf %196, %199 : vector<2x8x8xf32>
    %201 = math.exp %200 : vector<2x8x8xf32>
    %cst_84 = arith.constant dense<0.000000e+00> : vector<2x8xf32>
    %202 = vector.multi_reduction <add>, %201, %cst_84 [2] : vector<2x8x8xf32> to vector<2x8xf32>
    %203 = vector.shape_cast %202 : vector<2x8xf32> to vector<2x8x1xf32>
    %204 = vector.broadcast %203 : vector<2x8x1xf32> to vector<2x8x8xf32>
    %205 = arith.divf %201, %204 : vector<2x8x8xf32>
    "tpu.trace_start"() <{level = 10 : i32, message = "bqk,bkd->bqd"}> : () -> ()
    %cst_85 = arith.constant dense<0.000000e+00> : vector<2x8x16xf32>
    %206 = tpu.matmul %205, %195, %cst_85 {dimension_numbers = #tpu.dot_dimension_numbers<[2], [1], [1], [2], [0, 0, 0, 1, 1, 2], [0], [0]>} : vector<2x8x8xf32>, vector<2x8x16xf32>, vector<2x8x16xf32> -> vector<2x8x16xf32>
    "tpu.trace_stop"() : () -> ()
    %207 = vector.shape_cast %206 : vector<2x8x16xf32> to vector<16x16xf32>
    %208 = vector.extract_strided_slice %171 {offsets = [0, 32], sizes = [16, 16], strides = [1, 1]} : vector<16x192xf32> to vector<16x16xf32>
    %209 = vector.shape_cast %208 : vector<16x16xf32> to vector<2x8x16xf32>
    %210 = vector.extract_strided_slice %171 {offsets = [0, 96], sizes = [16, 16], strides = [1, 1]} : vector<16x192xf32> to vector<16x16xf32>
    %211 = vector.shape_cast %210 : vector<16x16xf32> to vector<2x8x16xf32>
    %212 = vector.extract_strided_slice %171 {offsets = [0, 160], sizes = [16, 16], strides = [1, 1]} : vector<16x192xf32> to vector<16x16xf32>
    %213 = vector.shape_cast %212 : vector<16x16xf32> to vector<2x8x16xf32>
    "tpu.trace_start"() <{level = 10 : i32, message = "bqd,bkd->bqk"}> : () -> ()
    %cst_86 = arith.constant dense<0.000000e+00> : vector<2x8x8xf32>
    %214 = tpu.matmul %209, %211, %cst_86 {dimension_numbers = #tpu.dot_dimension_numbers<[2], [2], [1], [1], [0, 0, 0, 1, 1, 1], [0], [0]>} : vector<2x8x16xf32>, vector<2x8x16xf32>, vector<2x8x8xf32> -> vector<2x8x8xf32>
    "tpu.trace_stop"() : () -> ()
    %cst_87 = arith.constant dense<0xFF800000> : vector<2x8xf32>
    %215 = vector.multi_reduction <maximumf>, %214, %cst_87 [2] : vector<2x8x8xf32> to vector<2x8xf32>
    %216 = vector.shape_cast %215 : vector<2x8xf32> to vector<2x8x1xf32>
    %217 = vector.broadcast %216 : vector<2x8x1xf32> to vector<2x8x8xf32>
    %218 = arith.subf %214, %217 : vector<2x8x8xf32>
    %219 = math.exp %218 : vector<2x8x8xf32>
    %cst_88 = arith.constant dense<0.000000e+00> : vector<2x8xf32>
    %220 = vector.multi_reduction <add>, %219, %cst_88 [2] : vector<2x8x8xf32> to vector<2x8xf32>
    %221 = vector.shape_cast %220 : vector<2x8xf32> to vector<2x8x1xf32>
    %222 = vector.broadcast %221 : vector<2x8x1xf32> to vector<2x8x8xf32>
    %223 = arith.divf %219, %222 : vector<2x8x8xf32>
    "tpu.trace_start"() <{level = 10 : i32, message = "bqk,bkd->bqd"}> : () -> ()
    %cst_89 = arith.constant dense<0.000000e+00> : vector<2x8x16xf32>
    %224 = tpu.matmul %223, %213, %cst_89 {dimension_numbers = #tpu.dot_dimension_numbers<[2], [1], [1], [2], [0, 0, 0, 1, 1, 2], [0], [0]>} : vector<2x8x8xf32>, vector<2x8x16xf32>, vector<2x8x16xf32> -> vector<2x8x16xf32>
    "tpu.trace_stop"() : () -> ()
    %225 = vector.shape_cast %224 : vector<2x8x16xf32> to vector<16x16xf32>
    %226 = vector.extract_strided_slice %171 {offsets = [0, 48], sizes = [16, 16], strides = [1, 1]} : vector<16x192xf32> to vector<16x16xf32>
    %227 = vector.shape_cast %226 : vector<16x16xf32> to vector<2x8x16xf32>
    %228 = vector.extract_strided_slice %171 {offsets = [0, 112], sizes = [16, 16], strides = [1, 1]} : vector<16x192xf32> to vector<16x16xf32>
    %229 = vector.shape_cast %228 : vector<16x16xf32> to vector<2x8x16xf32>
    %230 = vector.extract_strided_slice %171 {offsets = [0, 176], sizes = [16, 16], strides = [1, 1]} : vector<16x192xf32> to vector<16x16xf32>
    %231 = vector.shape_cast %230 : vector<16x16xf32> to vector<2x8x16xf32>
    "tpu.trace_start"() <{level = 10 : i32, message = "bqd,bkd->bqk"}> : () -> ()
    %cst_90 = arith.constant dense<0.000000e+00> : vector<2x8x8xf32>
    %232 = tpu.matmul %227, %229, %cst_90 {dimension_numbers = #tpu.dot_dimension_numbers<[2], [2], [1], [1], [0, 0, 0, 1, 1, 1], [0], [0]>} : vector<2x8x16xf32>, vector<2x8x16xf32>, vector<2x8x8xf32> -> vector<2x8x8xf32>
    "tpu.trace_stop"() : () -> ()
    %cst_91 = arith.constant dense<0xFF800000> : vector<2x8xf32>
    %233 = vector.multi_reduction <maximumf>, %232, %cst_91 [2] : vector<2x8x8xf32> to vector<2x8xf32>
    %234 = vector.shape_cast %233 : vector<2x8xf32> to vector<2x8x1xf32>
    %235 = vector.broadcast %234 : vector<2x8x1xf32> to vector<2x8x8xf32>
    %236 = arith.subf %232, %235 : vector<2x8x8xf32>
    %237 = math.exp %236 : vector<2x8x8xf32>
    %cst_92 = arith.constant dense<0.000000e+00> : vector<2x8xf32>
    %238 = vector.multi_reduction <add>, %237, %cst_92 [2] : vector<2x8x8xf32> to vector<2x8xf32>
    %239 = vector.shape_cast %238 : vector<2x8xf32> to vector<2x8x1xf32>
    %240 = vector.broadcast %239 : vector<2x8x1xf32> to vector<2x8x8xf32>
    %241 = arith.divf %237, %240 : vector<2x8x8xf32>
    "tpu.trace_start"() <{level = 10 : i32, message = "bqk,bkd->bqd"}> : () -> ()
    %cst_93 = arith.constant dense<0.000000e+00> : vector<2x8x16xf32>
    %242 = tpu.matmul %241, %231, %cst_93 {dimension_numbers = #tpu.dot_dimension_numbers<[2], [1], [1], [2], [0, 0, 0, 1, 1, 2], [0], [0]>} : vector<2x8x8xf32>, vector<2x8x16xf32>, vector<2x8x16xf32> -> vector<2x8x16xf32>
    "tpu.trace_stop"() : () -> ()
    %243 = vector.shape_cast %242 : vector<2x8x16xf32> to vector<16x16xf32>
    %244 = tpu.concatenate %189, %207, %225, %243 in 1 : vector<16x16xf32>, vector<16x16xf32>, vector<16x16xf32>, vector<16x16xf32> -> vector<16x64xf32>
    %c1_94 = arith.constant 1 : index
    %c0_95 = arith.constant 0 : index
    %c0_96 = arith.constant 0 : index
    %245 = vector.load %arg5[%c1_94, %c0_95, %c0_96] : memref<2x64x64xf32, #tpu.memory_space<vmem>>, vector<1x64x64xf32>
    %246 = vector.shape_cast %245 : vector<1x64x64xf32> to vector<64x64xf32>
    %cst_97 = arith.constant dense<0.000000e+00> : vector<16x64xf32>
    %247 = tpu.matmul %244, %246, %cst_97 {dimension_numbers = #tpu.dot_dimension_numbers<[1], [0], [0], [1], [0, 0, 1, 1], [], []>} : vector<16x64xf32>, vector<64x64xf32>, vector<16x64xf32> -> vector<16x64xf32>
    %c1_98 = arith.constant 1 : index
    %c0_99 = arith.constant 0 : index
    %c0_100 = arith.constant 0 : index
    %248 = vector.load %arg6[%c1_98, %c0_99, %c0_100] : memref<2x1x64xf32, #tpu.memory_space<vmem>>, vector<1x1x64xf32>
    %249 = vector.shape_cast %248 : vector<1x1x64xf32> to vector<1x64xf32>
    %250 = vector.broadcast %249 : vector<1x64xf32> to vector<16x64xf32>
    %251 = arith.addf %247, %250 : vector<16x64xf32>
    %252 = arith.addf %164, %251 : vector<16x64xf32>
    %c1_101 = arith.constant 1 : index
    %c0_102 = arith.constant 0 : index
    %c0_103 = arith.constant 0 : index
    %253 = vector.load %arg11[%c1_101, %c0_102, %c0_103] : memref<2x1x64xf32, #tpu.memory_space<vmem>>, vector<1x1x64xf32>
    %254 = vector.shape_cast %253 : vector<1x1x64xf32> to vector<1x64xf32>
    %c1_104 = arith.constant 1 : index
    %c0_105 = arith.constant 0 : index
    %c0_106 = arith.constant 0 : index
    %255 = vector.load %arg12[%c1_104, %c0_105, %c0_106] : memref<2x1x64xf32, #tpu.memory_space<vmem>>, vector<1x1x64xf32>
    %256 = vector.shape_cast %255 : vector<1x1x64xf32> to vector<1x64xf32>
    %cst_107 = arith.constant dense<0.000000e+00> : vector<16xf32>
    %257 = vector.multi_reduction <add>, %252, %cst_107 [1] : vector<16x64xf32> to vector<16xf32>
    %258 = vector.shape_cast %257 : vector<16xf32> to vector<16x1xf32>
    %cst_108 = arith.constant 1.562500e-02 : f32
    %259 = vector.broadcast %cst_108 : f32 to vector<16x1xf32>
    %260 = arith.mulf %258, %259 : vector<16x1xf32>
    %261 = arith.mulf %252, %252 : vector<16x64xf32>
    %cst_109 = arith.constant dense<0.000000e+00> : vector<16xf32>
    %262 = vector.multi_reduction <add>, %261, %cst_109 [1] : vector<16x64xf32> to vector<16xf32>
    %263 = vector.shape_cast %262 : vector<16xf32> to vector<16x1xf32>
    %cst_110 = arith.constant 1.562500e-02 : f32
    %264 = vector.broadcast %cst_110 : f32 to vector<16x1xf32>
    %265 = arith.mulf %263, %264 : vector<16x1xf32>
    %266 = arith.mulf %260, %260 : vector<16x1xf32>
    %267 = arith.subf %265, %266 : vector<16x1xf32>
    %268 = vector.broadcast %260 : vector<16x1xf32> to vector<16x64xf32>
    %269 = arith.subf %252, %268 : vector<16x64xf32>
    %cst_111 = arith.constant 9.99999974E-6 : f32
    %270 = vector.broadcast %cst_111 : f32 to vector<16x1xf32>
    %271 = arith.addf %267, %270 : vector<16x1xf32>
    %272 = math.rsqrt %271 : vector<16x1xf32>
    %273 = vector.broadcast %272 : vector<16x1xf32> to vector<16x64xf32>
    %274 = arith.mulf %269, %273 : vector<16x64xf32>
    %275 = vector.broadcast %254 : vector<1x64xf32> to vector<16x64xf32>
    %276 = arith.mulf %274, %275 : vector<16x64xf32>
    %277 = vector.broadcast %256 : vector<1x64xf32> to vector<16x64xf32>
    %278 = arith.addf %276, %277 : vector<16x64xf32>
    %c1_112 = arith.constant 1 : index
    %c0_113 = arith.constant 0 : index
    %c0_114 = arith.constant 0 : index
    %279 = vector.load %arg7[%c1_112, %c0_113, %c0_114] : memref<2x64x2048xbf16, #tpu.memory_space<vmem>>, vector<1x64x2048xbf16>
    %280 = vector.shape_cast %279 : vector<1x64x2048xbf16> to vector<64x2048xbf16>
    %281 = arith.extf %280 : vector<64x2048xbf16> to vector<64x2048xf32>
    %c1_115 = arith.constant 1 : index
    %c0_116 = arith.constant 0 : index
    %c0_117 = arith.constant 0 : index
    %282 = vector.load %arg9[%c1_115, %c0_116, %c0_117] : memref<2x2048x64xbf16, #tpu.memory_space<vmem>>, vector<1x2048x64xbf16>
    %283 = vector.shape_cast %282 : vector<1x2048x64xbf16> to vector<2048x64xbf16>
    %284 = arith.extf %283 : vector<2048x64xbf16> to vector<2048x64xf32>
    %cst_118 = arith.constant dense<0.000000e+00> : vector<16x2048xf32>
    %285 = tpu.matmul %278, %281, %cst_118 {dimension_numbers = #tpu.dot_dimension_numbers<[1], [0], [0], [1], [0, 0, 1, 1], [], []>} : vector<16x64xf32>, vector<64x2048xf32>, vector<16x2048xf32> -> vector<16x2048xf32>
    %c1_119 = arith.constant 1 : index
    %c0_120 = arith.constant 0 : index
    %c0_121 = arith.constant 0 : index
    %286 = vector.load %arg8[%c1_119, %c0_120, %c0_121] : memref<2x1x2048xf32, #tpu.memory_space<vmem>>, vector<1x1x2048xf32>
    %287 = vector.shape_cast %286 : vector<1x1x2048xf32> to vector<1x2048xf32>
    %288 = vector.broadcast %287 : vector<1x2048xf32> to vector<16x2048xf32>
    %289 = arith.addf %285, %288 : vector<16x2048xf32>
    %cst_122 = arith.constant 0.000000e+00 : f32
    %290 = vector.broadcast %cst_122 : f32 to vector<16x2048xf32>
    %291 = arith.maximumf %289, %290 : vector<16x2048xf32>
    %cst_123 = arith.constant dense<0.000000e+00> : vector<16x64xf32>
    %292 = tpu.matmul %291, %284, %cst_123 {dimension_numbers = #tpu.dot_dimension_numbers<[1], [0], [0], [1], [0, 0, 1, 1], [], []>} : vector<16x2048xf32>, vector<2048x64xf32>, vector<16x64xf32> -> vector<16x64xf32>
    %c1_124 = arith.constant 1 : index
    %c0_125 = arith.constant 0 : index
    %c0_126 = arith.constant 0 : index
    %293 = vector.load %arg10[%c1_124, %c0_125, %c0_126] : memref<2x1x64xf32, #tpu.memory_space<vmem>>, vector<1x1x64xf32>
    %294 = vector.shape_cast %293 : vector<1x1x64xf32> to vector<1x64xf32>
    %295 = vector.broadcast %294 : vector<1x64xf32> to vector<16x64xf32>
    %296 = arith.addf %292, %295 : vector<16x64xf32>
    %297 = arith.addf %278, %296 : vector<16x64xf32>
    %c1_127 = arith.constant 1 : index
    %c0_128 = arith.constant 0 : index
    %c0_129 = arith.constant 0 : index
    %298 = vector.load %arg13[%c1_127, %c0_128, %c0_129] : memref<2x1x64xf32, #tpu.memory_space<vmem>>, vector<1x1x64xf32>
    %299 = vector.shape_cast %298 : vector<1x1x64xf32> to vector<1x64xf32>
    %c1_130 = arith.constant 1 : index
    %c0_131 = arith.constant 0 : index
    %c0_132 = arith.constant 0 : index
    %300 = vector.load %arg14[%c1_130, %c0_131, %c0_132] : memref<2x1x64xf32, #tpu.memory_space<vmem>>, vector<1x1x64xf32>
    %301 = vector.shape_cast %300 : vector<1x1x64xf32> to vector<1x64xf32>
    %cst_133 = arith.constant dense<0.000000e+00> : vector<16xf32>
    %302 = vector.multi_reduction <add>, %297, %cst_133 [1] : vector<16x64xf32> to vector<16xf32>
    %303 = vector.shape_cast %302 : vector<16xf32> to vector<16x1xf32>
    %cst_134 = arith.constant 1.562500e-02 : f32
    %304 = vector.broadcast %cst_134 : f32 to vector<16x1xf32>
    %305 = arith.mulf %303, %304 : vector<16x1xf32>
    %306 = arith.mulf %297, %297 : vector<16x64xf32>
    %cst_135 = arith.constant dense<0.000000e+00> : vector<16xf32>
    %307 = vector.multi_reduction <add>, %306, %cst_135 [1] : vector<16x64xf32> to vector<16xf32>
    %308 = vector.shape_cast %307 : vector<16xf32> to vector<16x1xf32>
    %cst_136 = arith.constant 1.562500e-02 : f32
    %309 = vector.broadcast %cst_136 : f32 to vector<16x1xf32>
    %310 = arith.mulf %308, %309 : vector<16x1xf32>
    %311 = arith.mulf %305, %305 : vector<16x1xf32>
    %312 = arith.subf %310, %311 : vector<16x1xf32>
    %313 = vector.broadcast %305 : vector<16x1xf32> to vector<16x64xf32>
    %314 = arith.subf %297, %313 : vector<16x64xf32>
    %cst_137 = arith.constant 9.99999974E-6 : f32
    %315 = vector.broadcast %cst_137 : f32 to vector<16x1xf32>
    %316 = arith.addf %312, %315 : vector<16x1xf32>
    %317 = math.rsqrt %316 : vector<16x1xf32>
    %318 = vector.broadcast %317 : vector<16x1xf32> to vector<16x64xf32>
    %319 = arith.mulf %314, %318 : vector<16x64xf32>
    %320 = vector.broadcast %299 : vector<1x64xf32> to vector<16x64xf32>
    %321 = arith.mulf %319, %320 : vector<16x64xf32>
    %322 = vector.broadcast %301 : vector<1x64xf32> to vector<16x64xf32>
    %323 = arith.addf %321, %322 : vector<16x64xf32>
    %324 = vector.extract_strided_slice %323 {offsets = [7, 0], sizes = [1, 64], strides = [1, 1]} : vector<16x64xf32> to vector<1x64xf32>
    %325 = vector.extract_strided_slice %323 {offsets = [15, 0], sizes = [1, 64], strides = [1, 1]} : vector<16x64xf32> to vector<1x64xf32>
    %326 = tpu.concatenate %324, %325 in 0 : vector<1x64xf32>, vector<1x64xf32> -> vector<2x64xf32>
    %c0_138 = arith.constant 0 : index
    %c0_139 = arith.constant 0 : index
    %327 = vector.load %arg15[%c0_138, %c0_139] : memref<64x1xf32, #tpu.memory_space<vmem>>, vector<64x1xf32>
    %cst_140 = arith.constant dense<0.000000e+00> : vector<2x1xf32>
    %328 = tpu.matmul %326, %327, %cst_140 {dimension_numbers = #tpu.dot_dimension_numbers<[1], [0], [0], [1], [0, 0, 1, 1], [], []>} : vector<2x64xf32>, vector<64x1xf32>, vector<2x1xf32> -> vector<2x1xf32>
    %c0_141 = arith.constant 0 : index
    %c0_142 = arith.constant 0 : index
    %329 = vector.load %arg16[%c0_141, %c0_142] : memref<1x1xf32, #tpu.memory_space<vmem>>, vector<1x1xf32>
    %330 = vector.broadcast %329 : vector<1x1xf32> to vector<2x1xf32>
    %331 = arith.addf %328, %330 : vector<2x1xf32>
    %c0_143 = arith.constant 0 : index
    %c0_144 = arith.constant 0 : index
    %332 = vector.load %arg17[%c0_143, %c0_144] : memref<2x1xf32, #tpu.memory_space<vmem>>, vector<2x1xf32>
    tpu.vector_store %arg17[%c0_143, %c0_144], %331 {strides = array<i32>} : memref<2x1xf32, #tpu.memory_space<vmem>>, vector<2x1xf32>,
    return
  }
}

</mosaic_0001>

<llo_original>
// kernel: tpu_custom_call.1
$region0: #{tpu_custom_call.1}
  #allocation0 [shape = 'u32[]', space=smem, size = 0x4, offset = 0x4, fixed_abs, tag = 'smem constant byte address 0x4 - core index']
  #allocation1 [shape = 'u32[144,128]{1,0:T(1,128)}', space=vmem, size = 0x12000, scoped, tag = 'internal scratch']
  #allocation2 [shape = 'f32[1,1]{1,0:T(1,128)S(1)}', space=vmem, size = 0x200, scoped, tag = 'scoped memory for tpu_custom_call.1']
  %s0 = inlined_call_operand.vmem [shape: f32[16,16], index: 0, kind: input, shape index: {}]
  %s1 = inlined_call_operand.vmem [shape: f32[16,64], index: 1, kind: input, shape index: {}]
  %s2 = inlined_call_operand.vmem [shape: f32[1,64], index: 2, kind: input, shape index: {}]
  %s3 = inlined_call_operand.vmem [shape: f32[2,64,192], index: 3, kind: input, shape index: {}]
  %s4 = inlined_call_operand.vmem [shape: f32[2,1,192], index: 4, kind: input, shape index: {}]
  %s5 = inlined_call_operand.vmem [shape: f32[2,64,64], index: 5, kind: input, shape index: {}]
  %s6 = inlined_call_operand.vmem [shape: f32[2,1,64], index: 6, kind: input, shape index: {}]
  %s7 = inlined_call_operand.vmem [shape: bf16[2,64,2048], index: 7, kind: input, shape index: {}]
  %s8 = inlined_call_operand.vmem [shape: f32[2,1,2048], index: 8, kind: input, shape index: {}]
  %s9 = inlined_call_operand.vmem [shape: bf16[2,2048,64], index: 9, kind: input, shape index: {}]
  %s10 = inlined_call_operand.vmem [shape: f32[2,1,64], index: 10, kind: input, shape index: {}]
  %s11 = inlined_call_operand.vmem [shape: f32[2,1,64], index: 11, kind: input, shape index: {}]
  %s12 = inlined_call_operand.vmem [shape: f32[2,1,64], index: 12, kind: input, shape index: {}]
  %s13 = inlined_call_operand.vmem [shape: f32[2,1,64], index: 13, kind: input, shape index: {}]
  %s14 = inlined_call_operand.vmem [shape: f32[2,1,64], index: 14, kind: input, shape index: {}]
  %s15 = inlined_call_operand.vmem [shape: f32[64,1], index: 15, kind: input, shape index: {}]
  %s16 = inlined_call_operand.<no memory space> [shape: f32[1,1], index: 16, kind: input, shape index: {}]
  %s17 = inlined_call_operand.vmem [shape: f32[2,1], index: 17, kind: output, shape index: {}]
  %s18 = sld [smem:[#allocation0]]
  $region78: #{tpu_custom_call.1} parent=0
    _
  %s20 = ssub.s32 1, %s18
  %s21 = scalar_select 0, %s20, %s18
  %v22 = vstv %s16
  %23 = vst [vmem:[#allocation2] sm:$0x1] %v22
  // Predicated region
  $region2: #{tpu_custom_call.1} parent=0 // pred_check
    _
  $region3: #{tpu_custom_call.1} parent=0 // pred_check_branch
    %25 = sbr.rel (0) target = $region5
  $region4: #{tpu_custom_call.1} parent=0 // pred_region
    _
  $region5: #{tpu_custom_call.1} parent=0 // pred_fallthru
    _
  // Predicated region
  $region6: #{tpu_custom_call.1} parent=0 // pred_check
    _
  $region7: #{tpu_custom_call.1} parent=0 // pred_check_branch
    %27 = sbr.rel (0) target = $region9
  $region8: #{tpu_custom_call.1} parent=0 // pred_region
    _
  $region9: #{tpu_custom_call.1} parent=0 // pred_fallthru
    _
  // Predicated region
  $region10: #{tpu_custom_call.1} parent=0 // pred_check
    _
  $region11: #{tpu_custom_call.1} parent=0 // pred_check_branch
    %29 = sbr.rel (0) target = $region13
  $region12: #{tpu_custom_call.1} parent=0 // pred_region
    _
  $region13: #{tpu_custom_call.1} parent=0 // pred_fallthru
    _
  // Predicated region
  $region14: #{tpu_custom_call.1} parent=0 // pred_check
    _
  $region15: #{tpu_custom_call.1} parent=0 // pred_check_branch
    %31 = sbr.rel (0) target = $region17
  $region16: #{tpu_custom_call.1} parent=0 // pred_region
    _
  $region17: #{tpu_custom_call.1} parent=0 // pred_fallthru
    _
  // Predicated region
  $region18: #{tpu_custom_call.1} parent=0 // pred_check
    _
  $region19: #{tpu_custom_call.1} parent=0 // pred_check_branch
    %33 = sbr.rel (0) target = $region21
  $region20: #{tpu_custom_call.1} parent=0 // pred_region
    _
  $region21: #{tpu_custom_call.1} parent=0 // pred_fallthru
    _
  // Predicated region
  $region22: #{tpu_custom_call.1} parent=0 // pred_check
    _
  $region23: #{tpu_custom_call.1} parent=0 // pred_check_branch
    %35 = sbr.rel (0) target = $region25
  $region24: #{tpu_custom_call.1} parent=0 // pred_region
    _
  $region25: #{tpu_custom_call.1} parent=0 // pred_fallthru
    _
  // Predicated region
  $region26: #{tpu_custom_call.1} parent=0 // pred_check
    _
  $region27: #{tpu_custom_call.1} parent=0 // pred_check_branch
    %37 = sbr.rel (0) target = $region29
  $region28: #{tpu_custom_call.1} parent=0 // pred_region
    _
  $region29: #{tpu_custom_call.1} parent=0 // pred_fallthru
    _
  // Predicated region
  $region30: #{tpu_custom_call.1} parent=0 // pred_check
    _
  $region31: #{tpu_custom_call.1} parent=0 // pred_check_branch
    %39 = sbr.rel (0) target = $region33
  $region32: #{tpu_custom_call.1} parent=0 // pred_region
    _
  $region33: #{tpu_custom_call.1} parent=0 // pred_fallthru
    _
  // Predicated region
  $region34: #{tpu_custom_call.1} parent=0 // pred_check
    _
  $region35: #{tpu_custom_call.1} parent=0 // pred_check_branch
    %41 = sbr.rel (0) target = $region37
  $region36: #{tpu_custom_call.1} parent=0 // pred_region
    _
  $region37: #{tpu_custom_call.1} parent=0 // pred_fallthru
    _
  // Predicated region
  $region38: #{tpu_custom_call.1} parent=0 // pred_check
    _
  $region39: #{tpu_custom_call.1} parent=0 // pred_check_branch
    %43 = sbr.rel (0) target = $region41
  $region40: #{tpu_custom_call.1} parent=0 // pred_region
    _
  $region41: #{tpu_custom_call.1} parent=0 // pred_fallthru
    _
  // Predicated region
  $region42: #{tpu_custom_call.1} parent=0 // pred_check
    _
  $region43: #{tpu_custom_call.1} parent=0 // pred_check_branch
    %45 = sbr.rel (0) target = $region45
  $region44: #{tpu_custom_call.1} parent=0 // pred_region
    _
  $region45: #{tpu_custom_call.1} parent=0 // pred_fallthru
    _
  // Predicated region
  $region46: #{tpu_custom_call.1} parent=0 // pred_check
    _
  $region47: #{tpu_custom_call.1} parent=0 // pred_check_branch
    %47 = sbr.rel (0) target = $region49
  $region48: #{tpu_custom_call.1} parent=0 // pred_region
    _
  $region49: #{tpu_custom_call.1} parent=0 // pred_fallthru
    _
  // Predicated region
  $region50: #{tpu_custom_call.1} parent=0 // pred_check
    _
  $region51: #{tpu_custom_call.1} parent=0 // pred_check_branch
    %49 = sbr.rel (0) target = $region53
  $region52: #{tpu_custom_call.1} parent=0 // pred_region
    _
  $region53: #{tpu_custom_call.1} parent=0 // pred_fallthru
    _
  // Predicated region
  $region54: #{tpu_custom_call.1} parent=0 // pred_check
    _
  $region55: #{tpu_custom_call.1} parent=0 // pred_check_branch
    %51 = sbr.rel (0) target = $region57
  $region56: #{tpu_custom_call.1} parent=0 // pred_region
    _
  $region57: #{tpu_custom_call.1} parent=0 // pred_fallthru
    _
  // Predicated region
  $region58: #{tpu_custom_call.1} parent=0 // pred_check
    _
  $region59: #{tpu_custom_call.1} parent=0 // pred_check_branch
    %53 = sbr.rel (0) target = $region61
  $region60: #{tpu_custom_call.1} parent=0 // pred_region
    _
  $region61: #{tpu_custom_call.1} parent=0 // pred_fallthru
    _
  // Predicated region
  $region62: #{tpu_custom_call.1} parent=0 // pred_check
    _
  $region63: #{tpu_custom_call.1} parent=0 // pred_check_branch
    %55 = sbr.rel (0) target = $region65
  $region64: #{tpu_custom_call.1} parent=0 // pred_region
    _
  $region65: #{tpu_custom_call.1} parent=0 // pred_fallthru
    _
  // Predicated region
  $region66: #{tpu_custom_call.1} parent=0 // pred_check
    _
  $region67: #{tpu_custom_call.1} parent=0 // pred_check_branch
    %57 = sbr.rel (0) target = $region69
  $region68: #{tpu_custom_call.1} parent=0 // pred_region
    _
  $region69: #{tpu_custom_call.1} parent=0 // pred_fallthru
    _
  %v58 = vld [vmem:[%s0] sm:$0xff]
  %v59 = vld [vmem:[%s0 + $0x8] sm:$0xff]
  %v60 = vld [vmem:[%s1] sm:$0xff]
  %v61 = vld [vmem:[%s1 + $0x8] sm:$0xff]
  %v62 = vld [vmem:[%s2] sm:$0x1]
  %v64 = vlaneseq
  %v65 = vshrl.u32 %v64, 7
  %v66 = vsub.s32 0, %v65
  %v67 = vrot.slane %v62, %v66
  %vm69 = vcmask 130048
  %v71 = vsel %vm69, %v58, 0
  %v74 = vsel %vm69, %v59, 0
  %76 = vmatprep.subr.mxu0 0.0
  %77 = vmatpush1.msra.mxu0 %v60
  %78 = vmatprep.subr.mxu0 0.0
  %79 = vmatpush1.msra.mxu0 %v61
  %80 = vmatprep.subr.mxu0 0.0
  %81 = vmatpush1.msra.mxu0 0.0
  %82 = vmatprep.subr.mxu0 0.0
  %83 = vmatpush1.msra.mxu0 0.0
  %84 = vmatprep.subr.mxu0 0.0
  %85 = vmatpush1.msra.mxu0 0.0
  %86 = vmatprep.subr.mxu0 0.0
  %87 = vmatpush1.msra.mxu0 0.0
  %88 = vmatprep.subr.mxu0 0.0
  %89 = vmatpush1.msra.mxu0 0.0
  %90 = vmatprep.subr.mxu0 0.0
  %91 = vmatpush1.msra.mxu0 0.0
  %92 = vmatprep.subr.mxu0 0.0
  %93 = vmatpush1.msra.mxu0 0.0
  %94 = vmatprep.subr.mxu0 0.0
  %95 = vmatpush1.msra.mxu0 0.0
  %96 = vmatprep.subr.mxu0 0.0
  %97 = vmatpush1.msra.mxu0 0.0
  %98 = vmatprep.subr.mxu0 0.0
  %99 = vmatpush1.msra.mxu0 0.0
  %100 = vmatprep.subr.mxu0 0.0
  %101 = vmatpush1.msra.mxu0 0.0
  %102 = vmatprep.subr.mxu0 0.0
  %103 = vmatpush1.msra.mxu0 0.0
  %104 = vmatprep.subr.mxu0 0.0
  %105 = vmatpush1.msra.mxu0 0.0
  %106 = vmatprep.subr.mxu0 0.0
  %107 = vmatpush1.msra.mxu0 0.0
  %108 = vmatprep.subr.mxu0 0.0
  %109 = vmatpush1.msra.mxu0 0.0
  %110 = vmatprep.subr.mxu0 0.0
  %111 = vmatpush1.msra.mxu0 0.0
  %112 = vmatprep.subr.mxu0 0.0
  %113 = vmatpush1.msra.mxu0 0.0
  %114 = vmatprep.subr.mxu0 0.0
  %115 = vmatpush1.msra.mxu0 0.0
  %116 = vmatprep.subr.mxu0 0.0
  %117 = vmatpush1.msra.mxu0 0.0
  %118 = vmatprep.subr.mxu0 0.0
  %119 = vmatpush1.msra.mxu0 0.0
  %120 = vmatprep.subr.mxu0 0.0
  %121 = vmatpush1.msra.mxu0 0.0
  %122 = vmatprep.subr.mxu0 0.0
  %123 = vmatpush1.msra.mxu0 0.0
  %124 = vmatprep.subr.mxu0 0.0
  %125 = vmatpush1.msra.mxu0 0.0
  %126 = vmatprep.subr.mxu0 0.0
  %127 = vmatpush1.msra.mxu0 0.0
  %128 = vmatprep.subr.mxu0 0.0
  %129 = vmatpush1.msra.mxu0 0.0
  %130 = vmatprep.subr.mxu0 0.0
  %131 = vmatpush1.msra.mxu0 0.0
  %132 = vmatprep.subr.mxu0 0.0
  %133 = vmatpush1.msra.mxu0 0.0
  %134 = vmatprep.subr.mxu0 0.0
  %135 = vmatpush1.msra.mxu0 0.0
  %136 = vmatprep.subr.mxu0 0.0
  %137 = vmatpush1.msra.mxu0 0.0
  %138 = vmatprep.subr.mxu0 0.0
  %139 = vmatpush1.msra.mxu0 0.0
  %140 = vmatprep.mubr.f32.mxu0 0.0
  %141 = vmatmul.mubr.f32.gmra.mrb[0].mxu0 %v71
  %v142 = vpop.f32.mrb[0].mxu0
  %v143 = vadd.f32 %v67, %v142
  %v144 = vpop.f32.mrb[0].mxu0
  %145 = vmatprep.mubr.f32.mxu0 0.0
  %146 = vmatmul.mubr.f32.gmra.mrb[0].mxu0 %v74
  %v147 = vpop.f32.mrb[0].mxu0
  %v148 = vadd.f32 %v67, %v147
  %v149 = vpop.f32.mrb[0].mxu0
  %150 = vdwg.mxu0
  %v151 = vld [vmem:[%s3] sm:$0xff]
  %v152 = vld [vmem:[%s3 + $0x8] sm:$0xff]
  %v153 = vld [vmem:[%s3 + $0x10] sm:$0xff]
  %v154 = vld [vmem:[%s3 + $0x18] sm:$0xff]
  %v155 = vld [vmem:[%s3 + $0x20] sm:$0xff]
  %v156 = vld [vmem:[%s3 + $0x28] sm:$0xff]
  %v157 = vld [vmem:[%s3 + $0x30] sm:$0xff]
  %v158 = vld [vmem:[%s3 + $0x38] sm:$0xff]
  %v159 = vld [vmem:[%s3 + $0x40] sm:$0xff]
  %v160 = vld [vmem:[%s3 + $0x48] sm:$0xff]
  %v161 = vld [vmem:[%s3 + $0x50] sm:$0xff]
  %v162 = vld [vmem:[%s3 + $0x58] sm:$0xff]
  %v163 = vld [vmem:[%s3 + $0x60] sm:$0xff]
  %v164 = vld [vmem:[%s3 + $0x68] sm:$0xff]
  %v165 = vld [vmem:[%s3 + $0x70] sm:$0xff]
  %v166 = vld [vmem:[%s3 + $0x78] sm:$0xff]
  %v167 = vld [vmem:[%s4] sm:$0x3]
  %v169 = vlaneseq
  %v170 = vshrl.u32 %v169, 7
  %v171 = vsub.s32 0, %v170
  %v172 = vrot.slane %v167, %v171
  %v173 = vlaneseq
  %v174 = vshrl.u32 %v173, 7
  %v175 = vsub.s32 1, %v174
  %v176 = vrot.slane %v167, %v175
  %vm179 = vcmask 523264
  %v181 = vsel %vm179, %v143, 0
  %v184 = vsel %vm179, %v148, 0
  %186 = vmatprep.subr.mxu0 %v152
  %187 = vmatpush1.msra.mxu0 %v151
  %188 = vmatprep.subr.mxu0 %v154
  %189 = vmatpush1.msra.mxu0 %v153
  %190 = vmatprep.subr.mxu0 %v156
  %191 = vmatpush1.msra.mxu0 %v155
  %192 = vmatprep.subr.mxu0 %v158
  %193 = vmatpush1.msra.mxu0 %v157
  %194 = vmatprep.subr.mxu0 %v160
  %195 = vmatpush1.msra.mxu0 %v159
  %196 = vmatprep.subr.mxu0 %v162
  %197 = vmatpush1.msra.mxu0 %v161
  %198 = vmatprep.subr.mxu0 %v164
  %199 = vmatpush1.msra.mxu0 %v163
  %200 = vmatprep.subr.mxu0 %v166
  %201 = vmatpush1.msra.mxu0 %v165
  %202 = vmatprep.subr.mxu0 0.0
  %203 = vmatpush1.msra.mxu0 0.0
  %204 = vmatprep.subr.mxu0 0.0
  %205 = vmatpush1.msra.mxu0 0.0
  %206 = vmatprep.subr.mxu0 0.0
  %207 = vmatpush1.msra.mxu0 0.0
  %208 = vmatprep.subr.mxu0 0.0
  %209 = vmatpush1.msra.mxu0 0.0
  %210 = vmatprep.subr.mxu0 0.0
  %211 = vmatpush1.msra.mxu0 0.0
  %212 = vmatprep.subr.mxu0 0.0
  %213 = vmatpush1.msra.mxu0 0.0
  %214 = vmatprep.subr.mxu0 0.0
  %215 = vmatpush1.msra.mxu0 0.0
  %216 = vmatprep.subr.mxu0 0.0
  %217 = vmatpush1.msra.mxu0 0.0
  %218 = vmatprep.subr.mxu0 0.0
  %219 = vmatpush1.msra.mxu0 0.0
  %220 = vmatprep.subr.mxu0 0.0
  %221 = vmatpush1.msra.mxu0 0.0
  %222 = vmatprep.subr.mxu0 0.0
  %223 = vmatpush1.msra.mxu0 0.0
  %224 = vmatprep.subr.mxu0 0.0
  %225 = vmatpush1.msra.mxu0 0.0
  %226 = vmatprep.subr.mxu0 0.0
  %227 = vmatpush1.msra.mxu0 0.0
  %228 = vmatprep.subr.mxu0 0.0
  %229 = vmatpush1.msra.mxu0 0.0
  %230 = vmatprep.subr.mxu0 0.0
  %231 = vmatpush1.msra.mxu0 0.0
  %232 = vmatprep.subr.mxu0 0.0
  %233 = vmatpush1.msra.mxu0 0.0
  %234 = vmatprep.subr.mxu0 0.0
  %235 = vmatpush1.msra.mxu0 0.0
  %236 = vmatprep.subr.mxu0 0.0
  %237 = vmatpush1.msra.mxu0 0.0
  %238 = vmatprep.subr.mxu0 0.0
  %239 = vmatpush1.msra.mxu0 0.0
  %240 = vmatprep.subr.mxu0 0.0
  %241 = vmatpush1.msra.mxu0 0.0
  %242 = vmatprep.subr.mxu0 0.0
  %243 = vmatpush1.msra.mxu0 0.0
  %244 = vmatprep.subr.mxu0 0.0
  %245 = vmatpush1.msra.mxu0 0.0
  %246 = vmatprep.subr.mxu0 0.0
  %247 = vmatpush1.msra.mxu0 0.0
  %248 = vmatprep.subr.mxu0 0.0
  %249 = vmatpush1.msra.mxu0 0.0
  %250 = vmatprep.mubr.f32.mxu0 0.0
  %251 = vmatmul.mubr.f32.gmra.mrb[0].mxu0 %v181
  %v252 = vpop.f32.mrb[0].mxu0
  %v253 = vadd.f32 %v172, %v252
  %v254 = vpop.f32.mrb[0].mxu0
  %v255 = vadd.f32 %v176, %v254
  %256 = vmatprep.mubr.f32.mxu0 0.0
  %257 = vmatmul.mubr.f32.gmra.mrb[0].mxu0 %v184
  %v258 = vpop.f32.mrb[0].mxu0
  %v259 = vadd.f32 %v172, %v258
  %v260 = vpop.f32.mrb[0].mxu0
  %v261 = vadd.f32 %v176, %v260
  %262 = vdwg.mxu0
  %264 = vrot.lane.b32.xlu0 %v253, 64
  %v265 = vpop.permute.xlu0 %264
  %v266 = vsel %vm69, %v253, 0
  %v268 = vsel %vm69, %v265, 0
  %270 = vmatprep.subr.mxu0 0.0
  %271 = vmatpush1.xpose.msra.mxu0 %v268
  %272 = vmatprep.subr.mxu0 0.0
  %273 = vmatpush1.xpose.msra.mxu0 0.0
  %274 = vmatprep.subr.mxu0 0.0
  %275 = vmatpush1.xpose.msra.mxu0 0.0
  %276 = vmatprep.subr.mxu0 0.0
  %277 = vmatpush1.xpose.msra.mxu0 0.0
  %278 = vmatprep.subr.mxu0 0.0
  %279 = vmatpush1.xpose.msra.mxu0 0.0
  %280 = vmatprep.subr.mxu0 0.0
  %281 = vmatpush1.xpose.msra.mxu0 0.0
  %282 = vmatprep.subr.mxu0 0.0
  %283 = vmatpush1.xpose.msra.mxu0 0.0
  %284 = vmatprep.subr.mxu0 0.0
  %285 = vmatpush1.xpose.msra.mxu0 0.0
  %286 = vmatprep.subr.mxu0 0.0
  %287 = vmatpush1.xpose.msra.mxu0 0.0
  %288 = vmatprep.subr.mxu0 0.0
  %289 = vmatpush1.xpose.msra.mxu0 0.0
  %290 = vmatprep.subr.mxu0 0.0
  %291 = vmatpush1.xpose.msra.mxu0 0.0
  %292 = vmatprep.subr.mxu0 0.0
  %293 = vmatpush1.xpose.msra.mxu0 0.0
  %294 = vmatprep.subr.mxu0 0.0
  %295 = vmatpush1.xpose.msra.mxu0 0.0
  %296 = vmatprep.subr.mxu0 0.0
  %297 = vmatpush1.xpose.msra.mxu0 0.0
  %298 = vmatprep.subr.mxu0 0.0
  %299 = vmatpush1.xpose.msra.mxu0 0.0
  %300 = vmatprep.subr.mxu0 0.0
  %301 = vmatpush1.xpose.msra.mxu0 0.0
  %302 = vmatprep.subr.mxu0 0.0
  %303 = vmatpush1.xpose.msra.mxu0 0.0
  %304 = vmatprep.subr.mxu0 0.0
  %305 = vmatpush1.xpose.msra.mxu0 0.0
  %306 = vmatprep.subr.mxu0 0.0
  %307 = vmatpush1.xpose.msra.mxu0 0.0
  %308 = vmatprep.subr.mxu0 0.0
  %309 = vmatpush1.xpose.msra.mxu0 0.0
  %310 = vmatprep.subr.mxu0 0.0
  %311 = vmatpush1.xpose.msra.mxu0 0.0
  %312 = vmatprep.subr.mxu0 0.0
  %313 = vmatpush1.xpose.msra.mxu0 0.0
  %314 = vmatprep.subr.mxu0 0.0
  %315 = vmatpush1.xpose.msra.mxu0 0.0
  %316 = vmatprep.subr.mxu0 0.0
  %317 = vmatpush1.xpose.msra.mxu0 0.0
  %318 = vmatprep.subr.mxu0 0.0
  %319 = vmatpush1.xpose.msra.mxu0 0.0
  %320 = vmatprep.subr.mxu0 0.0
  %321 = vmatpush1.xpose.msra.mxu0 0.0
  %322 = vmatprep.subr.mxu0 0.0
  %323 = vmatpush1.xpose.msra.mxu0 0.0
  %324 = vmatprep.subr.mxu0 0.0
  %325 = vmatpush1.xpose.msra.mxu0 0.0
  %326 = vmatprep.subr.mxu0 0.0
  %327 = vmatpush1.xpose.msra.mxu0 0.0
  %328 = vmatprep.subr.mxu0 0.0
  %329 = vmatpush1.xpose.msra.mxu0 0.0
  %330 = vmatprep.subr.mxu0 0.0
  %331 = vmatpush1.xpose.msra.mxu0 0.0
  %332 = vmatprep.subr.mxu0 0.0
  %333 = vmatpush1.xpose.msra.mxu0 0.0
  %334 = vmatprep.mubr.f32.mxu0 0.0
  %335 = vmatmul.mubr.f32.gmra.mrb[0].mxu0 %v266
  %v336 = vpop.f32.mrb[0].mxu0
  %v337 = vadd.f32 0.0, %v336
  %v338 = vpop.f32.mrb[0].mxu0
  %339 = vdwg.mxu0
  %341 = vrot.lane.b32.xlu0 %v259, 64
  %v342 = vpop.permute.xlu0 %341
  %v343 = vsel %vm69, %v259, 0
  %v345 = vsel %vm69, %v342, 0
  %347 = vmatprep.subr.mxu0 0.0
  %348 = vmatpush1.xpose.msra.mxu0 %v345
  %349 = vmatprep.subr.mxu0 0.0
  %350 = vmatpush1.xpose.msra.mxu0 0.0
  %351 = vmatprep.subr.mxu0 0.0
  %352 = vmatpush1.xpose.msra.mxu0 0.0
  %353 = vmatprep.subr.mxu0 0.0
  %354 = vmatpush1.xpose.msra.mxu0 0.0
  %355 = vmatprep.subr.mxu0 0.0
  %356 = vmatpush1.xpose.msra.mxu0 0.0
  %357 = vmatprep.subr.mxu0 0.0
  %358 = vmatpush1.xpose.msra.mxu0 0.0
  %359 = vmatprep.subr.mxu0 0.0
  %360 = vmatpush1.xpose.msra.mxu0 0.0
  %361 = vmatprep.subr.mxu0 0.0
  %362 = vmatpush1.xpose.msra.mxu0 0.0
  %363 = vmatprep.subr.mxu0 0.0
  %364 = vmatpush1.xpose.msra.mxu0 0.0
  %365 = vmatprep.subr.mxu0 0.0
  %366 = vmatpush1.xpose.msra.mxu0 0.0
  %367 = vmatprep.subr.mxu0 0.0
  %368 = vmatpush1.xpose.msra.mxu0 0.0
  %369 = vmatprep.subr.mxu0 0.0
  %370 = vmatpush1.xpose.msra.mxu0 0.0
  %371 = vmatprep.subr.mxu0 0.0
  %372 = vmatpush1.xpose.msra.mxu0 0.0
  %373 = vmatprep.subr.mxu0 0.0
  %374 = vmatpush1.xpose.msra.mxu0 0.0
  %375 = vmatprep.subr.mxu0 0.0
  %376 = vmatpush1.xpose.msra.mxu0 0.0
  %377 = vmatprep.subr.mxu0 0.0
  %378 = vmatpush1.xpose.msra.mxu0 0.0
  %379 = vmatprep.subr.mxu0 0.0
  %380 = vmatpush1.xpose.msra.mxu0 0.0
  %381 = vmatprep.subr.mxu0 0.0
  %382 = vmatpush1.xpose.msra.mxu0 0.0
  %383 = vmatprep.subr.mxu0 0.0
  %384 = vmatpush1.xpose.msra.mxu0 0.0
  %385 = vmatprep.subr.mxu0 0.0
  %386 = vmatpush1.xpose.msra.mxu0 0.0
  %387 = vmatprep.subr.mxu0 0.0
  %388 = vmatpush1.xpose.msra.mxu0 0.0
  %389 = vmatprep.subr.mxu0 0.0
  %390 = vmatpush1.xpose.msra.mxu0 0.0
  %391 = vmatprep.subr.mxu0 0.0
  %392 = vmatpush1.xpose.msra.mxu0 0.0
  %393 = vmatprep.subr.mxu0 0.0
  %394 = vmatpush1.xpose.msra.mxu0 0.0
  %395 = vmatprep.subr.mxu0 0.0
  %396 = vmatpush1.xpose.msra.mxu0 0.0
  %397 = vmatprep.subr.mxu0 0.0
  %398 = vmatpush1.xpose.msra.mxu0 0.0
  %399 = vmatprep.subr.mxu0 0.0
  %400 = vmatpush1.xpose.msra.mxu0 0.0
  %401 = vmatprep.subr.mxu0 0.0
  %402 = vmatpush1.xpose.msra.mxu0 0.0
  %403 = vmatprep.subr.mxu0 0.0
  %404 = vmatpush1.xpose.msra.mxu0 0.0
  %405 = vmatprep.subr.mxu0 0.0
  %406 = vmatpush1.xpose.msra.mxu0 0.0
  %407 = vmatprep.subr.mxu0 0.0
  %408 = vmatpush1.xpose.msra.mxu0 0.0
  %409 = vmatprep.subr.mxu0 0.0
  %410 = vmatpush1.xpose.msra.mxu0 0.0
  %411 = vmatprep.mubr.f32.mxu0 0.0
  %412 = vmatmul.mubr.f32.gmra.mrb[0].mxu0 %v343
  %v413 = vpop.f32.mrb[0].mxu0
  %v414 = vadd.f32 0.0, %v413
  %v415 = vpop.f32.mrb[0].mxu0
  %416 = vdwg.mxu0
  %vm417 = vcmask 64512
  %v418 = vsel %vm417, %v337, -inf
  %419 = vmax.xlane.f32.xlu0 %v418
  %v420 = vpop.xlane.xlu0 %419
  %v421 = vsel %vm417, %v414, -inf
  %422 = vmax.xlane.f32.xlu0 %v421
  %v423 = vpop.xlane.xlu0 %422
  %v424 = vsub.f32 %v337, %v420
  %v425 = vsub.f32 %v414, %v423
  %v426 = vmul.f32 %v424, 1.442695
  %v427 = vpow.pop %v426
  %v428 = vmul.f32 %v425, 1.442695
  %v429 = vpow.pop %v428
  %v430 = vsel %vm417, %v427, 0.0
  %431 = vadd.xlane.f32.xlu0 %v430
  %v432 = vpop.xlane.xlu0 %431
  %v433 = vsel %vm417, %v429, 0.0
  %434 = vadd.xlane.f32.xlu0 %v433
  %v435 = vpop.xlane.xlu0 %434
  %v436 = vrcp.pop %v432
  %v437 = vmul.f32 %v427, %v436
  %v438 = vrcp.pop %v435
  %v439 = vmul.f32 %v429, %v438
  %v441 = vsel %vm417, %v437, 0
  %443 = vmatprep.subr.mxu0 0.0
  %444 = vmatpush1.msra.mxu0 %v255
  %445 = vmatprep.subr.mxu0 0.0
  %446 = vmatpush1.msra.mxu0 0.0
  %447 = vmatprep.subr.mxu0 0.0
  %448 = vmatpush1.msra.mxu0 0.0
  %449 = vmatprep.subr.mxu0 0.0
  %450 = vmatpush1.msra.mxu0 0.0
  %451 = vmatprep.subr.mxu0 0.0
  %452 = vmatpush1.msra.mxu0 0.0
  %453 = vmatprep.subr.mxu0 0.0
  %454 = vmatpush1.msra.mxu0 0.0
  %455 = vmatprep.subr.mxu0 0.0
  %456 = vmatpush1.msra.mxu0 0.0
  %457 = vmatprep.subr.mxu0 0.0
  %458 = vmatpush1.msra.mxu0 0.0
  %459 = vmatprep.subr.mxu0 0.0
  %460 = vmatpush1.msra.mxu0 0.0
  %461 = vmatprep.subr.mxu0 0.0
  %462 = vmatpush1.msra.mxu0 0.0
  %463 = vmatprep.subr.mxu0 0.0
  %464 = vmatpush1.msra.mxu0 0.0
  %465 = vmatprep.subr.mxu0 0.0
  %466 = vmatpush1.msra.mxu0 0.0
  %467 = vmatprep.subr.mxu0 0.0
  %468 = vmatpush1.msra.mxu0 0.0
  %469 = vmatprep.subr.mxu0 0.0
  %470 = vmatpush1.msra.mxu0 0.0
  %471 = vmatprep.subr.mxu0 0.0
  %472 = vmatpush1.msra.mxu0 0.0
  %473 = vmatprep.subr.mxu0 0.0
  %474 = vmatpush1.msra.mxu0 0.0
  %475 = vmatprep.subr.mxu0 0.0
  %476 = vmatpush1.msra.mxu0 0.0
  %477 = vmatprep.subr.mxu0 0.0
  %478 = vmatpush1.msra.mxu0 0.0
  %479 = vmatprep.subr.mxu0 0.0
  %480 = vmatpush1.msra.mxu0 0.0
  %481 = vmatprep.subr.mxu0 0.0
  %482 = vmatpush1.msra.mxu0 0.0
  %483 = vmatprep.subr.mxu0 0.0
  %484 = vmatpush1.msra.mxu0 0.0
  %485 = vmatprep.subr.mxu0 0.0
  %486 = vmatpush1.msra.mxu0 0.0
  %487 = vmatprep.subr.mxu0 0.0
  %488 = vmatpush1.msra.mxu0 0.0
  %489 = vmatprep.subr.mxu0 0.0
  %490 = vmatpush1.msra.mxu0 0.0
  %491 = vmatprep.subr.mxu0 0.0
  %492 = vmatpush1.msra.mxu0 0.0
  %493 = vmatprep.subr.mxu0 0.0
  %494 = vmatpush1.msra.mxu0 0.0
  %495 = vmatprep.subr.mxu0 0.0
  %496 = vmatpush1.msra.mxu0 0.0
  %497 = vmatprep.subr.mxu0 0.0
  %498 = vmatpush1.msra.mxu0 0.0
  %499 = vmatprep.subr.mxu0 0.0
  %500 = vmatpush1.msra.mxu0 0.0
  %501 = vmatprep.subr.mxu0 0.0
  %502 = vmatpush1.msra.mxu0 0.0
  %503 = vmatprep.subr.mxu0 0.0
  %504 = vmatpush1.msra.mxu0 0.0
  %505 = vmatprep.subr.mxu0 0.0
  %506 = vmatpush1.msra.mxu0 0.0
  %507 = vmatprep.mubr.f32.mxu0 0.0
  %508 = vmatmul.mubr.f32.gmra.mrb[0].mxu0 %v441
  %v509 = vpop.f32.mrb[0].mxu0
  %v510 = vadd.f32 0.0, %v509
  %v511 = vpop.f32.mrb[0].mxu0
  %512 = vdwg.mxu0
  %v514 = vsel %vm417, %v439, 0
  %516 = vmatprep.subr.mxu0 0.0
  %517 = vmatpush1.msra.mxu0 %v261
  %518 = vmatprep.subr.mxu0 0.0
  %519 = vmatpush1.msra.mxu0 0.0
  %520 = vmatprep.subr.mxu0 0.0
  %521 = vmatpush1.msra.mxu0 0.0
  %522 = vmatprep.subr.mxu0 0.0
  %523 = vmatpush1.msra.mxu0 0.0
  %524 = vmatprep.subr.mxu0 0.0
  %525 = vmatpush1.msra.mxu0 0.0
  %526 = vmatprep.subr.mxu0 0.0
  %527 = vmatpush1.msra.mxu0 0.0
  %528 = vmatprep.subr.mxu0 0.0
  %529 = vmatpush1.msra.mxu0 0.0
  %530 = vmatprep.subr.mxu0 0.0
  %531 = vmatpush1.msra.mxu0 0.0
  %532 = vmatprep.subr.mxu0 0.0
  %533 = vmatpush1.msra.mxu0 0.0
  %534 = vmatprep.subr.mxu0 0.0
  %535 = vmatpush1.msra.mxu0 0.0
  %536 = vmatprep.subr.mxu0 0.0
  %537 = vmatpush1.msra.mxu0 0.0
  %538 = vmatprep.subr.mxu0 0.0
  %539 = vmatpush1.msra.mxu0 0.0
  %540 = vmatprep.subr.mxu0 0.0
  %541 = vmatpush1.msra.mxu0 0.0
  %542 = vmatprep.subr.mxu0 0.0
  %543 = vmatpush1.msra.mxu0 0.0
  %544 = vmatprep.subr.mxu0 0.0
  %545 = vmatpush1.msra.mxu0 0.0
  %546 = vmatprep.subr.mxu0 0.0
  %547 = vmatpush1.msra.mxu0 0.0
  %548 = vmatprep.subr.mxu0 0.0
  %549 = vmatpush1.msra.mxu0 0.0
  %550 = vmatprep.subr.mxu0 0.0
  %551 = vmatpush1.msra.mxu0 0.0
  %552 = vmatprep.subr.mxu0 0.0
  %553 = vmatpush1.msra.mxu0 0.0
  %554 = vmatprep.subr.mxu0 0.0
  %555 = vmatpush1.msra.mxu0 0.0
  %556 = vmatprep.subr.mxu0 0.0
  %557 = vmatpush1.msra.mxu0 0.0
  %558 = vmatprep.subr.mxu0 0.0
  %559 = vmatpush1.msra.mxu0 0.0
  %560 = vmatprep.subr.mxu0 0.0
  %561 = vmatpush1.msra.mxu0 0.0
  %562 = vmatprep.subr.mxu0 0.0
  %563 = vmatpush1.msra.mxu0 0.0
  %564 = vmatprep.subr.mxu0 0.0
  %565 = vmatpush1.msra.mxu0 0.0
  %566 = vmatprep.subr.mxu0 0.0
  %567 = vmatpush1.msra.mxu0 0.0
  %568 = vmatprep.subr.mxu0 0.0
  %569 = vmatpush1.msra.mxu0 0.0
  %570 = vmatprep.subr.mxu0 0.0
  %571 = vmatpush1.msra.mxu0 0.0
  %572 = vmatprep.subr.mxu0 0.0
  %573 = vmatpush1.msra.mxu0 0.0
  %574 = vmatprep.subr.mxu0 0.0
  %575 = vmatpush1.msra.mxu0 0.0
  %576 = vmatprep.subr.mxu0 0.0
  %577 = vmatpush1.msra.mxu0 0.0
  %578 = vmatprep.subr.mxu0 0.0
  %579 = vmatpush1.msra.mxu0 0.0
  %580 = vmatprep.mubr.f32.mxu0 0.0
  %581 = vmatmul.mubr.f32.gmra.mrb[0].mxu0 %v514
  %v582 = vpop.f32.mrb[0].mxu0
  %v583 = vadd.f32 0.0, %v582
  %v584 = vpop.f32.mrb[0].mxu0
  %585 = vdwg.mxu0
  %586 = vrot.lane.b32.xlu0 %v253, 112
  %v587 = vpop.permute.xlu0 %586
  %588 = vrot.lane.b32.xlu0 %v253, 48
  %v589 = vpop.permute.xlu0 %588
  %v590 = vsel %vm69, %v587, 0
  %v592 = vsel %vm69, %v589, 0
  %594 = vmatprep.subr.mxu0 0.0
  %595 = vmatpush1.xpose.msra.mxu0 %v592
  %596 = vmatprep.subr.mxu0 0.0
  %597 = vmatpush1.xpose.msra.mxu0 0.0
  %598 = vmatprep.subr.mxu0 0.0
  %599 = vmatpush1.xpose.msra.mxu0 0.0
  %600 = vmatprep.subr.mxu0 0.0
  %601 = vmatpush1.xpose.msra.mxu0 0.0
  %602 = vmatprep.subr.mxu0 0.0
  %603 = vmatpush1.xpose.msra.mxu0 0.0
  %604 = vmatprep.subr.mxu0 0.0
  %605 = vmatpush1.xpose.msra.mxu0 0.0
  %606 = vmatprep.subr.mxu0 0.0
  %607 = vmatpush1.xpose.msra.mxu0 0.0
  %608 = vmatprep.subr.mxu0 0.0
  %609 = vmatpush1.xpose.msra.mxu0 0.0
  %610 = vmatprep.subr.mxu0 0.0
  %611 = vmatpush1.xpose.msra.mxu0 0.0
  %612 = vmatprep.subr.mxu0 0.0
  %613 = vmatpush1.xpose.msra.mxu0 0.0
  %614 = vmatprep.subr.mxu0 0.0
  %615 = vmatpush1.xpose.msra.mxu0 0.0
  %616 = vmatprep.subr.mxu0 0.0
  %617 = vmatpush1.xpose.msra.mxu0 0.0
  %618 = vmatprep.subr.mxu0 0.0
  %619 = vmatpush1.xpose.msra.mxu0 0.0
  %620 = vmatprep.subr.mxu0 0.0
  %621 = vmatpush1.xpose.msra.mxu0 0.0
  %622 = vmatprep.subr.mxu0 0.0
  %623 = vmatpush1.xpose.msra.mxu0 0.0
  %624 = vmatprep.subr.mxu0 0.0
  %625 = vmatpush1.xpose.msra.mxu0 0.0
  %626 = vmatprep.subr.mxu0 0.0
  %627 = vmatpush1.xpose.msra.mxu0 0.0
  %628 = vmatprep.subr.mxu0 0.0
  %629 = vmatpush1.xpose.msra.mxu0 0.0
  %630 = vmatprep.subr.mxu0 0.0
  %631 = vmatpush1.xpose.msra.mxu0 0.0
  %632 = vmatprep.subr.mxu0 0.0
  %633 = vmatpush1.xpose.msra.mxu0 0.0
  %634 = vmatprep.subr.mxu0 0.0
  %635 = vmatpush1.xpose.msra.mxu0 0.0
  %636 = vmatprep.subr.mxu0 0.0
  %637 = vmatpush1.xpose.msra.mxu0 0.0
  %638 = vmatprep.subr.mxu0 0.0
  %639 = vmatpush1.xpose.msra.mxu0 0.0
  %640 = vmatprep.subr.mxu0 0.0
  %641 = vmatpush1.xpose.msra.mxu0 0.0
  %642 = vmatprep.subr.mxu0 0.0
  %643 = vmatpush1.xpose.msra.mxu0 0.0
  %644 = vmatprep.subr.mxu0 0.0
  %645 = vmatpush1.xpose.msra.mxu0 0.0
  %646 = vmatprep.subr.mxu0 0.0
  %647 = vmatpush1.xpose.msra.mxu0 0.0
  %648 = vmatprep.subr.mxu0 0.0
  %649 = vmatpush1.xpose.msra.mxu0 0.0
  %650 = vmatprep.subr.mxu0 0.0
  %651 = vmatpush1.xpose.msra.mxu0 0.0
  %652 = vmatprep.subr.mxu0 0.0
  %653 = vmatpush1.xpose.msra.mxu0 0.0
  %654 = vmatprep.subr.mxu0 0.0
  %655 = vmatpush1.xpose.msra.mxu0 0.0
  %656 = vmatprep.subr.mxu0 0.0
  %657 = vmatpush1.xpose.msra.mxu0 0.0
  %658 = vmatprep.mubr.f32.mxu0 0.0
  %659 = vmatmul.mubr.f32.gmra.mrb[0].mxu0 %v590
  %v660 = vpop.f32.mrb[0].mxu0
  %v661 = vadd.f32 0.0, %v660
  %v662 = vpop.f32.mrb[0].mxu0
  %663 = vdwg.mxu0
  %664 = vrot.lane.b32.xlu0 %v259, 112
  %v665 = vpop.permute.xlu0 %664
  %666 = vrot.lane.b32.xlu0 %v259, 48
  %v667 = vpop.permute.xlu0 %666
  %v668 = vsel %vm69, %v665, 0
  %v670 = vsel %vm69, %v667, 0
  %672 = vmatprep.subr.mxu0 0.0
  %673 = vmatpush1.xpose.msra.mxu0 %v670
  %674 = vmatprep.subr.mxu0 0.0
  %675 = vmatpush1.xpose.msra.mxu0 0.0
  %676 = vmatprep.subr.mxu0 0.0
  %677 = vmatpush1.xpose.msra.mxu0 0.0
  %678 = vmatprep.subr.mxu0 0.0
  %679 = vmatpush1.xpose.msra.mxu0 0.0
  %680 = vmatprep.subr.mxu0 0.0
  %681 = vmatpush1.xpose.msra.mxu0 0.0
  %682 = vmatprep.subr.mxu0 0.0
  %683 = vmatpush1.xpose.msra.mxu0 0.0
  %684 = vmatprep.subr.mxu0 0.0
  %685 = vmatpush1.xpose.msra.mxu0 0.0
  %686 = vmatprep.subr.mxu0 0.0
  %687 = vmatpush1.xpose.msra.mxu0 0.0
  %688 = vmatprep.subr.mxu0 0.0
  %689 = vmatpush1.xpose.msra.mxu0 0.0
  %690 = vmatprep.subr.mxu0 0.0
  %691 = vmatpush1.xpose.msra.mxu0 0.0
  %692 = vmatprep.subr.mxu0 0.0
  %693 = vmatpush1.xpose.msra.mxu0 0.0
  %694 = vmatprep.subr.mxu0 0.0
  %695 = vmatpush1.xpose.msra.mxu0 0.0
  %696 = vmatprep.subr.mxu0 0.0
  %697 = vmatpush1.xpose.msra.mxu0 0.0
  %698 = vmatprep.subr.mxu0 0.0
  %699 = vmatpush1.xpose.msra.mxu0 0.0
  %700 = vmatprep.subr.mxu0 0.0
  %701 = vmatpush1.xpose.msra.mxu0 0.0
  %702 = vmatprep.subr.mxu0 0.0
  %703 = vmatpush1.xpose.msra.mxu0 0.0
  %704 = vmatprep.subr.mxu0 0.0
  %705 = vmatpush1.xpose.msra.mxu0 0.0
  %706 = vmatprep.subr.mxu0 0.0
  %707 = vmatpush1.xpose.msra.mxu0 0.0
  %708 = vmatprep.subr.mxu0 0.0
  %709 = vmatpush1.xpose.msra.mxu0 0.0
  %710 = vmatprep.subr.mxu0 0.0
  %711 = vmatpush1.xpose.msra.mxu0 0.0
  %712 = vmatprep.subr.mxu0 0.0
  %713 = vmatpush1.xpose.msra.mxu0 0.0
  %714 = vmatprep.subr.mxu0 0.0
  %715 = vmatpush1.xpose.msra.mxu0 0.0
  %716 = vmatprep.subr.mxu0 0.0
  %717 = vmatpush1.xpose.msra.mxu0 0.0
  %718 = vmatprep.subr.mxu0 0.0
  %719 = vmatpush1.xpose.msra.mxu0 0.0
  %720 = vmatprep.subr.mxu0 0.0
  %721 = vmatpush1.xpose.msra.mxu0 0.0
  %722 = vmatprep.subr.mxu0 0.0
  %723 = vmatpush1.xpose.msra.mxu0 0.0
  %724 = vmatprep.subr.mxu0 0.0
  %725 = vmatpush1.xpose.msra.mxu0 0.0
  %726 = vmatprep.subr.mxu0 0.0
  %727 = vmatpush1.xpose.msra.mxu0 0.0
  %728 = vmatprep.subr.mxu0 0.0
  %729 = vmatpush1.xpose.msra.mxu0 0.0
  %730 = vmatprep.subr.mxu0 0.0
  %731 = vmatpush1.xpose.msra.mxu0 0.0
  %732 = vmatprep.subr.mxu0 0.0
  %733 = vmatpush1.xpose.msra.mxu0 0.0
  %734 = vmatprep.subr.mxu0 0.0
  %735 = vmatpush1.xpose.msra.mxu0 0.0
  %736 = vmatprep.mubr.f32.mxu0 0.0
  %737 = vmatmul.mubr.f32.gmra.mrb[0].mxu0 %v668
  %v738 = vpop.f32.mrb[0].mxu0
  %v739 = vadd.f32 0.0, %v738
  %v740 = vpop.f32.mrb[0].mxu0
  %741 = vdwg.mxu0
  %v742 = vsel %vm417, %v661, -inf
  %743 = vmax.xlane.f32.xlu0 %v742
  %v744 = vpop.xlane.xlu0 %743
  %v745 = vsel %vm417, %v739, -inf
  %746 = vmax.xlane.f32.xlu0 %v745
  %v747 = vpop.xlane.xlu0 %746
  %v748 = vsub.f32 %v661, %v744
  %v749 = vsub.f32 %v739, %v747
  %v750 = vmul.f32 %v748, 1.442695
  %v751 = vpow.pop %v750
  %v752 = vmul.f32 %v749, 1.442695
  %v753 = vpow.pop %v752
  %v754 = vsel %vm417, %v751, 0.0
  %755 = vadd.xlane.f32.xlu0 %v754
  %v756 = vpop.xlane.xlu0 %755
  %v757 = vsel %vm417, %v753, 0.0
  %758 = vadd.xlane.f32.xlu0 %v757
  %v759 = vpop.xlane.xlu0 %758
  %v760 = vrcp.pop %v756
  %v761 = vmul.f32 %v751, %v760
  %v762 = vrcp.pop %v759
  %v763 = vmul.f32 %v753, %v762
  %765 = vrot.lane.b32.xlu0 %v255, 112
  %v766 = vpop.permute.xlu0 %765
  %v769 = vsel %vm417, %v761, 0
  %771 = vmatprep.subr.mxu0 0.0
  %772 = vmatpush1.msra.mxu0 %v766
  %773 = vmatprep.subr.mxu0 0.0
  %774 = vmatpush1.msra.mxu0 0.0
  %775 = vmatprep.subr.mxu0 0.0
  %776 = vmatpush1.msra.mxu0 0.0
  %777 = vmatprep.subr.mxu0 0.0
  %778 = vmatpush1.msra.mxu0 0.0
  %779 = vmatprep.subr.mxu0 0.0
  %780 = vmatpush1.msra.mxu0 0.0
  %781 = vmatprep.subr.mxu0 0.0
  %782 = vmatpush1.msra.mxu0 0.0
  %783 = vmatprep.subr.mxu0 0.0
  %784 = vmatpush1.msra.mxu0 0.0
  %785 = vmatprep.subr.mxu0 0.0
  %786 = vmatpush1.msra.mxu0 0.0
  %787 = vmatprep.subr.mxu0 0.0
  %788 = vmatpush1.msra.mxu0 0.0
  %789 = vmatprep.subr.mxu0 0.0
  %790 = vmatpush1.msra.mxu0 0.0
  %791 = vmatprep.subr.mxu0 0.0
  %792 = vmatpush1.msra.mxu0 0.0
  %793 = vmatprep.subr.mxu0 0.0
  %794 = vmatpush1.msra.mxu0 0.0
  %795 = vmatprep.subr.mxu0 0.0
  %796 = vmatpush1.msra.mxu0 0.0
  %797 = vmatprep.subr.mxu0 0.0
  %798 = vmatpush1.msra.mxu0 0.0
  %799 = vmatprep.subr.mxu0 0.0
  %800 = vmatpush1.msra.mxu0 0.0
  %801 = vmatprep.subr.mxu0 0.0
  %802 = vmatpush1.msra.mxu0 0.0
  %803 = vmatprep.subr.mxu0 0.0
  %804 = vmatpush1.msra.mxu0 0.0
  %805 = vmatprep.subr.mxu0 0.0
  %806 = vmatpush1.msra.mxu0 0.0
  %807 = vmatprep.subr.mxu0 0.0
  %808 = vmatpush1.msra.mxu0 0.0
  %809 = vmatprep.subr.mxu0 0.0
  %810 = vmatpush1.msra.mxu0 0.0
  %811 = vmatprep.subr.mxu0 0.0
  %812 = vmatpush1.msra.mxu0 0.0
  %813 = vmatprep.subr.mxu0 0.0
  %814 = vmatpush1.msra.mxu0 0.0
  %815 = vmatprep.subr.mxu0 0.0
  %816 = vmatpush1.msra.mxu0 0.0
  %817 = vmatprep.subr.mxu0 0.0
  %818 = vmatpush1.msra.mxu0 0.0
  %819 = vmatprep.subr.mxu0 0.0
  %820 = vmatpush1.msra.mxu0 0.0
  %821 = vmatprep.subr.mxu0 0.0
  %822 = vmatpush1.msra.mxu0 0.0
  %823 = vmatprep.subr.mxu0 0.0
  %824 = vmatpush1.msra.mxu0 0.0
  %825 = vmatprep.subr.mxu0 0.0
  %826 = vmatpush1.msra.mxu0 0.0
  %827 = vmatprep.subr.mxu0 0.0
  %828 = vmatpush1.msra.mxu0 0.0
  %829 = vmatprep.subr.mxu0 0.0
  %830 = vmatpush1.msra.mxu0 0.0
  %831 = vmatprep.subr.mxu0 0.0
  %832 = vmatpush1.msra.mxu0 0.0
  %833 = vmatprep.subr.mxu0 0.0
  %834 = vmatpush1.msra.mxu0 0.0
  %835 = vmatprep.mubr.f32.mxu0 0.0
  %836 = vmatmul.mubr.f32.gmra.mrb[0].mxu0 %v769
  %v837 = vpop.f32.mrb[0].mxu0
  %v838 = vadd.f32 0.0, %v837
  %v839 = vpop.f32.mrb[0].mxu0
  %840 = vdwg.mxu0
  %842 = vrot.lane.b32.xlu0 %v261, 112
  %v843 = vpop.permute.xlu0 %842
  %v846 = vsel %vm417, %v763, 0
  %848 = vmatprep.subr.mxu0 0.0
  %849 = vmatpush1.msra.mxu0 %v843
  %850 = vmatprep.subr.mxu0 0.0
  %851 = vmatpush1.msra.mxu0 0.0
  %852 = vmatprep.subr.mxu0 0.0
  %853 = vmatpush1.msra.mxu0 0.0
  %854 = vmatprep.subr.mxu0 0.0
  %855 = vmatpush1.msra.mxu0 0.0
  %856 = vmatprep.subr.mxu0 0.0
  %857 = vmatpush1.msra.mxu0 0.0
  %858 = vmatprep.subr.mxu0 0.0
  %859 = vmatpush1.msra.mxu0 0.0
  %860 = vmatprep.subr.mxu0 0.0
  %861 = vmatpush1.msra.mxu0 0.0
  %862 = vmatprep.subr.mxu0 0.0
  %863 = vmatpush1.msra.mxu0 0.0
  %864 = vmatprep.subr.mxu0 0.0
  %865 = vmatpush1.msra.mxu0 0.0
  %866 = vmatprep.subr.mxu0 0.0
  %867 = vmatpush1.msra.mxu0 0.0
  %868 = vmatprep.subr.mxu0 0.0
  %869 = vmatpush1.msra.mxu0 0.0
  %870 = vmatprep.subr.mxu0 0.0
  %871 = vmatpush1.msra.mxu0 0.0
  %872 = vmatprep.subr.mxu0 0.0
  %873 = vmatpush1.msra.mxu0 0.0
  %874 = vmatprep.subr.mxu0 0.0
  %875 = vmatpush1.msra.mxu0 0.0
  %876 = vmatprep.subr.mxu0 0.0
  %877 = vmatpush1.msra.mxu0 0.0
  %878 = vmatprep.subr.mxu0 0.0
  %879 = vmatpush1.msra.mxu0 0.0
  %880 = vmatprep.subr.mxu0 0.0
  %881 = vmatpush1.msra.mxu0 0.0
  %882 = vmatprep.subr.mxu0 0.0
  %883 = vmatpush1.msra.mxu0 0.0
  %884 = vmatprep.subr.mxu0 0.0
  %885 = vmatpush1.msra.mxu0 0.0
  %886 = vmatprep.subr.mxu0 0.0
  %887 = vmatpush1.msra.mxu0 0.0
  %888 = vmatprep.subr.mxu0 0.0
  %889 = vmatpush1.msra.mxu0 0.0
  %890 = vmatprep.subr.mxu0 0.0
  %891 = vmatpush1.msra.mxu0 0.0
  %892 = vmatprep.subr.mxu0 0.0
  %893 = vmatpush1.msra.mxu0 0.0
  %894 = vmatprep.subr.mxu0 0.0
  %895 = vmatpush1.msra.mxu0 0.0
  %896 = vmatprep.subr.mxu0 0.0
  %897 = vmatpush1.msra.mxu0 0.0
  %898 = vmatprep.subr.mxu0 0.0
  %899 = vmatpush1.msra.mxu0 0.0
  %900 = vmatprep.subr.mxu0 0.0
  %901 = vmatpush1.msra.mxu0 0.0
  %902 = vmatprep.subr.mxu0 0.0
  %903 = vmatpush1.msra.mxu0 0.0
  %904 = vmatprep.subr.mxu0 0.0
  %905 = vmatpush1.msra.mxu0 0.0
  %906 = vmatprep.subr.mxu0 0.0
  %907 = vmatpush1.msra.mxu0 0.0
  %908 = vmatprep.subr.mxu0 0.0
  %909 = vmatpush1.msra.mxu0 0.0
  %910 = vmatprep.subr.mxu0 0.0
  %911 = vmatpush1.msra.mxu0 0.0
  %912 = vmatprep.mubr.f32.mxu0 0.0
  %913 = vmatmul.mubr.f32.gmra.mrb[0].mxu0 %v846
  %v914 = vpop.f32.mrb[0].mxu0
  %v915 = vadd.f32 0.0, %v914
  %v916 = vpop.f32.mrb[0].mxu0
  %917 = vdwg.mxu0
  %918 = vrot.lane.b32.xlu0 %v253, 96
  %v919 = vpop.permute.xlu0 %918
  %920 = vrot.lane.b32.xlu0 %v253, 32
  %v921 = vpop.permute.xlu0 %920
  %v922 = vsel %vm69, %v919, 0
  %v924 = vsel %vm69, %v921, 0
  %926 = vmatprep.subr.mxu0 0.0
  %927 = vmatpush1.xpose.msra.mxu0 %v924
  %928 = vmatprep.subr.mxu0 0.0
  %929 = vmatpush1.xpose.msra.mxu0 0.0
  %930 = vmatprep.subr.mxu0 0.0
  %931 = vmatpush1.xpose.msra.mxu0 0.0
  %932 = vmatprep.subr.mxu0 0.0
  %933 = vmatpush1.xpose.msra.mxu0 0.0
  %934 = vmatprep.subr.mxu0 0.0
  %935 = vmatpush1.xpose.msra.mxu0 0.0
  %936 = vmatprep.subr.mxu0 0.0
  %937 = vmatpush1.xpose.msra.mxu0 0.0
  %938 = vmatprep.subr.mxu0 0.0
  %939 = vmatpush1.xpose.msra.mxu0 0.0
  %940 = vmatprep.subr.mxu0 0.0
  %941 = vmatpush1.xpose.msra.mxu0 0.0
  %942 = vmatprep.subr.mxu0 0.0
  %943 = vmatpush1.xpose.msra.mxu0 0.0
  %944 = vmatprep.subr.mxu0 0.0
  %945 = vmatpush1.xpose.msra.mxu0 0.0
  %946 = vmatprep.subr.mxu0 0.0
  %947 = vmatpush1.xpose.msra.mxu0 0.0
  %948 = vmatprep.subr.mxu0 0.0
  %949 = vmatpush1.xpose.msra.mxu0 0.0
  %950 = vmatprep.subr.mxu0 0.0
  %951 = vmatpush1.xpose.msra.mxu0 0.0
  %952 = vmatprep.subr.mxu0 0.0
  %953 = vmatpush1.xpose.msra.mxu0 0.0
  %954 = vmatprep.subr.mxu0 0.0
  %955 = vmatpush1.xpose.msra.mxu0 0.0
  %956 = vmatprep.subr.mxu0 0.0
  %957 = vmatpush1.xpose.msra.mxu0 0.0
  %958 = vmatprep.subr.mxu0 0.0
  %959 = vmatpush1.xpose.msra.mxu0 0.0
  %960 = vmatprep.subr.mxu0 0.0
  %961 = vmatpush1.xpose.msra.mxu0 0.0
  %962 = vmatprep.subr.mxu0 0.0
  %963 = vmatpush1.xpose.msra.mxu0 0.0
  %964 = vmatprep.subr.mxu0 0.0
  %965 = vmatpush1.xpose.msra.mxu0 0.0
  %966 = vmatprep.subr.mxu0 0.0
  %967 = vmatpush1.xpose.msra.mxu0 0.0
  %968 = vmatprep.subr.mxu0 0.0
  %969 = vmatpush1.xpose.msra.mxu0 0.0
  %970 = vmatprep.subr.mxu0 0.0
  %971 = vmatpush1.xpose.msra.mxu0 0.0
  %972 = vmatprep.subr.mxu0 0.0
  %973 = vmatpush1.xpose.msra.mxu0 0.0
  %974 = vmatprep.subr.mxu0 0.0
  %975 = vmatpush1.xpose.msra.mxu0 0.0
  %976 = vmatprep.subr.mxu0 0.0
  %977 = vmatpush1.xpose.msra.mxu0 0.0
  %978 = vmatprep.subr.mxu0 0.0
  %979 = vmatpush1.xpose.msra.mxu0 0.0
  %980 = vmatprep.subr.mxu0 0.0
  %981 = vmatpush1.xpose.msra.mxu0 0.0
  %982 = vmatprep.subr.mxu0 0.0
  %983 = vmatpush1.xpose.msra.mxu0 0.0
  %984 = vmatprep.subr.mxu0 0.0
  %985 = vmatpush1.xpose.msra.mxu0 0.0
  %986 = vmatprep.subr.mxu0 0.0
  %987 = vmatpush1.xpose.msra.mxu0 0.0
  %988 = vmatprep.subr.mxu0 0.0
  %989 = vmatpush1.xpose.msra.mxu0 0.0
  %990 = vmatprep.mubr.f32.mxu0 0.0
  %991 = vmatmul.mubr.f32.gmra.mrb[0].mxu0 %v922
  %v992 = vpop.f32.mrb[0].mxu0
  %v993 = vadd.f32 0.0, %v992
  %v994 = vpop.f32.mrb[0].mxu0
  %995 = vdwg.mxu0
  %996 = vrot.lane.b32.xlu0 %v259, 96
  %v997 = vpop.permute.xlu0 %996
  %998 = vrot.lane.b32.xlu0 %v259, 32
  %v999 = vpop.permute.xlu0 %998
  %v1000 = vsel %vm69, %v997, 0
  %v1002 = vsel %vm69, %v999, 0
  %1004 = vmatprep.subr.mxu0 0.0
  %1005 = vmatpush1.xpose.msra.mxu0 %v1002
  %1006 = vmatprep.subr.mxu0 0.0
  %1007 = vmatpush1.xpose.msra.mxu0 0.0
  %1008 = vmatprep.subr.mxu0 0.0
  %1009 = vmatpush1.xpose.msra.mxu0 0.0
  %1010 = vmatprep.subr.mxu0 0.0
  %1011 = vmatpush1.xpose.msra.mxu0 0.0
  %1012 = vmatprep.subr.mxu0 0.0
  %1013 = vmatpush1.xpose.msra.mxu0 0.0
  %1014 = vmatprep.subr.mxu0 0.0
  %1015 = vmatpush1.xpose.msra.mxu0 0.0
  %1016 = vmatprep.subr.mxu0 0.0
  %1017 = vmatpush1.xpose.msra.mxu0 0.0
  %1018 = vmatprep.subr.mxu0 0.0
  %1019 = vmatpush1.xpose.msra.mxu0 0.0
  %1020 = vmatprep.subr.mxu0 0.0
  %1021 = vmatpush1.xpose.msra.mxu0 0.0
  %1022 = vmatprep.subr.mxu0 0.0
  %1023 = vmatpush1.xpose.msra.mxu0 0.0
  %1024 = vmatprep.subr.mxu0 0.0
  %1025 = vmatpush1.xpose.msra.mxu0 0.0
  %1026 = vmatprep.subr.mxu0 0.0
  %1027 = vmatpush1.xpose.msra.mxu0 0.0
  %1028 = vmatprep.subr.mxu0 0.0
  %1029 = vmatpush1.xpose.msra.mxu0 0.0
  %1030 = vmatprep.subr.mxu0 0.0
  %1031 = vmatpush1.xpose.msra.mxu0 0.0
  %1032 = vmatprep.subr.mxu0 0.0
  %1033 = vmatpush1.xpose.msra.mxu0 0.0
  %1034 = vmatprep.subr.mxu0 0.0
  %1035 = vmatpush1.xpose.msra.mxu0 0.0
  %1036 = vmatprep.subr.mxu0 0.0
  %1037 = vmatpush1.xpose.msra.mxu0 0.0
  %1038 = vmatprep.subr.mxu0 0.0
  %1039 = vmatpush1.xpose.msra.mxu0 0.0
  %1040 = vmatprep.subr.mxu0 0.0
  %1041 = vmatpush1.xpose.msra.mxu0 0.0
  %1042 = vmatprep.subr.mxu0 0.0
  %1043 = vmatpush1.xpose.msra.mxu0 0.0
  %1044 = vmatprep.subr.mxu0 0.0
  %1045 = vmatpush1.xpose.msra.mxu0 0.0
  %1046 = vmatprep.subr.mxu0 0.0
  %1047 = vmatpush1.xpose.msra.mxu0 0.0
  %1048 = vmatprep.subr.mxu0 0.0
  %1049 = vmatpush1.xpose.msra.mxu0 0.0
  %1050 = vmatprep.subr.mxu0 0.0
  %1051 = vmatpush1.xpose.msra.mxu0 0.0
  %1052 = vmatprep.subr.mxu0 0.0
  %1053 = vmatpush1.xpose.msra.mxu0 0.0
  %1054 = vmatprep.subr.mxu0 0.0
  %1055 = vmatpush1.xpose.msra.mxu0 0.0
  %1056 = vmatprep.subr.mxu0 0.0
  %1057 = vmatpush1.xpose.msra.mxu0 0.0
  %1058 = vmatprep.subr.mxu0 0.0
  %1059 = vmatpush1.xpose.msra.mxu0 0.0
  %1060 = vmatprep.subr.mxu0 0.0
  %1061 = vmatpush1.xpose.msra.mxu0 0.0
  %1062 = vmatprep.subr.mxu0 0.0
  %1063 = vmatpush1.xpose.msra.mxu0 0.0
  %1064 = vmatprep.subr.mxu0 0.0
  %1065 = vmatpush1.xpose.msra.mxu0 0.0
  %1066 = vmatprep.subr.mxu0 0.0
  %1067 = vmatpush1.xpose.msra.mxu0 0.0
  %1068 = vmatprep.mubr.f32.mxu0 0.0
  %1069 = vmatmul.mubr.f32.gmra.mrb[0].mxu0 %v1000
  %v1070 = vpop.f32.mrb[0].mxu0
  %v1071 = vadd.f32 0.0, %v1070
  %v1072 = vpop.f32.mrb[0].mxu0
  %1073 = vdwg.mxu0
  %v1074 = vsel %vm417, %v993, -inf
  %1075 = vmax.xlane.f32.xlu0 %v1074
  %v1076 = vpop.xlane.xlu0 %1075
  %v1077 = vsel %vm417, %v1071, -inf
  %1078 = vmax.xlane.f32.xlu0 %v1077
  %v1079 = vpop.xlane.xlu0 %1078
  %v1080 = vsub.f32 %v993, %v1076
  %v1081 = vsub.f32 %v1071, %v1079
  %v1082 = vmul.f32 %v1080, 1.442695
  %v1083 = vpow.pop %v1082
  %v1084 = vmul.f32 %v1081, 1.442695
  %v1085 = vpow.pop %v1084
  %v1086 = vsel %vm417, %v1083, 0.0
  %1087 = vadd.xlane.f32.xlu0 %v1086
  %v1088 = vpop.xlane.xlu0 %1087
  %v1089 = vsel %vm417, %v1085, 0.0
  %1090 = vadd.xlane.f32.xlu0 %v1089
  %v1091 = vpop.xlane.xlu0 %1090
  %v1092 = vrcp.pop %v1088
  %v1093 = vmul.f32 %v1083, %v1092
  %v1094 = vrcp.pop %v1091
  %v1095 = vmul.f32 %v1085, %v1094
  %1096 = vrot.lane.b32.xlu0 %v255, 96
  %v1097 = vpop.permute.xlu0 %1096
  %v1100 = vsel %vm417, %v1093, 0
  %1102 = vmatprep.subr.mxu0 0.0
  %1103 = vmatpush1.msra.mxu0 %v1097
  %1104 = vmatprep.subr.mxu0 0.0
  %1105 = vmatpush1.msra.mxu0 0.0
  %1106 = vmatprep.subr.mxu0 0.0
  %1107 = vmatpush1.msra.mxu0 0.0
  %1108 = vmatprep.subr.mxu0 0.0
  %1109 = vmatpush1.msra.mxu0 0.0
  %1110 = vmatprep.subr.mxu0 0.0
  %1111 = vmatpush1.msra.mxu0 0.0
  %1112 = vmatprep.subr.mxu0 0.0
  %1113 = vmatpush1.msra.mxu0 0.0
  %1114 = vmatprep.subr.mxu0 0.0
  %1115 = vmatpush1.msra.mxu0 0.0
  %1116 = vmatprep.subr.mxu0 0.0
  %1117 = vmatpush1.msra.mxu0 0.0
  %1118 = vmatprep.subr.mxu0 0.0
  %1119 = vmatpush1.msra.mxu0 0.0
  %1120 = vmatprep.subr.mxu0 0.0
  %1121 = vmatpush1.msra.mxu0 0.0
  %1122 = vmatprep.subr.mxu0 0.0
  %1123 = vmatpush1.msra.mxu0 0.0
  %1124 = vmatprep.subr.mxu0 0.0
  %1125 = vmatpush1.msra.mxu0 0.0
  %1126 = vmatprep.subr.mxu0 0.0
  %1127 = vmatpush1.msra.mxu0 0.0
  %1128 = vmatprep.subr.mxu0 0.0
  %1129 = vmatpush1.msra.mxu0 0.0
  %1130 = vmatprep.subr.mxu0 0.0
  %1131 = vmatpush1.msra.mxu0 0.0
  %1132 = vmatprep.subr.mxu0 0.0
  %1133 = vmatpush1.msra.mxu0 0.0
  %1134 = vmatprep.subr.mxu0 0.0
  %1135 = vmatpush1.msra.mxu0 0.0
  %1136 = vmatprep.subr.mxu0 0.0
  %1137 = vmatpush1.msra.mxu0 0.0
  %1138 = vmatprep.subr.mxu0 0.0
  %1139 = vmatpush1.msra.mxu0 0.0
  %1140 = vmatprep.subr.mxu0 0.0
  %1141 = vmatpush1.msra.mxu0 0.0
  %1142 = vmatprep.subr.mxu0 0.0
  %1143 = vmatpush1.msra.mxu0 0.0
  %1144 = vmatprep.subr.mxu0 0.0
  %1145 = vmatpush1.msra.mxu0 0.0
  %1146 = vmatprep.subr.mxu0 0.0
  %1147 = vmatpush1.msra.mxu0 0.0
  %1148 = vmatprep.subr.mxu0 0.0
  %1149 = vmatpush1.msra.mxu0 0.0
  %1150 = vmatprep.subr.mxu0 0.0
  %1151 = vmatpush1.msra.mxu0 0.0
  %1152 = vmatprep.subr.mxu0 0.0
  %1153 = vmatpush1.msra.mxu0 0.0
  %1154 = vmatprep.subr.mxu0 0.0
  %1155 = vmatpush1.msra.mxu0 0.0
  %1156 = vmatprep.subr.mxu0 0.0
  %1157 = vmatpush1.msra.mxu0 0.0
  %1158 = vmatprep.subr.mxu0 0.0
  %1159 = vmatpush1.msra.mxu0 0.0
  %1160 = vmatprep.subr.mxu0 0.0
  %1161 = vmatpush1.msra.mxu0 0.0
  %1162 = vmatprep.subr.mxu0 0.0
  %1163 = vmatpush1.msra.mxu0 0.0
  %1164 = vmatprep.subr.mxu0 0.0
  %1165 = vmatpush1.msra.mxu0 0.0
  %1166 = vmatprep.mubr.f32.mxu0 0.0
  %1167 = vmatmul.mubr.f32.gmra.mrb[0].mxu0 %v1100
  %v1168 = vpop.f32.mrb[0].mxu0
  %v1169 = vadd.f32 0.0, %v1168
  %v1170 = vpop.f32.mrb[0].mxu0
  %1171 = vdwg.mxu0
  %1172 = vrot.lane.b32.xlu0 %v261, 96
  %v1173 = vpop.permute.xlu0 %1172
  %v1176 = vsel %vm417, %v1095, 0
  %1178 = vmatprep.subr.mxu0 0.0
  %1179 = vmatpush1.msra.mxu0 %v1173
  %1180 = vmatprep.subr.mxu0 0.0
  %1181 = vmatpush1.msra.mxu0 0.0
  %1182 = vmatprep.subr.mxu0 0.0
  %1183 = vmatpush1.msra.mxu0 0.0
  %1184 = vmatprep.subr.mxu0 0.0
  %1185 = vmatpush1.msra.mxu0 0.0
  %1186 = vmatprep.subr.mxu0 0.0
  %1187 = vmatpush1.msra.mxu0 0.0
  %1188 = vmatprep.subr.mxu0 0.0
  %1189 = vmatpush1.msra.mxu0 0.0
  %1190 = vmatprep.subr.mxu0 0.0
  %1191 = vmatpush1.msra.mxu0 0.0
  %1192 = vmatprep.subr.mxu0 0.0
  %1193 = vmatpush1.msra.mxu0 0.0
  %1194 = vmatprep.subr.mxu0 0.0
  %1195 = vmatpush1.msra.mxu0 0.0
  %1196 = vmatprep.subr.mxu0 0.0
  %1197 = vmatpush1.msra.mxu0 0.0
  %1198 = vmatprep.subr.mxu0 0.0
  %1199 = vmatpush1.msra.mxu0 0.0
  %1200 = vmatprep.subr.mxu0 0.0
  %1201 = vmatpush1.msra.mxu0 0.0
  %1202 = vmatprep.subr.mxu0 0.0
  %1203 = vmatpush1.msra.mxu0 0.0
  %1204 = vmatprep.subr.mxu0 0.0
  %1205 = vmatpush1.msra.mxu0 0.0
  %1206 = vmatprep.subr.mxu0 0.0
  %1207 = vmatpush1.msra.mxu0 0.0
  %1208 = vmatprep.subr.mxu0 0.0
  %1209 = vmatpush1.msra.mxu0 0.0
  %1210 = vmatprep.subr.mxu0 0.0
  %1211 = vmatpush1.msra.mxu0 0.0
  %1212 = vmatprep.subr.mxu0 0.0
  %1213 = vmatpush1.msra.mxu0 0.0
  %1214 = vmatprep.subr.mxu0 0.0
  %1215 = vmatpush1.msra.mxu0 0.0
  %1216 = vmatprep.subr.mxu0 0.0
  %1217 = vmatpush1.msra.mxu0 0.0
  %1218 = vmatprep.subr.mxu0 0.0
  %1219 = vmatpush1.msra.mxu0 0.0
  %1220 = vmatprep.subr.mxu0 0.0
  %1221 = vmatpush1.msra.mxu0 0.0
  %1222 = vmatprep.subr.mxu0 0.0
  %1223 = vmatpush1.msra.mxu0 0.0
  %1224 = vmatprep.subr.mxu0 0.0
  %1225 = vmatpush1.msra.mxu0 0.0
  %1226 = vmatprep.subr.mxu0 0.0
  %1227 = vmatpush1.msra.mxu0 0.0
  %1228 = vmatprep.subr.mxu0 0.0
  %1229 = vmatpush1.msra.mxu0 0.0
  %1230 = vmatprep.subr.mxu0 0.0
  %1231 = vmatpush1.msra.mxu0 0.0
  %1232 = vmatprep.subr.mxu0 0.0
  %1233 = vmatpush1.msra.mxu0 0.0
  %1234 = vmatprep.subr.mxu0 0.0
  %1235 = vmatpush1.msra.mxu0 0.0
  %1236 = vmatprep.subr.mxu0 0.0
  %1237 = vmatpush1.msra.mxu0 0.0
  %1238 = vmatprep.subr.mxu0 0.0
  %1239 = vmatpush1.msra.mxu0 0.0
  %1240 = vmatprep.subr.mxu0 0.0
  %1241 = vmatpush1.msra.mxu0 0.0
  %1242 = vmatprep.mubr.f32.mxu0 0.0
  %1243 = vmatmul.mubr.f32.gmra.mrb[0].mxu0 %v1176
  %v1244 = vpop.f32.mrb[0].mxu0
  %v1245 = vadd.f32 0.0, %v1244
  %v1246 = vpop.f32.mrb[0].mxu0
  %1247 = vdwg.mxu0
  %1248 = vrot.lane.b32.xlu0 %v253, 80
  %v1249 = vpop.permute.xlu0 %1248
  %1250 = vrot.lane.b32.xlu0 %v253, 16
  %v1251 = vpop.permute.xlu0 %1250
  %v1252 = vsel %vm69, %v1249, 0
  %v1254 = vsel %vm69, %v1251, 0
  %1256 = vmatprep.subr.mxu0 0.0
  %1257 = vmatpush1.xpose.msra.mxu0 %v1254
  %1258 = vmatprep.subr.mxu0 0.0
  %1259 = vmatpush1.xpose.msra.mxu0 0.0
  %1260 = vmatprep.subr.mxu0 0.0
  %1261 = vmatpush1.xpose.msra.mxu0 0.0
  %1262 = vmatprep.subr.mxu0 0.0
  %1263 = vmatpush1.xpose.msra.mxu0 0.0
  %1264 = vmatprep.subr.mxu0 0.0
  %1265 = vmatpush1.xpose.msra.mxu0 0.0
  %1266 = vmatprep.subr.mxu0 0.0
  %1267 = vmatpush1.xpose.msra.mxu0 0.0
  %1268 = vmatprep.subr.mxu0 0.0
  %1269 = vmatpush1.xpose.msra.mxu0 0.0
  %1270 = vmatprep.subr.mxu0 0.0
  %1271 = vmatpush1.xpose.msra.mxu0 0.0
  %1272 = vmatprep.subr.mxu0 0.0
  %1273 = vmatpush1.xpose.msra.mxu0 0.0
  %1274 = vmatprep.subr.mxu0 0.0
  %1275 = vmatpush1.xpose.msra.mxu0 0.0
  %1276 = vmatprep.subr.mxu0 0.0
  %1277 = vmatpush1.xpose.msra.mxu0 0.0
  %1278 = vmatprep.subr.mxu0 0.0
  %1279 = vmatpush1.xpose.msra.mxu0 0.0
  %1280 = vmatprep.subr.mxu0 0.0
  %1281 = vmatpush1.xpose.msra.mxu0 0.0
  %1282 = vmatprep.subr.mxu0 0.0
  %1283 = vmatpush1.xpose.msra.mxu0 0.0
  %1284 = vmatprep.subr.mxu0 0.0
  %1285 = vmatpush1.xpose.msra.mxu0 0.0
  %1286 = vmatprep.subr.mxu0 0.0
  %1287 = vmatpush1.xpose.msra.mxu0 0.0
  %1288 = vmatprep.subr.mxu0 0.0
  %1289 = vmatpush1.xpose.msra.mxu0 0.0
  %1290 = vmatprep.subr.mxu0 0.0
  %1291 = vmatpush1.xpose.msra.mxu0 0.0
  %1292 = vmatprep.subr.mxu0 0.0
  %1293 = vmatpush1.xpose.msra.mxu0 0.0
  %1294 = vmatprep.subr.mxu0 0.0
  %1295 = vmatpush1.xpose.msra.mxu0 0.0
  %1296 = vmatprep.subr.mxu0 0.0
  %1297 = vmatpush1.xpose.msra.mxu0 0.0
  %1298 = vmatprep.subr.mxu0 0.0
  %1299 = vmatpush1.xpose.msra.mxu0 0.0
  %1300 = vmatprep.subr.mxu0 0.0
  %1301 = vmatpush1.xpose.msra.mxu0 0.0
  %1302 = vmatprep.subr.mxu0 0.0
  %1303 = vmatpush1.xpose.msra.mxu0 0.0
  %1304 = vmatprep.subr.mxu0 0.0
  %1305 = vmatpush1.xpose.msra.mxu0 0.0
  %1306 = vmatprep.subr.mxu0 0.0
  %1307 = vmatpush1.xpose.msra.mxu0 0.0
  %1308 = vmatprep.subr.mxu0 0.0
  %1309 = vmatpush1.xpose.msra.mxu0 0.0
  %1310 = vmatprep.subr.mxu0 0.0
  %1311 = vmatpush1.xpose.msra.mxu0 0.0
  %1312 = vmatprep.subr.mxu0 0.0
  %1313 = vmatpush1.xpose.msra.mxu0 0.0
  %1314 = vmatprep.subr.mxu0 0.0
  %1315 = vmatpush1.xpose.msra.mxu0 0.0
  %1316 = vmatprep.subr.mxu0 0.0
  %1317 = vmatpush1.xpose.msra.mxu0 0.0
  %1318 = vmatprep.subr.mxu0 0.0
  %1319 = vmatpush1.xpose.msra.mxu0 0.0
  %1320 = vmatprep.mubr.f32.mxu0 0.0
  %1321 = vmatmul.mubr.f32.gmra.mrb[0].mxu0 %v1252
  %v1322 = vpop.f32.mrb[0].mxu0
  %v1323 = vadd.f32 0.0, %v1322
  %v1324 = vpop.f32.mrb[0].mxu0
  %1325 = vdwg.mxu0
  %1326 = vrot.lane.b32.xlu0 %v259, 80
  %v1327 = vpop.permute.xlu0 %1326
  %1328 = vrot.lane.b32.xlu0 %v259, 16
  %v1329 = vpop.permute.xlu0 %1328
  %v1330 = vsel %vm69, %v1327, 0
  %v1332 = vsel %vm69, %v1329, 0
  %1334 = vmatprep.subr.mxu0 0.0
  %1335 = vmatpush1.xpose.msra.mxu0 %v1332
  %1336 = vmatprep.subr.mxu0 0.0
  %1337 = vmatpush1.xpose.msra.mxu0 0.0
  %1338 = vmatprep.subr.mxu0 0.0
  %1339 = vmatpush1.xpose.msra.mxu0 0.0
  %1340 = vmatprep.subr.mxu0 0.0
  %1341 = vmatpush1.xpose.msra.mxu0 0.0
  %1342 = vmatprep.subr.mxu0 0.0
  %1343 = vmatpush1.xpose.msra.mxu0 0.0
  %1344 = vmatprep.subr.mxu0 0.0
  %1345 = vmatpush1.xpose.msra.mxu0 0.0
  %1346 = vmatprep.subr.mxu0 0.0
  %1347 = vmatpush1.xpose.msra.mxu0 0.0
  %1348 = vmatprep.subr.mxu0 0.0
  %1349 = vmatpush1.xpose.msra.mxu0 0.0
  %1350 = vmatprep.subr.mxu0 0.0
  %1351 = vmatpush1.xpose.msra.mxu0 0.0
  %1352 = vmatprep.subr.mxu0 0.0
  %1353 = vmatpush1.xpose.msra.mxu0 0.0
  %1354 = vmatprep.subr.mxu0 0.0
  %1355 = vmatpush1.xpose.msra.mxu0 0.0
  %1356 = vmatprep.subr.mxu0 0.0
  %1357 = vmatpush1.xpose.msra.mxu0 0.0
  %1358 = vmatprep.subr.mxu0 0.0
  %1359 = vmatpush1.xpose.msra.mxu0 0.0
  %1360 = vmatprep.subr.mxu0 0.0
  %1361 = vmatpush1.xpose.msra.mxu0 0.0
  %1362 = vmatprep.subr.mxu0 0.0
  %1363 = vmatpush1.xpose.msra.mxu0 0.0
  %1364 = vmatprep.subr.mxu0 0.0
  %1365 = vmatpush1.xpose.msra.mxu0 0.0
  %1366 = vmatprep.subr.mxu0 0.0
  %1367 = vmatpush1.xpose.msra.mxu0 0.0
  %1368 = vmatprep.subr.mxu0 0.0
  %1369 = vmatpush1.xpose.msra.mxu0 0.0
  %1370 = vmatprep.subr.mxu0 0.0
  %1371 = vmatpush1.xpose.msra.mxu0 0.0
  %1372 = vmatprep.subr.mxu0 0.0
  %1373 = vmatpush1.xpose.msra.mxu0 0.0
  %1374 = vmatprep.subr.mxu0 0.0
  %1375 = vmatpush1.xpose.msra.mxu0 0.0
  %1376 = vmatprep.subr.mxu0 0.0
  %1377 = vmatpush1.xpose.msra.mxu0 0.0
  %1378 = vmatprep.subr.mxu0 0.0
  %1379 = vmatpush1.xpose.msra.mxu0 0.0
  %1380 = vmatprep.subr.mxu0 0.0
  %1381 = vmatpush1.xpose.msra.mxu0 0.0
  %1382 = vmatprep.subr.mxu0 0.0
  %1383 = vmatpush1.xpose.msra.mxu0 0.0
  %1384 = vmatprep.subr.mxu0 0.0
  %1385 = vmatpush1.xpose.msra.mxu0 0.0
  %1386 = vmatprep.subr.mxu0 0.0
  %1387 = vmatpush1.xpose.msra.mxu0 0.0
  %1388 = vmatprep.subr.mxu0 0.0
  %1389 = vmatpush1.xpose.msra.mxu0 0.0
  %1390 = vmatprep.subr.mxu0 0.0
  %1391 = vmatpush1.xpose.msra.mxu0 0.0
  %1392 = vmatprep.subr.mxu0 0.0
  %1393 = vmatpush1.xpose.msra.mxu0 0.0
  %1394 = vmatprep.subr.mxu0 0.0
  %1395 = vmatpush1.xpose.msra.mxu0 0.0
  %1396 = vmatprep.subr.mxu0 0.0
  %1397 = vmatpush1.xpose.msra.mxu0 0.0
  %1398 = vmatprep.mubr.f32.mxu0 0.0
  %1399 = vmatmul.mubr.f32.gmra.mrb[0].mxu0 %v1330
  %v1400 = vpop.f32.mrb[0].mxu0
  %v1401 = vadd.f32 0.0, %v1400
  %v1402 = vpop.f32.mrb[0].mxu0
  %1403 = vdwg.mxu0
  %v1404 = vsel %vm417, %v1323, -inf
  %1405 = vmax.xlane.f32.xlu0 %v1404
  %v1406 = vpop.xlane.xlu0 %1405
  %v1407 = vsel %vm417, %v1401, -inf
  %1408 = vmax.xlane.f32.xlu0 %v1407
  %v1409 = vpop.xlane.xlu0 %1408
  %v1410 = vsub.f32 %v1323, %v1406
  %v1411 = vsub.f32 %v1401, %v1409
  %v1412 = vmul.f32 %v1410, 1.442695
  %v1413 = vpow.pop %v1412
  %v1414 = vmul.f32 %v1411, 1.442695
  %v1415 = vpow.pop %v1414
  %v1416 = vsel %vm417, %v1413, 0.0
  %1417 = vadd.xlane.f32.xlu0 %v1416
  %v1418 = vpop.xlane.xlu0 %1417
  %v1419 = vsel %vm417, %v1415, 0.0
  %1420 = vadd.xlane.f32.xlu0 %v1419
  %v1421 = vpop.xlane.xlu0 %1420
  %v1422 = vrcp.pop %v1418
  %v1423 = vmul.f32 %v1413, %v1422
  %v1424 = vrcp.pop %v1421
  %v1425 = vmul.f32 %v1415, %v1424
  %1426 = vrot.lane.b32.xlu0 %v255, 80
  %v1427 = vpop.permute.xlu0 %1426
  %v1430 = vsel %vm417, %v1423, 0
  %1432 = vmatprep.subr.mxu0 0.0
  %1433 = vmatpush1.msra.mxu0 %v1427
  %1434 = vmatprep.subr.mxu0 0.0
  %1435 = vmatpush1.msra.mxu0 0.0
  %1436 = vmatprep.subr.mxu0 0.0
  %1437 = vmatpush1.msra.mxu0 0.0
  %1438 = vmatprep.subr.mxu0 0.0
  %1439 = vmatpush1.msra.mxu0 0.0
  %1440 = vmatprep.subr.mxu0 0.0
  %1441 = vmatpush1.msra.mxu0 0.0
  %1442 = vmatprep.subr.mxu0 0.0
  %1443 = vmatpush1.msra.mxu0 0.0
  %1444 = vmatprep.subr.mxu0 0.0
  %1445 = vmatpush1.msra.mxu0 0.0
  %1446 = vmatprep.subr.mxu0 0.0
  %1447 = vmatpush1.msra.mxu0 0.0
  %1448 = vmatprep.subr.mxu0 0.0
  %1449 = vmatpush1.msra.mxu0 0.0
  %1450 = vmatprep.subr.mxu0 0.0
  %1451 = vmatpush1.msra.mxu0 0.0
  %1452 = vmatprep.subr.mxu0 0.0
  %1453 = vmatpush1.msra.mxu0 0.0
  %1454 = vmatprep.subr.mxu0 0.0
  %1455 = vmatpush1.msra.mxu0 0.0
  %1456 = vmatprep.subr.mxu0 0.0
  %1457 = vmatpush1.msra.mxu0 0.0
  %1458 = vmatprep.subr.mxu0 0.0
  %1459 = vmatpush1.msra.mxu0 0.0
  %1460 = vmatprep.subr.mxu0 0.0
  %1461 = vmatpush1.msra.mxu0 0.0
  %1462 = vmatprep.subr.mxu0 0.0
  %1463 = vmatpush1.msra.mxu0 0.0
  %1464 = vmatprep.subr.mxu0 0.0
  %1465 = vmatpush1.msra.mxu0 0.0
  %1466 = vmatprep.subr.mxu0 0.0
  %1467 = vmatpush1.msra.mxu0 0.0
  %1468 = vmatprep.subr.mxu0 0.0
  %1469 = vmatpush1.msra.mxu0 0.0
  %1470 = vmatprep.subr.mxu0 0.0
  %1471 = vmatpush1.msra.mxu0 0.0
  %1472 = vmatprep.subr.mxu0 0.0
  %1473 = vmatpush1.msra.mxu0 0.0
  %1474 = vmatprep.subr.mxu0 0.0
  %1475 = vmatpush1.msra.mxu0 0.0
  %1476 = vmatprep.subr.mxu0 0.0
  %1477 = vmatpush1.msra.mxu0 0.0
  %1478 = vmatprep.subr.mxu0 0.0
  %1479 = vmatpush1.msra.mxu0 0.0
  %1480 = vmatprep.subr.mxu0 0.0
  %1481 = vmatpush1.msra.mxu0 0.0
  %1482 = vmatprep.subr.mxu0 0.0
  %1483 = vmatpush1.msra.mxu0 0.0
  %1484 = vmatprep.subr.mxu0 0.0
  %1485 = vmatpush1.msra.mxu0 0.0
  %1486 = vmatprep.subr.mxu0 0.0
  %1487 = vmatpush1.msra.mxu0 0.0
  %1488 = vmatprep.subr.mxu0 0.0
  %1489 = vmatpush1.msra.mxu0 0.0
  %1490 = vmatprep.subr.mxu0 0.0
  %1491 = vmatpush1.msra.mxu0 0.0
  %1492 = vmatprep.subr.mxu0 0.0
  %1493 = vmatpush1.msra.mxu0 0.0
  %1494 = vmatprep.subr.mxu0 0.0
  %1495 = vmatpush1.msra.mxu0 0.0
  %1496 = vmatprep.mubr.f32.mxu0 0.0
  %1497 = vmatmul.mubr.f32.gmra.mrb[0].mxu0 %v1430
  %v1498 = vpop.f32.mrb[0].mxu0
  %v1499 = vadd.f32 0.0, %v1498
  %v1500 = vpop.f32.mrb[0].mxu0
  %1501 = vdwg.mxu0
  %1502 = vrot.lane.b32.xlu0 %v261, 80
  %v1503 = vpop.permute.xlu0 %1502
  %v1506 = vsel %vm417, %v1425, 0
  %1508 = vmatprep.subr.mxu0 0.0
  %1509 = vmatpush1.msra.mxu0 %v1503
  %1510 = vmatprep.subr.mxu0 0.0
  %1511 = vmatpush1.msra.mxu0 0.0
  %1512 = vmatprep.subr.mxu0 0.0
  %1513 = vmatpush1.msra.mxu0 0.0
  %1514 = vmatprep.subr.mxu0 0.0
  %1515 = vmatpush1.msra.mxu0 0.0
  %1516 = vmatprep.subr.mxu0 0.0
  %1517 = vmatpush1.msra.mxu0 0.0
  %1518 = vmatprep.subr.mxu0 0.0
  %1519 = vmatpush1.msra.mxu0 0.0
  %1520 = vmatprep.subr.mxu0 0.0
  %1521 = vmatpush1.msra.mxu0 0.0
  %1522 = vmatprep.subr.mxu0 0.0
  %1523 = vmatpush1.msra.mxu0 0.0
  %1524 = vmatprep.subr.mxu0 0.0
  %1525 = vmatpush1.msra.mxu0 0.0
  %1526 = vmatprep.subr.mxu0 0.0
  %1527 = vmatpush1.msra.mxu0 0.0
  %1528 = vmatprep.subr.mxu0 0.0
  %1529 = vmatpush1.msra.mxu0 0.0
  %1530 = vmatprep.subr.mxu0 0.0
  %1531 = vmatpush1.msra.mxu0 0.0
  %1532 = vmatprep.subr.mxu0 0.0
  %1533 = vmatpush1.msra.mxu0 0.0
  %1534 = vmatprep.subr.mxu0 0.0
  %1535 = vmatpush1.msra.mxu0 0.0
  %1536 = vmatprep.subr.mxu0 0.0
  %1537 = vmatpush1.msra.mxu0 0.0
  %1538 = vmatprep.subr.mxu0 0.0
  %1539 = vmatpush1.msra.mxu0 0.0
  %1540 = vmatprep.subr.mxu0 0.0
  %1541 = vmatpush1.msra.mxu0 0.0
  %1542 = vmatprep.subr.mxu0 0.0
  %1543 = vmatpush1.msra.mxu0 0.0
  %1544 = vmatprep.subr.mxu0 0.0
  %1545 = vmatpush1.msra.mxu0 0.0
  %1546 = vmatprep.subr.mxu0 0.0
  %1547 = vmatpush1.msra.mxu0 0.0
  %1548 = vmatprep.subr.mxu0 0.0
  %1549 = vmatpush1.msra.mxu0 0.0
  %1550 = vmatprep.subr.mxu0 0.0
  %1551 = vmatpush1.msra.mxu0 0.0
  %1552 = vmatprep.subr.mxu0 0.0
  %1553 = vmatpush1.msra.mxu0 0.0
  %1554 = vmatprep.subr.mxu0 0.0
  %1555 = vmatpush1.msra.mxu0 0.0
  %1556 = vmatprep.subr.mxu0 0.0
  %1557 = vmatpush1.msra.mxu0 0.0
  %1558 = vmatprep.subr.mxu0 0.0
  %1559 = vmatpush1.msra.mxu0 0.0
  %1560 = vmatprep.subr.mxu0 0.0
  %1561 = vmatpush1.msra.mxu0 0.0
  %1562 = vmatprep.subr.mxu0 0.0
  %1563 = vmatpush1.msra.mxu0 0.0
  %1564 = vmatprep.subr.mxu0 0.0
  %1565 = vmatpush1.msra.mxu0 0.0
  %1566 = vmatprep.subr.mxu0 0.0
  %1567 = vmatpush1.msra.mxu0 0.0
  %1568 = vmatprep.subr.mxu0 0.0
  %1569 = vmatpush1.msra.mxu0 0.0
  %1570 = vmatprep.subr.mxu0 0.0
  %1571 = vmatpush1.msra.mxu0 0.0
  %1572 = vmatprep.mubr.f32.mxu0 0.0
  %1573 = vmatmul.mubr.f32.gmra.mrb[0].mxu0 %v1506
  %v1574 = vpop.f32.mrb[0].mxu0
  %v1575 = vadd.f32 0.0, %v1574
  %v1576 = vpop.f32.mrb[0].mxu0
  %1577 = vdwg.mxu0
  %1580 = vrot.lane.b32.xlu0 %v838, 16
  %v1581 = vpop.permute.xlu0 %1580
  %1582 = vrot.lane.b32.xlu0 %v915, 16
  %v1583 = vpop.permute.xlu0 %1582
  %1588 = vrot.lane.b32.xlu0 %v1169, 32
  %v1589 = vpop.permute.xlu0 %1588
  %1590 = vrot.lane.b32.xlu0 %v1245, 32
  %v1591 = vpop.permute.xlu0 %1590
  %1596 = vrot.lane.b32.xlu0 %v1499, 48
  %v1597 = vpop.permute.xlu0 %1596
  %1598 = vrot.lane.b32.xlu0 %v1575, 48
  %v1599 = vpop.permute.xlu0 %1598
  %v1602 = vsel %vm69, %v510, %v1581
  %v1603 = vsel %vm69, %v583, %v1583
  %vm1604 = vcmask 261120
  %v1605 = vsel %vm1604, %v1602, %v1589
  %v1606 = vsel %vm1604, %v1603, %v1591
  %vm1607 = vcmask 392192
  %v1608 = vsel %vm1607, %v1605, %v1597
  %v1609 = vsel %vm1607, %v1606, %v1599
  %v1610 = vld [vmem:[%s5] sm:$0xff]
  %v1611 = vld [vmem:[%s5 + $0x8] sm:$0xff]
  %v1612 = vld [vmem:[%s5 + $0x10] sm:$0xff]
  %v1613 = vld [vmem:[%s5 + $0x18] sm:$0xff]
  %v1614 = vld [vmem:[%s5 + $0x20] sm:$0xff]
  %v1615 = vld [vmem:[%s5 + $0x28] sm:$0xff]
  %v1616 = vld [vmem:[%s5 + $0x30] sm:$0xff]
  %v1617 = vld [vmem:[%s5 + $0x38] sm:$0xff]
  %v1618 = vld [vmem:[%s6] sm:$0x1]
  %v1620 = vlaneseq
  %v1621 = vshrl.u32 %v1620, 7
  %v1622 = vsub.s32 0, %v1621
  %v1623 = vrot.slane %v1618, %v1622
  %v1626 = vsel %vm179, %v1608, 0
  %v1629 = vsel %vm179, %v1609, 0
  %1631 = vmatprep.subr.mxu0 0.0
  %1632 = vmatpush1.msra.mxu0 %v1610
  %1633 = vmatprep.subr.mxu0 0.0
  %1634 = vmatpush1.msra.mxu0 %v1611
  %1635 = vmatprep.subr.mxu0 0.0
  %1636 = vmatpush1.msra.mxu0 %v1612
  %1637 = vmatprep.subr.mxu0 0.0
  %1638 = vmatpush1.msra.mxu0 %v1613
  %1639 = vmatprep.subr.mxu0 0.0
  %1640 = vmatpush1.msra.mxu0 %v1614
  %1641 = vmatprep.subr.mxu0 0.0
  %1642 = vmatpush1.msra.mxu0 %v1615
  %1643 = vmatprep.subr.mxu0 0.0
  %1644 = vmatpush1.msra.mxu0 %v1616
  %1645 = vmatprep.subr.mxu0 0.0
  %1646 = vmatpush1.msra.mxu0 %v1617
  %1647 = vmatprep.subr.mxu0 0.0
  %1648 = vmatpush1.msra.mxu0 0.0
  %1649 = vmatprep.subr.mxu0 0.0
  %1650 = vmatpush1.msra.mxu0 0.0
  %1651 = vmatprep.subr.mxu0 0.0
  %1652 = vmatpush1.msra.mxu0 0.0
  %1653 = vmatprep.subr.mxu0 0.0
  %1654 = vmatpush1.msra.mxu0 0.0
  %1655 = vmatprep.subr.mxu0 0.0
  %1656 = vmatpush1.msra.mxu0 0.0
  %1657 = vmatprep.subr.mxu0 0.0
  %1658 = vmatpush1.msra.mxu0 0.0
  %1659 = vmatprep.subr.mxu0 0.0
  %1660 = vmatpush1.msra.mxu0 0.0
  %1661 = vmatprep.subr.mxu0 0.0
  %1662 = vmatpush1.msra.mxu0 0.0
  %1663 = vmatprep.subr.mxu0 0.0
  %1664 = vmatpush1.msra.mxu0 0.0
  %1665 = vmatprep.subr.mxu0 0.0
  %1666 = vmatpush1.msra.mxu0 0.0
  %1667 = vmatprep.subr.mxu0 0.0
  %1668 = vmatpush1.msra.mxu0 0.0
  %1669 = vmatprep.subr.mxu0 0.0
  %1670 = vmatpush1.msra.mxu0 0.0
  %1671 = vmatprep.subr.mxu0 0.0
  %1672 = vmatpush1.msra.mxu0 0.0
  %1673 = vmatprep.subr.mxu0 0.0
  %1674 = vmatpush1.msra.mxu0 0.0
  %1675 = vmatprep.subr.mxu0 0.0
  %1676 = vmatpush1.msra.mxu0 0.0
  %1677 = vmatprep.subr.mxu0 0.0
  %1678 = vmatpush1.msra.mxu0 0.0
  %1679 = vmatprep.subr.mxu0 0.0
  %1680 = vmatpush1.msra.mxu0 0.0
  %1681 = vmatprep.subr.mxu0 0.0
  %1682 = vmatpush1.msra.mxu0 0.0
  %1683 = vmatprep.subr.mxu0 0.0
  %1684 = vmatpush1.msra.mxu0 0.0
  %1685 = vmatprep.subr.mxu0 0.0
  %1686 = vmatpush1.msra.mxu0 0.0
  %1687 = vmatprep.subr.mxu0 0.0
  %1688 = vmatpush1.msra.mxu0 0.0
  %1689 = vmatprep.subr.mxu0 0.0
  %1690 = vmatpush1.msra.mxu0 0.0
  %1691 = vmatprep.subr.mxu0 0.0
  %1692 = vmatpush1.msra.mxu0 0.0
  %1693 = vmatprep.subr.mxu0 0.0
  %1694 = vmatpush1.msra.mxu0 0.0
  %1695 = vmatprep.mubr.f32.mxu0 0.0
  %1696 = vmatmul.mubr.f32.gmra.mrb[0].mxu0 %v1626
  %v1697 = vpop.f32.mrb[0].mxu0
  %v1698 = vadd.f32 %v1623, %v1697
  %v1699 = vpop.f32.mrb[0].mxu0
  %1700 = vmatprep.mubr.f32.mxu0 0.0
  %1701 = vmatmul.mubr.f32.gmra.mrb[0].mxu0 %v1629
  %v1702 = vpop.f32.mrb[0].mxu0
  %v1703 = vadd.f32 %v1623, %v1702
  %v1704 = vpop.f32.mrb[0].mxu0
  %1705 = vdwg.mxu0
  %v1706 = vadd.f32 %v143, %v1698
  %v1707 = vadd.f32 %v148, %v1703
  %v1708 = vld [vmem:[%s11] sm:$0x1]
  %v1709 = vld [vmem:[%s12] sm:$0x1]
  %v1710 = vsel %vm179, %v1706, 0.0
  %1711 = vadd.xlane.f32.xlu0 %v1710
  %v1712 = vpop.xlane.xlu0 %1711
  %v1713 = vsel %vm179, %v1707, 0.0
  %1714 = vadd.xlane.f32.xlu0 %v1713
  %v1715 = vpop.xlane.xlu0 %1714
  %v1716 = vmul.f32 %v1712, 0.015625
  %v1717 = vmul.f32 %v1715, 0.015625
  %v1718 = vmul.f32 %v1706, %v1706
  %v1719 = vmul.f32 %v1707, %v1707
  %v1720 = vsel %vm179, %v1718, 0.0
  %1721 = vadd.xlane.f32.xlu0 %v1720
  %v1722 = vpop.xlane.xlu0 %1721
  %v1723 = vsel %vm179, %v1719, 0.0
  %1724 = vadd.xlane.f32.xlu0 %v1723
  %v1725 = vpop.xlane.xlu0 %1724
  %v1726 = vmul.f32 %v1722, 0.015625
  %v1727 = vmul.f32 %v1725, 0.015625
  %v1728 = vmul.f32 %v1716, %v1716
  %v1729 = vmul.f32 %v1717, %v1717
  %v1730 = vsub.f32 %v1726, %v1728
  %v1731 = vsub.f32 %v1727, %v1729
  %v1732 = vsub.f32 %v1706, %v1716
  %v1733 = vsub.f32 %v1707, %v1717
  %v1734 = vadd.f32 %v1730, 1e-05
  %v1735 = vadd.f32 %v1731, 1e-05
  %v1736 = vrsqrt.pop %v1734
  %v1737 = vrsqrt.pop %v1735
  %v1738 = vmul.f32 %v1732, %v1736
  %v1739 = vmul.f32 %v1733, %v1737
  %v1741 = vlaneseq
  %v1742 = vshrl.u32 %v1741, 7
  %v1743 = vsub.s32 0, %v1742
  %v1744 = vrot.slane %v1708, %v1743
  %v1746 = vmul.f32 %v1738, %v1744
  %v1747 = vmul.f32 %v1739, %v1744
  %v1749 = vlaneseq
  %v1750 = vshrl.u32 %v1749, 7
  %v1751 = vsub.s32 0, %v1750
  %v1752 = vrot.slane %v1709, %v1751
  %v1754 = vadd.f32 %v1746, %v1752
  %v1755 = vadd.f32 %v1747, %v1752
  %v1756 = vld [vmem:[%s7] sm:$0xff]
  %v1757 = vld [vmem:[%s7 + $0x8] sm:$0xff]
  %v1758 = vld [vmem:[%s7 + $0x10] sm:$0xff]
  %v1759 = vld [vmem:[%s7 + $0x18] sm:$0xff]
  %v1760 = vld [vmem:[%s7 + $0x20] sm:$0xff]
  %v1761 = vld [vmem:[%s7 + $0x28] sm:$0xff]
  %v1762 = vld [vmem:[%s7 + $0x30] sm:$0xff]
  %v1763 = vld [vmem:[%s7 + $0x38] sm:$0xff]
  %v1764 = vld [vmem:[%s7 + $0x40] sm:$0xff]
  %v1765 = vld [vmem:[%s7 + $0x48] sm:$0xff]
  %v1766 = vld [vmem:[%s7 + $0x50] sm:$0xff]
  %v1767 = vld [vmem:[%s7 + $0x58] sm:$0xff]
  %v1768 = vld [vmem:[%s7 + $0x60] sm:$0xff]
  %v1769 = vld [vmem:[%s7 + $0x68] sm:$0xff]
  %v1770 = vld [vmem:[%s7 + $0x70] sm:$0xff]
  %v1771 = vld [vmem:[%s7 + $0x78] sm:$0xff]
  %v1772 = vld [vmem:[%s7 + $0x80] sm:$0xff]
  %v1773 = vld [vmem:[%s7 + $0x88] sm:$0xff]
  %v1774 = vld [vmem:[%s7 + $0x90] sm:$0xff]
  %v1775 = vld [vmem:[%s7 + $0x98] sm:$0xff]
  %v1776 = vld [vmem:[%s7 + $0xa0] sm:$0xff]
  %v1777 = vld [vmem:[%s7 + $0xa8] sm:$0xff]
  %v1778 = vld [vmem:[%s7 + $0xb0] sm:$0xff]
  %v1779 = vld [vmem:[%s7 + $0xb8] sm:$0xff]
  %v1780 = vld [vmem:[%s7 + $0xc0] sm:$0xff]
  %v1781 = vld [vmem:[%s7 + $0xc8] sm:$0xff]
  %v1782 = vld [vmem:[%s7 + $0xd0] sm:$0xff]
  %v1783 = vld [vmem:[%s7 + $0xd8] sm:$0xff]
  %v1784 = vld [vmem:[%s7 + $0xe0] sm:$0xff]
  %v1785 = vld [vmem:[%s7 + $0xe8] sm:$0xff]
  %v1786 = vld [vmem:[%s7 + $0xf0] sm:$0xff]
  %v1787 = vld [vmem:[%s7 + $0xf8] sm:$0xff]
  %v1788 = vld [vmem:[%s7 + $0x100] sm:$0xff]
  %v1789 = vld [vmem:[%s7 + $0x108] sm:$0xff]
  %v1790 = vld [vmem:[%s7 + $0x110] sm:$0xff]
  %v1791 = vld [vmem:[%s7 + $0x118] sm:$0xff]
  %v1792 = vld [vmem:[%s7 + $0x120] sm:$0xff]
  %v1793 = vld [vmem:[%s7 + $0x128] sm:$0xff]
  %v1794 = vld [vmem:[%s7 + $0x130] sm:$0xff]
  %v1795 = vld [vmem:[%s7 + $0x138] sm:$0xff]
  %v1796 = vld [vmem:[%s7 + $0x140] sm:$0xff]
  %v1797 = vld [vmem:[%s7 + $0x148] sm:$0xff]
  %v1798 = vld [vmem:[%s7 + $0x150] sm:$0xff]
  %v1799 = vld [vmem:[%s7 + $0x158] sm:$0xff]
  %v1800 = vld [vmem:[%s7 + $0x160] sm:$0xff]
  %v1801 = vld [vmem:[%s7 + $0x168] sm:$0xff]
  %v1802 = vld [vmem:[%s7 + $0x170] sm:$0xff]
  %v1803 = vld [vmem:[%s7 + $0x178] sm:$0xff]
  %v1804 = vld [vmem:[%s7 + $0x180] sm:$0xff]
  %v1805 = vld [vmem:[%s7 + $0x188] sm:$0xff]
  %v1806 = vld [vmem:[%s7 + $0x190] sm:$0xff]
  %v1807 = vld [vmem:[%s7 + $0x198] sm:$0xff]
  %v1808 = vld [vmem:[%s7 + $0x1a0] sm:$0xff]
  %v1809 = vld [vmem:[%s7 + $0x1a8] sm:$0xff]
  %v1810 = vld [vmem:[%s7 + $0x1b0] sm:$0xff]
  %v1811 = vld [vmem:[%s7 + $0x1b8] sm:$0xff]
  %v1812 = vld [vmem:[%s7 + $0x1c0] sm:$0xff]
  %v1813 = vld [vmem:[%s7 + $0x1c8] sm:$0xff]
  %v1814 = vld [vmem:[%s7 + $0x1d0] sm:$0xff]
  %v1815 = vld [vmem:[%s7 + $0x1d8] sm:$0xff]
  %v1816 = vld [vmem:[%s7 + $0x1e0] sm:$0xff]
  %v1817 = vld [vmem:[%s7 + $0x1e8] sm:$0xff]
  %v1818 = vld [vmem:[%s7 + $0x1f0] sm:$0xff]
  %v1819 = vld [vmem:[%s7 + $0x1f8] sm:$0xff]
  %v1820 = vunpack.c.l.bf16 %v1756
  %v1821 = vunpack.c.h.bf16 %v1756
  %v1822 = vunpack.c.l.bf16 %v1757
  %v1823 = vunpack.c.h.bf16 %v1757
  %v1824 = vunpack.c.l.bf16 %v1758
  %v1825 = vunpack.c.h.bf16 %v1758
  %v1826 = vunpack.c.l.bf16 %v1759
  %v1827 = vunpack.c.h.bf16 %v1759
  %v1828 = vunpack.c.l.bf16 %v1760
  %v1829 = vunpack.c.h.bf16 %v1760
  %v1830 = vunpack.c.l.bf16 %v1761
  %v1831 = vunpack.c.h.bf16 %v1761
  %v1832 = vunpack.c.l.bf16 %v1762
  %v1833 = vunpack.c.h.bf16 %v1762
  %v1834 = vunpack.c.l.bf16 %v1763
  %v1835 = vunpack.c.h.bf16 %v1763
  %v1836 = vunpack.c.l.bf16 %v1764
  %v1837 = vunpack.c.h.bf16 %v1764
  %v1838 = vunpack.c.l.bf16 %v1765
  %v1839 = vunpack.c.h.bf16 %v1765
  %v1840 = vunpack.c.l.bf16 %v1766
  %v1841 = vunpack.c.h.bf16 %v1766
  %v1842 = vunpack.c.l.bf16 %v1767
  %v1843 = vunpack.c.h.bf16 %v1767
  %v1844 = vunpack.c.l.bf16 %v1768
  %v1845 = vunpack.c.h.bf16 %v1768
  %v1846 = vunpack.c.l.bf16 %v1769
  %v1847 = vunpack.c.h.bf16 %v1769
  %v1848 = vunpack.c.l.bf16 %v1770
  %v1849 = vunpack.c.h.bf16 %v1770
  %v1850 = vunpack.c.l.bf16 %v1771
  %v1851 = vunpack.c.h.bf16 %v1771
  %v1852 = vunpack.c.l.bf16 %v1772
  %v1853 = vunpack.c.h.bf16 %v1772
  %v1854 = vunpack.c.l.bf16 %v1773
  %v1855 = vunpack.c.h.bf16 %v1773
  %v1856 = vunpack.c.l.bf16 %v1774
  %v1857 = vunpack.c.h.bf16 %v1774
  %v1858 = vunpack.c.l.bf16 %v1775
  %v1859 = vunpack.c.h.bf16 %v1775
  %v1860 = vunpack.c.l.bf16 %v1776
  %v1861 = vunpack.c.h.bf16 %v1776
  %v1862 = vunpack.c.l.bf16 %v1777
  %v1863 = vunpack.c.h.bf16 %v1777
  %v1864 = vunpack.c.l.bf16 %v1778
  %v1865 = vunpack.c.h.bf16 %v1778
  %v1866 = vunpack.c.l.bf16 %v1779
  %v1867 = vunpack.c.h.bf16 %v1779
  %v1868 = vunpack.c.l.bf16 %v1780
  %v1869 = vunpack.c.h.bf16 %v1780
  %v1870 = vunpack.c.l.bf16 %v1781
  %v1871 = vunpack.c.h.bf16 %v1781
  %v1872 = vunpack.c.l.bf16 %v1782
  %v1873 = vunpack.c.h.bf16 %v1782
  %v1874 = vunpack.c.l.bf16 %v1783
  %v1875 = vunpack.c.h.bf16 %v1783
  %v1876 = vunpack.c.l.bf16 %v1784
  %v1877 = vunpack.c.h.bf16 %v1784
  %v1878 = vunpack.c.l.bf16 %v1785
  %v1879 = vunpack.c.h.bf16 %v1785
  %v1880 = vunpack.c.l.bf16 %v1786
  %v1881 = vunpack.c.h.bf16 %v1786
  %v1882 = vunpack.c.l.bf16 %v1787
  %v1883 = vunpack.c.h.bf16 %v1787
  %v1884 = vunpack.c.l.bf16 %v1788
  %v1885 = vunpack.c.h.bf16 %v1788
  %v1886 = vunpack.c.l.bf16 %v1789
  %v1887 = vunpack.c.h.bf16 %v1789
  %v1888 = vunpack.c.l.bf16 %v1790
  %v1889 = vunpack.c.h.bf16 %v1790
  %v1890 = vunpack.c.l.bf16 %v1791
  %v1891 = vunpack.c.h.bf16 %v1791
  %v1892 = vunpack.c.l.bf16 %v1792
  %v1893 = vunpack.c.h.bf16 %v1792
  %v1894 = vunpack.c.l.bf16 %v1793
  %v1895 = vunpack.c.h.bf16 %v1793
  %v1896 = vunpack.c.l.bf16 %v1794
  %v1897 = vunpack.c.h.bf16 %v1794
  %v1898 = vunpack.c.l.bf16 %v1795
  %v1899 = vunpack.c.h.bf16 %v1795
  %v1900 = vunpack.c.l.bf16 %v1796
  %v1901 = vunpack.c.h.bf16 %v1796
  %v1902 = vunpack.c.l.bf16 %v1797
  %v1903 = vunpack.c.h.bf16 %v1797
  %v1904 = vunpack.c.l.bf16 %v1798
  %v1905 = vunpack.c.h.bf16 %v1798
  %v1906 = vunpack.c.l.bf16 %v1799
  %v1907 = vunpack.c.h.bf16 %v1799
  %v1908 = vunpack.c.l.bf16 %v1800
  %v1909 = vunpack.c.h.bf16 %v1800
  %v1910 = vunpack.c.l.bf16 %v1801
  %v1911 = vunpack.c.h.bf16 %v1801
  %v1912 = vunpack.c.l.bf16 %v1802
  %v1913 = vunpack.c.h.bf16 %v1802
  %v1914 = vunpack.c.l.bf16 %v1803
  %v1915 = vunpack.c.h.bf16 %v1803
  %v1916 = vunpack.c.l.bf16 %v1804
  %v1917 = vunpack.c.h.bf16 %v1804
  %v1918 = vunpack.c.l.bf16 %v1805
  %v1919 = vunpack.c.h.bf16 %v1805
  %v1920 = vunpack.c.l.bf16 %v1806
  %v1921 = vunpack.c.h.bf16 %v1806
  %v1922 = vunpack.c.l.bf16 %v1807
  %v1923 = vunpack.c.h.bf16 %v1807
  %v1924 = vunpack.c.l.bf16 %v1808
  %v1925 = vunpack.c.h.bf16 %v1808
  %v1926 = vunpack.c.l.bf16 %v1809
  %v1927 = vunpack.c.h.bf16 %v1809
  %v1928 = vunpack.c.l.bf16 %v1810
  %v1929 = vunpack.c.h.bf16 %v1810
  %v1930 = vunpack.c.l.bf16 %v1811
  %v1931 = vunpack.c.h.bf16 %v1811
  %v1932 = vunpack.c.l.bf16 %v1812
  %v1933 = vunpack.c.h.bf16 %v1812
  %v1934 = vunpack.c.l.bf16 %v1813
  %v1935 = vunpack.c.h.bf16 %v1813
  %v1936 = vunpack.c.l.bf16 %v1814
  %v1937 = vunpack.c.h.bf16 %v1814
  %v1938 = vunpack.c.l.bf16 %v1815
  %v1939 = vunpack.c.h.bf16 %v1815
  %v1940 = vunpack.c.l.bf16 %v1816
  %v1941 = vunpack.c.h.bf16 %v1816
  %v1942 = vunpack.c.l.bf16 %v1817
  %v1943 = vunpack.c.h.bf16 %v1817
  %v1944 = vunpack.c.l.bf16 %v1818
  %v1945 = vunpack.c.h.bf16 %v1818
  %v1946 = vunpack.c.l.bf16 %v1819
  %v1947 = vunpack.c.h.bf16 %v1819
  %v1948 = vld [vmem:[%s9] sm:$0xf]
  %v1949 = vld [vmem:[%s9 + $0x4] sm:$0xf]
  %v1950 = vld [vmem:[%s9 + $0x8] sm:$0xf]
  %v1951 = vld [vmem:[%s9 + $0xc] sm:$0xf]
  %v1952 = vld [vmem:[%s9 + $0x10] sm:$0xf]
  %v1953 = vld [vmem:[%s9 + $0x14] sm:$0xf]
  %v1954 = vld [vmem:[%s9 + $0x18] sm:$0xf]
  %v1955 = vld [vmem:[%s9 + $0x1c] sm:$0xf]
  %v1956 = vld [vmem:[%s9 + $0x20] sm:$0xf]
  %v1957 = vld [vmem:[%s9 + $0x24] sm:$0xf]
  %v1958 = vld [vmem:[%s9 + $0x28] sm:$0xf]
  %v1959 = vld [vmem:[%s9 + $0x2c] sm:$0xf]
  %v1960 = vld [vmem:[%s9 + $0x30] sm:$0xf]
  %v1961 = vld [vmem:[%s9 + $0x34] sm:$0xf]
  %v1962 = vld [vmem:[%s9 + $0x38] sm:$0xf]
  %v1963 = vld [vmem:[%s9 + $0x3c] sm:$0xf]
  %v1964 = vld [vmem:[%s9 + $0x40] sm:$0xf]
  %v1965 = vld [vmem:[%s9 + $0x44] sm:$0xf]
  %v1966 = vld [vmem:[%s9 + $0x48] sm:$0xf]
  %v1967 = vld [vmem:[%s9 + $0x4c] sm:$0xf]
  %v1968 = vld [vmem:[%s9 + $0x50] sm:$0xf]
  %v1969 = vld [vmem:[%s9 + $0x54] sm:$0xf]
  %v1970 = vld [vmem:[%s9 + $0x58] sm:$0xf]
  %v1971 = vld [vmem:[%s9 + $0x5c] sm:$0xf]
  %v1972 = vld [vmem:[%s9 + $0x60] sm:$0xf]
  %v1973 = vld [vmem:[%s9 + $0x64] sm:$0xf]
  %v1974 = vld [vmem:[%s9 + $0x68] sm:$0xf]
  %v1975 = vld [vmem:[%s9 + $0x6c] sm:$0xf]
  %v1976 = vld [vmem:[%s9 + $0x70] sm:$0xf]
  %v1977 = vld [vmem:[%s9 + $0x74] sm:$0xf]
  %v1978 = vld [vmem:[%s9 + $0x78] sm:$0xf]
  %v1979 = vld [vmem:[%s9 + $0x7c] sm:$0xf]
  %v1980 = vld [vmem:[%s9 + $0x80] sm:$0xf]
  %v1981 = vld [vmem:[%s9 + $0x84] sm:$0xf]
  %v1982 = vld [vmem:[%s9 + $0x88] sm:$0xf]
  %v1983 = vld [vmem:[%s9 + $0x8c] sm:$0xf]
  %v1984 = vld [vmem:[%s9 + $0x90] sm:$0xf]
  %v1985 = vld [vmem:[%s9 + $0x94] sm:$0xf]
  %v1986 = vld [vmem:[%s9 + $0x98] sm:$0xf]
  %v1987 = vld [vmem:[%s9 + $0x9c] sm:$0xf]
  %v1988 = vld [vmem:[%s9 + $0xa0] sm:$0xf]
  %v1989 = vld [vmem:[%s9 + $0xa4] sm:$0xf]
  %v1990 = vld [vmem:[%s9 + $0xa8] sm:$0xf]
  %v1991 = vld [vmem:[%s9 + $0xac] sm:$0xf]
  %v1992 = vld [vmem:[%s9 + $0xb0] sm:$0xf]
  %v1993 = vld [vmem:[%s9 + $0xb4] sm:$0xf]
  %v1994 = vld [vmem:[%s9 + $0xb8] sm:$0xf]
  %v1995 = vld [vmem:[%s9 + $0xbc] sm:$0xf]
  %v1996 = vld [vmem:[%s9 + $0xc0] sm:$0xf]
  %v1997 = vld [vmem:[%s9 + $0xc4] sm:$0xf]
  %v1998 = vld [vmem:[%s9 + $0xc8] sm:$0xf]
  %v1999 = vld [vmem:[%s9 + $0xcc] sm:$0xf]
  %v2000 = vld [vmem:[%s9 + $0xd0] sm:$0xf]
  %v2001 = vld [vmem:[%s9 + $0xd4] sm:$0xf]
  %v2002 = vld [vmem:[%s9 + $0xd8] sm:$0xf]
  %v2003 = vld [vmem:[%s9 + $0xdc] sm:$0xf]
  %v2004 = vld [vmem:[%s9 + $0xe0] sm:$0xf]
  %v2005 = vld [vmem:[%s9 + $0xe4] sm:$0xf]
  %v2006 = vld [vmem:[%s9 + $0xe8] sm:$0xf]
  %v2007 = vld [vmem:[%s9 + $0xec] sm:$0xf]
  %v2008 = vld [vmem:[%s9 + $0xf0] sm:$0xf]
  %v2009 = vld [vmem:[%s9 + $0xf4] sm:$0xf]
  %v2010 = vld [vmem:[%s9 + $0xf8] sm:$0xf]
  %v2011 = vld [vmem:[%s9 + $0xfc] sm:$0xf]
  %v2012 = vld [vmem:[%s9 + $0x100] sm:$0xf]
  %v2013 = vld [vmem:[%s9 + $0x104] sm:$0xf]
  %v2014 = vld [vmem:[%s9 + $0x108] sm:$0xf]
  %v2015 = vld [vmem:[%s9 + $0x10c] sm:$0xf]
  %v2016 = vld [vmem:[%s9 + $0x110] sm:$0xf]
  %v2017 = vld [vmem:[%s9 + $0x114] sm:$0xf]
  %v2018 = vld [vmem:[%s9 + $0x118] sm:$0xf]
  %v2019 = vld [vmem:[%s9 + $0x11c] sm:$0xf]
  %v2020 = vld [vmem:[%s9 + $0x120] sm:$0xf]
  %v2021 = vld [vmem:[%s9 + $0x124] sm:$0xf]
  %v2022 = vld [vmem:[%s9 + $0x128] sm:$0xf]
  %v2023 = vld [vmem:[%s9 + $0x12c] sm:$0xf]
  %v2024 = vld [vmem:[%s9 + $0x130] sm:$0xf]
  %v2025 = vld [vmem:[%s9 + $0x134] sm:$0xf]
  %v2026 = vld [vmem:[%s9 + $0x138] sm:$0xf]
  %v2027 = vld [vmem:[%s9 + $0x13c] sm:$0xf]
  %v2028 = vld [vmem:[%s9 + $0x140] sm:$0xf]
  %v2029 = vld [vmem:[%s9 + $0x144] sm:$0xf]
  %v2030 = vld [vmem:[%s9 + $0x148] sm:$0xf]
  %v2031 = vld [vmem:[%s9 + $0x14c] sm:$0xf]
  %v2032 = vld [vmem:[%s9 + $0x150] sm:$0xf]
  %v2033 = vld [vmem:[%s9 + $0x154] sm:$0xf]
  %v2034 = vld [vmem:[%s9 + $0x158] sm:$0xf]
  %v2035 = vld [vmem:[%s9 + $0x15c] sm:$0xf]
  %v2036 = vld [vmem:[%s9 + $0x160] sm:$0xf]
  %v2037 = vld [vmem:[%s9 + $0x164] sm:$0xf]
  %v2038 = vld [vmem:[%s9 + $0x168] sm:$0xf]
  %v2039 = vld [vmem:[%s9 + $0x16c] sm:$0xf]
  %v2040 = vld [vmem:[%s9 + $0x170] sm:$0xf]
  %v2041 = vld [vmem:[%s9 + $0x174] sm:$0xf]
  %v2042 = vld [vmem:[%s9 + $0x178] sm:$0xf]
  %v2043 = vld [vmem:[%s9 + $0x17c] sm:$0xf]
  %v2044 = vld [vmem:[%s9 + $0x180] sm:$0xf]
  %v2045 = vld [vmem:[%s9 + $0x184] sm:$0xf]
  %v2046 = vld [vmem:[%s9 + $0x188] sm:$0xf]
  %v2047 = vld [vmem:[%s9 + $0x18c] sm:$0xf]
  %v2048 = vld [vmem:[%s9 + $0x190] sm:$0xf]
  %v2049 = vld [vmem:[%s9 + $0x194] sm:$0xf]
  %v2050 = vld [vmem:[%s9 + $0x198] sm:$0xf]
  %v2051 = vld [vmem:[%s9 + $0x19c] sm:$0xf]
  %v2052 = vld [vmem:[%s9 + $0x1a0] sm:$0xf]
  %v2053 = vld [vmem:[%s9 + $0x1a4] sm:$0xf]
  %v2054 = vld [vmem:[%s9 + $0x1a8] sm:$0xf]
  %v2055 = vld [vmem:[%s9 + $0x1ac] sm:$0xf]
  %v2056 = vld [vmem:[%s9 + $0x1b0] sm:$0xf]
  %v2057 = vld [vmem:[%s9 + $0x1b4] sm:$0xf]
  %v2058 = vld [vmem:[%s9 + $0x1b8] sm:$0xf]
  %v2059 = vld [vmem:[%s9 + $0x1bc] sm:$0xf]
  %v2060 = vld [vmem:[%s9 + $0x1c0] sm:$0xf]
  %v2061 = vld [vmem:[%s9 + $0x1c4] sm:$0xf]
  %v2062 = vld [vmem:[%s9 + $0x1c8] sm:$0xf]
  %v2063 = vld [vmem:[%s9 + $0x1cc] sm:$0xf]
  %v2064 = vld [vmem:[%s9 + $0x1d0] sm:$0xf]
  %v2065 = vld [vmem:[%s9 + $0x1d4] sm:$0xf]
  %v2066 = vld [vmem:[%s9 + $0x1d8] sm:$0xf]
  %v2067 = vld [vmem:[%s9 + $0x1dc] sm:$0xf]
  %v2068 = vld [vmem:[%s9 + $0x1e0] sm:$0xf]
  %v2069 = vld [vmem:[%s9 + $0x1e4] sm:$0xf]
  %v2070 = vld [vmem:[%s9 + $0x1e8] sm:$0xf]
  %v2071 = vld [vmem:[%s9 + $0x1ec] sm:$0xf]
  %v2072 = vld [vmem:[%s9 + $0x1f0] sm:$0xf]
  %v2073 = vld [vmem:[%s9 + $0x1f4] sm:$0xf]
  %v2074 = vld [vmem:[%s9 + $0x1f8] sm:$0xf]
  %v2075 = vld [vmem:[%s9 + $0x1fc] sm:$0xf]
  %v2076 = vld [vmem:[%s9 + $0x200] sm:$0xf]
  %v2077 = vld [vmem:[%s9 + $0x204] sm:$0xf]
  %v2078 = vld [vmem:[%s9 + $0x208] sm:$0xf]
  %v2079 = vld [vmem:[%s9 + $0x20c] sm:$0xf]
  %v2080 = vld [vmem:[%s9 + $0x210] sm:$0xf]
  %v2081 = vld [vmem:[%s9 + $0x214] sm:$0xf]
  %v2082 = vld [vmem:[%s9 + $0x218] sm:$0xf]
  %v2083 = vld [vmem:[%s9 + $0x21c] sm:$0xf]
  %v2084 = vld [vmem:[%s9 + $0x220] sm:$0xf]
  %v2085 = vld [vmem:[%s9 + $0x224] sm:$0xf]
  %v2086 = vld [vmem:[%s9 + $0x228] sm:$0xf]
  %v2087 = vld [vmem:[%s9 + $0x22c] sm:$0xf]
  %v2088 = vld [vmem:[%s9 + $0x230] sm:$0xf]
  %v2089 = vld [vmem:[%s9 + $0x234] sm:$0xf]
  %v2090 = vld [vmem:[%s9 + $0x238] sm:$0xf]
  %v2091 = vld [vmem:[%s9 + $0x23c] sm:$0xf]
  %v2092 = vld [vmem:[%s9 + $0x240] sm:$0xf]
  %v2093 = vld [vmem:[%s9 + $0x244] sm:$0xf]
  %v2094 = vld [vmem:[%s9 + $0x248] sm:$0xf]
  %v2095 = vld [vmem:[%s9 + $0x24c] sm:$0xf]
  %v2096 = vld [vmem:[%s9 + $0x250] sm:$0xf]
  %v2097 = vld [vmem:[%s9 + $0x254] sm:$0xf]
  %v2098 = vld [vmem:[%s9 + $0x258] sm:$0xf]
  %v2099 = vld [vmem:[%s9 + $0x25c] sm:$0xf]
  %v2100 = vld [vmem:[%s9 + $0x260] sm:$0xf]
  %v2101 = vld [vmem:[%s9 + $0x264] sm:$0xf]
  %v2102 = vld [vmem:[%s9 + $0x268] sm:$0xf]
  %v2103 = vld [vmem:[%s9 + $0x26c] sm:$0xf]
  %v2104 = vld [vmem:[%s9 + $0x270] sm:$0xf]
  %v2105 = vld [vmem:[%s9 + $0x274] sm:$0xf]
  %v2106 = vld [vmem:[%s9 + $0x278] sm:$0xf]
  %v2107 = vld [vmem:[%s9 + $0x27c] sm:$0xf]
  %v2108 = vld [vmem:[%s9 + $0x280] sm:$0xf]
  %v2109 = vld [vmem:[%s9 + $0x284] sm:$0xf]
  %v2110 = vld [vmem:[%s9 + $0x288] sm:$0xf]
  %v2111 = vld [vmem:[%s9 + $0x28c] sm:$0xf]
  %v2112 = vld [vmem:[%s9 + $0x290] sm:$0xf]
  %v2113 = vld [vmem:[%s9 + $0x294] sm:$0xf]
  %v2114 = vld [vmem:[%s9 + $0x298] sm:$0xf]
  %v2115 = vld [vmem:[%s9 + $0x29c] sm:$0xf]
  %v2116 = vld [vmem:[%s9 + $0x2a0] sm:$0xf]
  %v2117 = vld [vmem:[%s9 + $0x2a4] sm:$0xf]
  %v2118 = vld [vmem:[%s9 + $0x2a8] sm:$0xf]
  %v2119 = vld [vmem:[%s9 + $0x2ac] sm:$0xf]
  %v2120 = vld [vmem:[%s9 + $0x2b0] sm:$0xf]
  %v2121 = vld [vmem:[%s9 + $0x2b4] sm:$0xf]
  %v2122 = vld [vmem:[%s9 + $0x2b8] sm:$0xf]
  %v2123 = vld [vmem:[%s9 + $0x2bc] sm:$0xf]
  %v2124 = vld [vmem:[%s9 + $0x2c0] sm:$0xf]
  %v2125 = vld [vmem:[%s9 + $0x2c4] sm:$0xf]
  %v2126 = vld [vmem:[%s9 + $0x2c8] sm:$0xf]
  %v2127 = vld [vmem:[%s9 + $0x2cc] sm:$0xf]
  %v2128 = vld [vmem:[%s9 + $0x2d0] sm:$0xf]
  %v2129 = vld [vmem:[%s9 + $0x2d4] sm:$0xf]
  %v2130 = vld [vmem:[%s9 + $0x2d8] sm:$0xf]
  %v2131 = vld [vmem:[%s9 + $0x2dc] sm:$0xf]
  %v2132 = vld [vmem:[%s9 + $0x2e0] sm:$0xf]
  %v2133 = vld [vmem:[%s9 + $0x2e4] sm:$0xf]
  %v2134 = vld [vmem:[%s9 + $0x2e8] sm:$0xf]
  %v2135 = vld [vmem:[%s9 + $0x2ec] sm:$0xf]
  %v2136 = vld [vmem:[%s9 + $0x2f0] sm:$0xf]
  %v2137 = vld [vmem:[%s9 + $0x2f4] sm:$0xf]
  %v2138 = vld [vmem:[%s9 + $0x2f8] sm:$0xf]
  %v2139 = vld [vmem:[%s9 + $0x2fc] sm:$0xf]
  %v2140 = vld [vmem:[%s9 + $0x300] sm:$0xf]
  %v2141 = vld [vmem:[%s9 + $0x304] sm:$0xf]
  %v2142 = vld [vmem:[%s9 + $0x308] sm:$0xf]
  %v2143 = vld [vmem:[%s9 + $0x30c] sm:$0xf]
  %v2144 = vld [vmem:[%s9 + $0x310] sm:$0xf]
  %v2145 = vld [vmem:[%s9 + $0x314] sm:$0xf]
  %v2146 = vld [vmem:[%s9 + $0x318] sm:$0xf]
  %v2147 = vld [vmem:[%s9 + $0x31c] sm:$0xf]
  %v2148 = vld [vmem:[%s9 + $0x320] sm:$0xf]
  %v2149 = vld [vmem:[%s9 + $0x324] sm:$0xf]
  %v2150 = vld [vmem:[%s9 + $0x328] sm:$0xf]
  %v2151 = vld [vmem:[%s9 + $0x32c] sm:$0xf]
  %v2152 = vld [vmem:[%s9 + $0x330] sm:$0xf]
  %v2153 = vld [vmem:[%s9 + $0x334] sm:$0xf]
  %v2154 = vld [vmem:[%s9 + $0x338] sm:$0xf]
  %v2155 = vld [vmem:[%s9 + $0x33c] sm:$0xf]
  %v2156 = vld [vmem:[%s9 + $0x340] sm:$0xf]
  %v2157 = vld [vmem:[%s9 + $0x344] sm:$0xf]
  %v2158 = vld [vmem:[%s9 + $0x348] sm:$0xf]
  %v2159 = vld [vmem:[%s9 + $0x34c] sm:$0xf]
  %v2160 = vld [vmem:[%s9 + $0x350] sm:$0xf]
  %v2161 = vld [vmem:[%s9 + $0x354] sm:$0xf]
  %v2162 = vld [vmem:[%s9 + $0x358] sm:$0xf]
  %v2163 = vld [vmem:[%s9 + $0x35c] sm:$0xf]
  %v2164 = vld [vmem:[%s9 + $0x360] sm:$0xf]
  %v2165 = vld [vmem:[%s9 + $0x364] sm:$0xf]
  %v2166 = vld [vmem:[%s9 + $0x368] sm:$0xf]
  %v2167 = vld [vmem:[%s9 + $0x36c] sm:$0xf]
  %v2168 = vld [vmem:[%s9 + $0x370] sm:$0xf]
  %v2169 = vld [vmem:[%s9 + $0x374] sm:$0xf]
  %v2170 = vld [vmem:[%s9 + $0x378] sm:$0xf]
  %v2171 = vld [vmem:[%s9 + $0x37c] sm:$0xf]
  %v2172 = vld [vmem:[%s9 + $0x380] sm:$0xf]
  %v2173 = vld [vmem:[%s9 + $0x384] sm:$0xf]
  %v2174 = vld [vmem:[%s9 + $0x388] sm:$0xf]
  %v2175 = vld [vmem:[%s9 + $0x38c] sm:$0xf]
  %v2176 = vld [vmem:[%s9 + $0x390] sm:$0xf]
  %v2177 = vld [vmem:[%s9 + $0x394] sm:$0xf]
  %v2178 = vld [vmem:[%s9 + $0x398] sm:$0xf]
  %v2179 = vld [vmem:[%s9 + $0x39c] sm:$0xf]
  %v2180 = vld [vmem:[%s9 + $0x3a0] sm:$0xf]
  %v2181 = vld [vmem:[%s9 + $0x3a4] sm:$0xf]
  %v2182 = vld [vmem:[%s9 + $0x3a8] sm:$0xf]
  %v2183 = vld [vmem:[%s9 + $0x3ac] sm:$0xf]
  %v2184 = vld [vmem:[%s9 + $0x3b0] sm:$0xf]
  %v2185 = vld [vmem:[%s9 + $0x3b4] sm:$0xf]
  %v2186 = vld [vmem:[%s9 + $0x3b8] sm:$0xf]
  %v2187 = vld [vmem:[%s9 + $0x3bc] sm:$0xf]
  %v2188 = vld [vmem:[%s9 + $0x3c0] sm:$0xf]
  %v2189 = vld [vmem:[%s9 + $0x3c4] sm:$0xf]
  %v2190 = vld [vmem:[%s9 + $0x3c8] sm:$0xf]
  %v2191 = vld [vmem:[%s9 + $0x3cc] sm:$0xf]
  %v2192 = vld [vmem:[%s9 + $0x3d0] sm:$0xf]
  %v2193 = vld [vmem:[%s9 + $0x3d4] sm:$0xf]
  %v2194 = vld [vmem:[%s9 + $0x3d8] sm:$0xf]
  %v2195 = vld [vmem:[%s9 + $0x3dc] sm:$0xf]
  %v2196 = vld [vmem:[%s9 + $0x3e0] sm:$0xf]
  %v2197 = vld [vmem:[%s9 + $0x3e4] sm:$0xf]
  %v2198 = vld [vmem:[%s9 + $0x3e8] sm:$0xf]
  %v2199 = vld [vmem:[%s9 + $0x3ec] sm:$0xf]
  %v2200 = vld [vmem:[%s9 + $0x3f0] sm:$0xf]
  %v2201 = vld [vmem:[%s9 + $0x3f4] sm:$0xf]
  %v2202 = vld [vmem:[%s9 + $0x3f8] sm:$0xf]
  %v2203 = vld [vmem:[%s9 + $0x3fc] sm:$0xf]
  %v2204 = vunpack.c.l.bf16 %v1948
  %v2205 = vunpack.c.l.bf16 %v1949
  %v2206 = vunpack.c.l.bf16 %v1950
  %v2207 = vunpack.c.l.bf16 %v1951
  %v2208 = vunpack.c.l.bf16 %v1952
  %v2209 = vunpack.c.l.bf16 %v1953
  %v2210 = vunpack.c.l.bf16 %v1954
  %v2211 = vunpack.c.l.bf16 %v1955
  %v2212 = vunpack.c.l.bf16 %v1956
  %v2213 = vunpack.c.l.bf16 %v1957
  %v2214 = vunpack.c.l.bf16 %v1958
  %v2215 = vunpack.c.l.bf16 %v1959
  %v2216 = vunpack.c.l.bf16 %v1960
  %v2217 = vunpack.c.l.bf16 %v1961
  %v2218 = vunpack.c.l.bf16 %v1962
  %v2219 = vunpack.c.l.bf16 %v1963
  %v2220 = vunpack.c.l.bf16 %v1964
  %v2221 = vunpack.c.l.bf16 %v1965
  %v2222 = vunpack.c.l.bf16 %v1966
  %v2223 = vunpack.c.l.bf16 %v1967
  %v2224 = vunpack.c.l.bf16 %v1968
  %v2225 = vunpack.c.l.bf16 %v1969
  %v2226 = vunpack.c.l.bf16 %v1970
  %v2227 = vunpack.c.l.bf16 %v1971
  %v2228 = vunpack.c.l.bf16 %v1972
  %v2229 = vunpack.c.l.bf16 %v1973
  %v2230 = vunpack.c.l.bf16 %v1974
  %v2231 = vunpack.c.l.bf16 %v1975
  %v2232 = vunpack.c.l.bf16 %v1976
  %v2233 = vunpack.c.l.bf16 %v1977
  %v2234 = vunpack.c.l.bf16 %v1978
  %v2235 = vunpack.c.l.bf16 %v1979
  %v2236 = vunpack.c.l.bf16 %v1980
  %v2237 = vunpack.c.l.bf16 %v1981
  %v2238 = vunpack.c.l.bf16 %v1982
  %v2239 = vunpack.c.l.bf16 %v1983
  %v2240 = vunpack.c.l.bf16 %v1984
  %v2241 = vunpack.c.l.bf16 %v1985
  %v2242 = vunpack.c.l.bf16 %v1986
  %v2243 = vunpack.c.l.bf16 %v1987
  %v2244 = vunpack.c.l.bf16 %v1988
  %v2245 = vunpack.c.l.bf16 %v1989
  %v2246 = vunpack.c.l.bf16 %v1990
  %v2247 = vunpack.c.l.bf16 %v1991
  %v2248 = vunpack.c.l.bf16 %v1992
  %v2249 = vunpack.c.l.bf16 %v1993
  %v2250 = vunpack.c.l.bf16 %v1994
  %v2251 = vunpack.c.l.bf16 %v1995
  %v2252 = vunpack.c.l.bf16 %v1996
  %v2253 = vunpack.c.l.bf16 %v1997
  %v2254 = vunpack.c.l.bf16 %v1998
  %v2255 = vunpack.c.l.bf16 %v1999
  %v2256 = vunpack.c.l.bf16 %v2000
  %v2257 = vunpack.c.l.bf16 %v2001
  %v2258 = vunpack.c.l.bf16 %v2002
  %v2259 = vunpack.c.l.bf16 %v2003
  %v2260 = vunpack.c.l.bf16 %v2004
  %v2261 = vunpack.c.l.bf16 %v2005
  %v2262 = vunpack.c.l.bf16 %v2006
  %v2263 = vunpack.c.l.bf16 %v2007
  %v2264 = vunpack.c.l.bf16 %v2008
  %v2265 = vunpack.c.l.bf16 %v2009
  %v2266 = vunpack.c.l.bf16 %v2010
  %v2267 = vunpack.c.l.bf16 %v2011
  %v2268 = vunpack.c.l.bf16 %v2012
  %v2269 = vunpack.c.l.bf16 %v2013
  %v2270 = vunpack.c.l.bf16 %v2014
  %v2271 = vunpack.c.l.bf16 %v2015
  %v2272 = vunpack.c.l.bf16 %v2016
  %v2273 = vunpack.c.l.bf16 %v2017
  %v2274 = vunpack.c.l.bf16 %v2018
  %v2275 = vunpack.c.l.bf16 %v2019
  %v2276 = vunpack.c.l.bf16 %v2020
  %v2277 = vunpack.c.l.bf16 %v2021
  %v2278 = vunpack.c.l.bf16 %v2022
  %v2279 = vunpack.c.l.bf16 %v2023
  %v2280 = vunpack.c.l.bf16 %v2024
  %v2281 = vunpack.c.l.bf16 %v2025
  %v2282 = vunpack.c.l.bf16 %v2026
  %v2283 = vunpack.c.l.bf16 %v2027
  %v2284 = vunpack.c.l.bf16 %v2028
  %v2285 = vunpack.c.l.bf16 %v2029
  %v2286 = vunpack.c.l.bf16 %v2030
  %v2287 = vunpack.c.l.bf16 %v2031
  %v2288 = vunpack.c.l.bf16 %v2032
  %v2289 = vunpack.c.l.bf16 %v2033
  %v2290 = vunpack.c.l.bf16 %v2034
  %v2291 = vunpack.c.l.bf16 %v2035
  %v2292 = vunpack.c.l.bf16 %v2036
  %v2293 = vunpack.c.l.bf16 %v2037
  %v2294 = vunpack.c.l.bf16 %v2038
  %v2295 = vunpack.c.l.bf16 %v2039
  %v2296 = vunpack.c.l.bf16 %v2040
  %v2297 = vunpack.c.l.bf16 %v2041
  %v2298 = vunpack.c.l.bf16 %v2042
  %v2299 = vunpack.c.l.bf16 %v2043
  %v2300 = vunpack.c.l.bf16 %v2044
  %v2301 = vunpack.c.l.bf16 %v2045
  %v2302 = vunpack.c.l.bf16 %v2046
  %v2303 = vunpack.c.l.bf16 %v2047
  %v2304 = vunpack.c.l.bf16 %v2048
  %v2305 = vunpack.c.l.bf16 %v2049
  %v2306 = vunpack.c.l.bf16 %v2050
  %v2307 = vunpack.c.l.bf16 %v2051
  %v2308 = vunpack.c.l.bf16 %v2052
  %v2309 = vunpack.c.l.bf16 %v2053
  %v2310 = vunpack.c.l.bf16 %v2054
  %v2311 = vunpack.c.l.bf16 %v2055
  %v2312 = vunpack.c.l.bf16 %v2056
  %v2313 = vunpack.c.l.bf16 %v2057
  %v2314 = vunpack.c.l.bf16 %v2058
  %v2315 = vunpack.c.l.bf16 %v2059
  %v2316 = vunpack.c.l.bf16 %v2060
  %v2317 = vunpack.c.l.bf16 %v2061
  %v2318 = vunpack.c.l.bf16 %v2062
  %v2319 = vunpack.c.l.bf16 %v2063
  %v2320 = vunpack.c.l.bf16 %v2064
  %v2321 = vunpack.c.l.bf16 %v2065
  %v2322 = vunpack.c.l.bf16 %v2066
  %v2323 = vunpack.c.l.bf16 %v2067
  %v2324 = vunpack.c.l.bf16 %v2068
  %v2325 = vunpack.c.l.bf16 %v2069
  %v2326 = vunpack.c.l.bf16 %v2070
  %v2327 = vunpack.c.l.bf16 %v2071
  %v2328 = vunpack.c.l.bf16 %v2072
  %v2329 = vunpack.c.l.bf16 %v2073
  %v2330 = vunpack.c.l.bf16 %v2074
  %v2331 = vunpack.c.l.bf16 %v2075
  %v2332 = vunpack.c.l.bf16 %v2076
  %v2333 = vunpack.c.l.bf16 %v2077
  %v2334 = vunpack.c.l.bf16 %v2078
  %v2335 = vunpack.c.l.bf16 %v2079
  %v2336 = vunpack.c.l.bf16 %v2080
  %v2337 = vunpack.c.l.bf16 %v2081
  %v2338 = vunpack.c.l.bf16 %v2082
  %v2339 = vunpack.c.l.bf16 %v2083
  %v2340 = vunpack.c.l.bf16 %v2084
  %v2341 = vunpack.c.l.bf16 %v2085
  %v2342 = vunpack.c.l.bf16 %v2086
  %v2343 = vunpack.c.l.bf16 %v2087
  %v2344 = vunpack.c.l.bf16 %v2088
  %v2345 = vunpack.c.l.bf16 %v2089
  %v2346 = vunpack.c.l.bf16 %v2090
  %v2347 = vunpack.c.l.bf16 %v2091
  %v2348 = vunpack.c.l.bf16 %v2092
  %v2349 = vunpack.c.l.bf16 %v2093
  %v2350 = vunpack.c.l.bf16 %v2094
  %v2351 = vunpack.c.l.bf16 %v2095
  %v2352 = vunpack.c.l.bf16 %v2096
  %v2353 = vunpack.c.l.bf16 %v2097
  %v2354 = vunpack.c.l.bf16 %v2098
  %v2355 = vunpack.c.l.bf16 %v2099
  %v2356 = vunpack.c.l.bf16 %v2100
  %v2357 = vunpack.c.l.bf16 %v2101
  %v2358 = vunpack.c.l.bf16 %v2102
  %v2359 = vunpack.c.l.bf16 %v2103
  %v2360 = vunpack.c.l.bf16 %v2104
  %v2361 = vunpack.c.l.bf16 %v2105
  %v2362 = vunpack.c.l.bf16 %v2106
  %v2363 = vunpack.c.l.bf16 %v2107
  %v2364 = vunpack.c.l.bf16 %v2108
  %v2365 = vunpack.c.l.bf16 %v2109
  %v2366 = vunpack.c.l.bf16 %v2110
  %v2367 = vunpack.c.l.bf16 %v2111
  %v2368 = vunpack.c.l.bf16 %v2112
  %v2369 = vunpack.c.l.bf16 %v2113
  %v2370 = vunpack.c.l.bf16 %v2114
  %v2371 = vunpack.c.l.bf16 %v2115
  %v2372 = vunpack.c.l.bf16 %v2116
  %v2373 = vunpack.c.l.bf16 %v2117
  %v2374 = vunpack.c.l.bf16 %v2118
  %v2375 = vunpack.c.l.bf16 %v2119
  %v2376 = vunpack.c.l.bf16 %v2120
  %v2377 = vunpack.c.l.bf16 %v2121
  %v2378 = vunpack.c.l.bf16 %v2122
  %v2379 = vunpack.c.l.bf16 %v2123
  %v2380 = vunpack.c.l.bf16 %v2124
  %v2381 = vunpack.c.l.bf16 %v2125
  %v2382 = vunpack.c.l.bf16 %v2126
  %v2383 = vunpack.c.l.bf16 %v2127
  %v2384 = vunpack.c.l.bf16 %v2128
  %v2385 = vunpack.c.l.bf16 %v2129
  %v2386 = vunpack.c.l.bf16 %v2130
  %v2387 = vunpack.c.l.bf16 %v2131
  %v2388 = vunpack.c.l.bf16 %v2132
  %v2389 = vunpack.c.l.bf16 %v2133
  %v2390 = vunpack.c.l.bf16 %v2134
  %v2391 = vunpack.c.l.bf16 %v2135
  %v2392 = vunpack.c.l.bf16 %v2136
  %v2393 = vunpack.c.l.bf16 %v2137
  %v2394 = vunpack.c.l.bf16 %v2138
  %v2395 = vunpack.c.l.bf16 %v2139
  %v2396 = vunpack.c.l.bf16 %v2140
  %v2397 = vunpack.c.l.bf16 %v2141
  %v2398 = vunpack.c.l.bf16 %v2142
  %v2399 = vunpack.c.l.bf16 %v2143
  %v2400 = vunpack.c.l.bf16 %v2144
  %v2401 = vunpack.c.l.bf16 %v2145
  %v2402 = vunpack.c.l.bf16 %v2146
  %v2403 = vunpack.c.l.bf16 %v2147
  %v2404 = vunpack.c.l.bf16 %v2148
  %v2405 = vunpack.c.l.bf16 %v2149
  %v2406 = vunpack.c.l.bf16 %v2150
  %v2407 = vunpack.c.l.bf16 %v2151
  %v2408 = vunpack.c.l.bf16 %v2152
  %v2409 = vunpack.c.l.bf16 %v2153
  %v2410 = vunpack.c.l.bf16 %v2154
  %v2411 = vunpack.c.l.bf16 %v2155
  %v2412 = vunpack.c.l.bf16 %v2156
  %v2413 = vunpack.c.l.bf16 %v2157
  %v2414 = vunpack.c.l.bf16 %v2158
  %v2415 = vunpack.c.l.bf16 %v2159
  %v2416 = vunpack.c.l.bf16 %v2160
  %v2417 = vunpack.c.l.bf16 %v2161
  %v2418 = vunpack.c.l.bf16 %v2162
  %v2419 = vunpack.c.l.bf16 %v2163
  %v2420 = vunpack.c.l.bf16 %v2164
  %v2421 = vunpack.c.l.bf16 %v2165
  %v2422 = vunpack.c.l.bf16 %v2166
  %v2423 = vunpack.c.l.bf16 %v2167
  %v2424 = vunpack.c.l.bf16 %v2168
  %v2425 = vunpack.c.l.bf16 %v2169
  %v2426 = vunpack.c.l.bf16 %v2170
  %v2427 = vunpack.c.l.bf16 %v2171
  %v2428 = vunpack.c.l.bf16 %v2172
  %v2429 = vunpack.c.l.bf16 %v2173
  %v2430 = vunpack.c.l.bf16 %v2174
  %v2431 = vunpack.c.l.bf16 %v2175
  %v2432 = vunpack.c.l.bf16 %v2176
  %v2433 = vunpack.c.l.bf16 %v2177
  %v2434 = vunpack.c.l.bf16 %v2178
  %v2435 = vunpack.c.l.bf16 %v2179
  %v2436 = vunpack.c.l.bf16 %v2180
  %v2437 = vunpack.c.l.bf16 %v2181
  %v2438 = vunpack.c.l.bf16 %v2182
  %v2439 = vunpack.c.l.bf16 %v2183
  %v2440 = vunpack.c.l.bf16 %v2184
  %v2441 = vunpack.c.l.bf16 %v2185
  %v2442 = vunpack.c.l.bf16 %v2186
  %v2443 = vunpack.c.l.bf16 %v2187
  %v2444 = vunpack.c.l.bf16 %v2188
  %v2445 = vunpack.c.l.bf16 %v2189
  %v2446 = vunpack.c.l.bf16 %v2190
  %v2447 = vunpack.c.l.bf16 %v2191
  %v2448 = vunpack.c.l.bf16 %v2192
  %v2449 = vunpack.c.l.bf16 %v2193
  %v2450 = vunpack.c.l.bf16 %v2194
  %v2451 = vunpack.c.l.bf16 %v2195
  %v2452 = vunpack.c.l.bf16 %v2196
  %v2453 = vunpack.c.l.bf16 %v2197
  %v2454 = vunpack.c.l.bf16 %v2198
  %v2455 = vunpack.c.l.bf16 %v2199
  %v2456 = vunpack.c.l.bf16 %v2200
  %v2457 = vunpack.c.l.bf16 %v2201
  %v2458 = vunpack.c.l.bf16 %v2202
  %v2459 = vunpack.c.l.bf16 %v2203
  %v2460 = vld [vmem:[%s8] sm:$0xff]
  %v2461 = vld [vmem:[%s8 + $0x8] sm:$0xff]
  %v2464 = vlaneseq
  %v2465 = vshrl.u32 %v2464, 7
  %v2466 = vsub.s32 0, %v2465
  %v2467 = vrot.slane %v2460, %v2466
  %v2468 = vlaneseq
  %v2469 = vshrl.u32 %v2468, 7
  %v2470 = vsub.s32 1, %v2469
  %v2471 = vrot.slane %v2460, %v2470
  %v2472 = vlaneseq
  %v2473 = vshrl.u32 %v2472, 7
  %v2474 = vsub.s32 2, %v2473
  %v2475 = vrot.slane %v2460, %v2474
  %v2476 = vlaneseq
  %v2477 = vshrl.u32 %v2476, 7
  %v2478 = vsub.s32 3, %v2477
  %v2479 = vrot.slane %v2460, %v2478
  %v2480 = vlaneseq
  %v2481 = vshrl.u32 %v2480, 7
  %v2482 = vsub.s32 4, %v2481
  %v2483 = vrot.slane %v2460, %v2482
  %v2484 = vlaneseq
  %v2485 = vshrl.u32 %v2484, 7
  %v2486 = vsub.s32 5, %v2485
  %v2487 = vrot.slane %v2460, %v2486
  %v2488 = vlaneseq
  %v2489 = vshrl.u32 %v2488, 7
  %v2490 = vsub.s32 6, %v2489
  %v2491 = vrot.slane %v2460, %v2490
  %v2492 = vlaneseq
  %v2493 = vshrl.u32 %v2492, 7
  %v2494 = vsub.s32 7, %v2493
  %v2495 = vrot.slane %v2460, %v2494
  %v2496 = vlaneseq
  %v2497 = vshrl.u32 %v2496, 7
  %v2498 = vsub.s32 0, %v2497
  %v2499 = vrot.slane %v2461, %v2498
  %v2500 = vlaneseq
  %v2501 = vshrl.u32 %v2500, 7
  %v2502 = vsub.s32 1, %v2501
  %v2503 = vrot.slane %v2461, %v2502
  %v2504 = vlaneseq
  %v2505 = vshrl.u32 %v2504, 7
  %v2506 = vsub.s32 2, %v2505
  %v2507 = vrot.slane %v2461, %v2506
  %v2508 = vlaneseq
  %v2509 = vshrl.u32 %v2508, 7
  %v2510 = vsub.s32 3, %v2509
  %v2511 = vrot.slane %v2461, %v2510
  %v2512 = vlaneseq
  %v2513 = vshrl.u32 %v2512, 7
  %v2514 = vsub.s32 4, %v2513
  %v2515 = vrot.slane %v2461, %v2514
  %v2516 = vlaneseq
  %v2517 = vshrl.u32 %v2516, 7
  %v2518 = vsub.s32 5, %v2517
  %v2519 = vrot.slane %v2461, %v2518
  %v2520 = vlaneseq
  %v2521 = vshrl.u32 %v2520, 7
  %v2522 = vsub.s32 6, %v2521
  %v2523 = vrot.slane %v2461, %v2522
  %v2524 = vlaneseq
  %v2525 = vshrl.u32 %v2524, 7
  %v2526 = vsub.s32 7, %v2525
  %v2527 = vrot.slane %v2461, %v2526
  %v2545 = vsel %vm179, %v1754, 0
  %v2548 = vsel %vm179, %v1755, 0
  %2550 = vmatprep.subr.mxu0 %v1821
  %2551 = vmatpush1.msra.mxu0 %v1820
  %2552 = vmatprep.subr.mxu0 %v1837
  %2553 = vmatpush1.msra.mxu0 %v1836
  %2554 = vmatprep.subr.mxu0 %v1853
  %2555 = vmatpush1.msra.mxu0 %v1852
  %2556 = vmatprep.subr.mxu0 %v1869
  %2557 = vmatpush1.msra.mxu0 %v1868
  %2558 = vmatprep.subr.mxu0 %v1885
  %2559 = vmatpush1.msra.mxu0 %v1884
  %2560 = vmatprep.subr.mxu0 %v1901
  %2561 = vmatpush1.msra.mxu0 %v1900
  %2562 = vmatprep.subr.mxu0 %v1917
  %2563 = vmatpush1.msra.mxu0 %v1916
  %2564 = vmatprep.subr.mxu0 %v1933
  %2565 = vmatpush1.msra.mxu0 %v1932
  %2566 = vmatprep.subr.mxu0 0.0
  %2567 = vmatpush1.msra.mxu0 0.0
  %2568 = vmatprep.subr.mxu0 0.0
  %2569 = vmatpush1.msra.mxu0 0.0
  %2570 = vmatprep.subr.mxu0 0.0
  %2571 = vmatpush1.msra.mxu0 0.0
  %2572 = vmatprep.subr.mxu0 0.0
  %2573 = vmatpush1.msra.mxu0 0.0
  %2574 = vmatprep.subr.mxu0 0.0
  %2575 = vmatpush1.msra.mxu0 0.0
  %2576 = vmatprep.subr.mxu0 0.0
  %2577 = vmatpush1.msra.mxu0 0.0
  %2578 = vmatprep.subr.mxu0 0.0
  %2579 = vmatpush1.msra.mxu0 0.0
  %2580 = vmatprep.subr.mxu0 0.0
  %2581 = vmatpush1.msra.mxu0 0.0
  %2582 = vmatprep.subr.mxu0 0.0
  %2583 = vmatpush1.msra.mxu0 0.0
  %2584 = vmatprep.subr.mxu0 0.0
  %2585 = vmatpush1.msra.mxu0 0.0
  %2586 = vmatprep.subr.mxu0 0.0
  %2587 = vmatpush1.msra.mxu0 0.0
  %2588 = vmatprep.subr.mxu0 0.0
  %2589 = vmatpush1.msra.mxu0 0.0
  %2590 = vmatprep.subr.mxu0 0.0
  %2591 = vmatpush1.msra.mxu0 0.0
  %2592 = vmatprep.subr.mxu0 0.0
  %2593 = vmatpush1.msra.mxu0 0.0
  %2594 = vmatprep.subr.mxu0 0.0
  %2595 = vmatpush1.msra.mxu0 0.0
  %2596 = vmatprep.subr.mxu0 0.0
  %2597 = vmatpush1.msra.mxu0 0.0
  %2598 = vmatprep.subr.mxu0 0.0
  %2599 = vmatpush1.msra.mxu0 0.0
  %2600 = vmatprep.subr.mxu0 0.0
  %2601 = vmatpush1.msra.mxu0 0.0
  %2602 = vmatprep.subr.mxu0 0.0
  %2603 = vmatpush1.msra.mxu0 0.0
  %2604 = vmatprep.subr.mxu0 0.0
  %2605 = vmatpush1.msra.mxu0 0.0
  %2606 = vmatprep.subr.mxu0 0.0
  %2607 = vmatpush1.msra.mxu0 0.0
  %2608 = vmatprep.subr.mxu0 0.0
  %2609 = vmatpush1.msra.mxu0 0.0
  %2610 = vmatprep.subr.mxu0 0.0
  %2611 = vmatpush1.msra.mxu0 0.0
  %2612 = vmatprep.subr.mxu0 0.0
  %2613 = vmatpush1.msra.mxu0 0.0
  %2614 = vmatprep.mubr.f32.mxu0 0.0
  %2615 = vmatmul.mubr.f32.gmra.mrb[0].mxu0 %v2545
  %v2616 = vpop.f32.mrb[0].mxu0
  %v2617 = vadd.f32 %v2467, %v2616
  %v2618 = vpop.f32.mrb[0].mxu0
  %v2619 = vadd.f32 %v2471, %v2618
  %2620 = vmatprep.mubr.f32.mxu0 0.0
  %2621 = vmatmul.mubr.f32.gmra.mrb[0].mxu0 %v2548
  %v2622 = vpop.f32.mrb[0].mxu0
  %v2623 = vadd.f32 %v2467, %v2622
  %v2624 = vpop.f32.mrb[0].mxu0
  %v2625 = vadd.f32 %v2471, %v2624
  %2626 = vdwg.mxu0
  %2627 = vmatprep.subr.mxu0 %v1823
  %2628 = vmatpush1.msra.mxu0 %v1822
  %2629 = vmatprep.subr.mxu0 %v1839
  %2630 = vmatpush1.msra.mxu0 %v1838
  %2631 = vmatprep.subr.mxu0 %v1855
  %2632 = vmatpush1.msra.mxu0 %v1854
  %2633 = vmatprep.subr.mxu0 %v1871
  %2634 = vmatpush1.msra.mxu0 %v1870
  %2635 = vmatprep.subr.mxu0 %v1887
  %2636 = vmatpush1.msra.mxu0 %v1886
  %2637 = vmatprep.subr.mxu0 %v1903
  %2638 = vmatpush1.msra.mxu0 %v1902
  %2639 = vmatprep.subr.mxu0 %v1919
  %2640 = vmatpush1.msra.mxu0 %v1918
  %2641 = vmatprep.subr.mxu0 %v1935
  %2642 = vmatpush1.msra.mxu0 %v1934
  %2643 = vmatprep.subr.mxu0 0.0
  %2644 = vmatpush1.msra.mxu0 0.0
  %2645 = vmatprep.subr.mxu0 0.0
  %2646 = vmatpush1.msra.mxu0 0.0
  %2647 = vmatprep.subr.mxu0 0.0
  %2648 = vmatpush1.msra.mxu0 0.0
  %2649 = vmatprep.subr.mxu0 0.0
  %2650 = vmatpush1.msra.mxu0 0.0
  %2651 = vmatprep.subr.mxu0 0.0
  %2652 = vmatpush1.msra.mxu0 0.0
  %2653 = vmatprep.subr.mxu0 0.0
  %2654 = vmatpush1.msra.mxu0 0.0
  %2655 = vmatprep.subr.mxu0 0.0
  %2656 = vmatpush1.msra.mxu0 0.0
  %2657 = vmatprep.subr.mxu0 0.0
  %2658 = vmatpush1.msra.mxu0 0.0
  %2659 = vmatprep.subr.mxu0 0.0
  %2660 = vmatpush1.msra.mxu0 0.0
  %2661 = vmatprep.subr.mxu0 0.0
  %2662 = vmatpush1.msra.mxu0 0.0
  %2663 = vmatprep.subr.mxu0 0.0
  %2664 = vmatpush1.msra.mxu0 0.0
  %2665 = vmatprep.subr.mxu0 0.0
  %2666 = vmatpush1.msra.mxu0 0.0
  %2667 = vmatprep.subr.mxu0 0.0
  %2668 = vmatpush1.msra.mxu0 0.0
  %2669 = vmatprep.subr.mxu0 0.0
  %2670 = vmatpush1.msra.mxu0 0.0
  %2671 = vmatprep.subr.mxu0 0.0
  %2672 = vmatpush1.msra.mxu0 0.0
  %2673 = vmatprep.subr.mxu0 0.0
  %2674 = vmatpush1.msra.mxu0 0.0
  %2675 = vmatprep.subr.mxu0 0.0
  %2676 = vmatpush1.msra.mxu0 0.0
  %2677 = vmatprep.subr.mxu0 0.0
  %2678 = vmatpush1.msra.mxu0 0.0
  %2679 = vmatprep.subr.mxu0 0.0
  %2680 = vmatpush1.msra.mxu0 0.0
  %2681 = vmatprep.subr.mxu0 0.0
  %2682 = vmatpush1.msra.mxu0 0.0
  %2683 = vmatprep.subr.mxu0 0.0
  %2684 = vmatpush1.msra.mxu0 0.0
  %2685 = vmatprep.subr.mxu0 0.0
  %2686 = vmatpush1.msra.mxu0 0.0
  %2687 = vmatprep.subr.mxu0 0.0
  %2688 = vmatpush1.msra.mxu0 0.0
  %2689 = vmatprep.subr.mxu0 0.0
  %2690 = vmatpush1.msra.mxu0 0.0
  %2691 = vmatprep.mubr.f32.mxu0 0.0
  %2692 = vmatmul.mubr.f32.gmra.mrb[0].mxu0 %v2545
  %v2693 = vpop.f32.mrb[0].mxu0
  %v2694 = vadd.f32 %v2475, %v2693
  %v2695 = vpop.f32.mrb[0].mxu0
  %v2696 = vadd.f32 %v2479, %v2695
  %2697 = vmatprep.mubr.f32.mxu0 0.0
  %2698 = vmatmul.mubr.f32.gmra.mrb[0].mxu0 %v2548
  %v2699 = vpop.f32.mrb[0].mxu0
  %v2700 = vadd.f32 %v2475, %v2699
  %v2701 = vpop.f32.mrb[0].mxu0
  %v2702 = vadd.f32 %v2479, %v2701
  %2703 = vdwg.mxu0
  %2704 = vmatprep.subr.mxu0 %v1825
  %2705 = vmatpush1.msra.mxu0 %v1824
  %2706 = vmatprep.subr.mxu0 %v1841
  %2707 = vmatpush1.msra.mxu0 %v1840
  %2708 = vmatprep.subr.mxu0 %v1857
  %2709 = vmatpush1.msra.mxu0 %v1856
  %2710 = vmatprep.subr.mxu0 %v1873
  %2711 = vmatpush1.msra.mxu0 %v1872
  %2712 = vmatprep.subr.mxu0 %v1889
  %2713 = vmatpush1.msra.mxu0 %v1888
  %2714 = vmatprep.subr.mxu0 %v1905
  %2715 = vmatpush1.msra.mxu0 %v1904
  %2716 = vmatprep.subr.mxu0 %v1921
  %2717 = vmatpush1.msra.mxu0 %v1920
  %2718 = vmatprep.subr.mxu0 %v1937
  %2719 = vmatpush1.msra.mxu0 %v1936
  %2720 = vmatprep.subr.mxu0 0.0
  %2721 = vmatpush1.msra.mxu0 0.0
  %2722 = vmatprep.subr.mxu0 0.0
  %2723 = vmatpush1.msra.mxu0 0.0
  %2724 = vmatprep.subr.mxu0 0.0
  %2725 = vmatpush1.msra.mxu0 0.0
  %2726 = vmatprep.subr.mxu0 0.0
  %2727 = vmatpush1.msra.mxu0 0.0
  %2728 = vmatprep.subr.mxu0 0.0
  %2729 = vmatpush1.msra.mxu0 0.0
  %2730 = vmatprep.subr.mxu0 0.0
  %2731 = vmatpush1.msra.mxu0 0.0
  %2732 = vmatprep.subr.mxu0 0.0
  %2733 = vmatpush1.msra.mxu0 0.0
  %2734 = vmatprep.subr.mxu0 0.0
  %2735 = vmatpush1.msra.mxu0 0.0
  %2736 = vmatprep.subr.mxu0 0.0
  %2737 = vmatpush1.msra.mxu0 0.0
  %2738 = vmatprep.subr.mxu0 0.0
  %2739 = vmatpush1.msra.mxu0 0.0
  %2740 = vmatprep.subr.mxu0 0.0
  %2741 = vmatpush1.msra.mxu0 0.0
  %2742 = vmatprep.subr.mxu0 0.0
  %2743 = vmatpush1.msra.mxu0 0.0
  %2744 = vmatprep.subr.mxu0 0.0
  %2745 = vmatpush1.msra.mxu0 0.0
  %2746 = vmatprep.subr.mxu0 0.0
  %2747 = vmatpush1.msra.mxu0 0.0
  %2748 = vmatprep.subr.mxu0 0.0
  %2749 = vmatpush1.msra.mxu0 0.0
  %2750 = vmatprep.subr.mxu0 0.0
  %2751 = vmatpush1.msra.mxu0 0.0
  %2752 = vmatprep.subr.mxu0 0.0
  %2753 = vmatpush1.msra.mxu0 0.0
  %2754 = vmatprep.subr.mxu0 0.0
  %2755 = vmatpush1.msra.mxu0 0.0
  %2756 = vmatprep.subr.mxu0 0.0
  %2757 = vmatpush1.msra.mxu0 0.0
  %2758 = vmatprep.subr.mxu0 0.0
  %2759 = vmatpush1.msra.mxu0 0.0
  %2760 = vmatprep.subr.mxu0 0.0
  %2761 = vmatpush1.msra.mxu0 0.0
  %2762 = vmatprep.subr.mxu0 0.0
  %2763 = vmatpush1.msra.mxu0 0.0
  %2764 = vmatprep.subr.mxu0 0.0
  %2765 = vmatpush1.msra.mxu0 0.0
  %2766 = vmatprep.subr.mxu0 0.0
  %2767 = vmatpush1.msra.mxu0 0.0
  %2768 = vmatprep.mubr.f32.mxu0 0.0
  %2769 = vmatmul.mubr.f32.gmra.mrb[0].mxu0 %v2545
  %v2770 = vpop.f32.mrb[0].mxu0
  %v2771 = vadd.f32 %v2483, %v2770
  %v2772 = vpop.f32.mrb[0].mxu0
  %v2773 = vadd.f32 %v2487, %v2772
  %2774 = vmatprep.mubr.f32.mxu0 0.0
  %2775 = vmatmul.mubr.f32.gmra.mrb[0].mxu0 %v2548
  %v2776 = vpop.f32.mrb[0].mxu0
  %v2777 = vadd.f32 %v2483, %v2776
  %v2778 = vpop.f32.mrb[0].mxu0
  %v2779 = vadd.f32 %v2487, %v2778
  %2780 = vdwg.mxu0
  %2781 = vmatprep.subr.mxu0 %v1827
  %2782 = vmatpush1.msra.mxu0 %v1826
  %2783 = vmatprep.subr.mxu0 %v1843
  %2784 = vmatpush1.msra.mxu0 %v1842
  %2785 = vmatprep.subr.mxu0 %v1859
  %2786 = vmatpush1.msra.mxu0 %v1858
  %2787 = vmatprep.subr.mxu0 %v1875
  %2788 = vmatpush1.msra.mxu0 %v1874
  %2789 = vmatprep.subr.mxu0 %v1891
  %2790 = vmatpush1.msra.mxu0 %v1890
  %2791 = vmatprep.subr.mxu0 %v1907
  %2792 = vmatpush1.msra.mxu0 %v1906
  %2793 = vmatprep.subr.mxu0 %v1923
  %2794 = vmatpush1.msra.mxu0 %v1922
  %2795 = vmatprep.subr.mxu0 %v1939
  %2796 = vmatpush1.msra.mxu0 %v1938
  %2797 = vmatprep.subr.mxu0 0.0
  %2798 = vmatpush1.msra.mxu0 0.0
  %2799 = vmatprep.subr.mxu0 0.0
  %2800 = vmatpush1.msra.mxu0 0.0
  %2801 = vmatprep.subr.mxu0 0.0
  %2802 = vmatpush1.msra.mxu0 0.0
  %2803 = vmatprep.subr.mxu0 0.0
  %2804 = vmatpush1.msra.mxu0 0.0
  %2805 = vmatprep.subr.mxu0 0.0
  %2806 = vmatpush1.msra.mxu0 0.0
  %2807 = vmatprep.subr.mxu0 0.0
  %2808 = vmatpush1.msra.mxu0 0.0
  %2809 = vmatprep.subr.mxu0 0.0
  %2810 = vmatpush1.msra.mxu0 0.0
  %2811 = vmatprep.subr.mxu0 0.0
  %2812 = vmatpush1.msra.mxu0 0.0
  %2813 = vmatprep.subr.mxu0 0.0
  %2814 = vmatpush1.msra.mxu0 0.0
  %2815 = vmatprep.subr.mxu0 0.0
  %2816 = vmatpush1.msra.mxu0 0.0
  %2817 = vmatprep.subr.mxu0 0.0
  %2818 = vmatpush1.msra.mxu0 0.0
  %2819 = vmatprep.subr.mxu0 0.0
  %2820 = vmatpush1.msra.mxu0 0.0
  %2821 = vmatprep.subr.mxu0 0.0
  %2822 = vmatpush1.msra.mxu0 0.0
  %2823 = vmatprep.subr.mxu0 0.0
  %2824 = vmatpush1.msra.mxu0 0.0
  %2825 = vmatprep.subr.mxu0 0.0
  %2826 = vmatpush1.msra.mxu0 0.0
  %2827 = vmatprep.subr.mxu0 0.0
  %2828 = vmatpush1.msra.mxu0 0.0
  %2829 = vmatprep.subr.mxu0 0.0
  %2830 = vmatpush1.msra.mxu0 0.0
  %2831 = vmatprep.subr.mxu0 0.0
  %2832 = vmatpush1.msra.mxu0 0.0
  %2833 = vmatprep.subr.mxu0 0.0
  %2834 = vmatpush1.msra.mxu0 0.0
  %2835 = vmatprep.subr.mxu0 0.0
  %2836 = vmatpush1.msra.mxu0 0.0
  %2837 = vmatprep.subr.mxu0 0.0
  %2838 = vmatpush1.msra.mxu0 0.0
  %2839 = vmatprep.subr.mxu0 0.0
  %2840 = vmatpush1.msra.mxu0 0.0
  %2841 = vmatprep.subr.mxu0 0.0
  %2842 = vmatpush1.msra.mxu0 0.0
  %2843 = vmatprep.subr.mxu0 0.0
  %2844 = vmatpush1.msra.mxu0 0.0
  %2845 = vmatprep.mubr.f32.mxu0 0.0
  %2846 = vmatmul.mubr.f32.gmra.mrb[0].mxu0 %v2545
  %v2847 = vpop.f32.mrb[0].mxu0
  %v2848 = vadd.f32 %v2491, %v2847
  %v2849 = vpop.f32.mrb[0].mxu0
  %v2850 = vadd.f32 %v2495, %v2849
  %2851 = vmatprep.mubr.f32.mxu0 0.0
  %2852 = vmatmul.mubr.f32.gmra.mrb[0].mxu0 %v2548
  %v2853 = vpop.f32.mrb[0].mxu0
  %v2854 = vadd.f32 %v2491, %v2853
  %v2855 = vpop.f32.mrb[0].mxu0
  %v2856 = vadd.f32 %v2495, %v2855
  %2857 = vdwg.mxu0
  %2858 = vmatprep.subr.mxu0 %v1829
  %2859 = vmatpush1.msra.mxu0 %v1828
  %2860 = vmatprep.subr.mxu0 %v1845
  %2861 = vmatpush1.msra.mxu0 %v1844
  %2862 = vmatprep.subr.mxu0 %v1861
  %2863 = vmatpush1.msra.mxu0 %v1860
  %2864 = vmatprep.subr.mxu0 %v1877
  %2865 = vmatpush1.msra.mxu0 %v1876
  %2866 = vmatprep.subr.mxu0 %v1893
  %2867 = vmatpush1.msra.mxu0 %v1892
  %2868 = vmatprep.subr.mxu0 %v1909
  %2869 = vmatpush1.msra.mxu0 %v1908
  %2870 = vmatprep.subr.mxu0 %v1925
  %2871 = vmatpush1.msra.mxu0 %v1924
  %2872 = vmatprep.subr.mxu0 %v1941
  %2873 = vmatpush1.msra.mxu0 %v1940
  %2874 = vmatprep.subr.mxu0 0.0
  %2875 = vmatpush1.msra.mxu0 0.0
  %2876 = vmatprep.subr.mxu0 0.0
  %2877 = vmatpush1.msra.mxu0 0.0
  %2878 = vmatprep.subr.mxu0 0.0
  %2879 = vmatpush1.msra.mxu0 0.0
  %2880 = vmatprep.subr.mxu0 0.0
  %2881 = vmatpush1.msra.mxu0 0.0
  %2882 = vmatprep.subr.mxu0 0.0
  %2883 = vmatpush1.msra.mxu0 0.0
  %2884 = vmatprep.subr.mxu0 0.0
  %2885 = vmatpush1.msra.mxu0 0.0
  %2886 = vmatprep.subr.mxu0 0.0
  %2887 = vmatpush1.msra.mxu0 0.0
  %2888 = vmatprep.subr.mxu0 0.0
  %2889 = vmatpush1.msra.mxu0 0.0
  %2890 = vmatprep.subr.mxu0 0.0
  %2891 = vmatpush1.msra.mxu0 0.0
  %2892 = vmatprep.subr.mxu0 0.0
  %2893 = vmatpush1.msra.mxu0 0.0
  %2894 = vmatprep.subr.mxu0 0.0
  %2895 = vmatpush1.msra.mxu0 0.0
  %2896 = vmatprep.subr.mxu0 0.0
  %2897 = vmatpush1.msra.mxu0 0.0
  %2898 = vmatprep.subr.mxu0 0.0
  %2899 = vmatpush1.msra.mxu0 0.0
  %2900 = vmatprep.subr.mxu0 0.0
  %2901 = vmatpush1.msra.mxu0 0.0
  %2902 = vmatprep.subr.mxu0 0.0
  %2903 = vmatpush1.msra.mxu0 0.0
  %2904 = vmatprep.subr.mxu0 0.0
  %2905 = vmatpush1.msra.mxu0 0.0
  %2906 = vmatprep.subr.mxu0 0.0
  %2907 = vmatpush1.msra.mxu0 0.0
  %2908 = vmatprep.subr.mxu0 0.0
  %2909 = vmatpush1.msra.mxu0 0.0
  %2910 = vmatprep.subr.mxu0 0.0
  %2911 = vmatpush1.msra.mxu0 0.0
  %2912 = vmatprep.subr.mxu0 0.0
  %2913 = vmatpush1.msra.mxu0 0.0
  %2914 = vmatprep.subr.mxu0 0.0
  %2915 = vmatpush1.msra.mxu0 0.0
  %2916 = vmatprep.subr.mxu0 0.0
  %2917 = vmatpush1.msra.mxu0 0.0
  %2918 = vmatprep.subr.mxu0 0.0
  %2919 = vmatpush1.msra.mxu0 0.0
  %2920 = vmatprep.subr.mxu0 0.0
  %2921 = vmatpush1.msra.mxu0 0.0
  %2922 = vmatprep.mubr.f32.mxu0 0.0
  %2923 = vmatmul.mubr.f32.gmra.mrb[0].mxu0 %v2545
  %v2924 = vpop.f32.mrb[0].mxu0
  %v2925 = vadd.f32 %v2499, %v2924
  %v2926 = vpop.f32.mrb[0].mxu0
  %v2927 = vadd.f32 %v2503, %v2926
  %2928 = vmatprep.mubr.f32.mxu0 0.0
  %2929 = vmatmul.mubr.f32.gmra.mrb[0].mxu0 %v2548
  %v2930 = vpop.f32.mrb[0].mxu0
  %v2931 = vadd.f32 %v2499, %v2930
  %v2932 = vpop.f32.mrb[0].mxu0
  %v2933 = vadd.f32 %v2503, %v2932
  %2934 = vdwg.mxu0
  %2935 = vmatprep.subr.mxu0 %v1831
  %2936 = vmatpush1.msra.mxu0 %v1830
  %2937 = vmatprep.subr.mxu0 %v1847
  %2938 = vmatpush1.msra.mxu0 %v1846
  %2939 = vmatprep.subr.mxu0 %v1863
  %2940 = vmatpush1.msra.mxu0 %v1862
  %2941 = vmatprep.subr.mxu0 %v1879
  %2942 = vmatpush1.msra.mxu0 %v1878
  %2943 = vmatprep.subr.mxu0 %v1895
  %2944 = vmatpush1.msra.mxu0 %v1894
  %2945 = vmatprep.subr.mxu0 %v1911
  %2946 = vmatpush1.msra.mxu0 %v1910
  %2947 = vmatprep.subr.mxu0 %v1927
  %2948 = vmatpush1.msra.mxu0 %v1926
  %2949 = vmatprep.subr.mxu0 %v1943
  %2950 = vmatpush1.msra.mxu0 %v1942
  %2951 = vmatprep.subr.mxu0 0.0
  %2952 = vmatpush1.msra.mxu0 0.0
  %2953 = vmatprep.subr.mxu0 0.0
  %2954 = vmatpush1.msra.mxu0 0.0
  %2955 = vmatprep.subr.mxu0 0.0
  %2956 = vmatpush1.msra.mxu0 0.0
  %2957 = vmatprep.subr.mxu0 0.0
  %2958 = vmatpush1.msra.mxu0 0.0
  %2959 = vmatprep.subr.mxu0 0.0
  %2960 = vmatpush1.msra.mxu0 0.0
  %2961 = vmatprep.subr.mxu0 0.0
  %2962 = vmatpush1.msra.mxu0 0.0
  %2963 = vmatprep.subr.mxu0 0.0
  %2964 = vmatpush1.msra.mxu0 0.0
  %2965 = vmatprep.subr.mxu0 0.0
  %2966 = vmatpush1.msra.mxu0 0.0
  %2967 = vmatprep.subr.mxu0 0.0
  %2968 = vmatpush1.msra.mxu0 0.0
  %2969 = vmatprep.subr.mxu0 0.0
  %2970 = vmatpush1.msra.mxu0 0.0
  %2971 = vmatprep.subr.mxu0 0.0
  %2972 = vmatpush1.msra.mxu0 0.0
  %2973 = vmatprep.subr.mxu0 0.0
  %2974 = vmatpush1.msra.mxu0 0.0
  %2975 = vmatprep.subr.mxu0 0.0
  %2976 = vmatpush1.msra.mxu0 0.0
  %2977 = vmatprep.subr.mxu0 0.0
  %2978 = vmatpush1.msra.mxu0 0.0
  %2979 = vmatprep.subr.mxu0 0.0
  %2980 = vmatpush1.msra.mxu0 0.0
  %2981 = vmatprep.subr.mxu0 0.0
  %2982 = vmatpush1.msra.mxu0 0.0
  %2983 = vmatprep.subr.mxu0 0.0
  %2984 = vmatpush1.msra.mxu0 0.0
  %2985 = vmatprep.subr.mxu0 0.0
  %2986 = vmatpush1.msra.mxu0 0.0
  %2987 = vmatprep.subr.mxu0 0.0
  %2988 = vmatpush1.msra.mxu0 0.0
  %2989 = vmatprep.subr.mxu0 0.0
  %2990 = vmatpush1.msra.mxu0 0.0
  %2991 = vmatprep.subr.mxu0 0.0
  %2992 = vmatpush1.msra.mxu0 0.0
  %2993 = vmatprep.subr.mxu0 0.0
  %2994 = vmatpush1.msra.mxu0 0.0
  %2995 = vmatprep.subr.mxu0 0.0
  %2996 = vmatpush1.msra.mxu0 0.0
  %2997 = vmatprep.subr.mxu0 0.0
  %2998 = vmatpush1.msra.mxu0 0.0
  %2999 = vmatprep.mubr.f32.mxu0 0.0
  %3000 = vmatmul.mubr.f32.gmra.mrb[0].mxu0 %v2545
  %v3001 = vpop.f32.mrb[0].mxu0
  %v3002 = vadd.f32 %v2507, %v3001
  %v3003 = vpop.f32.mrb[0].mxu0
  %v3004 = vadd.f32 %v2511, %v3003
  %3005 = vmatprep.mubr.f32.mxu0 0.0
  %3006 = vmatmul.mubr.f32.gmra.mrb[0].mxu0 %v2548
  %v3007 = vpop.f32.mrb[0].mxu0
  %v3008 = vadd.f32 %v2507, %v3007
  %v3009 = vpop.f32.mrb[0].mxu0
  %v3010 = vadd.f32 %v2511, %v3009
  %3011 = vdwg.mxu0
  %3012 = vmatprep.subr.mxu0 %v1833
  %3013 = vmatpush1.msra.mxu0 %v1832
  %3014 = vmatprep.subr.mxu0 %v1849
  %3015 = vmatpush1.msra.mxu0 %v1848
  %3016 = vmatprep.subr.mxu0 %v1865
  %3017 = vmatpush1.msra.mxu0 %v1864
  %3018 = vmatprep.subr.mxu0 %v1881
  %3019 = vmatpush1.msra.mxu0 %v1880
  %3020 = vmatprep.subr.mxu0 %v1897
  %3021 = vmatpush1.msra.mxu0 %v1896
  %3022 = vmatprep.subr.mxu0 %v1913
  %3023 = vmatpush1.msra.mxu0 %v1912
  %3024 = vmatprep.subr.mxu0 %v1929
  %3025 = vmatpush1.msra.mxu0 %v1928
  %3026 = vmatprep.subr.mxu0 %v1945
  %3027 = vmatpush1.msra.mxu0 %v1944
  %3028 = vmatprep.subr.mxu0 0.0
  %3029 = vmatpush1.msra.mxu0 0.0
  %3030 = vmatprep.subr.mxu0 0.0
  %3031 = vmatpush1.msra.mxu0 0.0
  %3032 = vmatprep.subr.mxu0 0.0
  %3033 = vmatpush1.msra.mxu0 0.0
  %3034 = vmatprep.subr.mxu0 0.0
  %3035 = vmatpush1.msra.mxu0 0.0
  %3036 = vmatprep.subr.mxu0 0.0
  %3037 = vmatpush1.msra.mxu0 0.0
  %3038 = vmatprep.subr.mxu0 0.0
  %3039 = vmatpush1.msra.mxu0 0.0
  %3040 = vmatprep.subr.mxu0 0.0
  %3041 = vmatpush1.msra.mxu0 0.0
  %3042 = vmatprep.subr.mxu0 0.0
  %3043 = vmatpush1.msra.mxu0 0.0
  %3044 = vmatprep.subr.mxu0 0.0
  %3045 = vmatpush1.msra.mxu0 0.0
  %3046 = vmatprep.subr.mxu0 0.0
  %3047 = vmatpush1.msra.mxu0 0.0
  %3048 = vmatprep.subr.mxu0 0.0
  %3049 = vmatpush1.msra.mxu0 0.0
  %3050 = vmatprep.subr.mxu0 0.0
  %3051 = vmatpush1.msra.mxu0 0.0
  %3052 = vmatprep.subr.mxu0 0.0
  %3053 = vmatpush1.msra.mxu0 0.0
  %3054 = vmatprep.subr.mxu0 0.0
  %3055 = vmatpush1.msra.mxu0 0.0
  %3056 = vmatprep.subr.mxu0 0.0
  %3057 = vmatpush1.msra.mxu0 0.0
  %3058 = vmatprep.subr.mxu0 0.0
  %3059 = vmatpush1.msra.mxu0 0.0
  %3060 = vmatprep.subr.mxu0 0.0
  %3061 = vmatpush1.msra.mxu0 0.0
  %3062 = vmatprep.subr.mxu0 0.0
  %3063 = vmatpush1.msra.mxu0 0.0
  %3064 = vmatprep.subr.mxu0 0.0
  %3065 = vmatpush1.msra.mxu0 0.0
  %3066 = vmatprep.subr.mxu0 0.0
  %3067 = vmatpush1.msra.mxu0 0.0
  %3068 = vmatprep.subr.mxu0 0.0
  %3069 = vmatpush1.msra.mxu0 0.0
  %3070 = vmatprep.subr.mxu0 0.0
  %3071 = vmatpush1.msra.mxu0 0.0
  %3072 = vmatprep.subr.mxu0 0.0
  %3073 = vmatpush1.msra.mxu0 0.0
  %3074 = vmatprep.subr.mxu0 0.0
  %3075 = vmatpush1.msra.mxu0 0.0
  %3076 = vmatprep.mubr.f32.mxu0 0.0
  %3077 = vmatmul.mubr.f32.gmra.mrb[0].mxu0 %v2545
  %v3078 = vpop.f32.mrb[0].mxu0
  %v3079 = vadd.f32 %v2515, %v3078
  %v3080 = vpop.f32.mrb[0].mxu0
  %v3081 = vadd.f32 %v2519, %v3080
  %3082 = vmatprep.mubr.f32.mxu0 0.0
  %3083 = vmatmul.mubr.f32.gmra.mrb[0].mxu0 %v2548
  %v3084 = vpop.f32.mrb[0].mxu0
  %v3085 = vadd.f32 %v2515, %v3084
  %v3086 = vpop.f32.mrb[0].mxu0
  %v3087 = vadd.f32 %v2519, %v3086
  %3088 = vdwg.mxu0
  %3089 = vmatprep.subr.mxu0 %v1835
  %3090 = vmatpush1.msra.mxu0 %v1834
  %3091 = vmatprep.subr.mxu0 %v1851
  %3092 = vmatpush1.msra.mxu0 %v1850
  %3093 = vmatprep.subr.mxu0 %v1867
  %3094 = vmatpush1.msra.mxu0 %v1866
  %3095 = vmatprep.subr.mxu0 %v1883
  %3096 = vmatpush1.msra.mxu0 %v1882
  %3097 = vmatprep.subr.mxu0 %v1899
  %3098 = vmatpush1.msra.mxu0 %v1898
  %3099 = vmatprep.subr.mxu0 %v1915
  %3100 = vmatpush1.msra.mxu0 %v1914
  %3101 = vmatprep.subr.mxu0 %v1931
  %3102 = vmatpush1.msra.mxu0 %v1930
  %3103 = vmatprep.subr.mxu0 %v1947
  %3104 = vmatpush1.msra.mxu0 %v1946
  %3105 = vmatprep.subr.mxu0 0.0
  %3106 = vmatpush1.msra.mxu0 0.0
  %3107 = vmatprep.subr.mxu0 0.0
  %3108 = vmatpush1.msra.mxu0 0.0
  %3109 = vmatprep.subr.mxu0 0.0
  %3110 = vmatpush1.msra.mxu0 0.0
  %3111 = vmatprep.subr.mxu0 0.0
  %3112 = vmatpush1.msra.mxu0 0.0
  %3113 = vmatprep.subr.mxu0 0.0
  %3114 = vmatpush1.msra.mxu0 0.0
  %3115 = vmatprep.subr.mxu0 0.0
  %3116 = vmatpush1.msra.mxu0 0.0
  %3117 = vmatprep.subr.mxu0 0.0
  %3118 = vmatpush1.msra.mxu0 0.0
  %3119 = vmatprep.subr.mxu0 0.0
  %3120 = vmatpush1.msra.mxu0 0.0
  %3121 = vmatprep.subr.mxu0 0.0
  %3122 = vmatpush1.msra.mxu0 0.0
  %3123 = vmatprep.subr.mxu0 0.0
  %3124 = vmatpush1.msra.mxu0 0.0
  %3125 = vmatprep.subr.mxu0 0.0
  %3126 = vmatpush1.msra.mxu0 0.0
  %3127 = vmatprep.subr.mxu0 0.0
  %3128 = vmatpush1.msra.mxu0 0.0
  %3129 = vmatprep.subr.mxu0 0.0
  %3130 = vmatpush1.msra.mxu0 0.0
  %3131 = vmatprep.subr.mxu0 0.0
  %3132 = vmatpush1.msra.mxu0 0.0
  %3133 = vmatprep.subr.mxu0 0.0
  %3134 = vmatpush1.msra.mxu0 0.0
  %3135 = vmatprep.subr.mxu0 0.0
  %3136 = vmatpush1.msra.mxu0 0.0
  %3137 = vmatprep.subr.mxu0 0.0
  %3138 = vmatpush1.msra.mxu0 0.0
  %3139 = vmatprep.subr.mxu0 0.0
  %3140 = vmatpush1.msra.mxu0 0.0
  %3141 = vmatprep.subr.mxu0 0.0
  %3142 = vmatpush1.msra.mxu0 0.0
  %3143 = vmatprep.subr.mxu0 0.0
  %3144 = vmatpush1.msra.mxu0 0.0
  %3145 = vmatprep.subr.mxu0 0.0
  %3146 = vmatpush1.msra.mxu0 0.0
  %3147 = vmatprep.subr.mxu0 0.0
  %3148 = vmatpush1.msra.mxu0 0.0
  %3149 = vmatprep.subr.mxu0 0.0
  %3150 = vmatpush1.msra.mxu0 0.0
  %3151 = vmatprep.subr.mxu0 0.0
  %3152 = vmatpush1.msra.mxu0 0.0
  %3153 = vmatprep.mubr.f32.mxu0 0.0
  %3154 = vmatmul.mubr.f32.gmra.mrb[0].mxu0 %v2545
  %v3155 = vpop.f32.mrb[0].mxu0
  %v3156 = vadd.f32 %v2523, %v3155
  %v3157 = vpop.f32.mrb[0].mxu0
  %v3158 = vadd.f32 %v2527, %v3157
  %3159 = vmatprep.mubr.f32.mxu0 0.0
  %3160 = vmatmul.mubr.f32.gmra.mrb[0].mxu0 %v2548
  %v3161 = vpop.f32.mrb[0].mxu0
  %v3162 = vadd.f32 %v2523, %v3161
  %v3163 = vpop.f32.mrb[0].mxu0
  %v3164 = vadd.f32 %v2527, %v3163
  %3165 = vdwg.mxu0
  %v3166 = vmax.f32 %v2617, 0.0
  %v3167 = vmax.f32 %v2619, 0.0
  %v3168 = vmax.f32 %v2694, 0.0
  %v3169 = vmax.f32 %v2696, 0.0
  %v3170 = vmax.f32 %v2771, 0.0
  %v3171 = vmax.f32 %v2773, 0.0
  %v3172 = vmax.f32 %v2848, 0.0
  %v3173 = vmax.f32 %v2850, 0.0
  %v3174 = vmax.f32 %v2925, 0.0
  %v3175 = vmax.f32 %v2927, 0.0
  %v3176 = vmax.f32 %v3002, 0.0
  %v3177 = vmax.f32 %v3004, 0.0
  %v3178 = vmax.f32 %v3079, 0.0
  %v3179 = vmax.f32 %v3081, 0.0
  %v3180 = vmax.f32 %v3156, 0.0
  %v3181 = vmax.f32 %v3158, 0.0
  %v3182 = vmax.f32 %v2623, 0.0
  %v3183 = vmax.f32 %v2625, 0.0
  %v3184 = vmax.f32 %v2700, 0.0
  %v3185 = vmax.f32 %v2702, 0.0
  %v3186 = vmax.f32 %v2777, 0.0
  %v3187 = vmax.f32 %v2779, 0.0
  %v3188 = vmax.f32 %v2854, 0.0
  %v3189 = vmax.f32 %v2856, 0.0
  %v3190 = vmax.f32 %v2931, 0.0
  %v3191 = vmax.f32 %v2933, 0.0
  %v3192 = vmax.f32 %v3008, 0.0
  %v3193 = vmax.f32 %v3010, 0.0
  %v3194 = vmax.f32 %v3085, 0.0
  %v3195 = vmax.f32 %v3087, 0.0
  %v3196 = vmax.f32 %v3162, 0.0
  %v3197 = vmax.f32 %v3164, 0.0
  %v3198 = vld [vmem:[%s10] sm:$0x1]
  %v3200 = vlaneseq
  %v3201 = vshrl.u32 %v3200, 7
  %v3202 = vsub.s32 0, %v3201
  %v3203 = vrot.slane %v3198, %v3202
  %3205 = vmatprep.subr.mxu0 0.0
  %3206 = vmatpush1.msra.mxu0 %v2204
  %3207 = vmatprep.subr.mxu0 0.0
  %3208 = vmatpush1.msra.mxu0 %v2205
  %3209 = vmatprep.subr.mxu0 0.0
  %3210 = vmatpush1.msra.mxu0 %v2206
  %3211 = vmatprep.subr.mxu0 0.0
  %3212 = vmatpush1.msra.mxu0 %v2207
  %3213 = vmatprep.subr.mxu0 0.0
  %3214 = vmatpush1.msra.mxu0 %v2208
  %3215 = vmatprep.subr.mxu0 0.0
  %3216 = vmatpush1.msra.mxu0 %v2209
  %3217 = vmatprep.subr.mxu0 0.0
  %3218 = vmatpush1.msra.mxu0 %v2210
  %3219 = vmatprep.subr.mxu0 0.0
  %3220 = vmatpush1.msra.mxu0 %v2211
  %3221 = vmatprep.subr.mxu0 0.0
  %3222 = vmatpush1.msra.mxu0 %v2212
  %3223 = vmatprep.subr.mxu0 0.0
  %3224 = vmatpush1.msra.mxu0 %v2213
  %3225 = vmatprep.subr.mxu0 0.0
  %3226 = vmatpush1.msra.mxu0 %v2214
  %3227 = vmatprep.subr.mxu0 0.0
  %3228 = vmatpush1.msra.mxu0 %v2215
  %3229 = vmatprep.subr.mxu0 0.0
  %3230 = vmatpush1.msra.mxu0 %v2216
  %3231 = vmatprep.subr.mxu0 0.0
  %3232 = vmatpush1.msra.mxu0 %v2217
  %3233 = vmatprep.subr.mxu0 0.0
  %3234 = vmatpush1.msra.mxu0 %v2218
  %3235 = vmatprep.subr.mxu0 0.0
  %3236 = vmatpush1.msra.mxu0 %v2219
  %3237 = vmatprep.subr.mxu0 0.0
  %3238 = vmatpush1.msra.mxu0 %v2220
  %3239 = vmatprep.subr.mxu0 0.0
  %3240 = vmatpush1.msra.mxu0 %v2221
  %3241 = vmatprep.subr.mxu0 0.0
  %3242 = vmatpush1.msra.mxu0 %v2222
  %3243 = vmatprep.subr.mxu0 0.0
  %3244 = vmatpush1.msra.mxu0 %v2223
  %3245 = vmatprep.subr.mxu0 0.0
  %3246 = vmatpush1.msra.mxu0 %v2224
  %3247 = vmatprep.subr.mxu0 0.0
  %3248 = vmatpush1.msra.mxu0 %v2225
  %3249 = vmatprep.subr.mxu0 0.0
  %3250 = vmatpush1.msra.mxu0 %v2226
  %3251 = vmatprep.subr.mxu0 0.0
  %3252 = vmatpush1.msra.mxu0 %v2227
  %3253 = vmatprep.subr.mxu0 0.0
  %3254 = vmatpush1.msra.mxu0 %v2228
  %3255 = vmatprep.subr.mxu0 0.0
  %3256 = vmatpush1.msra.mxu0 %v2229
  %3257 = vmatprep.subr.mxu0 0.0
  %3258 = vmatpush1.msra.mxu0 %v2230
  %3259 = vmatprep.subr.mxu0 0.0
  %3260 = vmatpush1.msra.mxu0 %v2231
  %3261 = vmatprep.subr.mxu0 0.0
  %3262 = vmatpush1.msra.mxu0 %v2232
  %3263 = vmatprep.subr.mxu0 0.0
  %3264 = vmatpush1.msra.mxu0 %v2233
  %3265 = vmatprep.subr.mxu0 0.0
  %3266 = vmatpush1.msra.mxu0 %v2234
  %3267 = vmatprep.subr.mxu0 0.0
  %3268 = vmatpush1.msra.mxu0 %v2235
  %3269 = vmatprep.mubr.f32.mxu0 %v3167
  %3270 = vmatmul.mubr.f32.gmra.mrb[0].mxu0 %v3166
  %v3271 = vpop.f32.mrb[0].mxu0
  %v3272 = vadd.f32 %v3203, %v3271
  %v3273 = vpop.f32.mrb[0].mxu0
  %3274 = vmatprep.mubr.f32.mxu0 %v3183
  %3275 = vmatmul.mubr.f32.gmra.mrb[0].mxu0 %v3182
  %v3276 = vpop.f32.mrb[0].mxu0
  %v3277 = vadd.f32 %v3203, %v3276
  %v3278 = vpop.f32.mrb[0].mxu0
  %3279 = vdwg.mxu0
  %3280 = vmatprep.subr.mxu0 0.0
  %3281 = vmatpush1.msra.mxu0 %v2236
  %3282 = vmatprep.subr.mxu0 0.0
  %3283 = vmatpush1.msra.mxu0 %v2237
  %3284 = vmatprep.subr.mxu0 0.0
  %3285 = vmatpush1.msra.mxu0 %v2238
  %3286 = vmatprep.subr.mxu0 0.0
  %3287 = vmatpush1.msra.mxu0 %v2239
  %3288 = vmatprep.subr.mxu0 0.0
  %3289 = vmatpush1.msra.mxu0 %v2240
  %3290 = vmatprep.subr.mxu0 0.0
  %3291 = vmatpush1.msra.mxu0 %v2241
  %3292 = vmatprep.subr.mxu0 0.0
  %3293 = vmatpush1.msra.mxu0 %v2242
  %3294 = vmatprep.subr.mxu0 0.0
  %3295 = vmatpush1.msra.mxu0 %v2243
  %3296 = vmatprep.subr.mxu0 0.0
  %3297 = vmatpush1.msra.mxu0 %v2244
  %3298 = vmatprep.subr.mxu0 0.0
  %3299 = vmatpush1.msra.mxu0 %v2245
  %3300 = vmatprep.subr.mxu0 0.0
  %3301 = vmatpush1.msra.mxu0 %v2246
  %3302 = vmatprep.subr.mxu0 0.0
  %3303 = vmatpush1.msra.mxu0 %v2247
  %3304 = vmatprep.subr.mxu0 0.0
  %3305 = vmatpush1.msra.mxu0 %v2248
  %3306 = vmatprep.subr.mxu0 0.0
  %3307 = vmatpush1.msra.mxu0 %v2249
  %3308 = vmatprep.subr.mxu0 0.0
  %3309 = vmatpush1.msra.mxu0 %v2250
  %3310 = vmatprep.subr.mxu0 0.0
  %3311 = vmatpush1.msra.mxu0 %v2251
  %3312 = vmatprep.subr.mxu0 0.0
  %3313 = vmatpush1.msra.mxu0 %v2252
  %3314 = vmatprep.subr.mxu0 0.0
  %3315 = vmatpush1.msra.mxu0 %v2253
  %3316 = vmatprep.subr.mxu0 0.0
  %3317 = vmatpush1.msra.mxu0 %v2254
  %3318 = vmatprep.subr.mxu0 0.0
  %3319 = vmatpush1.msra.mxu0 %v2255
  %3320 = vmatprep.subr.mxu0 0.0
  %3321 = vmatpush1.msra.mxu0 %v2256
  %3322 = vmatprep.subr.mxu0 0.0
  %3323 = vmatpush1.msra.mxu0 %v2257
  %3324 = vmatprep.subr.mxu0 0.0
  %3325 = vmatpush1.msra.mxu0 %v2258
  %3326 = vmatprep.subr.mxu0 0.0
  %3327 = vmatpush1.msra.mxu0 %v2259
  %3328 = vmatprep.subr.mxu0 0.0
  %3329 = vmatpush1.msra.mxu0 %v2260
  %3330 = vmatprep.subr.mxu0 0.0
  %3331 = vmatpush1.msra.mxu0 %v2261
  %3332 = vmatprep.subr.mxu0 0.0
  %3333 = vmatpush1.msra.mxu0 %v2262
  %3334 = vmatprep.subr.mxu0 0.0
  %3335 = vmatpush1.msra.mxu0 %v2263
  %3336 = vmatprep.subr.mxu0 0.0
  %3337 = vmatpush1.msra.mxu0 %v2264
  %3338 = vmatprep.subr.mxu0 0.0
  %3339 = vmatpush1.msra.mxu0 %v2265
  %3340 = vmatprep.subr.mxu0 0.0
  %3341 = vmatpush1.msra.mxu0 %v2266
  %3342 = vmatprep.subr.mxu0 0.0
  %3343 = vmatpush1.msra.mxu0 %v2267
  %3344 = vmatprep.mubr.f32.mxu0 %v3169
  %3345 = vmatmul.mubr.f32.gmra.mrb[0].mxu0 %v3168
  %v3346 = vpop.f32.mrb[0].mxu0
  %v3347 = vadd.f32 %v3272, %v3346
  %v3348 = vpop.f32.mrb[0].mxu0
  %3349 = vmatprep.mubr.f32.mxu0 %v3185
  %3350 = vmatmul.mubr.f32.gmra.mrb[0].mxu0 %v3184
  %v3351 = vpop.f32.mrb[0].mxu0
  %v3352 = vadd.f32 %v3277, %v3351
  %v3353 = vpop.f32.mrb[0].mxu0
  %3354 = vdwg.mxu0
  %3355 = vmatprep.subr.mxu0 0.0
  %3356 = vmatpush1.msra.mxu0 %v2268
  %3357 = vmatprep.subr.mxu0 0.0
  %3358 = vmatpush1.msra.mxu0 %v2269
  %3359 = vmatprep.subr.mxu0 0.0
  %3360 = vmatpush1.msra.mxu0 %v2270
  %3361 = vmatprep.subr.mxu0 0.0
  %3362 = vmatpush1.msra.mxu0 %v2271
  %3363 = vmatprep.subr.mxu0 0.0
  %3364 = vmatpush1.msra.mxu0 %v2272
  %3365 = vmatprep.subr.mxu0 0.0
  %3366 = vmatpush1.msra.mxu0 %v2273
  %3367 = vmatprep.subr.mxu0 0.0
  %3368 = vmatpush1.msra.mxu0 %v2274
  %3369 = vmatprep.subr.mxu0 0.0
  %3370 = vmatpush1.msra.mxu0 %v2275
  %3371 = vmatprep.subr.mxu0 0.0
  %3372 = vmatpush1.msra.mxu0 %v2276
  %3373 = vmatprep.subr.mxu0 0.0
  %3374 = vmatpush1.msra.mxu0 %v2277
  %3375 = vmatprep.subr.mxu0 0.0
  %3376 = vmatpush1.msra.mxu0 %v2278
  %3377 = vmatprep.subr.mxu0 0.0
  %3378 = vmatpush1.msra.mxu0 %v2279
  %3379 = vmatprep.subr.mxu0 0.0
  %3380 = vmatpush1.msra.mxu0 %v2280
  %3381 = vmatprep.subr.mxu0 0.0
  %3382 = vmatpush1.msra.mxu0 %v2281
  %3383 = vmatprep.subr.mxu0 0.0
  %3384 = vmatpush1.msra.mxu0 %v2282
  %3385 = vmatprep.subr.mxu0 0.0
  %3386 = vmatpush1.msra.mxu0 %v2283
  %3387 = vmatprep.subr.mxu0 0.0
  %3388 = vmatpush1.msra.mxu0 %v2284
  %3389 = vmatprep.subr.mxu0 0.0
  %3390 = vmatpush1.msra.mxu0 %v2285
  %3391 = vmatprep.subr.mxu0 0.0
  %3392 = vmatpush1.msra.mxu0 %v2286
  %3393 = vmatprep.subr.mxu0 0.0
  %3394 = vmatpush1.msra.mxu0 %v2287
  %3395 = vmatprep.subr.mxu0 0.0
  %3396 = vmatpush1.msra.mxu0 %v2288
  %3397 = vmatprep.subr.mxu0 0.0
  %3398 = vmatpush1.msra.mxu0 %v2289
  %3399 = vmatprep.subr.mxu0 0.0
  %3400 = vmatpush1.msra.mxu0 %v2290
  %3401 = vmatprep.subr.mxu0 0.0
  %3402 = vmatpush1.msra.mxu0 %v2291
  %3403 = vmatprep.subr.mxu0 0.0
  %3404 = vmatpush1.msra.mxu0 %v2292
  %3405 = vmatprep.subr.mxu0 0.0
  %3406 = vmatpush1.msra.mxu0 %v2293
  %3407 = vmatprep.subr.mxu0 0.0
  %3408 = vmatpush1.msra.mxu0 %v2294
  %3409 = vmatprep.subr.mxu0 0.0
  %3410 = vmatpush1.msra.mxu0 %v2295
  %3411 = vmatprep.subr.mxu0 0.0
  %3412 = vmatpush1.msra.mxu0 %v2296
  %3413 = vmatprep.subr.mxu0 0.0
  %3414 = vmatpush1.msra.mxu0 %v2297
  %3415 = vmatprep.subr.mxu0 0.0
  %3416 = vmatpush1.msra.mxu0 %v2298
  %3417 = vmatprep.subr.mxu0 0.0
  %3418 = vmatpush1.msra.mxu0 %v2299
  %3419 = vmatprep.mubr.f32.mxu0 %v3171
  %3420 = vmatmul.mubr.f32.gmra.mrb[0].mxu0 %v3170
  %v3421 = vpop.f32.mrb[0].mxu0
  %v3422 = vadd.f32 %v3347, %v3421
  %v3423 = vpop.f32.mrb[0].mxu0
  %3424 = vmatprep.mubr.f32.mxu0 %v3187
  %3425 = vmatmul.mubr.f32.gmra.mrb[0].mxu0 %v3186
  %v3426 = vpop.f32.mrb[0].mxu0
  %v3427 = vadd.f32 %v3352, %v3426
  %v3428 = vpop.f32.mrb[0].mxu0
  %3429 = vdwg.mxu0
  %3430 = vmatprep.subr.mxu0 0.0
  %3431 = vmatpush1.msra.mxu0 %v2300
  %3432 = vmatprep.subr.mxu0 0.0
  %3433 = vmatpush1.msra.mxu0 %v2301
  %3434 = vmatprep.subr.mxu0 0.0
  %3435 = vmatpush1.msra.mxu0 %v2302
  %3436 = vmatprep.subr.mxu0 0.0
  %3437 = vmatpush1.msra.mxu0 %v2303
  %3438 = vmatprep.subr.mxu0 0.0
  %3439 = vmatpush1.msra.mxu0 %v2304
  %3440 = vmatprep.subr.mxu0 0.0
  %3441 = vmatpush1.msra.mxu0 %v2305
  %3442 = vmatprep.subr.mxu0 0.0
  %3443 = vmatpush1.msra.mxu0 %v2306
  %3444 = vmatprep.subr.mxu0 0.0
  %3445 = vmatpush1.msra.mxu0 %v2307
  %3446 = vmatprep.subr.mxu0 0.0
  %3447 = vmatpush1.msra.mxu0 %v2308
  %3448 = vmatprep.subr.mxu0 0.0
  %3449 = vmatpush1.msra.mxu0 %v2309
  %3450 = vmatprep.subr.mxu0 0.0
  %3451 = vmatpush1.msra.mxu0 %v2310
  %3452 = vmatprep.subr.mxu0 0.0
  %3453 = vmatpush1.msra.mxu0 %v2311
  %3454 = vmatprep.subr.mxu0 0.0
  %3455 = vmatpush1.msra.mxu0 %v2312
  %3456 = vmatprep.subr.mxu0 0.0
  %3457 = vmatpush1.msra.mxu0 %v2313
  %3458 = vmatprep.subr.mxu0 0.0
  %3459 = vmatpush1.msra.mxu0 %v2314
  %3460 = vmatprep.subr.mxu0 0.0
  %3461 = vmatpush1.msra.mxu0 %v2315
  %3462 = vmatprep.subr.mxu0 0.0
  %3463 = vmatpush1.msra.mxu0 %v2316
  %3464 = vmatprep.subr.mxu0 0.0
  %3465 = vmatpush1.msra.mxu0 %v2317
  %3466 = vmatprep.subr.mxu0 0.0
  %3467 = vmatpush1.msra.mxu0 %v2318
  %3468 = vmatprep.subr.mxu0 0.0
  %3469 = vmatpush1.msra.mxu0 %v2319
  %3470 = vmatprep.subr.mxu0 0.0
  %3471 = vmatpush1.msra.mxu0 %v2320
  %3472 = vmatprep.subr.mxu0 0.0
  %3473 = vmatpush1.msra.mxu0 %v2321
  %3474 = vmatprep.subr.mxu0 0.0
  %3475 = vmatpush1.msra.mxu0 %v2322
  %3476 = vmatprep.subr.mxu0 0.0
  %3477 = vmatpush1.msra.mxu0 %v2323
  %3478 = vmatprep.subr.mxu0 0.0
  %3479 = vmatpush1.msra.mxu0 %v2324
  %3480 = vmatprep.subr.mxu0 0.0
  %3481 = vmatpush1.msra.mxu0 %v2325
  %3482 = vmatprep.subr.mxu0 0.0
  %3483 = vmatpush1.msra.mxu0 %v2326
  %3484 = vmatprep.subr.mxu0 0.0
  %3485 = vmatpush1.msra.mxu0 %v2327
  %3486 = vmatprep.subr.mxu0 0.0
  %3487 = vmatpush1.msra.mxu0 %v2328
  %3488 = vmatprep.subr.mxu0 0.0
  %3489 = vmatpush1.msra.mxu0 %v2329
  %3490 = vmatprep.subr.mxu0 0.0
  %3491 = vmatpush1.msra.mxu0 %v2330
  %3492 = vmatprep.subr.mxu0 0.0
  %3493 = vmatpush1.msra.mxu0 %v2331
  %3494 = vmatprep.mubr.f32.mxu0 %v3173
  %3495 = vmatmul.mubr.f32.gmra.mrb[0].mxu0 %v3172
  %v3496 = vpop.f32.mrb[0].mxu0
  %v3497 = vadd.f32 %v3422, %v3496
  %v3498 = vpop.f32.mrb[0].mxu0
  %3499 = vmatprep.mubr.f32.mxu0 %v3189
  %3500 = vmatmul.mubr.f32.gmra.mrb[0].mxu0 %v3188
  %v3501 = vpop.f32.mrb[0].mxu0
  %v3502 = vadd.f32 %v3427, %v3501
  %v3503 = vpop.f32.mrb[0].mxu0
  %3504 = vdwg.mxu0
  %3505 = vmatprep.subr.mxu0 0.0
  %3506 = vmatpush1.msra.mxu0 %v2332
  %3507 = vmatprep.subr.mxu0 0.0
  %3508 = vmatpush1.msra.mxu0 %v2333
  %3509 = vmatprep.subr.mxu0 0.0
  %3510 = vmatpush1.msra.mxu0 %v2334
  %3511 = vmatprep.subr.mxu0 0.0
  %3512 = vmatpush1.msra.mxu0 %v2335
  %3513 = vmatprep.subr.mxu0 0.0
  %3514 = vmatpush1.msra.mxu0 %v2336
  %3515 = vmatprep.subr.mxu0 0.0
  %3516 = vmatpush1.msra.mxu0 %v2337
  %3517 = vmatprep.subr.mxu0 0.0
  %3518 = vmatpush1.msra.mxu0 %v2338
  %3519 = vmatprep.subr.mxu0 0.0
  %3520 = vmatpush1.msra.mxu0 %v2339
  %3521 = vmatprep.subr.mxu0 0.0
  %3522 = vmatpush1.msra.mxu0 %v2340
  %3523 = vmatprep.subr.mxu0 0.0
  %3524 = vmatpush1.msra.mxu0 %v2341
  %3525 = vmatprep.subr.mxu0 0.0
  %3526 = vmatpush1.msra.mxu0 %v2342
  %3527 = vmatprep.subr.mxu0 0.0
  %3528 = vmatpush1.msra.mxu0 %v2343
  %3529 = vmatprep.subr.mxu0 0.0
  %3530 = vmatpush1.msra.mxu0 %v2344
  %3531 = vmatprep.subr.mxu0 0.0
  %3532 = vmatpush1.msra.mxu0 %v2345
  %3533 = vmatprep.subr.mxu0 0.0
  %3534 = vmatpush1.msra.mxu0 %v2346
  %3535 = vmatprep.subr.mxu0 0.0
  %3536 = vmatpush1.msra.mxu0 %v2347
  %3537 = vmatprep.subr.mxu0 0.0
  %3538 = vmatpush1.msra.mxu0 %v2348
  %3539 = vmatprep.subr.mxu0 0.0
  %3540 = vmatpush1.msra.mxu0 %v2349
  %3541 = vmatprep.subr.mxu0 0.0
  %3542 = vmatpush1.msra.mxu0 %v2350
  %3543 = vmatprep.subr.mxu0 0.0
  %3544 = vmatpush1.msra.mxu0 %v2351
  %3545 = vmatprep.subr.mxu0 0.0
  %3546 = vmatpush1.msra.mxu0 %v2352
  %3547 = vmatprep.subr.mxu0 0.0
  %3548 = vmatpush1.msra.mxu0 %v2353
  %3549 = vmatprep.subr.mxu0 0.0
  %3550 = vmatpush1.msra.mxu0 %v2354
  %3551 = vmatprep.subr.mxu0 0.0
  %3552 = vmatpush1.msra.mxu0 %v2355
  %3553 = vmatprep.subr.mxu0 0.0
  %3554 = vmatpush1.msra.mxu0 %v2356
  %3555 = vmatprep.subr.mxu0 0.0
  %3556 = vmatpush1.msra.mxu0 %v2357
  %3557 = vmatprep.subr.mxu0 0.0
  %3558 = vmatpush1.msra.mxu0 %v2358
  %3559 = vmatprep.subr.mxu0 0.0
  %3560 = vmatpush1.msra.mxu0 %v2359
  %3561 = vmatprep.subr.mxu0 0.0
  %3562 = vmatpush1.msra.mxu0 %v2360
  %3563 = vmatprep.subr.mxu0 0.0
  %3564 = vmatpush1.msra.mxu0 %v2361
  %3565 = vmatprep.subr.mxu0 0.0
  %3566 = vmatpush1.msra.mxu0 %v2362
  %3567 = vmatprep.subr.mxu0 0.0
  %3568 = vmatpush1.msra.mxu0 %v2363
  %3569 = vmatprep.mubr.f32.mxu0 %v3175
  %3570 = vmatmul.mubr.f32.gmra.mrb[0].mxu0 %v3174
  %v3571 = vpop.f32.mrb[0].mxu0
  %v3572 = vadd.f32 %v3497, %v3571
  %v3573 = vpop.f32.mrb[0].mxu0
  %3574 = vmatprep.mubr.f32.mxu0 %v3191
  %3575 = vmatmul.mubr.f32.gmra.mrb[0].mxu0 %v3190
  %v3576 = vpop.f32.mrb[0].mxu0
  %v3577 = vadd.f32 %v3502, %v3576
  %v3578 = vpop.f32.mrb[0].mxu0
  %3579 = vdwg.mxu0
  %3580 = vmatprep.subr.mxu0 0.0
  %3581 = vmatpush1.msra.mxu0 %v2364
  %3582 = vmatprep.subr.mxu0 0.0
  %3583 = vmatpush1.msra.mxu0 %v2365
  %3584 = vmatprep.subr.mxu0 0.0
  %3585 = vmatpush1.msra.mxu0 %v2366
  %3586 = vmatprep.subr.mxu0 0.0
  %3587 = vmatpush1.msra.mxu0 %v2367
  %3588 = vmatprep.subr.mxu0 0.0
  %3589 = vmatpush1.msra.mxu0 %v2368
  %3590 = vmatprep.subr.mxu0 0.0
  %3591 = vmatpush1.msra.mxu0 %v2369
  %3592 = vmatprep.subr.mxu0 0.0
  %3593 = vmatpush1.msra.mxu0 %v2370
  %3594 = vmatprep.subr.mxu0 0.0
  %3595 = vmatpush1.msra.mxu0 %v2371
  %3596 = vmatprep.subr.mxu0 0.0
  %3597 = vmatpush1.msra.mxu0 %v2372
  %3598 = vmatprep.subr.mxu0 0.0
  %3599 = vmatpush1.msra.mxu0 %v2373
  %3600 = vmatprep.subr.mxu0 0.0
  %3601 = vmatpush1.msra.mxu0 %v2374
  %3602 = vmatprep.subr.mxu0 0.0
  %3603 = vmatpush1.msra.mxu0 %v2375
  %3604 = vmatprep.subr.mxu0 0.0
  %3605 = vmatpush1.msra.mxu0 %v2376
  %3606 = vmatprep.subr.mxu0 0.0
  %3607 = vmatpush1.msra.mxu0 %v2377
  %3608 = vmatprep.subr.mxu0 0.0
  %3609 = vmatpush1.msra.mxu0 %v2378
  %3610 = vmatprep.subr.mxu0 0.0
  %3611 = vmatpush1.msra.mxu0 %v2379
  %3612 = vmatprep.subr.mxu0 0.0
  %3613 = vmatpush1.msra.mxu0 %v2380
  %3614 = vmatprep.subr.mxu0 0.0
  %3615 = vmatpush1.msra.mxu0 %v2381
  %3616 = vmatprep.subr.mxu0 0.0
  %3617 = vmatpush1.msra.mxu0 %v2382
  %3618 = vmatprep.subr.mxu0 0.0
  %3619 = vmatpush1.msra.mxu0 %v2383
  %3620 = vmatprep.subr.mxu0 0.0
  %3621 = vmatpush1.msra.mxu0 %v2384
  %3622 = vmatprep.subr.mxu0 0.0
  %3623 = vmatpush1.msra.mxu0 %v2385
  %3624 = vmatprep.subr.mxu0 0.0
  %3625 = vmatpush1.msra.mxu0 %v2386
  %3626 = vmatprep.subr.mxu0 0.0
  %3627 = vmatpush1.msra.mxu0 %v2387
  %3628 = vmatprep.subr.mxu0 0.0
  %3629 = vmatpush1.msra.mxu0 %v2388
  %3630 = vmatprep.subr.mxu0 0.0
  %3631 = vmatpush1.msra.mxu0 %v2389
  %3632 = vmatprep.subr.mxu0 0.0
  %3633 = vmatpush1.msra.mxu0 %v2390
  %3634 = vmatprep.subr.mxu0 0.0
  %3635 = vmatpush1.msra.mxu0 %v2391
  %3636 = vmatprep.subr.mxu0 0.0
  %3637 = vmatpush1.msra.mxu0 %v2392
  %3638 = vmatprep.subr.mxu0 0.0
  %3639 = vmatpush1.msra.mxu0 %v2393
  %3640 = vmatprep.subr.mxu0 0.0
  %3641 = vmatpush1.msra.mxu0 %v2394
  %3642 = vmatprep.subr.mxu0 0.0
  %3643 = vmatpush1.msra.mxu0 %v2395
  %3644 = vmatprep.mubr.f32.mxu0 %v3177
  %3645 = vmatmul.mubr.f32.gmra.mrb[0].mxu0 %v3176
  %v3646 = vpop.f32.mrb[0].mxu0
  %v3647 = vadd.f32 %v3572, %v3646
  %v3648 = vpop.f32.mrb[0].mxu0
  %3649 = vmatprep.mubr.f32.mxu0 %v3193
  %3650 = vmatmul.mubr.f32.gmra.mrb[0].mxu0 %v3192
  %v3651 = vpop.f32.mrb[0].mxu0
  %v3652 = vadd.f32 %v3577, %v3651
  %v3653 = vpop.f32.mrb[0].mxu0
  %3654 = vdwg.mxu0
  %3655 = vmatprep.subr.mxu0 0.0
  %3656 = vmatpush1.msra.mxu0 %v2396
  %3657 = vmatprep.subr.mxu0 0.0
  %3658 = vmatpush1.msra.mxu0 %v2397
  %3659 = vmatprep.subr.mxu0 0.0
  %3660 = vmatpush1.msra.mxu0 %v2398
  %3661 = vmatprep.subr.mxu0 0.0
  %3662 = vmatpush1.msra.mxu0 %v2399
  %3663 = vmatprep.subr.mxu0 0.0
  %3664 = vmatpush1.msra.mxu0 %v2400
  %3665 = vmatprep.subr.mxu0 0.0
  %3666 = vmatpush1.msra.mxu0 %v2401
  %3667 = vmatprep.subr.mxu0 0.0
  %3668 = vmatpush1.msra.mxu0 %v2402
  %3669 = vmatprep.subr.mxu0 0.0
  %3670 = vmatpush1.msra.mxu0 %v2403
  %3671 = vmatprep.subr.mxu0 0.0
  %3672 = vmatpush1.msra.mxu0 %v2404
  %3673 = vmatprep.subr.mxu0 0.0
  %3674 = vmatpush1.msra.mxu0 %v2405
  %3675 = vmatprep.subr.mxu0 0.0
  %3676 = vmatpush1.msra.mxu0 %v2406
  %3677 = vmatprep.subr.mxu0 0.0
  %3678 = vmatpush1.msra.mxu0 %v2407
  %3679 = vmatprep.subr.mxu0 0.0
  %3680 = vmatpush1.msra.mxu0 %v2408
  %3681 = vmatprep.subr.mxu0 0.0
  %3682 = vmatpush1.msra.mxu0 %v2409
  %3683 = vmatprep.subr.mxu0 0.0
  %3684 = vmatpush1.msra.mxu0 %v2410
  %3685 = vmatprep.subr.mxu0 0.0
  %3686 = vmatpush1.msra.mxu0 %v2411
  %3687 = vmatprep.subr.mxu0 0.0
  %3688 = vmatpush1.msra.mxu0 %v2412
  %3689 = vmatprep.subr.mxu0 0.0
  %3690 = vmatpush1.msra.mxu0 %v2413
  %3691 = vmatprep.subr.mxu0 0.0
  %3692 = vmatpush1.msra.mxu0 %v2414
  %3693 = vmatprep.subr.mxu0 0.0
  %3694 = vmatpush1.msra.mxu0 %v2415
  %3695 = vmatprep.subr.mxu0 0.0
  %3696 = vmatpush1.msra.mxu0 %v2416
  %3697 = vmatprep.subr.mxu0 0.0
  %3698 = vmatpush1.msra.mxu0 %v2417
  %3699 = vmatprep.subr.mxu0 0.0
  %3700 = vmatpush1.msra.mxu0 %v2418
  %3701 = vmatprep.subr.mxu0 0.0
  %3702 = vmatpush1.msra.mxu0 %v2419
  %3703 = vmatprep.subr.mxu0 0.0
  %3704 = vmatpush1.msra.mxu0 %v2420
  %3705 = vmatprep.subr.mxu0 0.0
  %3706 = vmatpush1.msra.mxu0 %v2421
  %3707 = vmatprep.subr.mxu0 0.0
  %3708 = vmatpush1.msra.mxu0 %v2422
  %3709 = vmatprep.subr.mxu0 0.0
  %3710 = vmatpush1.msra.mxu0 %v2423
  %3711 = vmatprep.subr.mxu0 0.0
  %3712 = vmatpush1.msra.mxu0 %v2424
  %3713 = vmatprep.subr.mxu0 0.0
  %3714 = vmatpush1.msra.mxu0 %v2425
  %3715 = vmatprep.subr.mxu0 0.0
  %3716 = vmatpush1.msra.mxu0 %v2426
  %3717 = vmatprep.subr.mxu0 0.0
  %3718 = vmatpush1.msra.mxu0 %v2427
  %3719 = vmatprep.mubr.f32.mxu0 %v3179
  %3720 = vmatmul.mubr.f32.gmra.mrb[0].mxu0 %v3178
  %v3721 = vpop.f32.mrb[0].mxu0
  %v3722 = vadd.f32 %v3647, %v3721
  %v3723 = vpop.f32.mrb[0].mxu0
  %3724 = vmatprep.mubr.f32.mxu0 %v3195
  %3725 = vmatmul.mubr.f32.gmra.mrb[0].mxu0 %v3194
  %v3726 = vpop.f32.mrb[0].mxu0
  %v3727 = vadd.f32 %v3652, %v3726
  %v3728 = vpop.f32.mrb[0].mxu0
  %3729 = vdwg.mxu0
  %3730 = vmatprep.subr.mxu0 0.0
  %3731 = vmatpush1.msra.mxu0 %v2428
  %3732 = vmatprep.subr.mxu0 0.0
  %3733 = vmatpush1.msra.mxu0 %v2429
  %3734 = vmatprep.subr.mxu0 0.0
  %3735 = vmatpush1.msra.mxu0 %v2430
  %3736 = vmatprep.subr.mxu0 0.0
  %3737 = vmatpush1.msra.mxu0 %v2431
  %3738 = vmatprep.subr.mxu0 0.0
  %3739 = vmatpush1.msra.mxu0 %v2432
  %3740 = vmatprep.subr.mxu0 0.0
  %3741 = vmatpush1.msra.mxu0 %v2433
  %3742 = vmatprep.subr.mxu0 0.0
  %3743 = vmatpush1.msra.mxu0 %v2434
  %3744 = vmatprep.subr.mxu0 0.0
  %3745 = vmatpush1.msra.mxu0 %v2435
  %3746 = vmatprep.subr.mxu0 0.0
  %3747 = vmatpush1.msra.mxu0 %v2436
  %3748 = vmatprep.subr.mxu0 0.0
  %3749 = vmatpush1.msra.mxu0 %v2437
  %3750 = vmatprep.subr.mxu0 0.0
  %3751 = vmatpush1.msra.mxu0 %v2438
  %3752 = vmatprep.subr.mxu0 0.0
  %3753 = vmatpush1.msra.mxu0 %v2439
  %3754 = vmatprep.subr.mxu0 0.0
  %3755 = vmatpush1.msra.mxu0 %v2440
  %3756 = vmatprep.subr.mxu0 0.0
  %3757 = vmatpush1.msra.mxu0 %v2441
  %3758 = vmatprep.subr.mxu0 0.0
  %3759 = vmatpush1.msra.mxu0 %v2442
  %3760 = vmatprep.subr.mxu0 0.0
  %3761 = vmatpush1.msra.mxu0 %v2443
  %3762 = vmatprep.subr.mxu0 0.0
  %3763 = vmatpush1.msra.mxu0 %v2444
  %3764 = vmatprep.subr.mxu0 0.0
  %3765 = vmatpush1.msra.mxu0 %v2445
  %3766 = vmatprep.subr.mxu0 0.0
  %3767 = vmatpush1.msra.mxu0 %v2446
  %3768 = vmatprep.subr.mxu0 0.0
  %3769 = vmatpush1.msra.mxu0 %v2447
  %3770 = vmatprep.subr.mxu0 0.0
  %3771 = vmatpush1.msra.mxu0 %v2448
  %3772 = vmatprep.subr.mxu0 0.0
  %3773 = vmatpush1.msra.mxu0 %v2449
  %3774 = vmatprep.subr.mxu0 0.0
  %3775 = vmatpush1.msra.mxu0 %v2450
  %3776 = vmatprep.subr.mxu0 0.0
  %3777 = vmatpush1.msra.mxu0 %v2451
  %3778 = vmatprep.subr.mxu0 0.0
  %3779 = vmatpush1.msra.mxu0 %v2452
  %3780 = vmatprep.subr.mxu0 0.0
  %3781 = vmatpush1.msra.mxu0 %v2453
  %3782 = vmatprep.subr.mxu0 0.0
  %3783 = vmatpush1.msra.mxu0 %v2454
  %3784 = vmatprep.subr.mxu0 0.0
  %3785 = vmatpush1.msra.mxu0 %v2455
  %3786 = vmatprep.subr.mxu0 0.0
  %3787 = vmatpush1.msra.mxu0 %v2456
  %3788 = vmatprep.subr.mxu0 0.0
  %3789 = vmatpush1.msra.mxu0 %v2457
  %3790 = vmatprep.subr.mxu0 0.0
  %3791 = vmatpush1.msra.mxu0 %v2458
  %3792 = vmatprep.subr.mxu0 0.0
  %3793 = vmatpush1.msra.mxu0 %v2459
  %3794 = vmatprep.mubr.f32.mxu0 %v3181
  %3795 = vmatmul.mubr.f32.gmra.mrb[0].mxu0 %v3180
  %v3796 = vpop.f32.mrb[0].mxu0
  %v3797 = vadd.f32 %v3722, %v3796
  %v3798 = vpop.f32.mrb[0].mxu0
  %3799 = vmatprep.mubr.f32.mxu0 %v3197
  %3800 = vmatmul.mubr.f32.gmra.mrb[0].mxu0 %v3196
  %v3801 = vpop.f32.mrb[0].mxu0
  %v3802 = vadd.f32 %v3727, %v3801
  %v3803 = vpop.f32.mrb[0].mxu0
  %3804 = vdwg.mxu0
  %v3805 = vadd.f32 %v1754, %v3797
  %v3806 = vadd.f32 %v1755, %v3802
  %v3807 = vld [vmem:[%s13] sm:$0x1]
  %v3808 = vld [vmem:[%s14] sm:$0x1]
  %v3809 = vsel %vm179, %v3805, 0.0
  %3810 = vadd.xlane.f32.xlu0 %v3809
  %v3811 = vpop.xlane.xlu0 %3810
  %v3812 = vsel %vm179, %v3806, 0.0
  %3813 = vadd.xlane.f32.xlu0 %v3812
  %v3814 = vpop.xlane.xlu0 %3813
  %v3815 = vmul.f32 %v3811, 0.015625
  %v3816 = vmul.f32 %v3814, 0.015625
  %v3817 = vmul.f32 %v3805, %v3805
  %v3818 = vmul.f32 %v3806, %v3806
  %v3819 = vsel %vm179, %v3817, 0.0
  %3820 = vadd.xlane.f32.xlu0 %v3819
  %v3821 = vpop.xlane.xlu0 %3820
  %v3822 = vsel %vm179, %v3818, 0.0
  %3823 = vadd.xlane.f32.xlu0 %v3822
  %v3824 = vpop.xlane.xlu0 %3823
  %v3825 = vmul.f32 %v3821, 0.015625
  %v3826 = vmul.f32 %v3824, 0.015625
  %v3827 = vmul.f32 %v3815, %v3815
  %v3828 = vmul.f32 %v3816, %v3816
  %v3829 = vsub.f32 %v3825, %v3827
  %v3830 = vsub.f32 %v3826, %v3828
  %v3831 = vsub.f32 %v3805, %v3815
  %v3832 = vsub.f32 %v3806, %v3816
  %v3833 = vadd.f32 %v3829, 1e-05
  %v3834 = vadd.f32 %v3830, 1e-05
  %v3835 = vrsqrt.pop %v3833
  %v3836 = vrsqrt.pop %v3834
  %v3837 = vmul.f32 %v3831, %v3835
  %v3838 = vmul.f32 %v3832, %v3836
  %v3840 = vlaneseq
  %v3841 = vshrl.u32 %v3840, 7
  %v3842 = vsub.s32 0, %v3841
  %v3843 = vrot.slane %v3807, %v3842
  %v3845 = vmul.f32 %v3837, %v3843
  %v3846 = vmul.f32 %v3838, %v3843
  %v3848 = vlaneseq
  %v3849 = vshrl.u32 %v3848, 7
  %v3850 = vsub.s32 0, %v3849
  %v3851 = vrot.slane %v3808, %v3850
  %v3853 = vadd.f32 %v3845, %v3851
  %v3854 = vadd.f32 %v3846, %v3851
  %s3855 = scalar_lea.vmem %s3, 128
  %v3856 = vld [vmem:[%s3855] sm:$0xff]
  %v3857 = vld [vmem:[%s3855 + $0x8] sm:$0xff]
  %v3858 = vld [vmem:[%s3855 + $0x10] sm:$0xff]
  %v3859 = vld [vmem:[%s3855 + $0x18] sm:$0xff]
  %v3860 = vld [vmem:[%s3855 + $0x20] sm:$0xff]
  %v3861 = vld [vmem:[%s3855 + $0x28] sm:$0xff]
  %v3862 = vld [vmem:[%s3855 + $0x30] sm:$0xff]
  %v3863 = vld [vmem:[%s3855 + $0x38] sm:$0xff]
  %v3864 = vld [vmem:[%s3855 + $0x40] sm:$0xff]
  %v3865 = vld [vmem:[%s3855 + $0x48] sm:$0xff]
  %v3866 = vld [vmem:[%s3855 + $0x50] sm:$0xff]
  %v3867 = vld [vmem:[%s3855 + $0x58] sm:$0xff]
  %v3868 = vld [vmem:[%s3855 + $0x60] sm:$0xff]
  %v3869 = vld [vmem:[%s3855 + $0x68] sm:$0xff]
  %v3870 = vld [vmem:[%s3855 + $0x70] sm:$0xff]
  %v3871 = vld [vmem:[%s3855 + $0x78] sm:$0xff]
  %s3872 = scalar_lea.vmem %s4, 2
  %v3873 = vld [vmem:[%s3872] sm:$0x3]
  %v3875 = vlaneseq
  %v3876 = vshrl.u32 %v3875, 7
  %v3877 = vsub.s32 0, %v3876
  %v3878 = vrot.slane %v3873, %v3877
  %v3879 = vlaneseq
  %v3880 = vshrl.u32 %v3879, 7
  %v3881 = vsub.s32 1, %v3880
  %v3882 = vrot.slane %v3873, %v3881
  %v3886 = vsel %vm179, %v3853, 0
  %v3889 = vsel %vm179, %v3854, 0
  %3891 = vmatprep.subr.mxu0 %v3857
  %3892 = vmatpush1.msra.mxu0 %v3856
  %3893 = vmatprep.subr.mxu0 %v3859
  %3894 = vmatpush1.msra.mxu0 %v3858
  %3895 = vmatprep.subr.mxu0 %v3861
  %3896 = vmatpush1.msra.mxu0 %v3860
  %3897 = vmatprep.subr.mxu0 %v3863
  %3898 = vmatpush1.msra.mxu0 %v3862
  %3899 = vmatprep.subr.mxu0 %v3865
  %3900 = vmatpush1.msra.mxu0 %v3864
  %3901 = vmatprep.subr.mxu0 %v3867
  %3902 = vmatpush1.msra.mxu0 %v3866
  %3903 = vmatprep.subr.mxu0 %v3869
  %3904 = vmatpush1.msra.mxu0 %v3868
  %3905 = vmatprep.subr.mxu0 %v3871
  %3906 = vmatpush1.msra.mxu0 %v3870
  %3907 = vmatprep.subr.mxu0 0.0
  %3908 = vmatpush1.msra.mxu0 0.0
  %3909 = vmatprep.subr.mxu0 0.0
  %3910 = vmatpush1.msra.mxu0 0.0
  %3911 = vmatprep.subr.mxu0 0.0
  %3912 = vmatpush1.msra.mxu0 0.0
  %3913 = vmatprep.subr.mxu0 0.0
  %3914 = vmatpush1.msra.mxu0 0.0
  %3915 = vmatprep.subr.mxu0 0.0
  %3916 = vmatpush1.msra.mxu0 0.0
  %3917 = vmatprep.subr.mxu0 0.0
  %3918 = vmatpush1.msra.mxu0 0.0
  %3919 = vmatprep.subr.mxu0 0.0
  %3920 = vmatpush1.msra.mxu0 0.0
  %3921 = vmatprep.subr.mxu0 0.0
  %3922 = vmatpush1.msra.mxu0 0.0
  %3923 = vmatprep.subr.mxu0 0.0
  %3924 = vmatpush1.msra.mxu0 0.0
  %3925 = vmatprep.subr.mxu0 0.0
  %3926 = vmatpush1.msra.mxu0 0.0
  %3927 = vmatprep.subr.mxu0 0.0
  %3928 = vmatpush1.msra.mxu0 0.0
  %3929 = vmatprep.subr.mxu0 0.0
  %3930 = vmatpush1.msra.mxu0 0.0
  %3931 = vmatprep.subr.mxu0 0.0
  %3932 = vmatpush1.msra.mxu0 0.0
  %3933 = vmatprep.subr.mxu0 0.0
  %3934 = vmatpush1.msra.mxu0 0.0
  %3935 = vmatprep.subr.mxu0 0.0
  %3936 = vmatpush1.msra.mxu0 0.0
  %3937 = vmatprep.subr.mxu0 0.0
  %3938 = vmatpush1.msra.mxu0 0.0
  %3939 = vmatprep.subr.mxu0 0.0
  %3940 = vmatpush1.msra.mxu0 0.0
  %3941 = vmatprep.subr.mxu0 0.0
  %3942 = vmatpush1.msra.mxu0 0.0
  %3943 = vmatprep.subr.mxu0 0.0
  %3944 = vmatpush1.msra.mxu0 0.0
  %3945 = vmatprep.subr.mxu0 0.0
  %3946 = vmatpush1.msra.mxu0 0.0
  %3947 = vmatprep.subr.mxu0 0.0
  %3948 = vmatpush1.msra.mxu0 0.0
  %3949 = vmatprep.subr.mxu0 0.0
  %3950 = vmatpush1.msra.mxu0 0.0
  %3951 = vmatprep.subr.mxu0 0.0
  %3952 = vmatpush1.msra.mxu0 0.0
  %3953 = vmatprep.subr.mxu0 0.0
  %3954 = vmatpush1.msra.mxu0 0.0
  %3955 = vmatprep.mubr.f32.mxu0 0.0
  %3956 = vmatmul.mubr.f32.gmra.mrb[0].mxu0 %v3886
  %v3957 = vpop.f32.mrb[0].mxu0
  %v3958 = vadd.f32 %v3878, %v3957
  %v3959 = vpop.f32.mrb[0].mxu0
  %v3960 = vadd.f32 %v3882, %v3959
  %3961 = vmatprep.mubr.f32.mxu0 0.0
  %3962 = vmatmul.mubr.f32.gmra.mrb[0].mxu0 %v3889
  %v3963 = vpop.f32.mrb[0].mxu0
  %v3964 = vadd.f32 %v3878, %v3963
  %v3965 = vpop.f32.mrb[0].mxu0
  %v3966 = vadd.f32 %v3882, %v3965
  %3967 = vdwg.mxu0
  %3969 = vrot.lane.b32.xlu0 %v3958, 64
  %v3970 = vpop.permute.xlu0 %3969
  %v3971 = vsel %vm69, %v3958, 0
  %v3973 = vsel %vm69, %v3970, 0
  %3975 = vmatprep.subr.mxu0 0.0
  %3976 = vmatpush1.xpose.msra.mxu0 %v3973
  %3977 = vmatprep.subr.mxu0 0.0
  %3978 = vmatpush1.xpose.msra.mxu0 0.0
  %3979 = vmatprep.subr.mxu0 0.0
  %3980 = vmatpush1.xpose.msra.mxu0 0.0
  %3981 = vmatprep.subr.mxu0 0.0
  %3982 = vmatpush1.xpose.msra.mxu0 0.0
  %3983 = vmatprep.subr.mxu0 0.0
  %3984 = vmatpush1.xpose.msra.mxu0 0.0
  %3985 = vmatprep.subr.mxu0 0.0
  %3986 = vmatpush1.xpose.msra.mxu0 0.0
  %3987 = vmatprep.subr.mxu0 0.0
  %3988 = vmatpush1.xpose.msra.mxu0 0.0
  %3989 = vmatprep.subr.mxu0 0.0
  %3990 = vmatpush1.xpose.msra.mxu0 0.0
  %3991 = vmatprep.subr.mxu0 0.0
  %3992 = vmatpush1.xpose.msra.mxu0 0.0
  %3993 = vmatprep.subr.mxu0 0.0
  %3994 = vmatpush1.xpose.msra.mxu0 0.0
  %3995 = vmatprep.subr.mxu0 0.0
  %3996 = vmatpush1.xpose.msra.mxu0 0.0
  %3997 = vmatprep.subr.mxu0 0.0
  %3998 = vmatpush1.xpose.msra.mxu0 0.0
  %3999 = vmatprep.subr.mxu0 0.0
  %4000 = vmatpush1.xpose.msra.mxu0 0.0
  %4001 = vmatprep.subr.mxu0 0.0
  %4002 = vmatpush1.xpose.msra.mxu0 0.0
  %4003 = vmatprep.subr.mxu0 0.0
  %4004 = vmatpush1.xpose.msra.mxu0 0.0
  %4005 = vmatprep.subr.mxu0 0.0
  %4006 = vmatpush1.xpose.msra.mxu0 0.0
  %4007 = vmatprep.subr.mxu0 0.0
  %4008 = vmatpush1.xpose.msra.mxu0 0.0
  %4009 = vmatprep.subr.mxu0 0.0
  %4010 = vmatpush1.xpose.msra.mxu0 0.0
  %4011 = vmatprep.subr.mxu0 0.0
  %4012 = vmatpush1.xpose.msra.mxu0 0.0
  %4013 = vmatprep.subr.mxu0 0.0
  %4014 = vmatpush1.xpose.msra.mxu0 0.0
  %4015 = vmatprep.subr.mxu0 0.0
  %4016 = vmatpush1.xpose.msra.mxu0 0.0
  %4017 = vmatprep.subr.mxu0 0.0
  %4018 = vmatpush1.xpose.msra.mxu0 0.0
  %4019 = vmatprep.subr.mxu0 0.0
  %4020 = vmatpush1.xpose.msra.mxu0 0.0
  %4021 = vmatprep.subr.mxu0 0.0
  %4022 = vmatpush1.xpose.msra.mxu0 0.0
  %4023 = vmatprep.subr.mxu0 0.0
  %4024 = vmatpush1.xpose.msra.mxu0 0.0
  %4025 = vmatprep.subr.mxu0 0.0
  %4026 = vmatpush1.xpose.msra.mxu0 0.0
  %4027 = vmatprep.subr.mxu0 0.0
  %4028 = vmatpush1.xpose.msra.mxu0 0.0
  %4029 = vmatprep.subr.mxu0 0.0
  %4030 = vmatpush1.xpose.msra.mxu0 0.0
  %4031 = vmatprep.subr.mxu0 0.0
  %4032 = vmatpush1.xpose.msra.mxu0 0.0
  %4033 = vmatprep.subr.mxu0 0.0
  %4034 = vmatpush1.xpose.msra.mxu0 0.0
  %4035 = vmatprep.subr.mxu0 0.0
  %4036 = vmatpush1.xpose.msra.mxu0 0.0
  %4037 = vmatprep.subr.mxu0 0.0
  %4038 = vmatpush1.xpose.msra.mxu0 0.0
  %4039 = vmatprep.mubr.f32.mxu0 0.0
  %4040 = vmatmul.mubr.f32.gmra.mrb[0].mxu0 %v3971
  %v4041 = vpop.f32.mrb[0].mxu0
  %v4042 = vadd.f32 0.0, %v4041
  %v4043 = vpop.f32.mrb[0].mxu0
  %4044 = vdwg.mxu0
  %4046 = vrot.lane.b32.xlu0 %v3964, 64
  %v4047 = vpop.permute.xlu0 %4046
  %v4048 = vsel %vm69, %v3964, 0
  %v4050 = vsel %vm69, %v4047, 0
  %4052 = vmatprep.subr.mxu0 0.0
  %4053 = vmatpush1.xpose.msra.mxu0 %v4050
  %4054 = vmatprep.subr.mxu0 0.0
  %4055 = vmatpush1.xpose.msra.mxu0 0.0
  %4056 = vmatprep.subr.mxu0 0.0
  %4057 = vmatpush1.xpose.msra.mxu0 0.0
  %4058 = vmatprep.subr.mxu0 0.0
  %4059 = vmatpush1.xpose.msra.mxu0 0.0
  %4060 = vmatprep.subr.mxu0 0.0
  %4061 = vmatpush1.xpose.msra.mxu0 0.0
  %4062 = vmatprep.subr.mxu0 0.0
  %4063 = vmatpush1.xpose.msra.mxu0 0.0
  %4064 = vmatprep.subr.mxu0 0.0
  %4065 = vmatpush1.xpose.msra.mxu0 0.0
  %4066 = vmatprep.subr.mxu0 0.0
  %4067 = vmatpush1.xpose.msra.mxu0 0.0
  %4068 = vmatprep.subr.mxu0 0.0
  %4069 = vmatpush1.xpose.msra.mxu0 0.0
  %4070 = vmatprep.subr.mxu0 0.0
  %4071 = vmatpush1.xpose.msra.mxu0 0.0
  %4072 = vmatprep.subr.mxu0 0.0
  %4073 = vmatpush1.xpose.msra.mxu0 0.0
  %4074 = vmatprep.subr.mxu0 0.0
  %4075 = vmatpush1.xpose.msra.mxu0 0.0
  %4076 = vmatprep.subr.mxu0 0.0
  %4077 = vmatpush1.xpose.msra.mxu0 0.0
  %4078 = vmatprep.subr.mxu0 0.0
  %4079 = vmatpush1.xpose.msra.mxu0 0.0
  %4080 = vmatprep.subr.mxu0 0.0
  %4081 = vmatpush1.xpose.msra.mxu0 0.0
  %4082 = vmatprep.subr.mxu0 0.0
  %4083 = vmatpush1.xpose.msra.mxu0 0.0
  %4084 = vmatprep.subr.mxu0 0.0
  %4085 = vmatpush1.xpose.msra.mxu0 0.0
  %4086 = vmatprep.subr.mxu0 0.0
  %4087 = vmatpush1.xpose.msra.mxu0 0.0
  %4088 = vmatprep.subr.mxu0 0.0
  %4089 = vmatpush1.xpose.msra.mxu0 0.0
  %4090 = vmatprep.subr.mxu0 0.0
  %4091 = vmatpush1.xpose.msra.mxu0 0.0
  %4092 = vmatprep.subr.mxu0 0.0
  %4093 = vmatpush1.xpose.msra.mxu0 0.0
  %4094 = vmatprep.subr.mxu0 0.0
  %4095 = vmatpush1.xpose.msra.mxu0 0.0
  %4096 = vmatprep.subr.mxu0 0.0
  %4097 = vmatpush1.xpose.msra.mxu0 0.0
  %4098 = vmatprep.subr.mxu0 0.0
  %4099 = vmatpush1.xpose.msra.mxu0 0.0
  %4100 = vmatprep.subr.mxu0 0.0
  %4101 = vmatpush1.xpose.msra.mxu0 0.0
  %4102 = vmatprep.subr.mxu0 0.0
  %4103 = vmatpush1.xpose.msra.mxu0 0.0
  %4104 = vmatprep.subr.mxu0 0.0
  %4105 = vmatpush1.xpose.msra.mxu0 0.0
  %4106 = vmatprep.subr.mxu0 0.0
  %4107 = vmatpush1.xpose.msra.mxu0 0.0
  %4108 = vmatprep.subr.mxu0 0.0
  %4109 = vmatpush1.xpose.msra.mxu0 0.0
  %4110 = vmatprep.subr.mxu0 0.0
  %4111 = vmatpush1.xpose.msra.mxu0 0.0
  %4112 = vmatprep.subr.mxu0 0.0
  %4113 = vmatpush1.xpose.msra.mxu0 0.0
  %4114 = vmatprep.subr.mxu0 0.0
  %4115 = vmatpush1.xpose.msra.mxu0 0.0
  %4116 = vmatprep.mubr.f32.mxu0 0.0
  %4117 = vmatmul.mubr.f32.gmra.mrb[0].mxu0 %v4048
  %v4118 = vpop.f32.mrb[0].mxu0
  %v4119 = vadd.f32 0.0, %v4118
  %v4120 = vpop.f32.mrb[0].mxu0
  %4121 = vdwg.mxu0
  %v4122 = vsel %vm417, %v4042, -inf
  %4123 = vmax.xlane.f32.xlu0 %v4122
  %v4124 = vpop.xlane.xlu0 %4123
  %v4125 = vsel %vm417, %v4119, -inf
  %4126 = vmax.xlane.f32.xlu0 %v4125
  %v4127 = vpop.xlane.xlu0 %4126
  %v4128 = vsub.f32 %v4042, %v4124
  %v4129 = vsub.f32 %v4119, %v4127
  %v4130 = vmul.f32 %v4128, 1.442695
  %v4131 = vpow.pop %v4130
  %v4132 = vmul.f32 %v4129, 1.442695
  %v4133 = vpow.pop %v4132
  %v4134 = vsel %vm417, %v4131, 0.0
  %4135 = vadd.xlane.f32.xlu0 %v4134
  %v4136 = vpop.xlane.xlu0 %4135
  %v4137 = vsel %vm417, %v4133, 0.0
  %4138 = vadd.xlane.f32.xlu0 %v4137
  %v4139 = vpop.xlane.xlu0 %4138
  %v4140 = vrcp.pop %v4136
  %v4141 = vmul.f32 %v4131, %v4140
  %v4142 = vrcp.pop %v4139
  %v4143 = vmul.f32 %v4133, %v4142
  %v4145 = vsel %vm417, %v4141, 0
  %4147 = vmatprep.subr.mxu0 0.0
  %4148 = vmatpush1.msra.mxu0 %v3960
  %4149 = vmatprep.subr.mxu0 0.0
  %4150 = vmatpush1.msra.mxu0 0.0
  %4151 = vmatprep.subr.mxu0 0.0
  %4152 = vmatpush1.msra.mxu0 0.0
  %4153 = vmatprep.subr.mxu0 0.0
  %4154 = vmatpush1.msra.mxu0 0.0
  %4155 = vmatprep.subr.mxu0 0.0
  %4156 = vmatpush1.msra.mxu0 0.0
  %4157 = vmatprep.subr.mxu0 0.0
  %4158 = vmatpush1.msra.mxu0 0.0
  %4159 = vmatprep.subr.mxu0 0.0
  %4160 = vmatpush1.msra.mxu0 0.0
  %4161 = vmatprep.subr.mxu0 0.0
  %4162 = vmatpush1.msra.mxu0 0.0
  %4163 = vmatprep.subr.mxu0 0.0
  %4164 = vmatpush1.msra.mxu0 0.0
  %4165 = vmatprep.subr.mxu0 0.0
  %4166 = vmatpush1.msra.mxu0 0.0
  %4167 = vmatprep.subr.mxu0 0.0
  %4168 = vmatpush1.msra.mxu0 0.0
  %4169 = vmatprep.subr.mxu0 0.0
  %4170 = vmatpush1.msra.mxu0 0.0
  %4171 = vmatprep.subr.mxu0 0.0
  %4172 = vmatpush1.msra.mxu0 0.0
  %4173 = vmatprep.subr.mxu0 0.0
  %4174 = vmatpush1.msra.mxu0 0.0
  %4175 = vmatprep.subr.mxu0 0.0
  %4176 = vmatpush1.msra.mxu0 0.0
  %4177 = vmatprep.subr.mxu0 0.0
  %4178 = vmatpush1.msra.mxu0 0.0
  %4179 = vmatprep.subr.mxu0 0.0
  %4180 = vmatpush1.msra.mxu0 0.0
  %4181 = vmatprep.subr.mxu0 0.0
  %4182 = vmatpush1.msra.mxu0 0.0
  %4183 = vmatprep.subr.mxu0 0.0
  %4184 = vmatpush1.msra.mxu0 0.0
  %4185 = vmatprep.subr.mxu0 0.0
  %4186 = vmatpush1.msra.mxu0 0.0
  %4187 = vmatprep.subr.mxu0 0.0
  %4188 = vmatpush1.msra.mxu0 0.0
  %4189 = vmatprep.subr.mxu0 0.0
  %4190 = vmatpush1.msra.mxu0 0.0
  %4191 = vmatprep.subr.mxu0 0.0
  %4192 = vmatpush1.msra.mxu0 0.0
  %4193 = vmatprep.subr.mxu0 0.0
  %4194 = vmatpush1.msra.mxu0 0.0
  %4195 = vmatprep.subr.mxu0 0.0
  %4196 = vmatpush1.msra.mxu0 0.0
  %4197 = vmatprep.subr.mxu0 0.0
  %4198 = vmatpush1.msra.mxu0 0.0
  %4199 = vmatprep.subr.mxu0 0.0
  %4200 = vmatpush1.msra.mxu0 0.0
  %4201 = vmatprep.subr.mxu0 0.0
  %4202 = vmatpush1.msra.mxu0 0.0
  %4203 = vmatprep.subr.mxu0 0.0
  %4204 = vmatpush1.msra.mxu0 0.0
  %4205 = vmatprep.subr.mxu0 0.0
  %4206 = vmatpush1.msra.mxu0 0.0
  %4207 = vmatprep.subr.mxu0 0.0
  %4208 = vmatpush1.msra.mxu0 0.0
  %4209 = vmatprep.subr.mxu0 0.0
  %4210 = vmatpush1.msra.mxu0 0.0
  %4211 = vmatprep.mubr.f32.mxu0 0.0
  %4212 = vmatmul.mubr.f32.gmra.mrb[0].mxu0 %v4145
  %v4213 = vpop.f32.mrb[0].mxu0
  %v4214 = vadd.f32 0.0, %v4213
  %v4215 = vpop.f32.mrb[0].mxu0
  %4216 = vdwg.mxu0
  %v4218 = vsel %vm417, %v4143, 0
  %4220 = vmatprep.subr.mxu0 0.0
  %4221 = vmatpush1.msra.mxu0 %v3966
  %4222 = vmatprep.subr.mxu0 0.0
  %4223 = vmatpush1.msra.mxu0 0.0
  %4224 = vmatprep.subr.mxu0 0.0
  %4225 = vmatpush1.msra.mxu0 0.0
  %4226 = vmatprep.subr.mxu0 0.0
  %4227 = vmatpush1.msra.mxu0 0.0
  %4228 = vmatprep.subr.mxu0 0.0
  %4229 = vmatpush1.msra.mxu0 0.0
  %4230 = vmatprep.subr.mxu0 0.0
  %4231 = vmatpush1.msra.mxu0 0.0
  %4232 = vmatprep.subr.mxu0 0.0
  %4233 = vmatpush1.msra.mxu0 0.0
  %4234 = vmatprep.subr.mxu0 0.0
  %4235 = vmatpush1.msra.mxu0 0.0
  %4236 = vmatprep.subr.mxu0 0.0
  %4237 = vmatpush1.msra.mxu0 0.0
  %4238 = vmatprep.subr.mxu0 0.0
  %4239 = vmatpush1.msra.mxu0 0.0
  %4240 = vmatprep.subr.mxu0 0.0
  %4241 = vmatpush1.msra.mxu0 0.0
  %4242 = vmatprep.subr.mxu0 0.0
  %4243 = vmatpush1.msra.mxu0 0.0
  %4244 = vmatprep.subr.mxu0 0.0
  %4245 = vmatpush1.msra.mxu0 0.0
  %4246 = vmatprep.subr.mxu0 0.0
  %4247 = vmatpush1.msra.mxu0 0.0
  %4248 = vmatprep.subr.mxu0 0.0
  %4249 = vmatpush1.msra.mxu0 0.0
  %4250 = vmatprep.subr.mxu0 0.0
  %4251 = vmatpush1.msra.mxu0 0.0
  %4252 = vmatprep.subr.mxu0 0.0
  %4253 = vmatpush1.msra.mxu0 0.0
  %4254 = vmatprep.subr.mxu0 0.0
  %4255 = vmatpush1.msra.mxu0 0.0
  %4256 = vmatprep.subr.mxu0 0.0
  %4257 = vmatpush1.msra.mxu0 0.0
  %4258 = vmatprep.subr.mxu0 0.0
  %4259 = vmatpush1.msra.mxu0 0.0
  %4260 = vmatprep.subr.mxu0 0.0
  %4261 = vmatpush1.msra.mxu0 0.0
  %4262 = vmatprep.subr.mxu0 0.0
  %4263 = vmatpush1.msra.mxu0 0.0
  %4264 = vmatprep.subr.mxu0 0.0
  %4265 = vmatpush1.msra.mxu0 0.0
  %4266 = vmatprep.subr.mxu0 0.0
  %4267 = vmatpush1.msra.mxu0 0.0
  %4268 = vmatprep.subr.mxu0 0.0
  %4269 = vmatpush1.msra.mxu0 0.0
  %4270 = vmatprep.subr.mxu0 0.0
  %4271 = vmatpush1.msra.mxu0 0.0
  %4272 = vmatprep.subr.mxu0 0.0
  %4273 = vmatpush1.msra.mxu0 0.0
  %4274 = vmatprep.subr.mxu0 0.0
  %4275 = vmatpush1.msra.mxu0 0.0
  %4276 = vmatprep.subr.mxu0 0.0
  %4277 = vmatpush1.msra.mxu0 0.0
  %4278 = vmatprep.subr.mxu0 0.0
  %4279 = vmatpush1.msra.mxu0 0.0
  %4280 = vmatprep.subr.mxu0 0.0
  %4281 = vmatpush1.msra.mxu0 0.0
  %4282 = vmatprep.subr.mxu0 0.0
  %4283 = vmatpush1.msra.mxu0 0.0
  %4284 = vmatprep.mubr.f32.mxu0 0.0
  %4285 = vmatmul.mubr.f32.gmra.mrb[0].mxu0 %v4218
  %v4286 = vpop.f32.mrb[0].mxu0
  %v4287 = vadd.f32 0.0, %v4286
  %v4288 = vpop.f32.mrb[0].mxu0
  %4289 = vdwg.mxu0
  %4290 = vrot.lane.b32.xlu0 %v3958, 112
  %v4291 = vpop.permute.xlu0 %4290
  %4292 = vrot.lane.b32.xlu0 %v3958, 48
  %v4293 = vpop.permute.xlu0 %4292
  %v4294 = vsel %vm69, %v4291, 0
  %v4296 = vsel %vm69, %v4293, 0
  %4298 = vmatprep.subr.mxu0 0.0
  %4299 = vmatpush1.xpose.msra.mxu0 %v4296
  %4300 = vmatprep.subr.mxu0 0.0
  %4301 = vmatpush1.xpose.msra.mxu0 0.0
  %4302 = vmatprep.subr.mxu0 0.0
  %4303 = vmatpush1.xpose.msra.mxu0 0.0
  %4304 = vmatprep.subr.mxu0 0.0
  %4305 = vmatpush1.xpose.msra.mxu0 0.0
  %4306 = vmatprep.subr.mxu0 0.0
  %4307 = vmatpush1.xpose.msra.mxu0 0.0
  %4308 = vmatprep.subr.mxu0 0.0
  %4309 = vmatpush1.xpose.msra.mxu0 0.0
  %4310 = vmatprep.subr.mxu0 0.0
  %4311 = vmatpush1.xpose.msra.mxu0 0.0
  %4312 = vmatprep.subr.mxu0 0.0
  %4313 = vmatpush1.xpose.msra.mxu0 0.0
  %4314 = vmatprep.subr.mxu0 0.0
  %4315 = vmatpush1.xpose.msra.mxu0 0.0
  %4316 = vmatprep.subr.mxu0 0.0
  %4317 = vmatpush1.xpose.msra.mxu0 0.0
  %4318 = vmatprep.subr.mxu0 0.0
  %4319 = vmatpush1.xpose.msra.mxu0 0.0
  %4320 = vmatprep.subr.mxu0 0.0
  %4321 = vmatpush1.xpose.msra.mxu0 0.0
  %4322 = vmatprep.subr.mxu0 0.0
  %4323 = vmatpush1.xpose.msra.mxu0 0.0
  %4324 = vmatprep.subr.mxu0 0.0
  %4325 = vmatpush1.xpose.msra.mxu0 0.0
  %4326 = vmatprep.subr.mxu0 0.0
  %4327 = vmatpush1.xpose.msra.mxu0 0.0
  %4328 = vmatprep.subr.mxu0 0.0
  %4329 = vmatpush1.xpose.msra.mxu0 0.0
  %4330 = vmatprep.subr.mxu0 0.0
  %4331 = vmatpush1.xpose.msra.mxu0 0.0
  %4332 = vmatprep.subr.mxu0 0.0
  %4333 = vmatpush1.xpose.msra.mxu0 0.0
  %4334 = vmatprep.subr.mxu0 0.0
  %4335 = vmatpush1.xpose.msra.mxu0 0.0
  %4336 = vmatprep.subr.mxu0 0.0
  %4337 = vmatpush1.xpose.msra.mxu0 0.0
  %4338 = vmatprep.subr.mxu0 0.0
  %4339 = vmatpush1.xpose.msra.mxu0 0.0
  %4340 = vmatprep.subr.mxu0 0.0
  %4341 = vmatpush1.xpose.msra.mxu0 0.0
  %4342 = vmatprep.subr.mxu0 0.0
  %4343 = vmatpush1.xpose.msra.mxu0 0.0
  %4344 = vmatprep.subr.mxu0 0.0
  %4345 = vmatpush1.xpose.msra.mxu0 0.0
  %4346 = vmatprep.subr.mxu0 0.0
  %4347 = vmatpush1.xpose.msra.mxu0 0.0
  %4348 = vmatprep.subr.mxu0 0.0
  %4349 = vmatpush1.xpose.msra.mxu0 0.0
  %4350 = vmatprep.subr.mxu0 0.0
  %4351 = vmatpush1.xpose.msra.mxu0 0.0
  %4352 = vmatprep.subr.mxu0 0.0
  %4353 = vmatpush1.xpose.msra.mxu0 0.0
  %4354 = vmatprep.subr.mxu0 0.0
  %4355 = vmatpush1.xpose.msra.mxu0 0.0
  %4356 = vmatprep.subr.mxu0 0.0
  %4357 = vmatpush1.xpose.msra.mxu0 0.0
  %4358 = vmatprep.subr.mxu0 0.0
  %4359 = vmatpush1.xpose.msra.mxu0 0.0
  %4360 = vmatprep.subr.mxu0 0.0
  %4361 = vmatpush1.xpose.msra.mxu0 0.0
  %4362 = vmatprep.mubr.f32.mxu0 0.0
  %4363 = vmatmul.mubr.f32.gmra.mrb[0].mxu0 %v4294
  %v4364 = vpop.f32.mrb[0].mxu0
  %v4365 = vadd.f32 0.0, %v4364
  %v4366 = vpop.f32.mrb[0].mxu0
  %4367 = vdwg.mxu0
  %4368 = vrot.lane.b32.xlu0 %v3964, 112
  %v4369 = vpop.permute.xlu0 %4368
  %4370 = vrot.lane.b32.xlu0 %v3964, 48
  %v4371 = vpop.permute.xlu0 %4370
  %v4372 = vsel %vm69, %v4369, 0
  %v4374 = vsel %vm69, %v4371, 0
  %4376 = vmatprep.subr.mxu0 0.0
  %4377 = vmatpush1.xpose.msra.mxu0 %v4374
  %4378 = vmatprep.subr.mxu0 0.0
  %4379 = vmatpush1.xpose.msra.mxu0 0.0
  %4380 = vmatprep.subr.mxu0 0.0
  %4381 = vmatpush1.xpose.msra.mxu0 0.0
  %4382 = vmatprep.subr.mxu0 0.0
  %4383 = vmatpush1.xpose.msra.mxu0 0.0
  %4384 = vmatprep.subr.mxu0 0.0
  %4385 = vmatpush1.xpose.msra.mxu0 0.0
  %4386 = vmatprep.subr.mxu0 0.0
  %4387 = vmatpush1.xpose.msra.mxu0 0.0
  %4388 = vmatprep.subr.mxu0 0.0
  %4389 = vmatpush1.xpose.msra.mxu0 0.0
  %4390 = vmatprep.subr.mxu0 0.0
  %4391 = vmatpush1.xpose.msra.mxu0 0.0
  %4392 = vmatprep.subr.mxu0 0.0
  %4393 = vmatpush1.xpose.msra.mxu0 0.0
  %4394 = vmatprep.subr.mxu0 0.0
  %4395 = vmatpush1.xpose.msra.mxu0 0.0
  %4396 = vmatprep.subr.mxu0 0.0
  %4397 = vmatpush1.xpose.msra.mxu0 0.0
  %4398 = vmatprep.subr.mxu0 0.0
  %4399 = vmatpush1.xpose.msra.mxu0 0.0
  %4400 = vmatprep.subr.mxu0 0.0
  %4401 = vmatpush1.xpose.msra.mxu0 0.0
  %4402 = vmatprep.subr.mxu0 0.0
  %4403 = vmatpush1.xpose.msra.mxu0 0.0
  %4404 = vmatprep.subr.mxu0 0.0
  %4405 = vmatpush1.xpose.msra.mxu0 0.0
  %4406 = vmatprep.subr.mxu0 0.0
  %4407 = vmatpush1.xpose.msra.mxu0 0.0
  %4408 = vmatprep.subr.mxu0 0.0
  %4409 = vmatpush1.xpose.msra.mxu0 0.0
  %4410 = vmatprep.subr.mxu0 0.0
  %4411 = vmatpush1.xpose.msra.mxu0 0.0
  %4412 = vmatprep.subr.mxu0 0.0
  %4413 = vmatpush1.xpose.msra.mxu0 0.0
  %4414 = vmatprep.subr.mxu0 0.0
  %4415 = vmatpush1.xpose.msra.mxu0 0.0
  %4416 = vmatprep.subr.mxu0 0.0
  %4417 = vmatpush1.xpose.msra.mxu0 0.0
  %4418 = vmatprep.subr.mxu0 0.0
  %4419 = vmatpush1.xpose.msra.mxu0 0.0
  %4420 = vmatprep.subr.mxu0 0.0
  %4421 = vmatpush1.xpose.msra.mxu0 0.0
  %4422 = vmatprep.subr.mxu0 0.0
  %4423 = vmatpush1.xpose.msra.mxu0 0.0
  %4424 = vmatprep.subr.mxu0 0.0
  %4425 = vmatpush1.xpose.msra.mxu0 0.0
  %4426 = vmatprep.subr.mxu0 0.0
  %4427 = vmatpush1.xpose.msra.mxu0 0.0
  %4428 = vmatprep.subr.mxu0 0.0
  %4429 = vmatpush1.xpose.msra.mxu0 0.0
  %4430 = vmatprep.subr.mxu0 0.0
  %4431 = vmatpush1.xpose.msra.mxu0 0.0
  %4432 = vmatprep.subr.mxu0 0.0
  %4433 = vmatpush1.xpose.msra.mxu0 0.0
  %4434 = vmatprep.subr.mxu0 0.0
  %4435 = vmatpush1.xpose.msra.mxu0 0.0
  %4436 = vmatprep.subr.mxu0 0.0
  %4437 = vmatpush1.xpose.msra.mxu0 0.0
  %4438 = vmatprep.subr.mxu0 0.0
  %4439 = vmatpush1.xpose.msra.mxu0 0.0
  %4440 = vmatprep.mubr.f32.mxu0 0.0
  %4441 = vmatmul.mubr.f32.gmra.mrb[0].mxu0 %v4372
  %v4442 = vpop.f32.mrb[0].mxu0
  %v4443 = vadd.f32 0.0, %v4442
  %v4444 = vpop.f32.mrb[0].mxu0
  %4445 = vdwg.mxu0
  %v4446 = vsel %vm417, %v4365, -inf
  %4447 = vmax.xlane.f32.xlu0 %v4446
  %v4448 = vpop.xlane.xlu0 %4447
  %v4449 = vsel %vm417, %v4443, -inf
  %4450 = vmax.xlane.f32.xlu0 %v4449
  %v4451 = vpop.xlane.xlu0 %4450
  %v4452 = vsub.f32 %v4365, %v4448
  %v4453 = vsub.f32 %v4443, %v4451
  %v4454 = vmul.f32 %v4452, 1.442695
  %v4455 = vpow.pop %v4454
  %v4456 = vmul.f32 %v4453, 1.442695
  %v4457 = vpow.pop %v4456
  %v4458 = vsel %vm417, %v4455, 0.0
  %4459 = vadd.xlane.f32.xlu0 %v4458
  %v4460 = vpop.xlane.xlu0 %4459
  %v4461 = vsel %vm417, %v4457, 0.0
  %4462 = vadd.xlane.f32.xlu0 %v4461
  %v4463 = vpop.xlane.xlu0 %4462
  %v4464 = vrcp.pop %v4460
  %v4465 = vmul.f32 %v4455, %v4464
  %v4466 = vrcp.pop %v4463
  %v4467 = vmul.f32 %v4457, %v4466
  %4469 = vrot.lane.b32.xlu0 %v3960, 112
  %v4470 = vpop.permute.xlu0 %4469
  %v4473 = vsel %vm417, %v4465, 0
  %4475 = vmatprep.subr.mxu0 0.0
  %4476 = vmatpush1.msra.mxu0 %v4470
  %4477 = vmatprep.subr.mxu0 0.0
  %4478 = vmatpush1.msra.mxu0 0.0
  %4479 = vmatprep.subr.mxu0 0.0
  %4480 = vmatpush1.msra.mxu0 0.0
  %4481 = vmatprep.subr.mxu0 0.0
  %4482 = vmatpush1.msra.mxu0 0.0
  %4483 = vmatprep.subr.mxu0 0.0
  %4484 = vmatpush1.msra.mxu0 0.0
  %4485 = vmatprep.subr.mxu0 0.0
  %4486 = vmatpush1.msra.mxu0 0.0
  %4487 = vmatprep.subr.mxu0 0.0
  %4488 = vmatpush1.msra.mxu0 0.0
  %4489 = vmatprep.subr.mxu0 0.0
  %4490 = vmatpush1.msra.mxu0 0.0
  %4491 = vmatprep.subr.mxu0 0.0
  %4492 = vmatpush1.msra.mxu0 0.0
  %4493 = vmatprep.subr.mxu0 0.0
  %4494 = vmatpush1.msra.mxu0 0.0
  %4495 = vmatprep.subr.mxu0 0.0
  %4496 = vmatpush1.msra.mxu0 0.0
  %4497 = vmatprep.subr.mxu0 0.0
  %4498 = vmatpush1.msra.mxu0 0.0
  %4499 = vmatprep.subr.mxu0 0.0
  %4500 = vmatpush1.msra.mxu0 0.0
  %4501 = vmatprep.subr.mxu0 0.0
  %4502 = vmatpush1.msra.mxu0 0.0
  %4503 = vmatprep.subr.mxu0 0.0
  %4504 = vmatpush1.msra.mxu0 0.0
  %4505 = vmatprep.subr.mxu0 0.0
  %4506 = vmatpush1.msra.mxu0 0.0
  %4507 = vmatprep.subr.mxu0 0.0
  %4508 = vmatpush1.msra.mxu0 0.0
  %4509 = vmatprep.subr.mxu0 0.0
  %4510 = vmatpush1.msra.mxu0 0.0
  %4511 = vmatprep.subr.mxu0 0.0
  %4512 = vmatpush1.msra.mxu0 0.0
  %4513 = vmatprep.subr.mxu0 0.0
  %4514 = vmatpush1.msra.mxu0 0.0
  %4515 = vmatprep.subr.mxu0 0.0
  %4516 = vmatpush1.msra.mxu0 0.0
  %4517 = vmatprep.subr.mxu0 0.0
  %4518 = vmatpush1.msra.mxu0 0.0
  %4519 = vmatprep.subr.mxu0 0.0
  %4520 = vmatpush1.msra.mxu0 0.0
  %4521 = vmatprep.subr.mxu0 0.0
  %4522 = vmatpush1.msra.mxu0 0.0
  %4523 = vmatprep.subr.mxu0 0.0
  %4524 = vmatpush1.msra.mxu0 0.0
  %4525 = vmatprep.subr.mxu0 0.0
  %4526 = vmatpush1.msra.mxu0 0.0
  %4527 = vmatprep.subr.mxu0 0.0
  %4528 = vmatpush1.msra.mxu0 0.0
  %4529 = vmatprep.subr.mxu0 0.0
  %4530 = vmatpush1.msra.mxu0 0.0
  %4531 = vmatprep.subr.mxu0 0.0
  %4532 = vmatpush1.msra.mxu0 0.0
  %4533 = vmatprep.subr.mxu0 0.0
  %4534 = vmatpush1.msra.mxu0 0.0
  %4535 = vmatprep.subr.mxu0 0.0
  %4536 = vmatpush1.msra.mxu0 0.0
  %4537 = vmatprep.subr.mxu0 0.0
  %4538 = vmatpush1.msra.mxu0 0.0
  %4539 = vmatprep.mubr.f32.mxu0 0.0
  %4540 = vmatmul.mubr.f32.gmra.mrb[0].mxu0 %v4473
  %v4541 = vpop.f32.mrb[0].mxu0
  %v4542 = vadd.f32 0.0, %v4541
  %v4543 = vpop.f32.mrb[0].mxu0
  %4544 = vdwg.mxu0
  %4546 = vrot.lane.b32.xlu0 %v3966, 112
  %v4547 = vpop.permute.xlu0 %4546
  %v4550 = vsel %vm417, %v4467, 0
  %4552 = vmatprep.subr.mxu0 0.0
  %4553 = vmatpush1.msra.mxu0 %v4547
  %4554 = vmatprep.subr.mxu0 0.0
  %4555 = vmatpush1.msra.mxu0 0.0
  %4556 = vmatprep.subr.mxu0 0.0
  %4557 = vmatpush1.msra.mxu0 0.0
  %4558 = vmatprep.subr.mxu0 0.0
  %4559 = vmatpush1.msra.mxu0 0.0
  %4560 = vmatprep.subr.mxu0 0.0
  %4561 = vmatpush1.msra.mxu0 0.0
  %4562 = vmatprep.subr.mxu0 0.0
  %4563 = vmatpush1.msra.mxu0 0.0
  %4564 = vmatprep.subr.mxu0 0.0
  %4565 = vmatpush1.msra.mxu0 0.0
  %4566 = vmatprep.subr.mxu0 0.0
  %4567 = vmatpush1.msra.mxu0 0.0
  %4568 = vmatprep.subr.mxu0 0.0
  %4569 = vmatpush1.msra.mxu0 0.0
  %4570 = vmatprep.subr.mxu0 0.0
  %4571 = vmatpush1.msra.mxu0 0.0
  %4572 = vmatprep.subr.mxu0 0.0
  %4573 = vmatpush1.msra.mxu0 0.0
  %4574 = vmatprep.subr.mxu0 0.0
  %4575 = vmatpush1.msra.mxu0 0.0
  %4576 = vmatprep.subr.mxu0 0.0
  %4577 = vmatpush1.msra.mxu0 0.0
  %4578 = vmatprep.subr.mxu0 0.0
  %4579 = vmatpush1.msra.mxu0 0.0
  %4580 = vmatprep.subr.mxu0 0.0
  %4581 = vmatpush1.msra.mxu0 0.0
  %4582 = vmatprep.subr.mxu0 0.0
  %4583 = vmatpush1.msra.mxu0 0.0
  %4584 = vmatprep.subr.mxu0 0.0
  %4585 = vmatpush1.msra.mxu0 0.0
  %4586 = vmatprep.subr.mxu0 0.0
  %4587 = vmatpush1.msra.mxu0 0.0
  %4588 = vmatprep.subr.mxu0 0.0
  %4589 = vmatpush1.msra.mxu0 0.0
  %4590 = vmatprep.subr.mxu0 0.0
  %4591 = vmatpush1.msra.mxu0 0.0
  %4592 = vmatprep.subr.mxu0 0.0
  %4593 = vmatpush1.msra.mxu0 0.0
  %4594 = vmatprep.subr.mxu0 0.0
  %4595 = vmatpush1.msra.mxu0 0.0
  %4596 = vmatprep.subr.mxu0 0.0
  %4597 = vmatpush1.msra.mxu0 0.0
  %4598 = vmatprep.subr.mxu0 0.0
  %4599 = vmatpush1.msra.mxu0 0.0
  %4600 = vmatprep.subr.mxu0 0.0
  %4601 = vmatpush1.msra.mxu0 0.0
  %4602 = vmatprep.subr.mxu0 0.0
  %4603 = vmatpush1.msra.mxu0 0.0
  %4604 = vmatprep.subr.mxu0 0.0
  %4605 = vmatpush1.msra.mxu0 0.0
  %4606 = vmatprep.subr.mxu0 0.0
  %4607 = vmatpush1.msra.mxu0 0.0
  %4608 = vmatprep.subr.mxu0 0.0
  %4609 = vmatpush1.msra.mxu0 0.0
  %4610 = vmatprep.subr.mxu0 0.0
  %4611 = vmatpush1.msra.mxu0 0.0
  %4612 = vmatprep.subr.mxu0 0.0
  %4613 = vmatpush1.msra.mxu0 0.0
  %4614 = vmatprep.subr.mxu0 0.0
  %4615 = vmatpush1.msra.mxu0 0.0
  %4616 = vmatprep.mubr.f32.mxu0 0.0
  %4617 = vmatmul.mubr.f32.gmra.mrb[0].mxu0 %v4550
  %v4618 = vpop.f32.mrb[0].mxu0
  %v4619 = vadd.f32 0.0, %v4618
  %v4620 = vpop.f32.mrb[0].mxu0
  %4621 = vdwg.mxu0
  %4622 = vrot.lane.b32.xlu0 %v3958, 96
  %v4623 = vpop.permute.xlu0 %4622
  %4624 = vrot.lane.b32.xlu0 %v3958, 32
  %v4625 = vpop.permute.xlu0 %4624
  %v4626 = vsel %vm69, %v4623, 0
  %v4628 = vsel %vm69, %v4625, 0
  %4630 = vmatprep.subr.mxu0 0.0
  %4631 = vmatpush1.xpose.msra.mxu0 %v4628
  %4632 = vmatprep.subr.mxu0 0.0
  %4633 = vmatpush1.xpose.msra.mxu0 0.0
  %4634 = vmatprep.subr.mxu0 0.0
  %4635 = vmatpush1.xpose.msra.mxu0 0.0
  %4636 = vmatprep.subr.mxu0 0.0
  %4637 = vmatpush1.xpose.msra.mxu0 0.0
  %4638 = vmatprep.subr.mxu0 0.0
  %4639 = vmatpush1.xpose.msra.mxu0 0.0
  %4640 = vmatprep.subr.mxu0 0.0
  %4641 = vmatpush1.xpose.msra.mxu0 0.0
  %4642 = vmatprep.subr.mxu0 0.0
  %4643 = vmatpush1.xpose.msra.mxu0 0.0
  %4644 = vmatprep.subr.mxu0 0.0
  %4645 = vmatpush1.xpose.msra.mxu0 0.0
  %4646 = vmatprep.subr.mxu0 0.0
  %4647 = vmatpush1.xpose.msra.mxu0 0.0
  %4648 = vmatprep.subr.mxu0 0.0
  %4649 = vmatpush1.xpose.msra.mxu0 0.0
  %4650 = vmatprep.subr.mxu0 0.0
  %4651 = vmatpush1.xpose.msra.mxu0 0.0
  %4652 = vmatprep.subr.mxu0 0.0
  %4653 = vmatpush1.xpose.msra.mxu0 0.0
  %4654 = vmatprep.subr.mxu0 0.0
  %4655 = vmatpush1.xpose.msra.mxu0 0.0
  %4656 = vmatprep.subr.mxu0 0.0
  %4657 = vmatpush1.xpose.msra.mxu0 0.0
  %4658 = vmatprep.subr.mxu0 0.0
  %4659 = vmatpush1.xpose.msra.mxu0 0.0
  %4660 = vmatprep.subr.mxu0 0.0
  %4661 = vmatpush1.xpose.msra.mxu0 0.0
  %4662 = vmatprep.subr.mxu0 0.0
  %4663 = vmatpush1.xpose.msra.mxu0 0.0
  %4664 = vmatprep.subr.mxu0 0.0
  %4665 = vmatpush1.xpose.msra.mxu0 0.0
  %4666 = vmatprep.subr.mxu0 0.0
  %4667 = vmatpush1.xpose.msra.mxu0 0.0
  %4668 = vmatprep.subr.mxu0 0.0
  %4669 = vmatpush1.xpose.msra.mxu0 0.0
  %4670 = vmatprep.subr.mxu0 0.0
  %4671 = vmatpush1.xpose.msra.mxu0 0.0
  %4672 = vmatprep.subr.mxu0 0.0
  %4673 = vmatpush1.xpose.msra.mxu0 0.0
  %4674 = vmatprep.subr.mxu0 0.0
  %4675 = vmatpush1.xpose.msra.mxu0 0.0
  %4676 = vmatprep.subr.mxu0 0.0
  %4677 = vmatpush1.xpose.msra.mxu0 0.0
  %4678 = vmatprep.subr.mxu0 0.0
  %4679 = vmatpush1.xpose.msra.mxu0 0.0
  %4680 = vmatprep.subr.mxu0 0.0
  %4681 = vmatpush1.xpose.msra.mxu0 0.0
  %4682 = vmatprep.subr.mxu0 0.0
  %4683 = vmatpush1.xpose.msra.mxu0 0.0
  %4684 = vmatprep.subr.mxu0 0.0
  %4685 = vmatpush1.xpose.msra.mxu0 0.0
  %4686 = vmatprep.subr.mxu0 0.0
  %4687 = vmatpush1.xpose.msra.mxu0 0.0
  %4688 = vmatprep.subr.mxu0 0.0
  %4689 = vmatpush1.xpose.msra.mxu0 0.0
  %4690 = vmatprep.subr.mxu0 0.0
  %4691 = vmatpush1.xpose.msra.mxu0 0.0
  %4692 = vmatprep.subr.mxu0 0.0
  %4693 = vmatpush1.xpose.msra.mxu0 0.0
  %4694 = vmatprep.mubr.f32.mxu0 0.0
  %4695 = vmatmul.mubr.f32.gmra.mrb[0].mxu0 %v4626
  %v4696 = vpop.f32.mrb[0].mxu0
  %v4697 = vadd.f32 0.0, %v4696
  %v4698 = vpop.f32.mrb[0].mxu0
  %4699 = vdwg.mxu0
  %4700 = vrot.lane.b32.xlu0 %v3964, 96
  %v4701 = vpop.permute.xlu0 %4700
  %4702 = vrot.lane.b32.xlu0 %v3964, 32
  %v4703 = vpop.permute.xlu0 %4702
  %v4704 = vsel %vm69, %v4701, 0
  %v4706 = vsel %vm69, %v4703, 0
  %4708 = vmatprep.subr.mxu0 0.0
  %4709 = vmatpush1.xpose.msra.mxu0 %v4706
  %4710 = vmatprep.subr.mxu0 0.0
  %4711 = vmatpush1.xpose.msra.mxu0 0.0
  %4712 = vmatprep.subr.mxu0 0.0
  %4713 = vmatpush1.xpose.msra.mxu0 0.0
  %4714 = vmatprep.subr.mxu0 0.0
  %4715 = vmatpush1.xpose.msra.mxu0 0.0
  %4716 = vmatprep.subr.mxu0 0.0
  %4717 = vmatpush1.xpose.msra.mxu0 0.0
  %4718 = vmatprep.subr.mxu0 0.0
  %4719 = vmatpush1.xpose.msra.mxu0 0.0
  %4720 = vmatprep.subr.mxu0 0.0
  %4721 = vmatpush1.xpose.msra.mxu0 0.0
  %4722 = vmatprep.subr.mxu0 0.0
  %4723 = vmatpush1.xpose.msra.mxu0 0.0
  %4724 = vmatprep.subr.mxu0 0.0
  %4725 = vmatpush1.xpose.msra.mxu0 0.0
  %4726 = vmatprep.subr.mxu0 0.0
  %4727 = vmatpush1.xpose.msra.mxu0 0.0
  %4728 = vmatprep.subr.mxu0 0.0
  %4729 = vmatpush1.xpose.msra.mxu0 0.0
  %4730 = vmatprep.subr.mxu0 0.0
  %4731 = vmatpush1.xpose.msra.mxu0 0.0
  %4732 = vmatprep.subr.mxu0 0.0
  %4733 = vmatpush1.xpose.msra.mxu0 0.0
  %4734 = vmatprep.subr.mxu0 0.0
  %4735 = vmatpush1.xpose.msra.mxu0 0.0
  %4736 = vmatprep.subr.mxu0 0.0
  %4737 = vmatpush1.xpose.msra.mxu0 0.0
  %4738 = vmatprep.subr.mxu0 0.0
  %4739 = vmatpush1.xpose.msra.mxu0 0.0
  %4740 = vmatprep.subr.mxu0 0.0
  %4741 = vmatpush1.xpose.msra.mxu0 0.0
  %4742 = vmatprep.subr.mxu0 0.0
  %4743 = vmatpush1.xpose.msra.mxu0 0.0
  %4744 = vmatprep.subr.mxu0 0.0
  %4745 = vmatpush1.xpose.msra.mxu0 0.0
  %4746 = vmatprep.subr.mxu0 0.0
  %4747 = vmatpush1.xpose.msra.mxu0 0.0
  %4748 = vmatprep.subr.mxu0 0.0
  %4749 = vmatpush1.xpose.msra.mxu0 0.0
  %4750 = vmatprep.subr.mxu0 0.0
  %4751 = vmatpush1.xpose.msra.mxu0 0.0
  %4752 = vmatprep.subr.mxu0 0.0
  %4753 = vmatpush1.xpose.msra.mxu0 0.0
  %4754 = vmatprep.subr.mxu0 0.0
  %4755 = vmatpush1.xpose.msra.mxu0 0.0
  %4756 = vmatprep.subr.mxu0 0.0
  %4757 = vmatpush1.xpose.msra.mxu0 0.0
  %4758 = vmatprep.subr.mxu0 0.0
  %4759 = vmatpush1.xpose.msra.mxu0 0.0
  %4760 = vmatprep.subr.mxu0 0.0
  %4761 = vmatpush1.xpose.msra.mxu0 0.0
  %4762 = vmatprep.subr.mxu0 0.0
  %4763 = vmatpush1.xpose.msra.mxu0 0.0
  %4764 = vmatprep.subr.mxu0 0.0
  %4765 = vmatpush1.xpose.msra.mxu0 0.0
  %4766 = vmatprep.subr.mxu0 0.0
  %4767 = vmatpush1.xpose.msra.mxu0 0.0
  %4768 = vmatprep.subr.mxu0 0.0
  %4769 = vmatpush1.xpose.msra.mxu0 0.0
  %4770 = vmatprep.subr.mxu0 0.0
  %4771 = vmatpush1.xpose.msra.mxu0 0.0
  %4772 = vmatprep.mubr.f32.mxu0 0.0
  %4773 = vmatmul.mubr.f32.gmra.mrb[0].mxu0 %v4704
  %v4774 = vpop.f32.mrb[0].mxu0
  %v4775 = vadd.f32 0.0, %v4774
  %v4776 = vpop.f32.mrb[0].mxu0
  %4777 = vdwg.mxu0
  %v4778 = vsel %vm417, %v4697, -inf
  %4779 = vmax.xlane.f32.xlu0 %v4778
  %v4780 = vpop.xlane.xlu0 %4779
  %v4781 = vsel %vm417, %v4775, -inf
  %4782 = vmax.xlane.f32.xlu0 %v4781
  %v4783 = vpop.xlane.xlu0 %4782
  %v4784 = vsub.f32 %v4697, %v4780
  %v4785 = vsub.f32 %v4775, %v4783
  %v4786 = vmul.f32 %v4784, 1.442695
  %v4787 = vpow.pop %v4786
  %v4788 = vmul.f32 %v4785, 1.442695
  %v4789 = vpow.pop %v4788
  %v4790 = vsel %vm417, %v4787, 0.0
  %4791 = vadd.xlane.f32.xlu0 %v4790
  %v4792 = vpop.xlane.xlu0 %4791
  %v4793 = vsel %vm417, %v4789, 0.0
  %4794 = vadd.xlane.f32.xlu0 %v4793
  %v4795 = vpop.xlane.xlu0 %4794
  %v4796 = vrcp.pop %v4792
  %v4797 = vmul.f32 %v4787, %v4796
  %v4798 = vrcp.pop %v4795
  %v4799 = vmul.f32 %v4789, %v4798
  %4800 = vrot.lane.b32.xlu0 %v3960, 96
  %v4801 = vpop.permute.xlu0 %4800
  %v4804 = vsel %vm417, %v4797, 0
  %4806 = vmatprep.subr.mxu0 0.0
  %4807 = vmatpush1.msra.mxu0 %v4801
  %4808 = vmatprep.subr.mxu0 0.0
  %4809 = vmatpush1.msra.mxu0 0.0
  %4810 = vmatprep.subr.mxu0 0.0
  %4811 = vmatpush1.msra.mxu0 0.0
  %4812 = vmatprep.subr.mxu0 0.0
  %4813 = vmatpush1.msra.mxu0 0.0
  %4814 = vmatprep.subr.mxu0 0.0
  %4815 = vmatpush1.msra.mxu0 0.0
  %4816 = vmatprep.subr.mxu0 0.0
  %4817 = vmatpush1.msra.mxu0 0.0
  %4818 = vmatprep.subr.mxu0 0.0
  %4819 = vmatpush1.msra.mxu0 0.0
  %4820 = vmatprep.subr.mxu0 0.0
  %4821 = vmatpush1.msra.mxu0 0.0
  %4822 = vmatprep.subr.mxu0 0.0
  %4823 = vmatpush1.msra.mxu0 0.0
  %4824 = vmatprep.subr.mxu0 0.0
  %4825 = vmatpush1.msra.mxu0 0.0
  %4826 = vmatprep.subr.mxu0 0.0
  %4827 = vmatpush1.msra.mxu0 0.0
  %4828 = vmatprep.subr.mxu0 0.0
  %4829 = vmatpush1.msra.mxu0 0.0
  %4830 = vmatprep.subr.mxu0 0.0
  %4831 = vmatpush1.msra.mxu0 0.0
  %4832 = vmatprep.subr.mxu0 0.0
  %4833 = vmatpush1.msra.mxu0 0.0
  %4834 = vmatprep.subr.mxu0 0.0
  %4835 = vmatpush1.msra.mxu0 0.0
  %4836 = vmatprep.subr.mxu0 0.0
  %4837 = vmatpush1.msra.mxu0 0.0
  %4838 = vmatprep.subr.mxu0 0.0
  %4839 = vmatpush1.msra.mxu0 0.0
  %4840 = vmatprep.subr.mxu0 0.0
  %4841 = vmatpush1.msra.mxu0 0.0
  %4842 = vmatprep.subr.mxu0 0.0
  %4843 = vmatpush1.msra.mxu0 0.0
  %4844 = vmatprep.subr.mxu0 0.0
  %4845 = vmatpush1.msra.mxu0 0.0
  %4846 = vmatprep.subr.mxu0 0.0
  %4847 = vmatpush1.msra.mxu0 0.0
  %4848 = vmatprep.subr.mxu0 0.0
  %4849 = vmatpush1.msra.mxu0 0.0
  %4850 = vmatprep.subr.mxu0 0.0
  %4851 = vmatpush1.msra.mxu0 0.0
  %4852 = vmatprep.subr.mxu0 0.0
  %4853 = vmatpush1.msra.mxu0 0.0
  %4854 = vmatprep.subr.mxu0 0.0
  %4855 = vmatpush1.msra.mxu0 0.0
  %4856 = vmatprep.subr.mxu0 0.0
  %4857 = vmatpush1.msra.mxu0 0.0
  %4858 = vmatprep.subr.mxu0 0.0
  %4859 = vmatpush1.msra.mxu0 0.0
  %4860 = vmatprep.subr.mxu0 0.0
  %4861 = vmatpush1.msra.mxu0 0.0
  %4862 = vmatprep.subr.mxu0 0.0
  %4863 = vmatpush1.msra.mxu0 0.0
  %4864 = vmatprep.subr.mxu0 0.0
  %4865 = vmatpush1.msra.mxu0 0.0
  %4866 = vmatprep.subr.mxu0 0.0
  %4867 = vmatpush1.msra.mxu0 0.0
  %4868 = vmatprep.subr.mxu0 0.0
  %4869 = vmatpush1.msra.mxu0 0.0
  %4870 = vmatprep.mubr.f32.mxu0 0.0
  %4871 = vmatmul.mubr.f32.gmra.mrb[0].mxu0 %v4804
  %v4872 = vpop.f32.mrb[0].mxu0
  %v4873 = vadd.f32 0.0, %v4872
  %v4874 = vpop.f32.mrb[0].mxu0
  %4875 = vdwg.mxu0
  %4876 = vrot.lane.b32.xlu0 %v3966, 96
  %v4877 = vpop.permute.xlu0 %4876
  %v4880 = vsel %vm417, %v4799, 0
  %4882 = vmatprep.subr.mxu0 0.0
  %4883 = vmatpush1.msra.mxu0 %v4877
  %4884 = vmatprep.subr.mxu0 0.0
  %4885 = vmatpush1.msra.mxu0 0.0
  %4886 = vmatprep.subr.mxu0 0.0
  %4887 = vmatpush1.msra.mxu0 0.0
  %4888 = vmatprep.subr.mxu0 0.0
  %4889 = vmatpush1.msra.mxu0 0.0
  %4890 = vmatprep.subr.mxu0 0.0
  %4891 = vmatpush1.msra.mxu0 0.0
  %4892 = vmatprep.subr.mxu0 0.0
  %4893 = vmatpush1.msra.mxu0 0.0
  %4894 = vmatprep.subr.mxu0 0.0
  %4895 = vmatpush1.msra.mxu0 0.0
  %4896 = vmatprep.subr.mxu0 0.0
  %4897 = vmatpush1.msra.mxu0 0.0
  %4898 = vmatprep.subr.mxu0 0.0
  %4899 = vmatpush1.msra.mxu0 0.0
  %4900 = vmatprep.subr.mxu0 0.0
  %4901 = vmatpush1.msra.mxu0 0.0
  %4902 = vmatprep.subr.mxu0 0.0
  %4903 = vmatpush1.msra.mxu0 0.0
  %4904 = vmatprep.subr.mxu0 0.0
  %4905 = vmatpush1.msra.mxu0 0.0
  %4906 = vmatprep.subr.mxu0 0.0
  %4907 = vmatpush1.msra.mxu0 0.0
  %4908 = vmatprep.subr.mxu0 0.0
  %4909 = vmatpush1.msra.mxu0 0.0
  %4910 = vmatprep.subr.mxu0 0.0
  %4911 = vmatpush1.msra.mxu0 0.0
  %4912 = vmatprep.subr.mxu0 0.0
  %4913 = vmatpush1.msra.mxu0 0.0
  %4914 = vmatprep.subr.mxu0 0.0
  %4915 = vmatpush1.msra.mxu0 0.0
  %4916 = vmatprep.subr.mxu0 0.0
  %4917 = vmatpush1.msra.mxu0 0.0
  %4918 = vmatprep.subr.mxu0 0.0
  %4919 = vmatpush1.msra.mxu0 0.0
  %4920 = vmatprep.subr.mxu0 0.0
  %4921 = vmatpush1.msra.mxu0 0.0
  %4922 = vmatprep.subr.mxu0 0.0
  %4923 = vmatpush1.msra.mxu0 0.0
  %4924 = vmatprep.subr.mxu0 0.0
  %4925 = vmatpush1.msra.mxu0 0.0
  %4926 = vmatprep.subr.mxu0 0.0
  %4927 = vmatpush1.msra.mxu0 0.0
  %4928 = vmatprep.subr.mxu0 0.0
  %4929 = vmatpush1.msra.mxu0 0.0
  %4930 = vmatprep.subr.mxu0 0.0
  %4931 = vmatpush1.msra.mxu0 0.0
  %4932 = vmatprep.subr.mxu0 0.0
  %4933 = vmatpush1.msra.mxu0 0.0
  %4934 = vmatprep.subr.mxu0 0.0
  %4935 = vmatpush1.msra.mxu0 0.0
  %4936 = vmatprep.subr.mxu0 0.0
  %4937 = vmatpush1.msra.mxu0 0.0
  %4938 = vmatprep.subr.mxu0 0.0
  %4939 = vmatpush1.msra.mxu0 0.0
  %4940 = vmatprep.subr.mxu0 0.0
  %4941 = vmatpush1.msra.mxu0 0.0
  %4942 = vmatprep.subr.mxu0 0.0
  %4943 = vmatpush1.msra.mxu0 0.0
  %4944 = vmatprep.subr.mxu0 0.0
  %4945 = vmatpush1.msra.mxu0 0.0
  %4946 = vmatprep.mubr.f32.mxu0 0.0
  %4947 = vmatmul.mubr.f32.gmra.mrb[0].mxu0 %v4880
  %v4948 = vpop.f32.mrb[0].mxu0
  %v4949 = vadd.f32 0.0, %v4948
  %v4950 = vpop.f32.mrb[0].mxu0
  %4951 = vdwg.mxu0
  %4952 = vrot.lane.b32.xlu0 %v3958, 80
  %v4953 = vpop.permute.xlu0 %4952
  %4954 = vrot.lane.b32.xlu0 %v3958, 16
  %v4955 = vpop.permute.xlu0 %4954
  %v4956 = vsel %vm69, %v4953, 0
  %v4958 = vsel %vm69, %v4955, 0
  %4960 = vmatprep.subr.mxu0 0.0
  %4961 = vmatpush1.xpose.msra.mxu0 %v4958
  %4962 = vmatprep.subr.mxu0 0.0
  %4963 = vmatpush1.xpose.msra.mxu0 0.0
  %4964 = vmatprep.subr.mxu0 0.0
  %4965 = vmatpush1.xpose.msra.mxu0 0.0
  %4966 = vmatprep.subr.mxu0 0.0
  %4967 = vmatpush1.xpose.msra.mxu0 0.0
  %4968 = vmatprep.subr.mxu0 0.0
  %4969 = vmatpush1.xpose.msra.mxu0 0.0
  %4970 = vmatprep.subr.mxu0 0.0
  %4971 = vmatpush1.xpose.msra.mxu0 0.0
  %4972 = vmatprep.subr.mxu0 0.0
  %4973 = vmatpush1.xpose.msra.mxu0 0.0
  %4974 = vmatprep.subr.mxu0 0.0
  %4975 = vmatpush1.xpose.msra.mxu0 0.0
  %4976 = vmatprep.subr.mxu0 0.0
  %4977 = vmatpush1.xpose.msra.mxu0 0.0
  %4978 = vmatprep.subr.mxu0 0.0
  %4979 = vmatpush1.xpose.msra.mxu0 0.0
  %4980 = vmatprep.subr.mxu0 0.0
  %4981 = vmatpush1.xpose.msra.mxu0 0.0
  %4982 = vmatprep.subr.mxu0 0.0
  %4983 = vmatpush1.xpose.msra.mxu0 0.0
  %4984 = vmatprep.subr.mxu0 0.0
  %4985 = vmatpush1.xpose.msra.mxu0 0.0
  %4986 = vmatprep.subr.mxu0 0.0
  %4987 = vmatpush1.xpose.msra.mxu0 0.0
  %4988 = vmatprep.subr.mxu0 0.0
  %4989 = vmatpush1.xpose.msra.mxu0 0.0
  %4990 = vmatprep.subr.mxu0 0.0
  %4991 = vmatpush1.xpose.msra.mxu0 0.0
  %4992 = vmatprep.subr.mxu0 0.0
  %4993 = vmatpush1.xpose.msra.mxu0 0.0
  %4994 = vmatprep.subr.mxu0 0.0
  %4995 = vmatpush1.xpose.msra.mxu0 0.0
  %4996 = vmatprep.subr.mxu0 0.0
  %4997 = vmatpush1.xpose.msra.mxu0 0.0
  %4998 = vmatprep.subr.mxu0 0.0
  %4999 = vmatpush1.xpose.msra.mxu0 0.0
  %5000 = vmatprep.subr.mxu0 0.0
  %5001 = vmatpush1.xpose.msra.mxu0 0.0
  %5002 = vmatprep.subr.mxu0 0.0
  %5003 = vmatpush1.xpose.msra.mxu0 0.0
  %5004 = vmatprep.subr.mxu0 0.0
  %5005 = vmatpush1.xpose.msra.mxu0 0.0
  %5006 = vmatprep.subr.mxu0 0.0
  %5007 = vmatpush1.xpose.msra.mxu0 0.0
  %5008 = vmatprep.subr.mxu0 0.0
  %5009 = vmatpush1.xpose.msra.mxu0 0.0
  %5010 = vmatprep.subr.mxu0 0.0
  %5011 = vmatpush1.xpose.msra.mxu0 0.0
  %5012 = vmatprep.subr.mxu0 0.0
  %5013 = vmatpush1.xpose.msra.mxu0 0.0
  %5014 = vmatprep.subr.mxu0 0.0
  %5015 = vmatpush1.xpose.msra.mxu0 0.0
  %5016 = vmatprep.subr.mxu0 0.0
  %5017 = vmatpush1.xpose.msra.mxu0 0.0
  %5018 = vmatprep.subr.mxu0 0.0
  %5019 = vmatpush1.xpose.msra.mxu0 0.0
  %5020 = vmatprep.subr.mxu0 0.0
  %5021 = vmatpush1.xpose.msra.mxu0 0.0
  %5022 = vmatprep.subr.mxu0 0.0
  %5023 = vmatpush1.xpose.msra.mxu0 0.0
  %5024 = vmatprep.mubr.f32.mxu0 0.0
  %5025 = vmatmul.mubr.f32.gmra.mrb[0].mxu0 %v4956
  %v5026 = vpop.f32.mrb[0].mxu0
  %v5027 = vadd.f32 0.0, %v5026
  %v5028 = vpop.f32.mrb[0].mxu0
  %5029 = vdwg.mxu0
  %5030 = vrot.lane.b32.xlu0 %v3964, 80
  %v5031 = vpop.permute.xlu0 %5030
  %5032 = vrot.lane.b32.xlu0 %v3964, 16
  %v5033 = vpop.permute.xlu0 %5032
  %v5034 = vsel %vm69, %v5031, 0
  %v5036 = vsel %vm69, %v5033, 0
  %5038 = vmatprep.subr.mxu0 0.0
  %5039 = vmatpush1.xpose.msra.mxu0 %v5036
  %5040 = vmatprep.subr.mxu0 0.0
  %5041 = vmatpush1.xpose.msra.mxu0 0.0
  %5042 = vmatprep.subr.mxu0 0.0
  %5043 = vmatpush1.xpose.msra.mxu0 0.0
  %5044 = vmatprep.subr.mxu0 0.0
  %5045 = vmatpush1.xpose.msra.mxu0 0.0
  %5046 = vmatprep.subr.mxu0 0.0
  %5047 = vmatpush1.xpose.msra.mxu0 0.0
  %5048 = vmatprep.subr.mxu0 0.0
  %5049 = vmatpush1.xpose.msra.mxu0 0.0
  %5050 = vmatprep.subr.mxu0 0.0
  %5051 = vmatpush1.xpose.msra.mxu0 0.0
  %5052 = vmatprep.subr.mxu0 0.0
  %5053 = vmatpush1.xpose.msra.mxu0 0.0
  %5054 = vmatprep.subr.mxu0 0.0
  %5055 = vmatpush1.xpose.msra.mxu0 0.0
  %5056 = vmatprep.subr.mxu0 0.0
  %5057 = vmatpush1.xpose.msra.mxu0 0.0
  %5058 = vmatprep.subr.mxu0 0.0
  %5059 = vmatpush1.xpose.msra.mxu0 0.0
  %5060 = vmatprep.subr.mxu0 0.0
  %5061 = vmatpush1.xpose.msra.mxu0 0.0
  %5062 = vmatprep.subr.mxu0 0.0
  %5063 = vmatpush1.xpose.msra.mxu0 0.0
  %5064 = vmatprep.subr.mxu0 0.0
  %5065 = vmatpush1.xpose.msra.mxu0 0.0
  %5066 = vmatprep.subr.mxu0 0.0
  %5067 = vmatpush1.xpose.msra.mxu0 0.0
  %5068 = vmatprep.subr.mxu0 0.0
  %5069 = vmatpush1.xpose.msra.mxu0 0.0
  %5070 = vmatprep.subr.mxu0 0.0
  %5071 = vmatpush1.xpose.msra.mxu0 0.0
  %5072 = vmatprep.subr.mxu0 0.0
  %5073 = vmatpush1.xpose.msra.mxu0 0.0
  %5074 = vmatprep.subr.mxu0 0.0
  %5075 = vmatpush1.xpose.msra.mxu0 0.0
  %5076 = vmatprep.subr.mxu0 0.0
  %5077 = vmatpush1.xpose.msra.mxu0 0.0
  %5078 = vmatprep.subr.mxu0 0.0
  %5079 = vmatpush1.xpose.msra.mxu0 0.0
  %5080 = vmatprep.subr.mxu0 0.0
  %5081 = vmatpush1.xpose.msra.mxu0 0.0
  %5082 = vmatprep.subr.mxu0 0.0
  %5083 = vmatpush1.xpose.msra.mxu0 0.0
  %5084 = vmatprep.subr.mxu0 0.0
  %5085 = vmatpush1.xpose.msra.mxu0 0.0
  %5086 = vmatprep.subr.mxu0 0.0
  %5087 = vmatpush1.xpose.msra.mxu0 0.0
  %5088 = vmatprep.subr.mxu0 0.0
  %5089 = vmatpush1.xpose.msra.mxu0 0.0
  %5090 = vmatprep.subr.mxu0 0.0
  %5091 = vmatpush1.xpose.msra.mxu0 0.0
  %5092 = vmatprep.subr.mxu0 0.0
  %5093 = vmatpush1.xpose.msra.mxu0 0.0
  %5094 = vmatprep.subr.mxu0 0.0
  %5095 = vmatpush1.xpose.msra.mxu0 0.0
  %5096 = vmatprep.subr.mxu0 0.0
  %5097 = vmatpush1.xpose.msra.mxu0 0.0
  %5098 = vmatprep.subr.mxu0 0.0
  %5099 = vmatpush1.xpose.msra.mxu0 0.0
  %5100 = vmatprep.subr.mxu0 0.0
  %5101 = vmatpush1.xpose.msra.mxu0 0.0
  %5102 = vmatprep.mubr.f32.mxu0 0.0
  %5103 = vmatmul.mubr.f32.gmra.mrb[0].mxu0 %v5034
  %v5104 = vpop.f32.mrb[0].mxu0
  %v5105 = vadd.f32 0.0, %v5104
  %v5106 = vpop.f32.mrb[0].mxu0
  %5107 = vdwg.mxu0
  %v5108 = vsel %vm417, %v5027, -inf
  %5109 = vmax.xlane.f32.xlu0 %v5108
  %v5110 = vpop.xlane.xlu0 %5109
  %v5111 = vsel %vm417, %v5105, -inf
  %5112 = vmax.xlane.f32.xlu0 %v5111
  %v5113 = vpop.xlane.xlu0 %5112
  %v5114 = vsub.f32 %v5027, %v5110
  %v5115 = vsub.f32 %v5105, %v5113
  %v5116 = vmul.f32 %v5114, 1.442695
  %v5117 = vpow.pop %v5116
  %v5118 = vmul.f32 %v5115, 1.442695
  %v5119 = vpow.pop %v5118
  %v5120 = vsel %vm417, %v5117, 0.0
  %5121 = vadd.xlane.f32.xlu0 %v5120
  %v5122 = vpop.xlane.xlu0 %5121
  %v5123 = vsel %vm417, %v5119, 0.0
  %5124 = vadd.xlane.f32.xlu0 %v5123
  %v5125 = vpop.xlane.xlu0 %5124
  %v5126 = vrcp.pop %v5122
  %v5127 = vmul.f32 %v5117, %v5126
  %v5128 = vrcp.pop %v5125
  %v5129 = vmul.f32 %v5119, %v5128
  %5130 = vrot.lane.b32.xlu0 %v3960, 80
  %v5131 = vpop.permute.xlu0 %5130
  %v5134 = vsel %vm417, %v5127, 0
  %5136 = vmatprep.subr.mxu0 0.0
  %5137 = vmatpush1.msra.mxu0 %v5131
  %5138 = vmatprep.subr.mxu0 0.0
  %5139 = vmatpush1.msra.mxu0 0.0
  %5140 = vmatprep.subr.mxu0 0.0
  %5141 = vmatpush1.msra.mxu0 0.0
  %5142 = vmatprep.subr.mxu0 0.0
  %5143 = vmatpush1.msra.mxu0 0.0
  %5144 = vmatprep.subr.mxu0 0.0
  %5145 = vmatpush1.msra.mxu0 0.0
  %5146 = vmatprep.subr.mxu0 0.0
  %5147 = vmatpush1.msra.mxu0 0.0
  %5148 = vmatprep.subr.mxu0 0.0
  %5149 = vmatpush1.msra.mxu0 0.0
  %5150 = vmatprep.subr.mxu0 0.0
  %5151 = vmatpush1.msra.mxu0 0.0
  %5152 = vmatprep.subr.mxu0 0.0
  %5153 = vmatpush1.msra.mxu0 0.0
  %5154 = vmatprep.subr.mxu0 0.0
  %5155 = vmatpush1.msra.mxu0 0.0
  %5156 = vmatprep.subr.mxu0 0.0
  %5157 = vmatpush1.msra.mxu0 0.0
  %5158 = vmatprep.subr.mxu0 0.0
  %5159 = vmatpush1.msra.mxu0 0.0
  %5160 = vmatprep.subr.mxu0 0.0
  %5161 = vmatpush1.msra.mxu0 0.0
  %5162 = vmatprep.subr.mxu0 0.0
  %5163 = vmatpush1.msra.mxu0 0.0
  %5164 = vmatprep.subr.mxu0 0.0
  %5165 = vmatpush1.msra.mxu0 0.0
  %5166 = vmatprep.subr.mxu0 0.0
  %5167 = vmatpush1.msra.mxu0 0.0
  %5168 = vmatprep.subr.mxu0 0.0
  %5169 = vmatpush1.msra.mxu0 0.0
  %5170 = vmatprep.subr.mxu0 0.0
  %5171 = vmatpush1.msra.mxu0 0.0
  %5172 = vmatprep.subr.mxu0 0.0
  %5173 = vmatpush1.msra.mxu0 0.0
  %5174 = vmatprep.subr.mxu0 0.0
  %5175 = vmatpush1.msra.mxu0 0.0
  %5176 = vmatprep.subr.mxu0 0.0
  %5177 = vmatpush1.msra.mxu0 0.0
  %5178 = vmatprep.subr.mxu0 0.0
  %5179 = vmatpush1.msra.mxu0 0.0
  %5180 = vmatprep.subr.mxu0 0.0
  %5181 = vmatpush1.msra.mxu0 0.0
  %5182 = vmatprep.subr.mxu0 0.0
  %5183 = vmatpush1.msra.mxu0 0.0
  %5184 = vmatprep.subr.mxu0 0.0
  %5185 = vmatpush1.msra.mxu0 0.0
  %5186 = vmatprep.subr.mxu0 0.0
  %5187 = vmatpush1.msra.mxu0 0.0
  %5188 = vmatprep.subr.mxu0 0.0
  %5189 = vmatpush1.msra.mxu0 0.0
  %5190 = vmatprep.subr.mxu0 0.0
  %5191 = vmatpush1.msra.mxu0 0.0
  %5192 = vmatprep.subr.mxu0 0.0
  %5193 = vmatpush1.msra.mxu0 0.0
  %5194 = vmatprep.subr.mxu0 0.0
  %5195 = vmatpush1.msra.mxu0 0.0
  %5196 = vmatprep.subr.mxu0 0.0
  %5197 = vmatpush1.msra.mxu0 0.0
  %5198 = vmatprep.subr.mxu0 0.0
  %5199 = vmatpush1.msra.mxu0 0.0
  %5200 = vmatprep.mubr.f32.mxu0 0.0
  %5201 = vmatmul.mubr.f32.gmra.mrb[0].mxu0 %v5134
  %v5202 = vpop.f32.mrb[0].mxu0
  %v5203 = vadd.f32 0.0, %v5202
  %v5204 = vpop.f32.mrb[0].mxu0
  %5205 = vdwg.mxu0
  %5206 = vrot.lane.b32.xlu0 %v3966, 80
  %v5207 = vpop.permute.xlu0 %5206
  %v5210 = vsel %vm417, %v5129, 0
  %5212 = vmatprep.subr.mxu0 0.0
  %5213 = vmatpush1.msra.mxu0 %v5207
  %5214 = vmatprep.subr.mxu0 0.0
  %5215 = vmatpush1.msra.mxu0 0.0
  %5216 = vmatprep.subr.mxu0 0.0
  %5217 = vmatpush1.msra.mxu0 0.0
  %5218 = vmatprep.subr.mxu0 0.0
  %5219 = vmatpush1.msra.mxu0 0.0
  %5220 = vmatprep.subr.mxu0 0.0
  %5221 = vmatpush1.msra.mxu0 0.0
  %5222 = vmatprep.subr.mxu0 0.0
  %5223 = vmatpush1.msra.mxu0 0.0
  %5224 = vmatprep.subr.mxu0 0.0
  %5225 = vmatpush1.msra.mxu0 0.0
  %5226 = vmatprep.subr.mxu0 0.0
  %5227 = vmatpush1.msra.mxu0 0.0
  %5228 = vmatprep.subr.mxu0 0.0
  %5229 = vmatpush1.msra.mxu0 0.0
  %5230 = vmatprep.subr.mxu0 0.0
  %5231 = vmatpush1.msra.mxu0 0.0
  %5232 = vmatprep.subr.mxu0 0.0
  %5233 = vmatpush1.msra.mxu0 0.0
  %5234 = vmatprep.subr.mxu0 0.0
  %5235 = vmatpush1.msra.mxu0 0.0
  %5236 = vmatprep.subr.mxu0 0.0
  %5237 = vmatpush1.msra.mxu0 0.0
  %5238 = vmatprep.subr.mxu0 0.0
  %5239 = vmatpush1.msra.mxu0 0.0
  %5240 = vmatprep.subr.mxu0 0.0
  %5241 = vmatpush1.msra.mxu0 0.0
  %5242 = vmatprep.subr.mxu0 0.0
  %5243 = vmatpush1.msra.mxu0 0.0
  %5244 = vmatprep.subr.mxu0 0.0
  %5245 = vmatpush1.msra.mxu0 0.0
  %5246 = vmatprep.subr.mxu0 0.0
  %5247 = vmatpush1.msra.mxu0 0.0
  %5248 = vmatprep.subr.mxu0 0.0
  %5249 = vmatpush1.msra.mxu0 0.0
  %5250 = vmatprep.subr.mxu0 0.0
  %5251 = vmatpush1.msra.mxu0 0.0
  %5252 = vmatprep.subr.mxu0 0.0
  %5253 = vmatpush1.msra.mxu0 0.0
  %5254 = vmatprep.subr.mxu0 0.0
  %5255 = vmatpush1.msra.mxu0 0.0
  %5256 = vmatprep.subr.mxu0 0.0
  %5257 = vmatpush1.msra.mxu0 0.0
  %5258 = vmatprep.subr.mxu0 0.0
  %5259 = vmatpush1.msra.mxu0 0.0
  %5260 = vmatprep.subr.mxu0 0.0
  %5261 = vmatpush1.msra.mxu0 0.0
  %5262 = vmatprep.subr.mxu0 0.0
  %5263 = vmatpush1.msra.mxu0 0.0
  %5264 = vmatprep.subr.mxu0 0.0
  %5265 = vmatpush1.msra.mxu0 0.0
  %5266 = vmatprep.subr.mxu0 0.0
  %5267 = vmatpush1.msra.mxu0 0.0
  %5268 = vmatprep.subr.mxu0 0.0
  %5269 = vmatpush1.msra.mxu0 0.0
  %5270 = vmatprep.subr.mxu0 0.0
  %5271 = vmatpush1.msra.mxu0 0.0
  %5272 = vmatprep.subr.mxu0 0.0
  %5273 = vmatpush1.msra.mxu0 0.0
  %5274 = vmatprep.subr.mxu0 0.0
  %5275 = vmatpush1.msra.mxu0 0.0
  %5276 = vmatprep.mubr.f32.mxu0 0.0
  %5277 = vmatmul.mubr.f32.gmra.mrb[0].mxu0 %v5210
  %v5278 = vpop.f32.mrb[0].mxu0
  %v5279 = vadd.f32 0.0, %v5278
  %v5280 = vpop.f32.mrb[0].mxu0
  %5281 = vdwg.mxu0
  %5284 = vrot.lane.b32.xlu0 %v4542, 16
  %v5285 = vpop.permute.xlu0 %5284
  %5286 = vrot.lane.b32.xlu0 %v4619, 16
  %v5287 = vpop.permute.xlu0 %5286
  %5292 = vrot.lane.b32.xlu0 %v4873, 32
  %v5293 = vpop.permute.xlu0 %5292
  %5294 = vrot.lane.b32.xlu0 %v4949, 32
  %v5295 = vpop.permute.xlu0 %5294
  %5300 = vrot.lane.b32.xlu0 %v5203, 48
  %v5301 = vpop.permute.xlu0 %5300
  %5302 = vrot.lane.b32.xlu0 %v5279, 48
  %v5303 = vpop.permute.xlu0 %5302
  %v5306 = vsel %vm69, %v4214, %v5285
  %v5307 = vsel %vm69, %v4287, %v5287
  %v5308 = vsel %vm1604, %v5306, %v5293
  %v5309 = vsel %vm1604, %v5307, %v5295
  %v5310 = vsel %vm1607, %v5308, %v5301
  %v5311 = vsel %vm1607, %v5309, %v5303
  %s5312 = scalar_lea.vmem %s5, 64
  %v5313 = vld [vmem:[%s5312] sm:$0xff]
  %v5314 = vld [vmem:[%s5312 + $0x8] sm:$0xff]
  %v5315 = vld [vmem:[%s5312 + $0x10] sm:$0xff]
  %v5316 = vld [vmem:[%s5312 + $0x18] sm:$0xff]
  %v5317 = vld [vmem:[%s5312 + $0x20] sm:$0xff]
  %v5318 = vld [vmem:[%s5312 + $0x28] sm:$0xff]
  %v5319 = vld [vmem:[%s5312 + $0x30] sm:$0xff]
  %v5320 = vld [vmem:[%s5312 + $0x38] sm:$0xff]
  %s5321 = scalar_lea.vmem %s6, 1
  %v5322 = vld [vmem:[%s5321] sm:$0x1]
  %v5324 = vlaneseq
  %v5325 = vshrl.u32 %v5324, 7
  %v5326 = vsub.s32 0, %v5325
  %v5327 = vrot.slane %v5322, %v5326
  %v5330 = vsel %vm179, %v5310, 0
  %v5333 = vsel %vm179, %v5311, 0
  %5335 = vmatprep.subr.mxu0 0.0
  %5336 = vmatpush1.msra.mxu0 %v5313
  %5337 = vmatprep.subr.mxu0 0.0
  %5338 = vmatpush1.msra.mxu0 %v5314
  %5339 = vmatprep.subr.mxu0 0.0
  %5340 = vmatpush1.msra.mxu0 %v5315
  %5341 = vmatprep.subr.mxu0 0.0
  %5342 = vmatpush1.msra.mxu0 %v5316
  %5343 = vmatprep.subr.mxu0 0.0
  %5344 = vmatpush1.msra.mxu0 %v5317
  %5345 = vmatprep.subr.mxu0 0.0
  %5346 = vmatpush1.msra.mxu0 %v5318
  %5347 = vmatprep.subr.mxu0 0.0
  %5348 = vmatpush1.msra.mxu0 %v5319
  %5349 = vmatprep.subr.mxu0 0.0
  %5350 = vmatpush1.msra.mxu0 %v5320
  %5351 = vmatprep.subr.mxu0 0.0
  %5352 = vmatpush1.msra.mxu0 0.0
  %5353 = vmatprep.subr.mxu0 0.0
  %5354 = vmatpush1.msra.mxu0 0.0
  %5355 = vmatprep.subr.mxu0 0.0
  %5356 = vmatpush1.msra.mxu0 0.0
  %5357 = vmatprep.subr.mxu0 0.0
  %5358 = vmatpush1.msra.mxu0 0.0
  %5359 = vmatprep.subr.mxu0 0.0
  %5360 = vmatpush1.msra.mxu0 0.0
  %5361 = vmatprep.subr.mxu0 0.0
  %5362 = vmatpush1.msra.mxu0 0.0
  %5363 = vmatprep.subr.mxu0 0.0
  %5364 = vmatpush1.msra.mxu0 0.0
  %5365 = vmatprep.subr.mxu0 0.0
  %5366 = vmatpush1.msra.mxu0 0.0
  %5367 = vmatprep.subr.mxu0 0.0
  %5368 = vmatpush1.msra.mxu0 0.0
  %5369 = vmatprep.subr.mxu0 0.0
  %5370 = vmatpush1.msra.mxu0 0.0
  %5371 = vmatprep.subr.mxu0 0.0
  %5372 = vmatpush1.msra.mxu0 0.0
  %5373 = vmatprep.subr.mxu0 0.0
  %5374 = vmatpush1.msra.mxu0 0.0
  %5375 = vmatprep.subr.mxu0 0.0
  %5376 = vmatpush1.msra.mxu0 0.0
  %5377 = vmatprep.subr.mxu0 0.0
  %5378 = vmatpush1.msra.mxu0 0.0
  %5379 = vmatprep.subr.mxu0 0.0
  %5380 = vmatpush1.msra.mxu0 0.0
  %5381 = vmatprep.subr.mxu0 0.0
  %5382 = vmatpush1.msra.mxu0 0.0
  %5383 = vmatprep.subr.mxu0 0.0
  %5384 = vmatpush1.msra.mxu0 0.0
  %5385 = vmatprep.subr.mxu0 0.0
  %5386 = vmatpush1.msra.mxu0 0.0
  %5387 = vmatprep.subr.mxu0 0.0
  %5388 = vmatpush1.msra.mxu0 0.0
  %5389 = vmatprep.subr.mxu0 0.0
  %5390 = vmatpush1.msra.mxu0 0.0
  %5391 = vmatprep.subr.mxu0 0.0
  %5392 = vmatpush1.msra.mxu0 0.0
  %5393 = vmatprep.subr.mxu0 0.0
  %5394 = vmatpush1.msra.mxu0 0.0
  %5395 = vmatprep.subr.mxu0 0.0
  %5396 = vmatpush1.msra.mxu0 0.0
  %5397 = vmatprep.subr.mxu0 0.0
  %5398 = vmatpush1.msra.mxu0 0.0
  %5399 = vmatprep.mubr.f32.mxu0 0.0
  %5400 = vmatmul.mubr.f32.gmra.mrb[0].mxu0 %v5330
  %v5401 = vpop.f32.mrb[0].mxu0
  %v5402 = vadd.f32 %v5327, %v5401
  %v5403 = vpop.f32.mrb[0].mxu0
  %5404 = vmatprep.mubr.f32.mxu0 0.0
  %5405 = vmatmul.mubr.f32.gmra.mrb[0].mxu0 %v5333
  %v5406 = vpop.f32.mrb[0].mxu0
  %v5407 = vadd.f32 %v5327, %v5406
  %v5408 = vpop.f32.mrb[0].mxu0
  %5409 = vdwg.mxu0
  %v5410 = vadd.f32 %v3853, %v5402
  %v5411 = vadd.f32 %v3854, %v5407
  %s5412 = scalar_lea.vmem %s11, 1
  %v5413 = vld [vmem:[%s5412] sm:$0x1]
  %s5414 = scalar_lea.vmem %s12, 1
  %v5415 = vld [vmem:[%s5414] sm:$0x1]
  %v5416 = vsel %vm179, %v5410, 0.0
  %5417 = vadd.xlane.f32.xlu0 %v5416
  %v5418 = vpop.xlane.xlu0 %5417
  %v5419 = vsel %vm179, %v5411, 0.0
  %5420 = vadd.xlane.f32.xlu0 %v5419
  %v5421 = vpop.xlane.xlu0 %5420
  %v5422 = vmul.f32 %v5418, 0.015625
  %v5423 = vmul.f32 %v5421, 0.015625
  %v5424 = vmul.f32 %v5410, %v5410
  %v5425 = vmul.f32 %v5411, %v5411
  %v5426 = vsel %vm179, %v5424, 0.0
  %5427 = vadd.xlane.f32.xlu0 %v5426
  %v5428 = vpop.xlane.xlu0 %5427
  %v5429 = vsel %vm179, %v5425, 0.0
  %5430 = vadd.xlane.f32.xlu0 %v5429
  %v5431 = vpop.xlane.xlu0 %5430
  %v5432 = vmul.f32 %v5428, 0.015625
  %v5433 = vmul.f32 %v5431, 0.015625
  %v5434 = vmul.f32 %v5422, %v5422
  %v5435 = vmul.f32 %v5423, %v5423
  %v5436 = vsub.f32 %v5432, %v5434
  %v5437 = vsub.f32 %v5433, %v5435
  %v5438 = vsub.f32 %v5410, %v5422
  %v5439 = vsub.f32 %v5411, %v5423
  %v5440 = vadd.f32 %v5436, 1e-05
  %v5441 = vadd.f32 %v5437, 1e-05
  %v5442 = vrsqrt.pop %v5440
  %v5443 = vrsqrt.pop %v5441
  %v5444 = vmul.f32 %v5438, %v5442
  %v5445 = vmul.f32 %v5439, %v5443
  %v5447 = vlaneseq
  %v5448 = vshrl.u32 %v5447, 7
  %v5449 = vsub.s32 0, %v5448
  %v5450 = vrot.slane %v5413, %v5449
  %v5452 = vmul.f32 %v5444, %v5450
  %v5453 = vmul.f32 %v5445, %v5450
  %v5455 = vlaneseq
  %v5456 = vshrl.u32 %v5455, 7
  %v5457 = vsub.s32 0, %v5456
  %v5458 = vrot.slane %v5415, %v5457
  %v5460 = vadd.f32 %v5452, %v5458
  %v5461 = vadd.f32 %v5453, %v5458
  %s5462 = scalar_lea.vmem %s7, 512
  %v5463 = vld [vmem:[%s5462] sm:$0xff]
  %v5464 = vld [vmem:[%s5462 + $0x8] sm:$0xff]
  %v5465 = vld [vmem:[%s5462 + $0x10] sm:$0xff]
  %v5466 = vld [vmem:[%s5462 + $0x18] sm:$0xff]
  %v5467 = vld [vmem:[%s5462 + $0x20] sm:$0xff]
  %v5468 = vld [vmem:[%s5462 + $0x28] sm:$0xff]
  %v5469 = vld [vmem:[%s5462 + $0x30] sm:$0xff]
  %v5470 = vld [vmem:[%s5462 + $0x38] sm:$0xff]
  %v5471 = vld [vmem:[%s5462 + $0x40] sm:$0xff]
  %v5472 = vld [vmem:[%s5462 + $0x48] sm:$0xff]
  %v5473 = vld [vmem:[%s5462 + $0x50] sm:$0xff]
  %v5474 = vld [vmem:[%s5462 + $0x58] sm:$0xff]
  %v5475 = vld [vmem:[%s5462 + $0x60] sm:$0xff]
  %v5476 = vld [vmem:[%s5462 + $0x68] sm:$0xff]
  %v5477 = vld [vmem:[%s5462 + $0x70] sm:$0xff]
  %v5478 = vld [vmem:[%s5462 + $0x78] sm:$0xff]
  %v5479 = vld [vmem:[%s5462 + $0x80] sm:$0xff]
  %v5480 = vld [vmem:[%s5462 + $0x88] sm:$0xff]
  %v5481 = vld [vmem:[%s5462 + $0x90] sm:$0xff]
  %v5482 = vld [vmem:[%s5462 + $0x98] sm:$0xff]
  %v5483 = vld [vmem:[%s5462 + $0xa0] sm:$0xff]
  %v5484 = vld [vmem:[%s5462 + $0xa8] sm:$0xff]
  %v5485 = vld [vmem:[%s5462 + $0xb0] sm:$0xff]
  %v5486 = vld [vmem:[%s5462 + $0xb8] sm:$0xff]
  %v5487 = vld [vmem:[%s5462 + $0xc0] sm:$0xff]
  %v5488 = vld [vmem:[%s5462 + $0xc8] sm:$0xff]
  %v5489 = vld [vmem:[%s5462 + $0xd0] sm:$0xff]
  %v5490 = vld [vmem:[%s5462 + $0xd8] sm:$0xff]
  %v5491 = vld [vmem:[%s5462 + $0xe0] sm:$0xff]
  %v5492 = vld [vmem:[%s5462 + $0xe8] sm:$0xff]
  %v5493 = vld [vmem:[%s5462 + $0xf0] sm:$0xff]
  %v5494 = vld [vmem:[%s5462 + $0xf8] sm:$0xff]
  %v5495 = vld [vmem:[%s5462 + $0x100] sm:$0xff]
  %v5496 = vld [vmem:[%s5462 + $0x108] sm:$0xff]
  %v5497 = vld [vmem:[%s5462 + $0x110] sm:$0xff]
  %v5498 = vld [vmem:[%s5462 + $0x118] sm:$0xff]
  %v5499 = vld [vmem:[%s5462 + $0x120] sm:$0xff]
  %v5500 = vld [vmem:[%s5462 + $0x128] sm:$0xff]
  %v5501 = vld [vmem:[%s5462 + $0x130] sm:$0xff]
  %v5502 = vld [vmem:[%s5462 + $0x138] sm:$0xff]
  %v5503 = vld [vmem:[%s5462 + $0x140] sm:$0xff]
  %v5504 = vld [vmem:[%s5462 + $0x148] sm:$0xff]
  %v5505 = vld [vmem:[%s5462 + $0x150] sm:$0xff]
  %v5506 = vld [vmem:[%s5462 + $0x158] sm:$0xff]
  %v5507 = vld [vmem:[%s5462 + $0x160] sm:$0xff]
  %v5508 = vld [vmem:[%s5462 + $0x168] sm:$0xff]
  %v5509 = vld [vmem:[%s5462 + $0x170] sm:$0xff]
  %v5510 = vld [vmem:[%s5462 + $0x178] sm:$0xff]
  %v5511 = vld [vmem:[%s5462 + $0x180] sm:$0xff]
  %v5512 = vld [vmem:[%s5462 + $0x188] sm:$0xff]
  %v5513 = vld [vmem:[%s5462 + $0x190] sm:$0xff]
  %v5514 = vld [vmem:[%s5462 + $0x198] sm:$0xff]
  %v5515 = vld [vmem:[%s5462 + $0x1a0] sm:$0xff]
  %v5516 = vld [vmem:[%s5462 + $0x1a8] sm:$0xff]
  %v5517 = vld [vmem:[%s5462 + $0x1b0] sm:$0xff]
  %v5518 = vld [vmem:[%s5462 + $0x1b8] sm:$0xff]
  %v5519 = vld [vmem:[%s5462 + $0x1c0] sm:$0xff]
  %v5520 = vld [vmem:[%s5462 + $0x1c8] sm:$0xff]
  %v5521 = vld [vmem:[%s5462 + $0x1d0] sm:$0xff]
  %v5522 = vld [vmem:[%s5462 + $0x1d8] sm:$0xff]
  %v5523 = vld [vmem:[%s5462 + $0x1e0] sm:$0xff]
  %v5524 = vld [vmem:[%s5462 + $0x1e8] sm:$0xff]
  %v5525 = vld [vmem:[%s5462 + $0x1f0] sm:$0xff]
  %v5526 = vld [vmem:[%s5462 + $0x1f8] sm:$0xff]
  %v5527 = vunpack.c.l.bf16 %v5463
  %v5528 = vunpack.c.h.bf16 %v5463
  %v5529 = vunpack.c.l.bf16 %v5464
  %v5530 = vunpack.c.h.bf16 %v5464
  %v5531 = vunpack.c.l.bf16 %v5465
  %v5532 = vunpack.c.h.bf16 %v5465
  %v5533 = vunpack.c.l.bf16 %v5466
  %v5534 = vunpack.c.h.bf16 %v5466
  %v5535 = vunpack.c.l.bf16 %v5467
  %v5536 = vunpack.c.h.bf16 %v5467
  %v5537 = vunpack.c.l.bf16 %v5468
  %v5538 = vunpack.c.h.bf16 %v5468
  %v5539 = vunpack.c.l.bf16 %v5469
  %v5540 = vunpack.c.h.bf16 %v5469
  %v5541 = vunpack.c.l.bf16 %v5470
  %v5542 = vunpack.c.h.bf16 %v5470
  %v5543 = vunpack.c.l.bf16 %v5471
  %v5544 = vunpack.c.h.bf16 %v5471
  %v5545 = vunpack.c.l.bf16 %v5472
  %v5546 = vunpack.c.h.bf16 %v5472
  %v5547 = vunpack.c.l.bf16 %v5473
  %v5548 = vunpack.c.h.bf16 %v5473
  %v5549 = vunpack.c.l.bf16 %v5474
  %v5550 = vunpack.c.h.bf16 %v5474
  %v5551 = vunpack.c.l.bf16 %v5475
  %v5552 = vunpack.c.h.bf16 %v5475
  %v5553 = vunpack.c.l.bf16 %v5476
  %v5554 = vunpack.c.h.bf16 %v5476
  %v5555 = vunpack.c.l.bf16 %v5477
  %v5556 = vunpack.c.h.bf16 %v5477
  %v5557 = vunpack.c.l.bf16 %v5478
  %v5558 = vunpack.c.h.bf16 %v5478
  %v5559 = vunpack.c.l.bf16 %v5479
  %v5560 = vunpack.c.h.bf16 %v5479
  %v5561 = vunpack.c.l.bf16 %v5480
  %v5562 = vunpack.c.h.bf16 %v5480
  %v5563 = vunpack.c.l.bf16 %v5481
  %v5564 = vunpack.c.h.bf16 %v5481
  %v5565 = vunpack.c.l.bf16 %v5482
  %v5566 = vunpack.c.h.bf16 %v5482
  %v5567 = vunpack.c.l.bf16 %v5483
  %v5568 = vunpack.c.h.bf16 %v5483
  %v5569 = vunpack.c.l.bf16 %v5484
  %v5570 = vunpack.c.h.bf16 %v5484
  %v5571 = vunpack.c.l.bf16 %v5485
  %v5572 = vunpack.c.h.bf16 %v5485
  %v5573 = vunpack.c.l.bf16 %v5486
  %v5574 = vunpack.c.h.bf16 %v5486
  %v5575 = vunpack.c.l.bf16 %v5487
  %v5576 = vunpack.c.h.bf16 %v5487
  %v5577 = vunpack.c.l.bf16 %v5488
  %v5578 = vunpack.c.h.bf16 %v5488
  %v5579 = vunpack.c.l.bf16 %v5489
  %v5580 = vunpack.c.h.bf16 %v5489
  %v5581 = vunpack.c.l.bf16 %v5490
  %v5582 = vunpack.c.h.bf16 %v5490
  %v5583 = vunpack.c.l.bf16 %v5491
  %v5584 = vunpack.c.h.bf16 %v5491
  %v5585 = vunpack.c.l.bf16 %v5492
  %v5586 = vunpack.c.h.bf16 %v5492
  %v5587 = vunpack.c.l.bf16 %v5493
  %v5588 = vunpack.c.h.bf16 %v5493
  %v5589 = vunpack.c.l.bf16 %v5494
  %v5590 = vunpack.c.h.bf16 %v5494
  %v5591 = vunpack.c.l.bf16 %v5495
  %v5592 = vunpack.c.h.bf16 %v5495
  %v5593 = vunpack.c.l.bf16 %v5496
  %v5594 = vunpack.c.h.bf16 %v5496
  %v5595 = vunpack.c.l.bf16 %v5497
  %v5596 = vunpack.c.h.bf16 %v5497
  %v5597 = vunpack.c.l.bf16 %v5498
  %v5598 = vunpack.c.h.bf16 %v5498
  %v5599 = vunpack.c.l.bf16 %v5499
  %v5600 = vunpack.c.h.bf16 %v5499
  %v5601 = vunpack.c.l.bf16 %v5500
  %v5602 = vunpack.c.h.bf16 %v5500
  %v5603 = vunpack.c.l.bf16 %v5501
  %v5604 = vunpack.c.h.bf16 %v5501
  %v5605 = vunpack.c.l.bf16 %v5502
  %v5606 = vunpack.c.h.bf16 %v5502
  %v5607 = vunpack.c.l.bf16 %v5503
  %v5608 = vunpack.c.h.bf16 %v5503
  %v5609 = vunpack.c.l.bf16 %v5504
  %v5610 = vunpack.c.h.bf16 %v5504
  %v5611 = vunpack.c.l.bf16 %v5505
  %v5612 = vunpack.c.h.bf16 %v5505
  %v5613 = vunpack.c.l.bf16 %v5506
  %v5614 = vunpack.c.h.bf16 %v5506
  %v5615 = vunpack.c.l.bf16 %v5507
  %v5616 = vunpack.c.h.bf16 %v5507
  %v5617 = vunpack.c.l.bf16 %v5508
  %v5618 = vunpack.c.h.bf16 %v5508
  %v5619 = vunpack.c.l.bf16 %v5509
  %v5620 = vunpack.c.h.bf16 %v5509
  %v5621 = vunpack.c.l.bf16 %v5510
  %v5622 = vunpack.c.h.bf16 %v5510
  %v5623 = vunpack.c.l.bf16 %v5511
  %v5624 = vunpack.c.h.bf16 %v5511
  %v5625 = vunpack.c.l.bf16 %v5512
  %v5626 = vunpack.c.h.bf16 %v5512
  %v5627 = vunpack.c.l.bf16 %v5513
  %v5628 = vunpack.c.h.bf16 %v5513
  %v5629 = vunpack.c.l.bf16 %v5514
  %v5630 = vunpack.c.h.bf16 %v5514
  %v5631 = vunpack.c.l.bf16 %v5515
  %v5632 = vunpack.c.h.bf16 %v5515
  %v5633 = vunpack.c.l.bf16 %v5516
  %v5634 = vunpack.c.h.bf16 %v5516
  %v5635 = vunpack.c.l.bf16 %v5517
  %v5636 = vunpack.c.h.bf16 %v5517
  %v5637 = vunpack.c.l.bf16 %v5518
  %v5638 = vunpack.c.h.bf16 %v5518
  %v5639 = vunpack.c.l.bf16 %v5519
  %v5640 = vunpack.c.h.bf16 %v5519
  %v5641 = vunpack.c.l.bf16 %v5520
  %v5642 = vunpack.c.h.bf16 %v5520
  %v5643 = vunpack.c.l.bf16 %v5521
  %v5644 = vunpack.c.h.bf16 %v5521
  %v5645 = vunpack.c.l.bf16 %v5522
  %v5646 = vunpack.c.h.bf16 %v5522
  %v5647 = vunpack.c.l.bf16 %v5523
  %v5648 = vunpack.c.h.bf16 %v5523
  %v5649 = vunpack.c.l.bf16 %v5524
  %v5650 = vunpack.c.h.bf16 %v5524
  %v5651 = vunpack.c.l.bf16 %v5525
  %v5652 = vunpack.c.h.bf16 %v5525
  %v5653 = vunpack.c.l.bf16 %v5526
  %v5654 = vunpack.c.h.bf16 %v5526
  %s5655 = scalar_lea.vmem %s9, 1024
  %v5656 = vld [vmem:[%s5655] sm:$0xf]
  %v5657 = vld [vmem:[%s5655 + $0x4] sm:$0xf]
  %v5658 = vld [vmem:[%s5655 + $0x8] sm:$0xf]
  %v5659 = vld [vmem:[%s5655 + $0xc] sm:$0xf]
  %v5660 = vld [vmem:[%s5655 + $0x10] sm:$0xf]
  %v5661 = vld [vmem:[%s5655 + $0x14] sm:$0xf]
  %v5662 = vld [vmem:[%s5655 + $0x18] sm:$0xf]
  %v5663 = vld [vmem:[%s5655 + $0x1c] sm:$0xf]
  %v5664 = vld [vmem:[%s5655 + $0x20] sm:$0xf]
  %v5665 = vld [vmem:[%s5655 + $0x24] sm:$0xf]
  %v5666 = vld [vmem:[%s5655 + $0x28] sm:$0xf]
  %v5667 = vld [vmem:[%s5655 + $0x2c] sm:$0xf]
  %v5668 = vld [vmem:[%s5655 + $0x30] sm:$0xf]
  %v5669 = vld [vmem:[%s5655 + $0x34] sm:$0xf]
  %v5670 = vld [vmem:[%s5655 + $0x38] sm:$0xf]
  %v5671 = vld [vmem:[%s5655 + $0x3c] sm:$0xf]
  %v5672 = vld [vmem:[%s5655 + $0x40] sm:$0xf]
  %v5673 = vld [vmem:[%s5655 + $0x44] sm:$0xf]
  %v5674 = vld [vmem:[%s5655 + $0x48] sm:$0xf]
  %v5675 = vld [vmem:[%s5655 + $0x4c] sm:$0xf]
  %v5676 = vld [vmem:[%s5655 + $0x50] sm:$0xf]
  %v5677 = vld [vmem:[%s5655 + $0x54] sm:$0xf]
  %v5678 = vld [vmem:[%s5655 + $0x58] sm:$0xf]
  %v5679 = vld [vmem:[%s5655 + $0x5c] sm:$0xf]
  %v5680 = vld [vmem:[%s5655 + $0x60] sm:$0xf]
  %v5681 = vld [vmem:[%s5655 + $0x64] sm:$0xf]
  %v5682 = vld [vmem:[%s5655 + $0x68] sm:$0xf]
  %v5683 = vld [vmem:[%s5655 + $0x6c] sm:$0xf]
  %v5684 = vld [vmem:[%s5655 + $0x70] sm:$0xf]
  %v5685 = vld [vmem:[%s5655 + $0x74] sm:$0xf]
  %v5686 = vld [vmem:[%s5655 + $0x78] sm:$0xf]
  %v5687 = vld [vmem:[%s5655 + $0x7c] sm:$0xf]
  %v5688 = vld [vmem:[%s5655 + $0x80] sm:$0xf]
  %v5689 = vld [vmem:[%s5655 + $0x84] sm:$0xf]
  %v5690 = vld [vmem:[%s5655 + $0x88] sm:$0xf]
  %v5691 = vld [vmem:[%s5655 + $0x8c] sm:$0xf]
  %v5692 = vld [vmem:[%s5655 + $0x90] sm:$0xf]
  %v5693 = vld [vmem:[%s5655 + $0x94] sm:$0xf]
  %v5694 = vld [vmem:[%s5655 + $0x98] sm:$0xf]
  %v5695 = vld [vmem:[%s5655 + $0x9c] sm:$0xf]
  %v5696 = vld [vmem:[%s5655 + $0xa0] sm:$0xf]
  %v5697 = vld [vmem:[%s5655 + $0xa4] sm:$0xf]
  %v5698 = vld [vmem:[%s5655 + $0xa8] sm:$0xf]
  %v5699 = vld [vmem:[%s5655 + $0xac] sm:$0xf]
  %v5700 = vld [vmem:[%s5655 + $0xb0] sm:$0xf]
  %v5701 = vld [vmem:[%s5655 + $0xb4] sm:$0xf]
  %v5702 = vld [vmem:[%s5655 + $0xb8] sm:$0xf]
  %v5703 = vld [vmem:[%s5655 + $0xbc] sm:$0xf]
  %v5704 = vld [vmem:[%s5655 + $0xc0] sm:$0xf]
  %v5705 = vld [vmem:[%s5655 + $0xc4] sm:$0xf]
  %v5706 = vld [vmem:[%s5655 + $0xc8] sm:$0xf]
  %v5707 = vld [vmem:[%s5655 + $0xcc] sm:$0xf]
  %v5708 = vld [vmem:[%s5655 + $0xd0] sm:$0xf]
  %v5709 = vld [vmem:[%s5655 + $0xd4] sm:$0xf]
  %v5710 = vld [vmem:[%s5655 + $0xd8] sm:$0xf]
  %v5711 = vld [vmem:[%s5655 + $0xdc] sm:$0xf]
  %v5712 = vld [vmem:[%s5655 + $0xe0] sm:$0xf]
  %v5713 = vld [vmem:[%s5655 + $0xe4] sm:$0xf]
  %v5714 = vld [vmem:[%s5655 + $0xe8] sm:$0xf]
  %v5715 = vld [vmem:[%s5655 + $0xec] sm:$0xf]
  %v5716 = vld [vmem:[%s5655 + $0xf0] sm:$0xf]
  %v5717 = vld [vmem:[%s5655 + $0xf4] sm:$0xf]
  %v5718 = vld [vmem:[%s5655 + $0xf8] sm:$0xf]
  %v5719 = vld [vmem:[%s5655 + $0xfc] sm:$0xf]
  %v5720 = vld [vmem:[%s5655 + $0x100] sm:$0xf]
  %v5721 = vld [vmem:[%s5655 + $0x104] sm:$0xf]
  %v5722 = vld [vmem:[%s5655 + $0x108] sm:$0xf]
  %v5723 = vld [vmem:[%s5655 + $0x10c] sm:$0xf]
  %v5724 = vld [vmem:[%s5655 + $0x110] sm:$0xf]
  %v5725 = vld [vmem:[%s5655 + $0x114] sm:$0xf]
  %v5726 = vld [vmem:[%s5655 + $0x118] sm:$0xf]
  %v5727 = vld [vmem:[%s5655 + $0x11c] sm:$0xf]
  %v5728 = vld [vmem:[%s5655 + $0x120] sm:$0xf]
  %v5729 = vld [vmem:[%s5655 + $0x124] sm:$0xf]
  %v5730 = vld [vmem:[%s5655 + $0x128] sm:$0xf]
  %v5731 = vld [vmem:[%s5655 + $0x12c] sm:$0xf]
  %v5732 = vld [vmem:[%s5655 + $0x130] sm:$0xf]
  %v5733 = vld [vmem:[%s5655 + $0x134] sm:$0xf]
  %v5734 = vld [vmem:[%s5655 + $0x138] sm:$0xf]
  %v5735 = vld [vmem:[%s5655 + $0x13c] sm:$0xf]
  %v5736 = vld [vmem:[%s5655 + $0x140] sm:$0xf]
  %v5737 = vld [vmem:[%s5655 + $0x144] sm:$0xf]
  %v5738 = vld [vmem:[%s5655 + $0x148] sm:$0xf]
  %v5739 = vld [vmem:[%s5655 + $0x14c] sm:$0xf]
  %v5740 = vld [vmem:[%s5655 + $0x150] sm:$0xf]
  %v5741 = vld [vmem:[%s5655 + $0x154] sm:$0xf]
  %v5742 = vld [vmem:[%s5655 + $0x158] sm:$0xf]
  %v5743 = vld [vmem:[%s5655 + $0x15c] sm:$0xf]
  %v5744 = vld [vmem:[%s5655 + $0x160] sm:$0xf]
  %v5745 = vld [vmem:[%s5655 + $0x164] sm:$0xf]
  %v5746 = vld [vmem:[%s5655 + $0x168] sm:$0xf]
  %v5747 = vld [vmem:[%s5655 + $0x16c] sm:$0xf]
  %v5748 = vld [vmem:[%s5655 + $0x170] sm:$0xf]
  %v5749 = vld [vmem:[%s5655 + $0x174] sm:$0xf]
  %v5750 = vld [vmem:[%s5655 + $0x178] sm:$0xf]
  %v5751 = vld [vmem:[%s5655 + $0x17c] sm:$0xf]
  %v5752 = vld [vmem:[%s5655 + $0x180] sm:$0xf]
  %v5753 = vld [vmem:[%s5655 + $0x184] sm:$0xf]
  %v5754 = vld [vmem:[%s5655 + $0x188] sm:$0xf]
  %v5755 = vld [vmem:[%s5655 + $0x18c] sm:$0xf]
  %v5756 = vld [vmem:[%s5655 + $0x190] sm:$0xf]
  %v5757 = vld [vmem:[%s5655 + $0x194] sm:$0xf]
  %v5758 = vld [vmem:[%s5655 + $0x198] sm:$0xf]
  %v5759 = vld [vmem:[%s5655 + $0x19c] sm:$0xf]
  %v5760 = vld [vmem:[%s5655 + $0x1a0] sm:$0xf]
  %v5761 = vld [vmem:[%s5655 + $0x1a4] sm:$0xf]
  %v5762 = vld [vmem:[%s5655 + $0x1a8] sm:$0xf]
  %v5763 = vld [vmem:[%s5655 + $0x1ac] sm:$0xf]
  %v5764 = vld [vmem:[%s5655 + $0x1b0] sm:$0xf]
  %v5765 = vld [vmem:[%s5655 + $0x1b4] sm:$0xf]
  %v5766 = vld [vmem:[%s5655 + $0x1b8] sm:$0xf]
  %v5767 = vld [vmem:[%s5655 + $0x1bc] sm:$0xf]
  %v5768 = vld [vmem:[%s5655 + $0x1c0] sm:$0xf]
  %v5769 = vld [vmem:[%s5655 + $0x1c4] sm:$0xf]
  %v5770 = vld [vmem:[%s5655 + $0x1c8] sm:$0xf]
  %v5771 = vld [vmem:[%s5655 + $0x1cc] sm:$0xf]
  %v5772 = vld [vmem:[%s5655 + $0x1d0] sm:$0xf]
  %v5773 = vld [vmem:[%s5655 + $0x1d4] sm:$0xf]
  %v5774 = vld [vmem:[%s5655 + $0x1d8] sm:$0xf]
  %v5775 = vld [vmem:[%s5655 + $0x1dc] sm:$0xf]
  %v5776 = vld [vmem:[%s5655 + $0x1e0] sm:$0xf]
  %v5777 = vld [vmem:[%s5655 + $0x1e4] sm:$0xf]
  %v5778 = vld [vmem:[%s5655 + $0x1e8] sm:$0xf]
  %v5779 = vld [vmem:[%s5655 + $0x1ec] sm:$0xf]
  %v5780 = vld [vmem:[%s5655 + $0x1f0] sm:$0xf]
  %v5781 = vld [vmem:[%s5655 + $0x1f4] sm:$0xf]
  %v5782 = vld [vmem:[%s5655 + $0x1f8] sm:$0xf]
  %v5783 = vld [vmem:[%s5655 + $0x1fc] sm:$0xf]
  %v5784 = vld [vmem:[%s5655 + $0x200] sm:$0xf]
  %v5785 = vld [vmem:[%s5655 + $0x204] sm:$0xf]
  %v5786 = vld [vmem:[%s5655 + $0x208] sm:$0xf]
  %v5787 = vld [vmem:[%s5655 + $0x20c] sm:$0xf]
  %v5788 = vld [vmem:[%s5655 + $0x210] sm:$0xf]
  %v5789 = vld [vmem:[%s5655 + $0x214] sm:$0xf]
  %v5790 = vld [vmem:[%s5655 + $0x218] sm:$0xf]
  %v5791 = vld [vmem:[%s5655 + $0x21c] sm:$0xf]
  %v5792 = vld [vmem:[%s5655 + $0x220] sm:$0xf]
  %v5793 = vld [vmem:[%s5655 + $0x224] sm:$0xf]
  %v5794 = vld [vmem:[%s5655 + $0x228] sm:$0xf]
  %v5795 = vld [vmem:[%s5655 + $0x22c] sm:$0xf]
  %v5796 = vld [vmem:[%s5655 + $0x230] sm:$0xf]
  %v5797 = vld [vmem:[%s5655 + $0x234] sm:$0xf]
  %v5798 = vld [vmem:[%s5655 + $0x238] sm:$0xf]
  %v5799 = vld [vmem:[%s5655 + $0x23c] sm:$0xf]
  %v5800 = vld [vmem:[%s5655 + $0x240] sm:$0xf]
  %v5801 = vld [vmem:[%s5655 + $0x244] sm:$0xf]
  %v5802 = vld [vmem:[%s5655 + $0x248] sm:$0xf]
  %v5803 = vld [vmem:[%s5655 + $0x24c] sm:$0xf]
  %v5804 = vld [vmem:[%s5655 + $0x250] sm:$0xf]
  %v5805 = vld [vmem:[%s5655 + $0x254] sm:$0xf]
  %v5806 = vld [vmem:[%s5655 + $0x258] sm:$0xf]
  %v5807 = vld [vmem:[%s5655 + $0x25c] sm:$0xf]
  %v5808 = vld [vmem:[%s5655 + $0x260] sm:$0xf]
  %v5809 = vld [vmem:[%s5655 + $0x264] sm:$0xf]
  %v5810 = vld [vmem:[%s5655 + $0x268] sm:$0xf]
  %v5811 = vld [vmem:[%s5655 + $0x26c] sm:$0xf]
  %v5812 = vld [vmem:[%s5655 + $0x270] sm:$0xf]
  %v5813 = vld [vmem:[%s5655 + $0x274] sm:$0xf]
  %v5814 = vld [vmem:[%s5655 + $0x278] sm:$0xf]
  %v5815 = vld [vmem:[%s5655 + $0x27c] sm:$0xf]
  %v5816 = vld [vmem:[%s5655 + $0x280] sm:$0xf]
  %v5817 = vld [vmem:[%s5655 + $0x284] sm:$0xf]
  %v5818 = vld [vmem:[%s5655 + $0x288] sm:$0xf]
  %v5819 = vld [vmem:[%s5655 + $0x28c] sm:$0xf]
  %v5820 = vld [vmem:[%s5655 + $0x290] sm:$0xf]
  %v5821 = vld [vmem:[%s5655 + $0x294] sm:$0xf]
  %v5822 = vld [vmem:[%s5655 + $0x298] sm:$0xf]
  %v5823 = vld [vmem:[%s5655 + $0x29c] sm:$0xf]
  %v5824 = vld [vmem:[%s5655 + $0x2a0] sm:$0xf]
  %v5825 = vld [vmem:[%s5655 + $0x2a4] sm:$0xf]
  %v5826 = vld [vmem:[%s5655 + $0x2a8] sm:$0xf]
  %v5827 = vld [vmem:[%s5655 + $0x2ac] sm:$0xf]
  %v5828 = vld [vmem:[%s5655 + $0x2b0] sm:$0xf]
  %v5829 = vld [vmem:[%s5655 + $0x2b4] sm:$0xf]
  %v5830 = vld [vmem:[%s5655 + $0x2b8] sm:$0xf]
  %v5831 = vld [vmem:[%s5655 + $0x2bc] sm:$0xf]
  %v5832 = vld [vmem:[%s5655 + $0x2c0] sm:$0xf]
  %v5833 = vld [vmem:[%s5655 + $0x2c4] sm:$0xf]
  %v5834 = vld [vmem:[%s5655 + $0x2c8] sm:$0xf]
  %v5835 = vld [vmem:[%s5655 + $0x2cc] sm:$0xf]
  %v5836 = vld [vmem:[%s5655 + $0x2d0] sm:$0xf]
  %v5837 = vld [vmem:[%s5655 + $0x2d4] sm:$0xf]
  %v5838 = vld [vmem:[%s5655 + $0x2d8] sm:$0xf]
  %v5839 = vld [vmem:[%s5655 + $0x2dc] sm:$0xf]
  %v5840 = vld [vmem:[%s5655 + $0x2e0] sm:$0xf]
  %v5841 = vld [vmem:[%s5655 + $0x2e4] sm:$0xf]
  %v5842 = vld [vmem:[%s5655 + $0x2e8] sm:$0xf]
  %v5843 = vld [vmem:[%s5655 + $0x2ec] sm:$0xf]
  %v5844 = vld [vmem:[%s5655 + $0x2f0] sm:$0xf]
  %v5845 = vld [vmem:[%s5655 + $0x2f4] sm:$0xf]
  %v5846 = vld [vmem:[%s5655 + $0x2f8] sm:$0xf]
  %v5847 = vld [vmem:[%s5655 + $0x2fc] sm:$0xf]
  %v5848 = vld [vmem:[%s5655 + $0x300] sm:$0xf]
  %v5849 = vld [vmem:[%s5655 + $0x304] sm:$0xf]
  %v5850 = vld [vmem:[%s5655 + $0x308] sm:$0xf]
  %v5851 = vld [vmem:[%s5655 + $0x30c] sm:$0xf]
  %v5852 = vld [vmem:[%s5655 + $0x310] sm:$0xf]
  %v5853 = vld [vmem:[%s5655 + $0x314] sm:$0xf]
  %v5854 = vld [vmem:[%s5655 + $0x318] sm:$0xf]
  %v5855 = vld [vmem:[%s5655 + $0x31c] sm:$0xf]
  %v5856 = vld [vmem:[%s5655 + $0x320] sm:$0xf]
  %v5857 = vld [vmem:[%s5655 + $0x324] sm:$0xf]
  %v5858 = vld [vmem:[%s5655 + $0x328] sm:$0xf]
  %v5859 = vld [vmem:[%s5655 + $0x32c] sm:$0xf]
  %v5860 = vld [vmem:[%s5655 + $0x330] sm:$0xf]
  %v5861 = vld [vmem:[%s5655 + $0x334] sm:$0xf]
  %v5862 = vld [vmem:[%s5655 + $0x338] sm:$0xf]
  %v5863 = vld [vmem:[%s5655 + $0x33c] sm:$0xf]
  %v5864 = vld [vmem:[%s5655 + $0x340] sm:$0xf]
  %v5865 = vld [vmem:[%s5655 + $0x344] sm:$0xf]
  %v5866 = vld [vmem:[%s5655 + $0x348] sm:$0xf]
  %v5867 = vld [vmem:[%s5655 + $0x34c] sm:$0xf]
  %v5868 = vld [vmem:[%s5655 + $0x350] sm:$0xf]
  %v5869 = vld [vmem:[%s5655 + $0x354] sm:$0xf]
  %v5870 = vld [vmem:[%s5655 + $0x358] sm:$0xf]
  %v5871 = vld [vmem:[%s5655 + $0x35c] sm:$0xf]
  %v5872 = vld [vmem:[%s5655 + $0x360] sm:$0xf]
  %v5873 = vld [vmem:[%s5655 + $0x364] sm:$0xf]
  %v5874 = vld [vmem:[%s5655 + $0x368] sm:$0xf]
  %v5875 = vld [vmem:[%s5655 + $0x36c] sm:$0xf]
  %v5876 = vld [vmem:[%s5655 + $0x370] sm:$0xf]
  %v5877 = vld [vmem:[%s5655 + $0x374] sm:$0xf]
  %v5878 = vld [vmem:[%s5655 + $0x378] sm:$0xf]
  %v5879 = vld [vmem:[%s5655 + $0x37c] sm:$0xf]
  %v5880 = vld [vmem:[%s5655 + $0x380] sm:$0xf]
  %v5881 = vld [vmem:[%s5655 + $0x384] sm:$0xf]
  %v5882 = vld [vmem:[%s5655 + $0x388] sm:$0xf]
  %v5883 = vld [vmem:[%s5655 + $0x38c] sm:$0xf]
  %v5884 = vld [vmem:[%s5655 + $0x390] sm:$0xf]
  %v5885 = vld [vmem:[%s5655 + $0x394] sm:$0xf]
  %v5886 = vld [vmem:[%s5655 + $0x398] sm:$0xf]
  %v5887 = vld [vmem:[%s5655 + $0x39c] sm:$0xf]
  %v5888 = vld [vmem:[%s5655 + $0x3a0] sm:$0xf]
  %v5889 = vld [vmem:[%s5655 + $0x3a4] sm:$0xf]
  %v5890 = vld [vmem:[%s5655 + $0x3a8] sm:$0xf]
  %v5891 = vld [vmem:[%s5655 + $0x3ac] sm:$0xf]
  %v5892 = vld [vmem:[%s5655 + $0x3b0] sm:$0xf]
  %v5893 = vld [vmem:[%s5655 + $0x3b4] sm:$0xf]
  %v5894 = vld [vmem:[%s5655 + $0x3b8] sm:$0xf]
  %v5895 = vld [vmem:[%s5655 + $0x3bc] sm:$0xf]
  %v5896 = vld [vmem:[%s5655 + $0x3c0] sm:$0xf]
  %v5897 = vld [vmem:[%s5655 + $0x3c4] sm:$0xf]
  %v5898 = vld [vmem:[%s5655 + $0x3c8] sm:$0xf]
  %v5899 = vld [vmem:[%s5655 + $0x3cc] sm:$0xf]
  %v5900 = vld [vmem:[%s5655 + $0x3d0] sm:$0xf]
  %v5901 = vld [vmem:[%s5655 + $0x3d4] sm:$0xf]
  %v5902 = vld [vmem:[%s5655 + $0x3d8] sm:$0xf]
  %v5903 = vld [vmem:[%s5655 + $0x3dc] sm:$0xf]
  %v5904 = vld [vmem:[%s5655 + $0x3e0] sm:$0xf]
  %v5905 = vld [vmem:[%s5655 + $0x3e4] sm:$0xf]
  %v5906 = vld [vmem:[%s5655 + $0x3e8] sm:$0xf]
  %v5907 = vld [vmem:[%s5655 + $0x3ec] sm:$0xf]
  %v5908 = vld [vmem:[%s5655 + $0x3f0] sm:$0xf]
  %v5909 = vld [vmem:[%s5655 + $0x3f4] sm:$0xf]
  %v5910 = vld [vmem:[%s5655 + $0x3f8] sm:$0xf]
  %v5911 = vld [vmem:[%s5655 + $0x3fc] sm:$0xf]
  %v5912 = vunpack.c.l.bf16 %v5656
  %v5913 = vunpack.c.l.bf16 %v5657
  %v5914 = vunpack.c.l.bf16 %v5658
  %v5915 = vunpack.c.l.bf16 %v5659
  %v5916 = vunpack.c.l.bf16 %v5660
  %v5917 = vunpack.c.l.bf16 %v5661
  %v5918 = vunpack.c.l.bf16 %v5662
  %v5919 = vunpack.c.l.bf16 %v5663
  %v5920 = vunpack.c.l.bf16 %v5664
  %v5921 = vunpack.c.l.bf16 %v5665
  %v5922 = vunpack.c.l.bf16 %v5666
  %v5923 = vunpack.c.l.bf16 %v5667
  %v5924 = vunpack.c.l.bf16 %v5668
  %v5925 = vunpack.c.l.bf16 %v5669
  %v5926 = vunpack.c.l.bf16 %v5670
  %v5927 = vunpack.c.l.bf16 %v5671
  %v5928 = vunpack.c.l.bf16 %v5672
  %v5929 = vunpack.c.l.bf16 %v5673
  %v5930 = vunpack.c.l.bf16 %v5674
  %v5931 = vunpack.c.l.bf16 %v5675
  %v5932 = vunpack.c.l.bf16 %v5676
  %v5933 = vunpack.c.l.bf16 %v5677
  %v5934 = vunpack.c.l.bf16 %v5678
  %v5935 = vunpack.c.l.bf16 %v5679
  %v5936 = vunpack.c.l.bf16 %v5680
  %v5937 = vunpack.c.l.bf16 %v5681
  %v5938 = vunpack.c.l.bf16 %v5682
  %v5939 = vunpack.c.l.bf16 %v5683
  %v5940 = vunpack.c.l.bf16 %v5684
  %v5941 = vunpack.c.l.bf16 %v5685
  %v5942 = vunpack.c.l.bf16 %v5686
  %v5943 = vunpack.c.l.bf16 %v5687
  %v5944 = vunpack.c.l.bf16 %v5688
  %v5945 = vunpack.c.l.bf16 %v5689
  %v5946 = vunpack.c.l.bf16 %v5690
  %v5947 = vunpack.c.l.bf16 %v5691
  %v5948 = vunpack.c.l.bf16 %v5692
  %v5949 = vunpack.c.l.bf16 %v5693
  %v5950 = vunpack.c.l.bf16 %v5694
  %v5951 = vunpack.c.l.bf16 %v5695
  %v5952 = vunpack.c.l.bf16 %v5696
  %v5953 = vunpack.c.l.bf16 %v5697
  %v5954 = vunpack.c.l.bf16 %v5698
  %v5955 = vunpack.c.l.bf16 %v5699
  %v5956 = vunpack.c.l.bf16 %v5700
  %v5957 = vunpack.c.l.bf16 %v5701
  %v5958 = vunpack.c.l.bf16 %v5702
  %v5959 = vunpack.c.l.bf16 %v5703
  %v5960 = vunpack.c.l.bf16 %v5704
  %v5961 = vunpack.c.l.bf16 %v5705
  %v5962 = vunpack.c.l.bf16 %v5706
  %v5963 = vunpack.c.l.bf16 %v5707
  %v5964 = vunpack.c.l.bf16 %v5708
  %v5965 = vunpack.c.l.bf16 %v5709
  %v5966 = vunpack.c.l.bf16 %v5710
  %v5967 = vunpack.c.l.bf16 %v5711
  %v5968 = vunpack.c.l.bf16 %v5712
  %v5969 = vunpack.c.l.bf16 %v5713
  %v5970 = vunpack.c.l.bf16 %v5714
  %v5971 = vunpack.c.l.bf16 %v5715
  %v5972 = vunpack.c.l.bf16 %v5716
  %v5973 = vunpack.c.l.bf16 %v5717
  %v5974 = vunpack.c.l.bf16 %v5718
  %v5975 = vunpack.c.l.bf16 %v5719
  %v5976 = vunpack.c.l.bf16 %v5720
  %v5977 = vunpack.c.l.bf16 %v5721
  %v5978 = vunpack.c.l.bf16 %v5722
  %v5979 = vunpack.c.l.bf16 %v5723
  %v5980 = vunpack.c.l.bf16 %v5724
  %v5981 = vunpack.c.l.bf16 %v5725
  %v5982 = vunpack.c.l.bf16 %v5726
  %v5983 = vunpack.c.l.bf16 %v5727
  %v5984 = vunpack.c.l.bf16 %v5728
  %v5985 = vunpack.c.l.bf16 %v5729
  %v5986 = vunpack.c.l.bf16 %v5730
  %v5987 = vunpack.c.l.bf16 %v5731
  %v5988 = vunpack.c.l.bf16 %v5732
  %v5989 = vunpack.c.l.bf16 %v5733
  %v5990 = vunpack.c.l.bf16 %v5734
  %v5991 = vunpack.c.l.bf16 %v5735
  %v5992 = vunpack.c.l.bf16 %v5736
  %v5993 = vunpack.c.l.bf16 %v5737
  %v5994 = vunpack.c.l.bf16 %v5738
  %v5995 = vunpack.c.l.bf16 %v5739
  %v5996 = vunpack.c.l.bf16 %v5740
  %v5997 = vunpack.c.l.bf16 %v5741
  %v5998 = vunpack.c.l.bf16 %v5742
  %v5999 = vunpack.c.l.bf16 %v5743
  %v6000 = vunpack.c.l.bf16 %v5744
  %v6001 = vunpack.c.l.bf16 %v5745
  %v6002 = vunpack.c.l.bf16 %v5746
  %v6003 = vunpack.c.l.bf16 %v5747
  %v6004 = vunpack.c.l.bf16 %v5748
  %v6005 = vunpack.c.l.bf16 %v5749
  %v6006 = vunpack.c.l.bf16 %v5750
  %v6007 = vunpack.c.l.bf16 %v5751
  %v6008 = vunpack.c.l.bf16 %v5752
  %v6009 = vunpack.c.l.bf16 %v5753
  %v6010 = vunpack.c.l.bf16 %v5754
  %v6011 = vunpack.c.l.bf16 %v5755
  %v6012 = vunpack.c.l.bf16 %v5756
  %v6013 = vunpack.c.l.bf16 %v5757
  %v6014 = vunpack.c.l.bf16 %v5758
  %v6015 = vunpack.c.l.bf16 %v5759
  %v6016 = vunpack.c.l.bf16 %v5760
  %v6017 = vunpack.c.l.bf16 %v5761
  %v6018 = vunpack.c.l.bf16 %v5762
  %v6019 = vunpack.c.l.bf16 %v5763
  %v6020 = vunpack.c.l.bf16 %v5764
  %v6021 = vunpack.c.l.bf16 %v5765
  %v6022 = vunpack.c.l.bf16 %v5766
  %v6023 = vunpack.c.l.bf16 %v5767
  %v6024 = vunpack.c.l.bf16 %v5768
  %v6025 = vunpack.c.l.bf16 %v5769
  %v6026 = vunpack.c.l.bf16 %v5770
  %v6027 = vunpack.c.l.bf16 %v5771
  %v6028 = vunpack.c.l.bf16 %v5772
  %v6029 = vunpack.c.l.bf16 %v5773
  %v6030 = vunpack.c.l.bf16 %v5774
  %v6031 = vunpack.c.l.bf16 %v5775
  %v6032 = vunpack.c.l.bf16 %v5776
  %v6033 = vunpack.c.l.bf16 %v5777
  %v6034 = vunpack.c.l.bf16 %v5778
  %v6035 = vunpack.c.l.bf16 %v5779
  %v6036 = vunpack.c.l.bf16 %v5780
  %v6037 = vunpack.c.l.bf16 %v5781
  %v6038 = vunpack.c.l.bf16 %v5782
  %v6039 = vunpack.c.l.bf16 %v5783
  %v6040 = vunpack.c.l.bf16 %v5784
  %v6041 = vunpack.c.l.bf16 %v5785
  %v6042 = vunpack.c.l.bf16 %v5786
  %v6043 = vunpack.c.l.bf16 %v5787
  %v6044 = vunpack.c.l.bf16 %v5788
  %v6045 = vunpack.c.l.bf16 %v5789
  %v6046 = vunpack.c.l.bf16 %v5790
  %v6047 = vunpack.c.l.bf16 %v5791
  %v6048 = vunpack.c.l.bf16 %v5792
  %v6049 = vunpack.c.l.bf16 %v5793
  %v6050 = vunpack.c.l.bf16 %v5794
  %v6051 = vunpack.c.l.bf16 %v5795
  %v6052 = vunpack.c.l.bf16 %v5796
  %v6053 = vunpack.c.l.bf16 %v5797
  %v6054 = vunpack.c.l.bf16 %v5798
  %v6055 = vunpack.c.l.bf16 %v5799
  %v6056 = vunpack.c.l.bf16 %v5800
  %v6057 = vunpack.c.l.bf16 %v5801
  %v6058 = vunpack.c.l.bf16 %v5802
  %v6059 = vunpack.c.l.bf16 %v5803
  %v6060 = vunpack.c.l.bf16 %v5804
  %v6061 = vunpack.c.l.bf16 %v5805
  %v6062 = vunpack.c.l.bf16 %v5806
  %v6063 = vunpack.c.l.bf16 %v5807
  %v6064 = vunpack.c.l.bf16 %v5808
  %v6065 = vunpack.c.l.bf16 %v5809
  %v6066 = vunpack.c.l.bf16 %v5810
  %v6067 = vunpack.c.l.bf16 %v5811
  %v6068 = vunpack.c.l.bf16 %v5812
  %v6069 = vunpack.c.l.bf16 %v5813
  %v6070 = vunpack.c.l.bf16 %v5814
  %v6071 = vunpack.c.l.bf16 %v5815
  %v6072 = vunpack.c.l.bf16 %v5816
  %v6073 = vunpack.c.l.bf16 %v5817
  %v6074 = vunpack.c.l.bf16 %v5818
  %v6075 = vunpack.c.l.bf16 %v5819
  %v6076 = vunpack.c.l.bf16 %v5820
  %v6077 = vunpack.c.l.bf16 %v5821
  %v6078 = vunpack.c.l.bf16 %v5822
  %v6079 = vunpack.c.l.bf16 %v5823
  %v6080 = vunpack.c.l.bf16 %v5824
  %v6081 = vunpack.c.l.bf16 %v5825
  %v6082 = vunpack.c.l.bf16 %v5826
  %v6083 = vunpack.c.l.bf16 %v5827
  %v6084 = vunpack.c.l.bf16 %v5828
  %v6085 = vunpack.c.l.bf16 %v5829
  %v6086 = vunpack.c.l.bf16 %v5830
  %v6087 = vunpack.c.l.bf16 %v5831
  %v6088 = vunpack.c.l.bf16 %v5832
  %v6089 = vunpack.c.l.bf16 %v5833
  %v6090 = vunpack.c.l.bf16 %v5834
  %v6091 = vunpack.c.l.bf16 %v5835
  %v6092 = vunpack.c.l.bf16 %v5836
  %v6093 = vunpack.c.l.bf16 %v5837
  %v6094 = vunpack.c.l.bf16 %v5838
  %v6095 = vunpack.c.l.bf16 %v5839
  %v6096 = vunpack.c.l.bf16 %v5840
  %v6097 = vunpack.c.l.bf16 %v5841
  %v6098 = vunpack.c.l.bf16 %v5842
  %v6099 = vunpack.c.l.bf16 %v5843
  %v6100 = vunpack.c.l.bf16 %v5844
  %v6101 = vunpack.c.l.bf16 %v5845
  %v6102 = vunpack.c.l.bf16 %v5846
  %v6103 = vunpack.c.l.bf16 %v5847
  %v6104 = vunpack.c.l.bf16 %v5848
  %v6105 = vunpack.c.l.bf16 %v5849
  %v6106 = vunpack.c.l.bf16 %v5850
  %v6107 = vunpack.c.l.bf16 %v5851
  %v6108 = vunpack.c.l.bf16 %v5852
  %v6109 = vunpack.c.l.bf16 %v5853
  %v6110 = vunpack.c.l.bf16 %v5854
  %v6111 = vunpack.c.l.bf16 %v5855
  %v6112 = vunpack.c.l.bf16 %v5856
  %v6113 = vunpack.c.l.bf16 %v5857
  %v6114 = vunpack.c.l.bf16 %v5858
  %v6115 = vunpack.c.l.bf16 %v5859
  %v6116 = vunpack.c.l.bf16 %v5860
  %v6117 = vunpack.c.l.bf16 %v5861
  %v6118 = vunpack.c.l.bf16 %v5862
  %v6119 = vunpack.c.l.bf16 %v5863
  %v6120 = vunpack.c.l.bf16 %v5864
  %v6121 = vunpack.c.l.bf16 %v5865
  %v6122 = vunpack.c.l.bf16 %v5866
  %v6123 = vunpack.c.l.bf16 %v5867
  %v6124 = vunpack.c.l.bf16 %v5868
  %v6125 = vunpack.c.l.bf16 %v5869
  %v6126 = vunpack.c.l.bf16 %v5870
  %v6127 = vunpack.c.l.bf16 %v5871
  %v6128 = vunpack.c.l.bf16 %v5872
  %v6129 = vunpack.c.l.bf16 %v5873
  %v6130 = vunpack.c.l.bf16 %v5874
  %v6131 = vunpack.c.l.bf16 %v5875
  %v6132 = vunpack.c.l.bf16 %v5876
  %v6133 = vunpack.c.l.bf16 %v5877
  %v6134 = vunpack.c.l.bf16 %v5878
  %v6135 = vunpack.c.l.bf16 %v5879
  %v6136 = vunpack.c.l.bf16 %v5880
  %v6137 = vunpack.c.l.bf16 %v5881
  %v6138 = vunpack.c.l.bf16 %v5882
  %v6139 = vunpack.c.l.bf16 %v5883
  %v6140 = vunpack.c.l.bf16 %v5884
  %v6141 = vunpack.c.l.bf16 %v5885
  %v6142 = vunpack.c.l.bf16 %v5886
  %v6143 = vunpack.c.l.bf16 %v5887
  %v6144 = vunpack.c.l.bf16 %v5888
  %v6145 = vunpack.c.l.bf16 %v5889
  %v6146 = vunpack.c.l.bf16 %v5890
  %v6147 = vunpack.c.l.bf16 %v5891
  %v6148 = vunpack.c.l.bf16 %v5892
  %v6149 = vunpack.c.l.bf16 %v5893
  %v6150 = vunpack.c.l.bf16 %v5894
  %v6151 = vunpack.c.l.bf16 %v5895
  %v6152 = vunpack.c.l.bf16 %v5896
  %v6153 = vunpack.c.l.bf16 %v5897
  %v6154 = vunpack.c.l.bf16 %v5898
  %v6155 = vunpack.c.l.bf16 %v5899
  %v6156 = vunpack.c.l.bf16 %v5900
  %v6157 = vunpack.c.l.bf16 %v5901
  %v6158 = vunpack.c.l.bf16 %v5902
  %v6159 = vunpack.c.l.bf16 %v5903
  %v6160 = vunpack.c.l.bf16 %v5904
  %v6161 = vunpack.c.l.bf16 %v5905
  %v6162 = vunpack.c.l.bf16 %v5906
  %v6163 = vunpack.c.l.bf16 %v5907
  %v6164 = vunpack.c.l.bf16 %v5908
  %v6165 = vunpack.c.l.bf16 %v5909
  %v6166 = vunpack.c.l.bf16 %v5910
  %v6167 = vunpack.c.l.bf16 %v5911
  %s6168 = scalar_lea.vmem %s8, 16
  %v6169 = vld [vmem:[%s6168] sm:$0xff]
  %v6170 = vld [vmem:[%s6168 + $0x8] sm:$0xff]
  %v6173 = vlaneseq
  %v6174 = vshrl.u32 %v6173, 7
  %v6175 = vsub.s32 0, %v6174
  %v6176 = vrot.slane %v6169, %v6175
  %v6177 = vlaneseq
  %v6178 = vshrl.u32 %v6177, 7
  %v6179 = vsub.s32 1, %v6178
  %v6180 = vrot.slane %v6169, %v6179
  %v6181 = vlaneseq
  %v6182 = vshrl.u32 %v6181, 7
  %v6183 = vsub.s32 2, %v6182
  %v6184 = vrot.slane %v6169, %v6183
  %v6185 = vlaneseq
  %v6186 = vshrl.u32 %v6185, 7
  %v6187 = vsub.s32 3, %v6186
  %v6188 = vrot.slane %v6169, %v6187
  %v6189 = vlaneseq
  %v6190 = vshrl.u32 %v6189, 7
  %v6191 = vsub.s32 4, %v6190
  %v6192 = vrot.slane %v6169, %v6191
  %v6193 = vlaneseq
  %v6194 = vshrl.u32 %v6193, 7
  %v6195 = vsub.s32 5, %v6194
  %v6196 = vrot.slane %v6169, %v6195
  %v6197 = vlaneseq
  %v6198 = vshrl.u32 %v6197, 7
  %v6199 = vsub.s32 6, %v6198
  %v6200 = vrot.slane %v6169, %v6199
  %v6201 = vlaneseq
  %v6202 = vshrl.u32 %v6201, 7
  %v6203 = vsub.s32 7, %v6202
  %v6204 = vrot.slane %v6169, %v6203
  %v6205 = vlaneseq
  %v6206 = vshrl.u32 %v6205, 7
  %v6207 = vsub.s32 0, %v6206
  %v6208 = vrot.slane %v6170, %v6207
  %v6209 = vlaneseq
  %v6210 = vshrl.u32 %v6209, 7
  %v6211 = vsub.s32 1, %v6210
  %v6212 = vrot.slane %v6170, %v6211
  %v6213 = vlaneseq
  %v6214 = vshrl.u32 %v6213, 7
  %v6215 = vsub.s32 2, %v6214
  %v6216 = vrot.slane %v6170, %v6215
  %v6217 = vlaneseq
  %v6218 = vshrl.u32 %v6217, 7
  %v6219 = vsub.s32 3, %v6218
  %v6220 = vrot.slane %v6170, %v6219
  %v6221 = vlaneseq
  %v6222 = vshrl.u32 %v6221, 7
  %v6223 = vsub.s32 4, %v6222
  %v6224 = vrot.slane %v6170, %v6223
  %v6225 = vlaneseq
  %v6226 = vshrl.u32 %v6225, 7
  %v6227 = vsub.s32 5, %v6226
  %v6228 = vrot.slane %v6170, %v6227
  %v6229 = vlaneseq
  %v6230 = vshrl.u32 %v6229, 7
  %v6231 = vsub.s32 6, %v6230
  %v6232 = vrot.slane %v6170, %v6231
  %v6233 = vlaneseq
  %v6234 = vshrl.u32 %v6233, 7
  %v6235 = vsub.s32 7, %v6234
  %v6236 = vrot.slane %v6170, %v6235
  %v6254 = vsel %vm179, %v5460, 0
  %v6257 = vsel %vm179, %v5461, 0
  %6259 = vmatprep.subr.mxu0 %v5528
  %6260 = vmatpush1.msra.mxu0 %v5527
  %6261 = vmatprep.subr.mxu0 %v5544
  %6262 = vmatpush1.msra.mxu0 %v5543
  %6263 = vmatprep.subr.mxu0 %v5560
  %6264 = vmatpush1.msra.mxu0 %v5559
  %6265 = vmatprep.subr.mxu0 %v5576
  %6266 = vmatpush1.msra.mxu0 %v5575
  %6267 = vmatprep.subr.mxu0 %v5592
  %6268 = vmatpush1.msra.mxu0 %v5591
  %6269 = vmatprep.subr.mxu0 %v5608
  %6270 = vmatpush1.msra.mxu0 %v5607
  %6271 = vmatprep.subr.mxu0 %v5624
  %6272 = vmatpush1.msra.mxu0 %v5623
  %6273 = vmatprep.subr.mxu0 %v5640
  %6274 = vmatpush1.msra.mxu0 %v5639
  %6275 = vmatprep.subr.mxu0 0.0
  %6276 = vmatpush1.msra.mxu0 0.0
  %6277 = vmatprep.subr.mxu0 0.0
  %6278 = vmatpush1.msra.mxu0 0.0
  %6279 = vmatprep.subr.mxu0 0.0
  %6280 = vmatpush1.msra.mxu0 0.0
  %6281 = vmatprep.subr.mxu0 0.0
  %6282 = vmatpush1.msra.mxu0 0.0
  %6283 = vmatprep.subr.mxu0 0.0
  %6284 = vmatpush1.msra.mxu0 0.0
  %6285 = vmatprep.subr.mxu0 0.0
  %6286 = vmatpush1.msra.mxu0 0.0
  %6287 = vmatprep.subr.mxu0 0.0
  %6288 = vmatpush1.msra.mxu0 0.0
  %6289 = vmatprep.subr.mxu0 0.0
  %6290 = vmatpush1.msra.mxu0 0.0
  %6291 = vmatprep.subr.mxu0 0.0
  %6292 = vmatpush1.msra.mxu0 0.0
  %6293 = vmatprep.subr.mxu0 0.0
  %6294 = vmatpush1.msra.mxu0 0.0
  %6295 = vmatprep.subr.mxu0 0.0
  %6296 = vmatpush1.msra.mxu0 0.0
  %6297 = vmatprep.subr.mxu0 0.0
  %6298 = vmatpush1.msra.mxu0 0.0
  %6299 = vmatprep.subr.mxu0 0.0
  %6300 = vmatpush1.msra.mxu0 0.0
  %6301 = vmatprep.subr.mxu0 0.0
  %6302 = vmatpush1.msra.mxu0 0.0
  %6303 = vmatprep.subr.mxu0 0.0
  %6304 = vmatpush1.msra.mxu0 0.0
  %6305 = vmatprep.subr.mxu0 0.0
  %6306 = vmatpush1.msra.mxu0 0.0
  %6307 = vmatprep.subr.mxu0 0.0
  %6308 = vmatpush1.msra.mxu0 0.0
  %6309 = vmatprep.subr.mxu0 0.0
  %6310 = vmatpush1.msra.mxu0 0.0
  %6311 = vmatprep.subr.mxu0 0.0
  %6312 = vmatpush1.msra.mxu0 0.0
  %6313 = vmatprep.subr.mxu0 0.0
  %6314 = vmatpush1.msra.mxu0 0.0
  %6315 = vmatprep.subr.mxu0 0.0
  %6316 = vmatpush1.msra.mxu0 0.0
  %6317 = vmatprep.subr.mxu0 0.0
  %6318 = vmatpush1.msra.mxu0 0.0
  %6319 = vmatprep.subr.mxu0 0.0
  %6320 = vmatpush1.msra.mxu0 0.0
  %6321 = vmatprep.subr.mxu0 0.0
  %6322 = vmatpush1.msra.mxu0 0.0
  %6323 = vmatprep.mubr.f32.mxu0 0.0
  %6324 = vmatmul.mubr.f32.gmra.mrb[0].mxu0 %v6254
  %v6325 = vpop.f32.mrb[0].mxu0
  %v6326 = vadd.f32 %v6176, %v6325
  %v6327 = vpop.f32.mrb[0].mxu0
  %v6328 = vadd.f32 %v6180, %v6327
  %6329 = vmatprep.mubr.f32.mxu0 0.0
  %6330 = vmatmul.mubr.f32.gmra.mrb[0].mxu0 %v6257
  %v6331 = vpop.f32.mrb[0].mxu0
  %v6332 = vadd.f32 %v6176, %v6331
  %v6333 = vpop.f32.mrb[0].mxu0
  %v6334 = vadd.f32 %v6180, %v6333
  %6335 = vdwg.mxu0
  %6336 = vmatprep.subr.mxu0 %v5530
  %6337 = vmatpush1.msra.mxu0 %v5529
  %6338 = vmatprep.subr.mxu0 %v5546
  %6339 = vmatpush1.msra.mxu0 %v5545
  %6340 = vmatprep.subr.mxu0 %v5562
  %6341 = vmatpush1.msra.mxu0 %v5561
  %6342 = vmatprep.subr.mxu0 %v5578
  %6343 = vmatpush1.msra.mxu0 %v5577
  %6344 = vmatprep.subr.mxu0 %v5594
  %6345 = vmatpush1.msra.mxu0 %v5593
  %6346 = vmatprep.subr.mxu0 %v5610
  %6347 = vmatpush1.msra.mxu0 %v5609
  %6348 = vmatprep.subr.mxu0 %v5626
  %6349 = vmatpush1.msra.mxu0 %v5625
  %6350 = vmatprep.subr.mxu0 %v5642
  %6351 = vmatpush1.msra.mxu0 %v5641
  %6352 = vmatprep.subr.mxu0 0.0
  %6353 = vmatpush1.msra.mxu0 0.0
  %6354 = vmatprep.subr.mxu0 0.0
  %6355 = vmatpush1.msra.mxu0 0.0
  %6356 = vmatprep.subr.mxu0 0.0
  %6357 = vmatpush1.msra.mxu0 0.0
  %6358 = vmatprep.subr.mxu0 0.0
  %6359 = vmatpush1.msra.mxu0 0.0
  %6360 = vmatprep.subr.mxu0 0.0
  %6361 = vmatpush1.msra.mxu0 0.0
  %6362 = vmatprep.subr.mxu0 0.0
  %6363 = vmatpush1.msra.mxu0 0.0
  %6364 = vmatprep.subr.mxu0 0.0
  %6365 = vmatpush1.msra.mxu0 0.0
  %6366 = vmatprep.subr.mxu0 0.0
  %6367 = vmatpush1.msra.mxu0 0.0
  %6368 = vmatprep.subr.mxu0 0.0
  %6369 = vmatpush1.msra.mxu0 0.0
  %6370 = vmatprep.subr.mxu0 0.0
  %6371 = vmatpush1.msra.mxu0 0.0
  %6372 = vmatprep.subr.mxu0 0.0
  %6373 = vmatpush1.msra.mxu0 0.0
  %6374 = vmatprep.subr.mxu0 0.0
  %6375 = vmatpush1.msra.mxu0 0.0
  %6376 = vmatprep.subr.mxu0 0.0
  %6377 = vmatpush1.msra.mxu0 0.0
  %6378 = vmatprep.subr.mxu0 0.0
  %6379 = vmatpush1.msra.mxu0 0.0
  %6380 = vmatprep.subr.mxu0 0.0
  %6381 = vmatpush1.msra.mxu0 0.0
  %6382 = vmatprep.subr.mxu0 0.0
  %6383 = vmatpush1.msra.mxu0 0.0
  %6384 = vmatprep.subr.mxu0 0.0
  %6385 = vmatpush1.msra.mxu0 0.0
  %6386 = vmatprep.subr.mxu0 0.0
  %6387 = vmatpush1.msra.mxu0 0.0
  %6388 = vmatprep.subr.mxu0 0.0
  %6389 = vmatpush1.msra.mxu0 0.0
  %6390 = vmatprep.subr.mxu0 0.0
  %6391 = vmatpush1.msra.mxu0 0.0
  %6392 = vmatprep.subr.mxu0 0.0
  %6393 = vmatpush1.msra.mxu0 0.0
  %6394 = vmatprep.subr.mxu0 0.0
  %6395 = vmatpush1.msra.mxu0 0.0
  %6396 = vmatprep.subr.mxu0 0.0
  %6397 = vmatpush1.msra.mxu0 0.0
  %6398 = vmatprep.subr.mxu0 0.0
  %6399 = vmatpush1.msra.mxu0 0.0
  %6400 = vmatprep.mubr.f32.mxu0 0.0
  %6401 = vmatmul.mubr.f32.gmra.mrb[0].mxu0 %v6254
  %v6402 = vpop.f32.mrb[0].mxu0
  %v6403 = vadd.f32 %v6184, %v6402
  %v6404 = vpop.f32.mrb[0].mxu0
  %v6405 = vadd.f32 %v6188, %v6404
  %6406 = vmatprep.mubr.f32.mxu0 0.0
  %6407 = vmatmul.mubr.f32.gmra.mrb[0].mxu0 %v6257
  %v6408 = vpop.f32.mrb[0].mxu0
  %v6409 = vadd.f32 %v6184, %v6408
  %v6410 = vpop.f32.mrb[0].mxu0
  %v6411 = vadd.f32 %v6188, %v6410
  %6412 = vdwg.mxu0
  %6413 = vmatprep.subr.mxu0 %v5532
  %6414 = vmatpush1.msra.mxu0 %v5531
  %6415 = vmatprep.subr.mxu0 %v5548
  %6416 = vmatpush1.msra.mxu0 %v5547
  %6417 = vmatprep.subr.mxu0 %v5564
  %6418 = vmatpush1.msra.mxu0 %v5563
  %6419 = vmatprep.subr.mxu0 %v5580
  %6420 = vmatpush1.msra.mxu0 %v5579
  %6421 = vmatprep.subr.mxu0 %v5596
  %6422 = vmatpush1.msra.mxu0 %v5595
  %6423 = vmatprep.subr.mxu0 %v5612
  %6424 = vmatpush1.msra.mxu0 %v5611
  %6425 = vmatprep.subr.mxu0 %v5628
  %6426 = vmatpush1.msra.mxu0 %v5627
  %6427 = vmatprep.subr.mxu0 %v5644
  %6428 = vmatpush1.msra.mxu0 %v5643
  %6429 = vmatprep.subr.mxu0 0.0
  %6430 = vmatpush1.msra.mxu0 0.0
  %6431 = vmatprep.subr.mxu0 0.0
  %6432 = vmatpush1.msra.mxu0 0.0
  %6433 = vmatprep.subr.mxu0 0.0
  %6434 = vmatpush1.msra.mxu0 0.0
  %6435 = vmatprep.subr.mxu0 0.0
  %6436 = vmatpush1.msra.mxu0 0.0
  %6437 = vmatprep.subr.mxu0 0.0
  %6438 = vmatpush1.msra.mxu0 0.0
  %6439 = vmatprep.subr.mxu0 0.0
  %6440 = vmatpush1.msra.mxu0 0.0
  %6441 = vmatprep.subr.mxu0 0.0
  %6442 = vmatpush1.msra.mxu0 0.0
  %6443 = vmatprep.subr.mxu0 0.0
  %6444 = vmatpush1.msra.mxu0 0.0
  %6445 = vmatprep.subr.mxu0 0.0
  %6446 = vmatpush1.msra.mxu0 0.0
  %6447 = vmatprep.subr.mxu0 0.0
  %6448 = vmatpush1.msra.mxu0 0.0
  %6449 = vmatprep.subr.mxu0 0.0
  %6450 = vmatpush1.msra.mxu0 0.0
  %6451 = vmatprep.subr.mxu0 0.0
  %6452 = vmatpush1.msra.mxu0 0.0
  %6453 = vmatprep.subr.mxu0 0.0
  %6454 = vmatpush1.msra.mxu0 0.0
  %6455 = vmatprep.subr.mxu0 0.0
  %6456 = vmatpush1.msra.mxu0 0.0
  %6457 = vmatprep.subr.mxu0 0.0
  %6458 = vmatpush1.msra.mxu0 0.0
  %6459 = vmatprep.subr.mxu0 0.0
  %6460 = vmatpush1.msra.mxu0 0.0
  %6461 = vmatprep.subr.mxu0 0.0
  %6462 = vmatpush1.msra.mxu0 0.0
  %6463 = vmatprep.subr.mxu0 0.0
  %6464 = vmatpush1.msra.mxu0 0.0
  %6465 = vmatprep.subr.mxu0 0.0
  %6466 = vmatpush1.msra.mxu0 0.0
  %6467 = vmatprep.subr.mxu0 0.0
  %6468 = vmatpush1.msra.mxu0 0.0
  %6469 = vmatprep.subr.mxu0 0.0
  %6470 = vmatpush1.msra.mxu0 0.0
  %6471 = vmatprep.subr.mxu0 0.0
  %6472 = vmatpush1.msra.mxu0 0.0
  %6473 = vmatprep.subr.mxu0 0.0
  %6474 = vmatpush1.msra.mxu0 0.0
  %6475 = vmatprep.subr.mxu0 0.0
  %6476 = vmatpush1.msra.mxu0 0.0
  %6477 = vmatprep.mubr.f32.mxu0 0.0
  %6478 = vmatmul.mubr.f32.gmra.mrb[0].mxu0 %v6254
  %v6479 = vpop.f32.mrb[0].mxu0
  %v6480 = vadd.f32 %v6192, %v6479
  %v6481 = vpop.f32.mrb[0].mxu0
  %v6482 = vadd.f32 %v6196, %v6481
  %6483 = vmatprep.mubr.f32.mxu0 0.0
  %6484 = vmatmul.mubr.f32.gmra.mrb[0].mxu0 %v6257
  %v6485 = vpop.f32.mrb[0].mxu0
  %v6486 = vadd.f32 %v6192, %v6485
  %v6487 = vpop.f32.mrb[0].mxu0
  %v6488 = vadd.f32 %v6196, %v6487
  %6489 = vdwg.mxu0
  %6490 = vmatprep.subr.mxu0 %v5534
  %6491 = vmatpush1.msra.mxu0 %v5533
  %6492 = vmatprep.subr.mxu0 %v5550
  %6493 = vmatpush1.msra.mxu0 %v5549
  %6494 = vmatprep.subr.mxu0 %v5566
  %6495 = vmatpush1.msra.mxu0 %v5565
  %6496 = vmatprep.subr.mxu0 %v5582
  %6497 = vmatpush1.msra.mxu0 %v5581
  %6498 = vmatprep.subr.mxu0 %v5598
  %6499 = vmatpush1.msra.mxu0 %v5597
  %6500 = vmatprep.subr.mxu0 %v5614
  %6501 = vmatpush1.msra.mxu0 %v5613
  %6502 = vmatprep.subr.mxu0 %v5630
  %6503 = vmatpush1.msra.mxu0 %v5629
  %6504 = vmatprep.subr.mxu0 %v5646
  %6505 = vmatpush1.msra.mxu0 %v5645
  %6506 = vmatprep.subr.mxu0 0.0
  %6507 = vmatpush1.msra.mxu0 0.0
  %6508 = vmatprep.subr.mxu0 0.0
  %6509 = vmatpush1.msra.mxu0 0.0
  %6510 = vmatprep.subr.mxu0 0.0
  %6511 = vmatpush1.msra.mxu0 0.0
  %6512 = vmatprep.subr.mxu0 0.0
  %6513 = vmatpush1.msra.mxu0 0.0
  %6514 = vmatprep.subr.mxu0 0.0
  %6515 = vmatpush1.msra.mxu0 0.0
  %6516 = vmatprep.subr.mxu0 0.0
  %6517 = vmatpush1.msra.mxu0 0.0
  %6518 = vmatprep.subr.mxu0 0.0
  %6519 = vmatpush1.msra.mxu0 0.0
  %6520 = vmatprep.subr.mxu0 0.0
  %6521 = vmatpush1.msra.mxu0 0.0
  %6522 = vmatprep.subr.mxu0 0.0
  %6523 = vmatpush1.msra.mxu0 0.0
  %6524 = vmatprep.subr.mxu0 0.0
  %6525 = vmatpush1.msra.mxu0 0.0
  %6526 = vmatprep.subr.mxu0 0.0
  %6527 = vmatpush1.msra.mxu0 0.0
  %6528 = vmatprep.subr.mxu0 0.0
  %6529 = vmatpush1.msra.mxu0 0.0
  %6530 = vmatprep.subr.mxu0 0.0
  %6531 = vmatpush1.msra.mxu0 0.0
  %6532 = vmatprep.subr.mxu0 0.0
  %6533 = vmatpush1.msra.mxu0 0.0
  %6534 = vmatprep.subr.mxu0 0.0
  %6535 = vmatpush1.msra.mxu0 0.0
  %6536 = vmatprep.subr.mxu0 0.0
  %6537 = vmatpush1.msra.mxu0 0.0
  %6538 = vmatprep.subr.mxu0 0.0
  %6539 = vmatpush1.msra.mxu0 0.0
  %6540 = vmatprep.subr.mxu0 0.0
  %6541 = vmatpush1.msra.mxu0 0.0
  %6542 = vmatprep.subr.mxu0 0.0
  %6543 = vmatpush1.msra.mxu0 0.0
  %6544 = vmatprep.subr.mxu0 0.0
  %6545 = vmatpush1.msra.mxu0 0.0
  %6546 = vmatprep.subr.mxu0 0.0
  %6547 = vmatpush1.msra.mxu0 0.0
  %6548 = vmatprep.subr.mxu0 0.0
  %6549 = vmatpush1.msra.mxu0 0.0
  %6550 = vmatprep.subr.mxu0 0.0
  %6551 = vmatpush1.msra.mxu0 0.0
  %6552 = vmatprep.subr.mxu0 0.0
  %6553 = vmatpush1.msra.mxu0 0.0
  %6554 = vmatprep.mubr.f32.mxu0 0.0
  %6555 = vmatmul.mubr.f32.gmra.mrb[0].mxu0 %v6254
  %v6556 = vpop.f32.mrb[0].mxu0
  %v6557 = vadd.f32 %v6200, %v6556
  %v6558 = vpop.f32.mrb[0].mxu0
  %v6559 = vadd.f32 %v6204, %v6558
  %6560 = vmatprep.mubr.f32.mxu0 0.0
  %6561 = vmatmul.mubr.f32.gmra.mrb[0].mxu0 %v6257
  %v6562 = vpop.f32.mrb[0].mxu0
  %v6563 = vadd.f32 %v6200, %v6562
  %v6564 = vpop.f32.mrb[0].mxu0
  %v6565 = vadd.f32 %v6204, %v6564
  %6566 = vdwg.mxu0
  %6567 = vmatprep.subr.mxu0 %v5536
  %6568 = vmatpush1.msra.mxu0 %v5535
  %6569 = vmatprep.subr.mxu0 %v5552
  %6570 = vmatpush1.msra.mxu0 %v5551
  %6571 = vmatprep.subr.mxu0 %v5568
  %6572 = vmatpush1.msra.mxu0 %v5567
  %6573 = vmatprep.subr.mxu0 %v5584
  %6574 = vmatpush1.msra.mxu0 %v5583
  %6575 = vmatprep.subr.mxu0 %v5600
  %6576 = vmatpush1.msra.mxu0 %v5599
  %6577 = vmatprep.subr.mxu0 %v5616
  %6578 = vmatpush1.msra.mxu0 %v5615
  %6579 = vmatprep.subr.mxu0 %v5632
  %6580 = vmatpush1.msra.mxu0 %v5631
  %6581 = vmatprep.subr.mxu0 %v5648
  %6582 = vmatpush1.msra.mxu0 %v5647
  %6583 = vmatprep.subr.mxu0 0.0
  %6584 = vmatpush1.msra.mxu0 0.0
  %6585 = vmatprep.subr.mxu0 0.0
  %6586 = vmatpush1.msra.mxu0 0.0
  %6587 = vmatprep.subr.mxu0 0.0
  %6588 = vmatpush1.msra.mxu0 0.0
  %6589 = vmatprep.subr.mxu0 0.0
  %6590 = vmatpush1.msra.mxu0 0.0
  %6591 = vmatprep.subr.mxu0 0.0
  %6592 = vmatpush1.msra.mxu0 0.0
  %6593 = vmatprep.subr.mxu0 0.0
  %6594 = vmatpush1.msra.mxu0 0.0
  %6595 = vmatprep.subr.mxu0 0.0
  %6596 = vmatpush1.msra.mxu0 0.0
  %6597 = vmatprep.subr.mxu0 0.0
  %6598 = vmatpush1.msra.mxu0 0.0
  %6599 = vmatprep.subr.mxu0 0.0
  %6600 = vmatpush1.msra.mxu0 0.0
  %6601 = vmatprep.subr.mxu0 0.0
  %6602 = vmatpush1.msra.mxu0 0.0
  %6603 = vmatprep.subr.mxu0 0.0
  %6604 = vmatpush1.msra.mxu0 0.0
  %6605 = vmatprep.subr.mxu0 0.0
  %6606 = vmatpush1.msra.mxu0 0.0
  %6607 = vmatprep.subr.mxu0 0.0
  %6608 = vmatpush1.msra.mxu0 0.0
  %6609 = vmatprep.subr.mxu0 0.0
  %6610 = vmatpush1.msra.mxu0 0.0
  %6611 = vmatprep.subr.mxu0 0.0
  %6612 = vmatpush1.msra.mxu0 0.0
  %6613 = vmatprep.subr.mxu0 0.0
  %6614 = vmatpush1.msra.mxu0 0.0
  %6615 = vmatprep.subr.mxu0 0.0
  %6616 = vmatpush1.msra.mxu0 0.0
  %6617 = vmatprep.subr.mxu0 0.0
  %6618 = vmatpush1.msra.mxu0 0.0
  %6619 = vmatprep.subr.mxu0 0.0
  %6620 = vmatpush1.msra.mxu0 0.0
  %6621 = vmatprep.subr.mxu0 0.0
  %6622 = vmatpush1.msra.mxu0 0.0
  %6623 = vmatprep.subr.mxu0 0.0
  %6624 = vmatpush1.msra.mxu0 0.0
  %6625 = vmatprep.subr.mxu0 0.0
  %6626 = vmatpush1.msra.mxu0 0.0
  %6627 = vmatprep.subr.mxu0 0.0
  %6628 = vmatpush1.msra.mxu0 0.0
  %6629 = vmatprep.subr.mxu0 0.0
  %6630 = vmatpush1.msra.mxu0 0.0
  %6631 = vmatprep.mubr.f32.mxu0 0.0
  %6632 = vmatmul.mubr.f32.gmra.mrb[0].mxu0 %v6254
  %v6633 = vpop.f32.mrb[0].mxu0
  %v6634 = vadd.f32 %v6208, %v6633
  %v6635 = vpop.f32.mrb[0].mxu0
  %v6636 = vadd.f32 %v6212, %v6635
  %6637 = vmatprep.mubr.f32.mxu0 0.0
  %6638 = vmatmul.mubr.f32.gmra.mrb[0].mxu0 %v6257
  %v6639 = vpop.f32.mrb[0].mxu0
  %v6640 = vadd.f32 %v6208, %v6639
  %v6641 = vpop.f32.mrb[0].mxu0
  %v6642 = vadd.f32 %v6212, %v6641
  %6643 = vdwg.mxu0
  %6644 = vmatprep.subr.mxu0 %v5538
  %6645 = vmatpush1.msra.mxu0 %v5537
  %6646 = vmatprep.subr.mxu0 %v5554
  %6647 = vmatpush1.msra.mxu0 %v5553
  %6648 = vmatprep.subr.mxu0 %v5570
  %6649 = vmatpush1.msra.mxu0 %v5569
  %6650 = vmatprep.subr.mxu0 %v5586
  %6651 = vmatpush1.msra.mxu0 %v5585
  %6652 = vmatprep.subr.mxu0 %v5602
  %6653 = vmatpush1.msra.mxu0 %v5601
  %6654 = vmatprep.subr.mxu0 %v5618
  %6655 = vmatpush1.msra.mxu0 %v5617
  %6656 = vmatprep.subr.mxu0 %v5634
  %6657 = vmatpush1.msra.mxu0 %v5633
  %6658 = vmatprep.subr.mxu0 %v5650
  %6659 = vmatpush1.msra.mxu0 %v5649
  %6660 = vmatprep.subr.mxu0 0.0
  %6661 = vmatpush1.msra.mxu0 0.0
  %6662 = vmatprep.subr.mxu0 0.0
  %6663 = vmatpush1.msra.mxu0 0.0
  %6664 = vmatprep.subr.mxu0 0.0
  %6665 = vmatpush1.msra.mxu0 0.0
  %6666 = vmatprep.subr.mxu0 0.0
  %6667 = vmatpush1.msra.mxu0 0.0
  %6668 = vmatprep.subr.mxu0 0.0
  %6669 = vmatpush1.msra.mxu0 0.0
  %6670 = vmatprep.subr.mxu0 0.0
  %6671 = vmatpush1.msra.mxu0 0.0
  %6672 = vmatprep.subr.mxu0 0.0
  %6673 = vmatpush1.msra.mxu0 0.0
  %6674 = vmatprep.subr.mxu0 0.0
  %6675 = vmatpush1.msra.mxu0 0.0
  %6676 = vmatprep.subr.mxu0 0.0
  %6677 = vmatpush1.msra.mxu0 0.0
  %6678 = vmatprep.subr.mxu0 0.0
  %6679 = vmatpush1.msra.mxu0 0.0
  %6680 = vmatprep.subr.mxu0 0.0
  %6681 = vmatpush1.msra.mxu0 0.0
  %6682 = vmatprep.subr.mxu0 0.0
  %6683 = vmatpush1.msra.mxu0 0.0
  %6684 = vmatprep.subr.mxu0 0.0
  %6685 = vmatpush1.msra.mxu0 0.0
  %6686 = vmatprep.subr.mxu0 0.0
  %6687 = vmatpush1.msra.mxu0 0.0
  %6688 = vmatprep.subr.mxu0 0.0
  %6689 = vmatpush1.msra.mxu0 0.0
  %6690 = vmatprep.subr.mxu0 0.0
  %6691 = vmatpush1.msra.mxu0 0.0
  %6692 = vmatprep.subr.mxu0 0.0
  %6693 = vmatpush1.msra.mxu0 0.0
  %6694 = vmatprep.subr.mxu0 0.0
  %6695 = vmatpush1.msra.mxu0 0.0
  %6696 = vmatprep.subr.mxu0 0.0
  %6697 = vmatpush1.msra.mxu0 0.0
  %6698 = vmatprep.subr.mxu0 0.0
  %6699 = vmatpush1.msra.mxu0 0.0
  %6700 = vmatprep.subr.mxu0 0.0
  %6701 = vmatpush1.msra.mxu0 0.0
  %6702 = vmatprep.subr.mxu0 0.0
  %6703 = vmatpush1.msra.mxu0 0.0
  %6704 = vmatprep.subr.mxu0 0.0
  %6705 = vmatpush1.msra.mxu0 0.0
  %6706 = vmatprep.subr.mxu0 0.0
  %6707 = vmatpush1.msra.mxu0 0.0
  %6708 = vmatprep.mubr.f32.mxu0 0.0
  %6709 = vmatmul.mubr.f32.gmra.mrb[0].mxu0 %v6254
  %v6710 = vpop.f32.mrb[0].mxu0
  %v6711 = vadd.f32 %v6216, %v6710
  %v6712 = vpop.f32.mrb[0].mxu0
  %v6713 = vadd.f32 %v6220, %v6712
  %6714 = vmatprep.mubr.f32.mxu0 0.0
  %6715 = vmatmul.mubr.f32.gmra.mrb[0].mxu0 %v6257
  %v6716 = vpop.f32.mrb[0].mxu0
  %v6717 = vadd.f32 %v6216, %v6716
  %v6718 = vpop.f32.mrb[0].mxu0
  %v6719 = vadd.f32 %v6220, %v6718
  %6720 = vdwg.mxu0
  %6721 = vmatprep.subr.mxu0 %v5540
  %6722 = vmatpush1.msra.mxu0 %v5539
  %6723 = vmatprep.subr.mxu0 %v5556
  %6724 = vmatpush1.msra.mxu0 %v5555
  %6725 = vmatprep.subr.mxu0 %v5572
  %6726 = vmatpush1.msra.mxu0 %v5571
  %6727 = vmatprep.subr.mxu0 %v5588
  %6728 = vmatpush1.msra.mxu0 %v5587
  %6729 = vmatprep.subr.mxu0 %v5604
  %6730 = vmatpush1.msra.mxu0 %v5603
  %6731 = vmatprep.subr.mxu0 %v5620
  %6732 = vmatpush1.msra.mxu0 %v5619
  %6733 = vmatprep.subr.mxu0 %v5636
  %6734 = vmatpush1.msra.mxu0 %v5635
  %6735 = vmatprep.subr.mxu0 %v5652
  %6736 = vmatpush1.msra.mxu0 %v5651
  %6737 = vmatprep.subr.mxu0 0.0
  %6738 = vmatpush1.msra.mxu0 0.0
  %6739 = vmatprep.subr.mxu0 0.0
  %6740 = vmatpush1.msra.mxu0 0.0
  %6741 = vmatprep.subr.mxu0 0.0
  %6742 = vmatpush1.msra.mxu0 0.0
  %6743 = vmatprep.subr.mxu0 0.0
  %6744 = vmatpush1.msra.mxu0 0.0
  %6745 = vmatprep.subr.mxu0 0.0
  %6746 = vmatpush1.msra.mxu0 0.0
  %6747 = vmatprep.subr.mxu0 0.0
  %6748 = vmatpush1.msra.mxu0 0.0
  %6749 = vmatprep.subr.mxu0 0.0
  %6750 = vmatpush1.msra.mxu0 0.0
  %6751 = vmatprep.subr.mxu0 0.0
  %6752 = vmatpush1.msra.mxu0 0.0
  %6753 = vmatprep.subr.mxu0 0.0
  %6754 = vmatpush1.msra.mxu0 0.0
  %6755 = vmatprep.subr.mxu0 0.0
  %6756 = vmatpush1.msra.mxu0 0.0
  %6757 = vmatprep.subr.mxu0 0.0
  %6758 = vmatpush1.msra.mxu0 0.0
  %6759 = vmatprep.subr.mxu0 0.0
  %6760 = vmatpush1.msra.mxu0 0.0
  %6761 = vmatprep.subr.mxu0 0.0
  %6762 = vmatpush1.msra.mxu0 0.0
  %6763 = vmatprep.subr.mxu0 0.0
  %6764 = vmatpush1.msra.mxu0 0.0
  %6765 = vmatprep.subr.mxu0 0.0
  %6766 = vmatpush1.msra.mxu0 0.0
  %6767 = vmatprep.subr.mxu0 0.0
  %6768 = vmatpush1.msra.mxu0 0.0
  %6769 = vmatprep.subr.mxu0 0.0
  %6770 = vmatpush1.msra.mxu0 0.0
  %6771 = vmatprep.subr.mxu0 0.0
  %6772 = vmatpush1.msra.mxu0 0.0
  %6773 = vmatprep.subr.mxu0 0.0
  %6774 = vmatpush1.msra.mxu0 0.0
  %6775 = vmatprep.subr.mxu0 0.0
  %6776 = vmatpush1.msra.mxu0 0.0
  %6777 = vmatprep.subr.mxu0 0.0
  %6778 = vmatpush1.msra.mxu0 0.0
  %6779 = vmatprep.subr.mxu0 0.0
  %6780 = vmatpush1.msra.mxu0 0.0
  %6781 = vmatprep.subr.mxu0 0.0
  %6782 = vmatpush1.msra.mxu0 0.0
  %6783 = vmatprep.subr.mxu0 0.0
  %6784 = vmatpush1.msra.mxu0 0.0
  %6785 = vmatprep.mubr.f32.mxu0 0.0
  %6786 = vmatmul.mubr.f32.gmra.mrb[0].mxu0 %v6254
  %v6787 = vpop.f32.mrb[0].mxu0
  %v6788 = vadd.f32 %v6224, %v6787
  %v6789 = vpop.f32.mrb[0].mxu0
  %v6790 = vadd.f32 %v6228, %v6789
  %6791 = vmatprep.mubr.f32.mxu0 0.0
  %6792 = vmatmul.mubr.f32.gmra.mrb[0].mxu0 %v6257
  %v6793 = vpop.f32.mrb[0].mxu0
  %v6794 = vadd.f32 %v6224, %v6793
  %v6795 = vpop.f32.mrb[0].mxu0
  %v6796 = vadd.f32 %v6228, %v6795
  %6797 = vdwg.mxu0
  %6798 = vmatprep.subr.mxu0 %v5542
  %6799 = vmatpush1.msra.mxu0 %v5541
  %6800 = vmatprep.subr.mxu0 %v5558
  %6801 = vmatpush1.msra.mxu0 %v5557
  %6802 = vmatprep.subr.mxu0 %v5574
  %6803 = vmatpush1.msra.mxu0 %v5573
  %6804 = vmatprep.subr.mxu0 %v5590
  %6805 = vmatpush1.msra.mxu0 %v5589
  %6806 = vmatprep.subr.mxu0 %v5606
  %6807 = vmatpush1.msra.mxu0 %v5605
  %6808 = vmatprep.subr.mxu0 %v5622
  %6809 = vmatpush1.msra.mxu0 %v5621
  %6810 = vmatprep.subr.mxu0 %v5638
  %6811 = vmatpush1.msra.mxu0 %v5637
  %6812 = vmatprep.subr.mxu0 %v5654
  %6813 = vmatpush1.msra.mxu0 %v5653
  %6814 = vmatprep.subr.mxu0 0.0
  %6815 = vmatpush1.msra.mxu0 0.0
  %6816 = vmatprep.subr.mxu0 0.0
  %6817 = vmatpush1.msra.mxu0 0.0
  %6818 = vmatprep.subr.mxu0 0.0
  %6819 = vmatpush1.msra.mxu0 0.0
  %6820 = vmatprep.subr.mxu0 0.0
  %6821 = vmatpush1.msra.mxu0 0.0
  %6822 = vmatprep.subr.mxu0 0.0
  %6823 = vmatpush1.msra.mxu0 0.0
  %6824 = vmatprep.subr.mxu0 0.0
  %6825 = vmatpush1.msra.mxu0 0.0
  %6826 = vmatprep.subr.mxu0 0.0
  %6827 = vmatpush1.msra.mxu0 0.0
  %6828 = vmatprep.subr.mxu0 0.0
  %6829 = vmatpush1.msra.mxu0 0.0
  %6830 = vmatprep.subr.mxu0 0.0
  %6831 = vmatpush1.msra.mxu0 0.0
  %6832 = vmatprep.subr.mxu0 0.0
  %6833 = vmatpush1.msra.mxu0 0.0
  %6834 = vmatprep.subr.mxu0 0.0
  %6835 = vmatpush1.msra.mxu0 0.0
  %6836 = vmatprep.subr.mxu0 0.0
  %6837 = vmatpush1.msra.mxu0 0.0
  %6838 = vmatprep.subr.mxu0 0.0
  %6839 = vmatpush1.msra.mxu0 0.0
  %6840 = vmatprep.subr.mxu0 0.0
  %6841 = vmatpush1.msra.mxu0 0.0
  %6842 = vmatprep.subr.mxu0 0.0
  %6843 = vmatpush1.msra.mxu0 0.0
  %6844 = vmatprep.subr.mxu0 0.0
  %6845 = vmatpush1.msra.mxu0 0.0
  %6846 = vmatprep.subr.mxu0 0.0
  %6847 = vmatpush1.msra.mxu0 0.0
  %6848 = vmatprep.subr.mxu0 0.0
  %6849 = vmatpush1.msra.mxu0 0.0
  %6850 = vmatprep.subr.mxu0 0.0
  %6851 = vmatpush1.msra.mxu0 0.0
  %6852 = vmatprep.subr.mxu0 0.0
  %6853 = vmatpush1.msra.mxu0 0.0
  %6854 = vmatprep.subr.mxu0 0.0
  %6855 = vmatpush1.msra.mxu0 0.0
  %6856 = vmatprep.subr.mxu0 0.0
  %6857 = vmatpush1.msra.mxu0 0.0
  %6858 = vmatprep.subr.mxu0 0.0
  %6859 = vmatpush1.msra.mxu0 0.0
  %6860 = vmatprep.subr.mxu0 0.0
  %6861 = vmatpush1.msra.mxu0 0.0
  %6862 = vmatprep.mubr.f32.mxu0 0.0
  %6863 = vmatmul.mubr.f32.gmra.mrb[0].mxu0 %v6254
  %v6864 = vpop.f32.mrb[0].mxu0
  %v6865 = vadd.f32 %v6232, %v6864
  %v6866 = vpop.f32.mrb[0].mxu0
  %v6867 = vadd.f32 %v6236, %v6866
  %6868 = vmatprep.mubr.f32.mxu0 0.0
  %6869 = vmatmul.mubr.f32.gmra.mrb[0].mxu0 %v6257
  %v6870 = vpop.f32.mrb[0].mxu0
  %v6871 = vadd.f32 %v6232, %v6870
  %v6872 = vpop.f32.mrb[0].mxu0
  %v6873 = vadd.f32 %v6236, %v6872
  %6874 = vdwg.mxu0
  %v6875 = vmax.f32 %v6326, 0.0
  %v6876 = vmax.f32 %v6328, 0.0
  %v6877 = vmax.f32 %v6403, 0.0
  %v6878 = vmax.f32 %v6405, 0.0
  %v6879 = vmax.f32 %v6480, 0.0
  %v6880 = vmax.f32 %v6482, 0.0
  %v6881 = vmax.f32 %v6557, 0.0
  %v6882 = vmax.f32 %v6559, 0.0
  %v6883 = vmax.f32 %v6634, 0.0
  %v6884 = vmax.f32 %v6636, 0.0
  %v6885 = vmax.f32 %v6711, 0.0
  %v6886 = vmax.f32 %v6713, 0.0
  %v6887 = vmax.f32 %v6788, 0.0
  %v6888 = vmax.f32 %v6790, 0.0
  %v6889 = vmax.f32 %v6865, 0.0
  %v6890 = vmax.f32 %v6867, 0.0
  %v6891 = vmax.f32 %v6332, 0.0
  %v6892 = vmax.f32 %v6334, 0.0
  %v6893 = vmax.f32 %v6409, 0.0
  %v6894 = vmax.f32 %v6411, 0.0
  %v6895 = vmax.f32 %v6486, 0.0
  %v6896 = vmax.f32 %v6488, 0.0
  %v6897 = vmax.f32 %v6563, 0.0
  %v6898 = vmax.f32 %v6565, 0.0
  %v6899 = vmax.f32 %v6640, 0.0
  %v6900 = vmax.f32 %v6642, 0.0
  %v6901 = vmax.f32 %v6717, 0.0
  %v6902 = vmax.f32 %v6719, 0.0
  %v6903 = vmax.f32 %v6794, 0.0
  %v6904 = vmax.f32 %v6796, 0.0
  %v6905 = vmax.f32 %v6871, 0.0
  %v6906 = vmax.f32 %v6873, 0.0
  %s6907 = scalar_lea.vmem %s10, 1
  %v6908 = vld [vmem:[%s6907] sm:$0x1]
  %v6910 = vlaneseq
  %v6911 = vshrl.u32 %v6910, 7
  %v6912 = vsub.s32 0, %v6911
  %v6913 = vrot.slane %v6908, %v6912
  %6915 = vmatprep.subr.mxu0 0.0
  %6916 = vmatpush1.msra.mxu0 %v5912
  %6917 = vmatprep.subr.mxu0 0.0
  %6918 = vmatpush1.msra.mxu0 %v5913
  %6919 = vmatprep.subr.mxu0 0.0
  %6920 = vmatpush1.msra.mxu0 %v5914
  %6921 = vmatprep.subr.mxu0 0.0
  %6922 = vmatpush1.msra.mxu0 %v5915
  %6923 = vmatprep.subr.mxu0 0.0
  %6924 = vmatpush1.msra.mxu0 %v5916
  %6925 = vmatprep.subr.mxu0 0.0
  %6926 = vmatpush1.msra.mxu0 %v5917
  %6927 = vmatprep.subr.mxu0 0.0
  %6928 = vmatpush1.msra.mxu0 %v5918
  %6929 = vmatprep.subr.mxu0 0.0
  %6930 = vmatpush1.msra.mxu0 %v5919
  %6931 = vmatprep.subr.mxu0 0.0
  %6932 = vmatpush1.msra.mxu0 %v5920
  %6933 = vmatprep.subr.mxu0 0.0
  %6934 = vmatpush1.msra.mxu0 %v5921
  %6935 = vmatprep.subr.mxu0 0.0
  %6936 = vmatpush1.msra.mxu0 %v5922
  %6937 = vmatprep.subr.mxu0 0.0
  %6938 = vmatpush1.msra.mxu0 %v5923
  %6939 = vmatprep.subr.mxu0 0.0
  %6940 = vmatpush1.msra.mxu0 %v5924
  %6941 = vmatprep.subr.mxu0 0.0
  %6942 = vmatpush1.msra.mxu0 %v5925
  %6943 = vmatprep.subr.mxu0 0.0
  %6944 = vmatpush1.msra.mxu0 %v5926
  %6945 = vmatprep.subr.mxu0 0.0
  %6946 = vmatpush1.msra.mxu0 %v5927
  %6947 = vmatprep.subr.mxu0 0.0
  %6948 = vmatpush1.msra.mxu0 %v5928
  %6949 = vmatprep.subr.mxu0 0.0
  %6950 = vmatpush1.msra.mxu0 %v5929
  %6951 = vmatprep.subr.mxu0 0.0
  %6952 = vmatpush1.msra.mxu0 %v5930
  %6953 = vmatprep.subr.mxu0 0.0
  %6954 = vmatpush1.msra.mxu0 %v5931
  %6955 = vmatprep.subr.mxu0 0.0
  %6956 = vmatpush1.msra.mxu0 %v5932
  %6957 = vmatprep.subr.mxu0 0.0
  %6958 = vmatpush1.msra.mxu0 %v5933
  %6959 = vmatprep.subr.mxu0 0.0
  %6960 = vmatpush1.msra.mxu0 %v5934
  %6961 = vmatprep.subr.mxu0 0.0
  %6962 = vmatpush1.msra.mxu0 %v5935
  %6963 = vmatprep.subr.mxu0 0.0
  %6964 = vmatpush1.msra.mxu0 %v5936
  %6965 = vmatprep.subr.mxu0 0.0
  %6966 = vmatpush1.msra.mxu0 %v5937
  %6967 = vmatprep.subr.mxu0 0.0
  %6968 = vmatpush1.msra.mxu0 %v5938
  %6969 = vmatprep.subr.mxu0 0.0
  %6970 = vmatpush1.msra.mxu0 %v5939
  %6971 = vmatprep.subr.mxu0 0.0
  %6972 = vmatpush1.msra.mxu0 %v5940
  %6973 = vmatprep.subr.mxu0 0.0
  %6974 = vmatpush1.msra.mxu0 %v5941
  %6975 = vmatprep.subr.mxu0 0.0
  %6976 = vmatpush1.msra.mxu0 %v5942
  %6977 = vmatprep.subr.mxu0 0.0
  %6978 = vmatpush1.msra.mxu0 %v5943
  %6979 = vmatprep.mubr.f32.mxu0 %v6876
  %6980 = vmatmul.mubr.f32.gmra.mrb[0].mxu0 %v6875
  %v6981 = vpop.f32.mrb[0].mxu0
  %v6982 = vadd.f32 %v6913, %v6981
  %v6983 = vpop.f32.mrb[0].mxu0
  %6984 = vmatprep.mubr.f32.mxu0 %v6892
  %6985 = vmatmul.mubr.f32.gmra.mrb[0].mxu0 %v6891
  %v6986 = vpop.f32.mrb[0].mxu0
  %v6987 = vadd.f32 %v6913, %v6986
  %v6988 = vpop.f32.mrb[0].mxu0
  %6989 = vdwg.mxu0
  %6990 = vmatprep.subr.mxu0 0.0
  %6991 = vmatpush1.msra.mxu0 %v5944
  %6992 = vmatprep.subr.mxu0 0.0
  %6993 = vmatpush1.msra.mxu0 %v5945
  %6994 = vmatprep.subr.mxu0 0.0
  %6995 = vmatpush1.msra.mxu0 %v5946
  %6996 = vmatprep.subr.mxu0 0.0
  %6997 = vmatpush1.msra.mxu0 %v5947
  %6998 = vmatprep.subr.mxu0 0.0
  %6999 = vmatpush1.msra.mxu0 %v5948
  %7000 = vmatprep.subr.mxu0 0.0
  %7001 = vmatpush1.msra.mxu0 %v5949
  %7002 = vmatprep.subr.mxu0 0.0
  %7003 = vmatpush1.msra.mxu0 %v5950
  %7004 = vmatprep.subr.mxu0 0.0
  %7005 = vmatpush1.msra.mxu0 %v5951
  %7006 = vmatprep.subr.mxu0 0.0
  %7007 = vmatpush1.msra.mxu0 %v5952
  %7008 = vmatprep.subr.mxu0 0.0
  %7009 = vmatpush1.msra.mxu0 %v5953
  %7010 = vmatprep.subr.mxu0 0.0
  %7011 = vmatpush1.msra.mxu0 %v5954
  %7012 = vmatprep.subr.mxu0 0.0
  %7013 = vmatpush1.msra.mxu0 %v5955
  %7014 = vmatprep.subr.mxu0 0.0
  %7015 = vmatpush1.msra.mxu0 %v5956
  %7016 = vmatprep.subr.mxu0 0.0
  %7017 = vmatpush1.msra.mxu0 %v5957
  %7018 = vmatprep.subr.mxu0 0.0
  %7019 = vmatpush1.msra.mxu0 %v5958
  %7020 = vmatprep.subr.mxu0 0.0
  %7021 = vmatpush1.msra.mxu0 %v5959
  %7022 = vmatprep.subr.mxu0 0.0
  %7023 = vmatpush1.msra.mxu0 %v5960
  %7024 = vmatprep.subr.mxu0 0.0
  %7025 = vmatpush1.msra.mxu0 %v5961
  %7026 = vmatprep.subr.mxu0 0.0
  %7027 = vmatpush1.msra.mxu0 %v5962
  %7028 = vmatprep.subr.mxu0 0.0
  %7029 = vmatpush1.msra.mxu0 %v5963
  %7030 = vmatprep.subr.mxu0 0.0
  %7031 = vmatpush1.msra.mxu0 %v5964
  %7032 = vmatprep.subr.mxu0 0.0
  %7033 = vmatpush1.msra.mxu0 %v5965
  %7034 = vmatprep.subr.mxu0 0.0
  %7035 = vmatpush1.msra.mxu0 %v5966
  %7036 = vmatprep.subr.mxu0 0.0
  %7037 = vmatpush1.msra.mxu0 %v5967
  %7038 = vmatprep.subr.mxu0 0.0
  %7039 = vmatpush1.msra.mxu0 %v5968
  %7040 = vmatprep.subr.mxu0 0.0
  %7041 = vmatpush1.msra.mxu0 %v5969
  %7042 = vmatprep.subr.mxu0 0.0
  %7043 = vmatpush1.msra.mxu0 %v5970
  %7044 = vmatprep.subr.mxu0 0.0
  %7045 = vmatpush1.msra.mxu0 %v5971
  %7046 = vmatprep.subr.mxu0 0.0
  %7047 = vmatpush1.msra.mxu0 %v5972
  %7048 = vmatprep.subr.mxu0 0.0
  %7049 = vmatpush1.msra.mxu0 %v5973
  %7050 = vmatprep.subr.mxu0 0.0
  %7051 = vmatpush1.msra.mxu0 %v5974
  %7052 = vmatprep.subr.mxu0 0.0
  %7053 = vmatpush1.msra.mxu0 %v5975
  %7054 = vmatprep.mubr.f32.mxu0 %v6878
  %7055 = vmatmul.mubr.f32.gmra.mrb[0].mxu0 %v6877
  %v7056 = vpop.f32.mrb[0].mxu0
  %v7057 = vadd.f32 %v6982, %v7056
  %v7058 = vpop.f32.mrb[0].mxu0
  %7059 = vmatprep.mubr.f32.mxu0 %v6894
  %7060 = vmatmul.mubr.f32.gmra.mrb[0].mxu0 %v6893
  %v7061 = vpop.f32.mrb[0].mxu0
  %v7062 = vadd.f32 %v6987, %v7061
  %v7063 = vpop.f32.mrb[0].mxu0
  %7064 = vdwg.mxu0
  %7065 = vmatprep.subr.mxu0 0.0
  %7066 = vmatpush1.msra.mxu0 %v5976
  %7067 = vmatprep.subr.mxu0 0.0
  %7068 = vmatpush1.msra.mxu0 %v5977
  %7069 = vmatprep.subr.mxu0 0.0
  %7070 = vmatpush1.msra.mxu0 %v5978
  %7071 = vmatprep.subr.mxu0 0.0
  %7072 = vmatpush1.msra.mxu0 %v5979
  %7073 = vmatprep.subr.mxu0 0.0
  %7074 = vmatpush1.msra.mxu0 %v5980
  %7075 = vmatprep.subr.mxu0 0.0
  %7076 = vmatpush1.msra.mxu0 %v5981
  %7077 = vmatprep.subr.mxu0 0.0
  %7078 = vmatpush1.msra.mxu0 %v5982
  %7079 = vmatprep.subr.mxu0 0.0
  %7080 = vmatpush1.msra.mxu0 %v5983
  %7081 = vmatprep.subr.mxu0 0.0
  %7082 = vmatpush1.msra.mxu0 %v5984
  %7083 = vmatprep.subr.mxu0 0.0
  %7084 = vmatpush1.msra.mxu0 %v5985
  %7085 = vmatprep.subr.mxu0 0.0
  %7086 = vmatpush1.msra.mxu0 %v5986
  %7087 = vmatprep.subr.mxu0 0.0
  %7088 = vmatpush1.msra.mxu0 %v5987
  %7089 = vmatprep.subr.mxu0 0.0
  %7090 = vmatpush1.msra.mxu0 %v5988
  %7091 = vmatprep.subr.mxu0 0.0
  %7092 = vmatpush1.msra.mxu0 %v5989
  %7093 = vmatprep.subr.mxu0 0.0
  %7094 = vmatpush1.msra.mxu0 %v5990
  %7095 = vmatprep.subr.mxu0 0.0
  %7096 = vmatpush1.msra.mxu0 %v5991
  %7097 = vmatprep.subr.mxu0 0.0
  %7098 = vmatpush1.msra.mxu0 %v5992
  %7099 = vmatprep.subr.mxu0 0.0
  %7100 = vmatpush1.msra.mxu0 %v5993
  %7101 = vmatprep.subr.mxu0 0.0
  %7102 = vmatpush1.msra.mxu0 %v5994
  %7103 = vmatprep.subr.mxu0 0.0
  %7104 = vmatpush1.msra.mxu0 %v5995
  %7105 = vmatprep.subr.mxu0 0.0
  %7106 = vmatpush1.msra.mxu0 %v5996
  %7107 = vmatprep.subr.mxu0 0.0
  %7108 = vmatpush1.msra.mxu0 %v5997
  %7109 = vmatprep.subr.mxu0 0.0
  %7110 = vmatpush1.msra.mxu0 %v5998
  %7111 = vmatprep.subr.mxu0 0.0
  %7112 = vmatpush1.msra.mxu0 %v5999
  %7113 = vmatprep.subr.mxu0 0.0
  %7114 = vmatpush1.msra.mxu0 %v6000
  %7115 = vmatprep.subr.mxu0 0.0
  %7116 = vmatpush1.msra.mxu0 %v6001
  %7117 = vmatprep.subr.mxu0 0.0
  %7118 = vmatpush1.msra.mxu0 %v6002
  %7119 = vmatprep.subr.mxu0 0.0
  %7120 = vmatpush1.msra.mxu0 %v6003
  %7121 = vmatprep.subr.mxu0 0.0
  %7122 = vmatpush1.msra.mxu0 %v6004
  %7123 = vmatprep.subr.mxu0 0.0
  %7124 = vmatpush1.msra.mxu0 %v6005
  %7125 = vmatprep.subr.mxu0 0.0
  %7126 = vmatpush1.msra.mxu0 %v6006
  %7127 = vmatprep.subr.mxu0 0.0
  %7128 = vmatpush1.msra.mxu0 %v6007
  %7129 = vmatprep.mubr.f32.mxu0 %v6880
  %7130 = vmatmul.mubr.f32.gmra.mrb[0].mxu0 %v6879
  %v7131 = vpop.f32.mrb[0].mxu0
  %v7132 = vadd.f32 %v7057, %v7131
  %v7133 = vpop.f32.mrb[0].mxu0
  %7134 = vmatprep.mubr.f32.mxu0 %v6896
  %7135 = vmatmul.mubr.f32.gmra.mrb[0].mxu0 %v6895
  %v7136 = vpop.f32.mrb[0].mxu0
  %v7137 = vadd.f32 %v7062, %v7136
  %v7138 = vpop.f32.mrb[0].mxu0
  %7139 = vdwg.mxu0
  %7140 = vmatprep.subr.mxu0 0.0
  %7141 = vmatpush1.msra.mxu0 %v6008
  %7142 = vmatprep.subr.mxu0 0.0
  %7143 = vmatpush1.msra.mxu0 %v6009
  %7144 = vmatprep.subr.mxu0 0.0
  %7145 = vmatpush1.msra.mxu0 %v6010
  %7146 = vmatprep.subr.mxu0 0.0
  %7147 = vmatpush1.msra.mxu0 %v6011
  %7148 = vmatprep.subr.mxu0 0.0
  %7149 = vmatpush1.msra.mxu0 %v6012
  %7150 = vmatprep.subr.mxu0 0.0
  %7151 = vmatpush1.msra.mxu0 %v6013
  %7152 = vmatprep.subr.mxu0 0.0
  %7153 = vmatpush1.msra.mxu0 %v6014
  %7154 = vmatprep.subr.mxu0 0.0
  %7155 = vmatpush1.msra.mxu0 %v6015
  %7156 = vmatprep.subr.mxu0 0.0
  %7157 = vmatpush1.msra.mxu0 %v6016
  %7158 = vmatprep.subr.mxu0 0.0
  %7159 = vmatpush1.msra.mxu0 %v6017
  %7160 = vmatprep.subr.mxu0 0.0
  %7161 = vmatpush1.msra.mxu0 %v6018
  %7162 = vmatprep.subr.mxu0 0.0
  %7163 = vmatpush1.msra.mxu0 %v6019
  %7164 = vmatprep.subr.mxu0 0.0
  %7165 = vmatpush1.msra.mxu0 %v6020
  %7166 = vmatprep.subr.mxu0 0.0
  %7167 = vmatpush1.msra.mxu0 %v6021
  %7168 = vmatprep.subr.mxu0 0.0
  %7169 = vmatpush1.msra.mxu0 %v6022
  %7170 = vmatprep.subr.mxu0 0.0
  %7171 = vmatpush1.msra.mxu0 %v6023
  %7172 = vmatprep.subr.mxu0 0.0
  %7173 = vmatpush1.msra.mxu0 %v6024
  %7174 = vmatprep.subr.mxu0 0.0
  %7175 = vmatpush1.msra.mxu0 %v6025
  %7176 = vmatprep.subr.mxu0 0.0
  %7177 = vmatpush1.msra.mxu0 %v6026
  %7178 = vmatprep.subr.mxu0 0.0
  %7179 = vmatpush1.msra.mxu0 %v6027
  %7180 = vmatprep.subr.mxu0 0.0
  %7181 = vmatpush1.msra.mxu0 %v6028
  %7182 = vmatprep.subr.mxu0 0.0
  %7183 = vmatpush1.msra.mxu0 %v6029
  %7184 = vmatprep.subr.mxu0 0.0
  %7185 = vmatpush1.msra.mxu0 %v6030
  %7186 = vmatprep.subr.mxu0 0.0
  %7187 = vmatpush1.msra.mxu0 %v6031
  %7188 = vmatprep.subr.mxu0 0.0
  %7189 = vmatpush1.msra.mxu0 %v6032
  %7190 = vmatprep.subr.mxu0 0.0
  %7191 = vmatpush1.msra.mxu0 %v6033
  %7192 = vmatprep.subr.mxu0 0.0
  %7193 = vmatpush1.msra.mxu0 %v6034
  %7194 = vmatprep.subr.mxu0 0.0
  %7195 = vmatpush1.msra.mxu0 %v6035
  %7196 = vmatprep.subr.mxu0 0.0
  %7197 = vmatpush1.msra.mxu0 %v6036
  %7198 = vmatprep.subr.mxu0 0.0
  %7199 = vmatpush1.msra.mxu0 %v6037
  %7200 = vmatprep.subr.mxu0 0.0
  %7201 = vmatpush1.msra.mxu0 %v6038
  %7202 = vmatprep.subr.mxu0 0.0
  %7203 = vmatpush1.msra.mxu0 %v6039
  %7204 = vmatprep.mubr.f32.mxu0 %v6882
  %7205 = vmatmul.mubr.f32.gmra.mrb[0].mxu0 %v6881
  %v7206 = vpop.f32.mrb[0].mxu0
  %v7207 = vadd.f32 %v7132, %v7206
  %v7208 = vpop.f32.mrb[0].mxu0
  %7209 = vmatprep.mubr.f32.mxu0 %v6898
  %7210 = vmatmul.mubr.f32.gmra.mrb[0].mxu0 %v6897
  %v7211 = vpop.f32.mrb[0].mxu0
  %v7212 = vadd.f32 %v7137, %v7211
  %v7213 = vpop.f32.mrb[0].mxu0
  %7214 = vdwg.mxu0
  %7215 = vmatprep.subr.mxu0 0.0
  %7216 = vmatpush1.msra.mxu0 %v6040
  %7217 = vmatprep.subr.mxu0 0.0
  %7218 = vmatpush1.msra.mxu0 %v6041
  %7219 = vmatprep.subr.mxu0 0.0
  %7220 = vmatpush1.msra.mxu0 %v6042
  %7221 = vmatprep.subr.mxu0 0.0
  %7222 = vmatpush1.msra.mxu0 %v6043
  %7223 = vmatprep.subr.mxu0 0.0
  %7224 = vmatpush1.msra.mxu0 %v6044
  %7225 = vmatprep.subr.mxu0 0.0
  %7226 = vmatpush1.msra.mxu0 %v6045
  %7227 = vmatprep.subr.mxu0 0.0
  %7228 = vmatpush1.msra.mxu0 %v6046
  %7229 = vmatprep.subr.mxu0 0.0
  %7230 = vmatpush1.msra.mxu0 %v6047
  %7231 = vmatprep.subr.mxu0 0.0
  %7232 = vmatpush1.msra.mxu0 %v6048
  %7233 = vmatprep.subr.mxu0 0.0
  %7234 = vmatpush1.msra.mxu0 %v6049
  %7235 = vmatprep.subr.mxu0 0.0
  %7236 = vmatpush1.msra.mxu0 %v6050
  %7237 = vmatprep.subr.mxu0 0.0
  %7238 = vmatpush1.msra.mxu0 %v6051
  %7239 = vmatprep.subr.mxu0 0.0
  %7240 = vmatpush1.msra.mxu0 %v6052
  %7241 = vmatprep.subr.mxu0 0.0
  %7242 = vmatpush1.msra.mxu0 %v6053
  %7243 = vmatprep.subr.mxu0 0.0
  %7244 = vmatpush1.msra.mxu0 %v6054
  %7245 = vmatprep.subr.mxu0 0.0
  %7246 = vmatpush1.msra.mxu0 %v6055
  %7247 = vmatprep.subr.mxu0 0.0
  %7248 = vmatpush1.msra.mxu0 %v6056
  %7249 = vmatprep.subr.mxu0 0.0
  %7250 = vmatpush1.msra.mxu0 %v6057
  %7251 = vmatprep.subr.mxu0 0.0
  %7252 = vmatpush1.msra.mxu0 %v6058
  %7253 = vmatprep.subr.mxu0 0.0
  %7254 = vmatpush1.msra.mxu0 %v6059
  %7255 = vmatprep.subr.mxu0 0.0
  %7256 = vmatpush1.msra.mxu0 %v6060
  %7257 = vmatprep.subr.mxu0 0.0
  %7258 = vmatpush1.msra.mxu0 %v6061
  %7259 = vmatprep.subr.mxu0 0.0
  %7260 = vmatpush1.msra.mxu0 %v6062
  %7261 = vmatprep.subr.mxu0 0.0
  %7262 = vmatpush1.msra.mxu0 %v6063
  %7263 = vmatprep.subr.mxu0 0.0
  %7264 = vmatpush1.msra.mxu0 %v6064
  %7265 = vmatprep.subr.mxu0 0.0
  %7266 = vmatpush1.msra.mxu0 %v6065
  %7267 = vmatprep.subr.mxu0 0.0
  %7268 = vmatpush1.msra.mxu0 %v6066
  %7269 = vmatprep.subr.mxu0 0.0
  %7270 = vmatpush1.msra.mxu0 %v6067
  %7271 = vmatprep.subr.mxu0 0.0
  %7272 = vmatpush1.msra.mxu0 %v6068
  %7273 = vmatprep.subr.mxu0 0.0
  %7274 = vmatpush1.msra.mxu0 %v6069
  %7275 = vmatprep.subr.mxu0 0.0
  %7276 = vmatpush1.msra.mxu0 %v6070
  %7277 = vmatprep.subr.mxu0 0.0
  %7278 = vmatpush1.msra.mxu0 %v6071
  %7279 = vmatprep.mubr.f32.mxu0 %v6884
  %7280 = vmatmul.mubr.f32.gmra.mrb[0].mxu0 %v6883
  %v7281 = vpop.f32.mrb[0].mxu0
  %v7282 = vadd.f32 %v7207, %v7281
  %v7283 = vpop.f32.mrb[0].mxu0
  %7284 = vmatprep.mubr.f32.mxu0 %v6900
  %7285 = vmatmul.mubr.f32.gmra.mrb[0].mxu0 %v6899
  %v7286 = vpop.f32.mrb[0].mxu0
  %v7287 = vadd.f32 %v7212, %v7286
  %v7288 = vpop.f32.mrb[0].mxu0
  %7289 = vdwg.mxu0
  %7290 = vmatprep.subr.mxu0 0.0
  %7291 = vmatpush1.msra.mxu0 %v6072
  %7292 = vmatprep.subr.mxu0 0.0
  %7293 = vmatpush1.msra.mxu0 %v6073
  %7294 = vmatprep.subr.mxu0 0.0
  %7295 = vmatpush1.msra.mxu0 %v6074
  %7296 = vmatprep.subr.mxu0 0.0
  %7297 = vmatpush1.msra.mxu0 %v6075
  %7298 = vmatprep.subr.mxu0 0.0
  %7299 = vmatpush1.msra.mxu0 %v6076
  %7300 = vmatprep.subr.mxu0 0.0
  %7301 = vmatpush1.msra.mxu0 %v6077
  %7302 = vmatprep.subr.mxu0 0.0
  %7303 = vmatpush1.msra.mxu0 %v6078
  %7304 = vmatprep.subr.mxu0 0.0
  %7305 = vmatpush1.msra.mxu0 %v6079
  %7306 = vmatprep.subr.mxu0 0.0
  %7307 = vmatpush1.msra.mxu0 %v6080
  %7308 = vmatprep.subr.mxu0 0.0
  %7309 = vmatpush1.msra.mxu0 %v6081
  %7310 = vmatprep.subr.mxu0 0.0
  %7311 = vmatpush1.msra.mxu0 %v6082
  %7312 = vmatprep.subr.mxu0 0.0
  %7313 = vmatpush1.msra.mxu0 %v6083
  %7314 = vmatprep.subr.mxu0 0.0
  %7315 = vmatpush1.msra.mxu0 %v6084
  %7316 = vmatprep.subr.mxu0 0.0
  %7317 = vmatpush1.msra.mxu0 %v6085
  %7318 = vmatprep.subr.mxu0 0.0
  %7319 = vmatpush1.msra.mxu0 %v6086
  %7320 = vmatprep.subr.mxu0 0.0
  %7321 = vmatpush1.msra.mxu0 %v6087
  %7322 = vmatprep.subr.mxu0 0.0
  %7323 = vmatpush1.msra.mxu0 %v6088
  %7324 = vmatprep.subr.mxu0 0.0
  %7325 = vmatpush1.msra.mxu0 %v6089
  %7326 = vmatprep.subr.mxu0 0.0
  %7327 = vmatpush1.msra.mxu0 %v6090
  %7328 = vmatprep.subr.mxu0 0.0
  %7329 = vmatpush1.msra.mxu0 %v6091
  %7330 = vmatprep.subr.mxu0 0.0
  %7331 = vmatpush1.msra.mxu0 %v6092
  %7332 = vmatprep.subr.mxu0 0.0
  %7333 = vmatpush1.msra.mxu0 %v6093
  %7334 = vmatprep.subr.mxu0 0.0
  %7335 = vmatpush1.msra.mxu0 %v6094
  %7336 = vmatprep.subr.mxu0 0.0
  %7337 = vmatpush1.msra.mxu0 %v6095
  %7338 = vmatprep.subr.mxu0 0.0
  %7339 = vmatpush1.msra.mxu0 %v6096
  %7340 = vmatprep.subr.mxu0 0.0
  %7341 = vmatpush1.msra.mxu0 %v6097
  %7342 = vmatprep.subr.mxu0 0.0
  %7343 = vmatpush1.msra.mxu0 %v6098
  %7344 = vmatprep.subr.mxu0 0.0
  %7345 = vmatpush1.msra.mxu0 %v6099
  %7346 = vmatprep.subr.mxu0 0.0
  %7347 = vmatpush1.msra.mxu0 %v6100
  %7348 = vmatprep.subr.mxu0 0.0
  %7349 = vmatpush1.msra.mxu0 %v6101
  %7350 = vmatprep.subr.mxu0 0.0
  %7351 = vmatpush1.msra.mxu0 %v6102
  %7352 = vmatprep.subr.mxu0 0.0
  %7353 = vmatpush1.msra.mxu0 %v6103
  %7354 = vmatprep.mubr.f32.mxu0 %v6886
  %7355 = vmatmul.mubr.f32.gmra.mrb[0].mxu0 %v6885
  %v7356 = vpop.f32.mrb[0].mxu0
  %v7357 = vadd.f32 %v7282, %v7356
  %v7358 = vpop.f32.mrb[0].mxu0
  %7359 = vmatprep.mubr.f32.mxu0 %v6902
  %7360 = vmatmul.mubr.f32.gmra.mrb[0].mxu0 %v6901
  %v7361 = vpop.f32.mrb[0].mxu0
  %v7362 = vadd.f32 %v7287, %v7361
  %v7363 = vpop.f32.mrb[0].mxu0
  %7364 = vdwg.mxu0
  %7365 = vmatprep.subr.mxu0 0.0
  %7366 = vmatpush1.msra.mxu0 %v6104
  %7367 = vmatprep.subr.mxu0 0.0
  %7368 = vmatpush1.msra.mxu0 %v6105
  %7369 = vmatprep.subr.mxu0 0.0
  %7370 = vmatpush1.msra.mxu0 %v6106
  %7371 = vmatprep.subr.mxu0 0.0
  %7372 = vmatpush1.msra.mxu0 %v6107
  %7373 = vmatprep.subr.mxu0 0.0
  %7374 = vmatpush1.msra.mxu0 %v6108
  %7375 = vmatprep.subr.mxu0 0.0
  %7376 = vmatpush1.msra.mxu0 %v6109
  %7377 = vmatprep.subr.mxu0 0.0
  %7378 = vmatpush1.msra.mxu0 %v6110
  %7379 = vmatprep.subr.mxu0 0.0
  %7380 = vmatpush1.msra.mxu0 %v6111
  %7381 = vmatprep.subr.mxu0 0.0
  %7382 = vmatpush1.msra.mxu0 %v6112
  %7383 = vmatprep.subr.mxu0 0.0
  %7384 = vmatpush1.msra.mxu0 %v6113
  %7385 = vmatprep.subr.mxu0 0.0
  %7386 = vmatpush1.msra.mxu0 %v6114
  %7387 = vmatprep.subr.mxu0 0.0
  %7388 = vmatpush1.msra.mxu0 %v6115
  %7389 = vmatprep.subr.mxu0 0.0
  %7390 = vmatpush1.msra.mxu0 %v6116
  %7391 = vmatprep.subr.mxu0 0.0
  %7392 = vmatpush1.msra.mxu0 %v6117
  %7393 = vmatprep.subr.mxu0 0.0
  %7394 = vmatpush1.msra.mxu0 %v6118
  %7395 = vmatprep.subr.mxu0 0.0
  %7396 = vmatpush1.msra.mxu0 %v6119
  %7397 = vmatprep.subr.mxu0 0.0
  %7398 = vmatpush1.msra.mxu0 %v6120
  %7399 = vmatprep.subr.mxu0 0.0
  %7400 = vmatpush1.msra.mxu0 %v6121
  %7401 = vmatprep.subr.mxu0 0.0
  %7402 = vmatpush1.msra.mxu0 %v6122
  %7403 = vmatprep.subr.mxu0 0.0
  %7404 = vmatpush1.msra.mxu0 %v6123
  %7405 = vmatprep.subr.mxu0 0.0
  %7406 = vmatpush1.msra.mxu0 %v6124
  %7407 = vmatprep.subr.mxu0 0.0
  %7408 = vmatpush1.msra.mxu0 %v6125
  %7409 = vmatprep.subr.mxu0 0.0
  %7410 = vmatpush1.msra.mxu0 %v6126
  %7411 = vmatprep.subr.mxu0 0.0
  %7412 = vmatpush1.msra.mxu0 %v6127
  %7413 = vmatprep.subr.mxu0 0.0
  %7414 = vmatpush1.msra.mxu0 %v6128
  %7415 = vmatprep.subr.mxu0 0.0
  %7416 = vmatpush1.msra.mxu0 %v6129
  %7417 = vmatprep.subr.mxu0 0.0
  %7418 = vmatpush1.msra.mxu0 %v6130
  %7419 = vmatprep.subr.mxu0 0.0
  %7420 = vmatpush1.msra.mxu0 %v6131
  %7421 = vmatprep.subr.mxu0 0.0
  %7422 = vmatpush1.msra.mxu0 %v6132
  %7423 = vmatprep.subr.mxu0 0.0
  %7424 = vmatpush1.msra.mxu0 %v6133
  %7425 = vmatprep.subr.mxu0 0.0
  %7426 = vmatpush1.msra.mxu0 %v6134
  %7427 = vmatprep.subr.mxu0 0.0
  %7428 = vmatpush1.msra.mxu0 %v6135
  %7429 = vmatprep.mubr.f32.mxu0 %v6888
  %7430 = vmatmul.mubr.f32.gmra.mrb[0].mxu0 %v6887
  %v7431 = vpop.f32.mrb[0].mxu0
  %v7432 = vadd.f32 %v7357, %v7431
  %v7433 = vpop.f32.mrb[0].mxu0
  %7434 = vmatprep.mubr.f32.mxu0 %v6904
  %7435 = vmatmul.mubr.f32.gmra.mrb[0].mxu0 %v6903
  %v7436 = vpop.f32.mrb[0].mxu0
  %v7437 = vadd.f32 %v7362, %v7436
  %v7438 = vpop.f32.mrb[0].mxu0
  %7439 = vdwg.mxu0
  %7440 = vmatprep.subr.mxu0 0.0
  %7441 = vmatpush1.msra.mxu0 %v6136
  %7442 = vmatprep.subr.mxu0 0.0
  %7443 = vmatpush1.msra.mxu0 %v6137
  %7444 = vmatprep.subr.mxu0 0.0
  %7445 = vmatpush1.msra.mxu0 %v6138
  %7446 = vmatprep.subr.mxu0 0.0
  %7447 = vmatpush1.msra.mxu0 %v6139
  %7448 = vmatprep.subr.mxu0 0.0
  %7449 = vmatpush1.msra.mxu0 %v6140
  %7450 = vmatprep.subr.mxu0 0.0
  %7451 = vmatpush1.msra.mxu0 %v6141
  %7452 = vmatprep.subr.mxu0 0.0
  %7453 = vmatpush1.msra.mxu0 %v6142
  %7454 = vmatprep.subr.mxu0 0.0
  %7455 = vmatpush1.msra.mxu0 %v6143
  %7456 = vmatprep.subr.mxu0 0.0
  %7457 = vmatpush1.msra.mxu0 %v6144
  %7458 = vmatprep.subr.mxu0 0.0
  %7459 = vmatpush1.msra.mxu0 %v6145
  %7460 = vmatprep.subr.mxu0 0.0
  %7461 = vmatpush1.msra.mxu0 %v6146
  %7462 = vmatprep.subr.mxu0 0.0
  %7463 = vmatpush1.msra.mxu0 %v6147
  %7464 = vmatprep.subr.mxu0 0.0
  %7465 = vmatpush1.msra.mxu0 %v6148
  %7466 = vmatprep.subr.mxu0 0.0
  %7467 = vmatpush1.msra.mxu0 %v6149
  %7468 = vmatprep.subr.mxu0 0.0
  %7469 = vmatpush1.msra.mxu0 %v6150
  %7470 = vmatprep.subr.mxu0 0.0
  %7471 = vmatpush1.msra.mxu0 %v6151
  %7472 = vmatprep.subr.mxu0 0.0
  %7473 = vmatpush1.msra.mxu0 %v6152
  %7474 = vmatprep.subr.mxu0 0.0
  %7475 = vmatpush1.msra.mxu0 %v6153
  %7476 = vmatprep.subr.mxu0 0.0
  %7477 = vmatpush1.msra.mxu0 %v6154
  %7478 = vmatprep.subr.mxu0 0.0
  %7479 = vmatpush1.msra.mxu0 %v6155
  %7480 = vmatprep.subr.mxu0 0.0
  %7481 = vmatpush1.msra.mxu0 %v6156
  %7482 = vmatprep.subr.mxu0 0.0
  %7483 = vmatpush1.msra.mxu0 %v6157
  %7484 = vmatprep.subr.mxu0 0.0
  %7485 = vmatpush1.msra.mxu0 %v6158
  %7486 = vmatprep.subr.mxu0 0.0
  %7487 = vmatpush1.msra.mxu0 %v6159
  %7488 = vmatprep.subr.mxu0 0.0
  %7489 = vmatpush1.msra.mxu0 %v6160
  %7490 = vmatprep.subr.mxu0 0.0
  %7491 = vmatpush1.msra.mxu0 %v6161
  %7492 = vmatprep.subr.mxu0 0.0
  %7493 = vmatpush1.msra.mxu0 %v6162
  %7494 = vmatprep.subr.mxu0 0.0
  %7495 = vmatpush1.msra.mxu0 %v6163
  %7496 = vmatprep.subr.mxu0 0.0
  %7497 = vmatpush1.msra.mxu0 %v6164
  %7498 = vmatprep.subr.mxu0 0.0
  %7499 = vmatpush1.msra.mxu0 %v6165
  %7500 = vmatprep.subr.mxu0 0.0
  %7501 = vmatpush1.msra.mxu0 %v6166
  %7502 = vmatprep.subr.mxu0 0.0
  %7503 = vmatpush1.msra.mxu0 %v6167
  %7504 = vmatprep.mubr.f32.mxu0 %v6890
  %7505 = vmatmul.mubr.f32.gmra.mrb[0].mxu0 %v6889
  %v7506 = vpop.f32.mrb[0].mxu0
  %v7507 = vadd.f32 %v7432, %v7506
  %v7508 = vpop.f32.mrb[0].mxu0
  %7509 = vmatprep.mubr.f32.mxu0 %v6906
  %7510 = vmatmul.mubr.f32.gmra.mrb[0].mxu0 %v6905
  %v7511 = vpop.f32.mrb[0].mxu0
  %v7512 = vadd.f32 %v7437, %v7511
  %v7513 = vpop.f32.mrb[0].mxu0
  %7514 = vdwg.mxu0
  %v7515 = vadd.f32 %v5460, %v7507
  %v7516 = vadd.f32 %v5461, %v7512
  %s7517 = scalar_lea.vmem %s13, 1
  %v7518 = vld [vmem:[%s7517] sm:$0x1]
  %s7519 = scalar_lea.vmem %s14, 1
  %v7520 = vld [vmem:[%s7519] sm:$0x1]
  %v7521 = vsel %vm179, %v7515, 0.0
  %7522 = vadd.xlane.f32.xlu0 %v7521
  %v7523 = vpop.xlane.xlu0 %7522
  %v7524 = vsel %vm179, %v7516, 0.0
  %7525 = vadd.xlane.f32.xlu0 %v7524
  %v7526 = vpop.xlane.xlu0 %7525
  %v7527 = vmul.f32 %v7523, 0.015625
  %v7528 = vmul.f32 %v7526, 0.015625
  %v7529 = vmul.f32 %v7515, %v7515
  %v7530 = vmul.f32 %v7516, %v7516
  %v7531 = vsel %vm179, %v7529, 0.0
  %7532 = vadd.xlane.f32.xlu0 %v7531
  %v7533 = vpop.xlane.xlu0 %7532
  %v7534 = vsel %vm179, %v7530, 0.0
  %7535 = vadd.xlane.f32.xlu0 %v7534
  %v7536 = vpop.xlane.xlu0 %7535
  %v7537 = vmul.f32 %v7533, 0.015625
  %v7538 = vmul.f32 %v7536, 0.015625
  %v7539 = vmul.f32 %v7527, %v7527
  %v7540 = vmul.f32 %v7528, %v7528
  %v7541 = vsub.f32 %v7537, %v7539
  %v7542 = vsub.f32 %v7538, %v7540
  %v7543 = vsub.f32 %v7515, %v7527
  %v7544 = vsub.f32 %v7516, %v7528
  %v7545 = vadd.f32 %v7541, 1e-05
  %v7546 = vadd.f32 %v7542, 1e-05
  %v7547 = vrsqrt.pop %v7545
  %v7548 = vrsqrt.pop %v7546
  %v7549 = vmul.f32 %v7543, %v7547
  %v7550 = vmul.f32 %v7544, %v7548
  %v7552 = vlaneseq
  %v7553 = vshrl.u32 %v7552, 7
  %v7554 = vsub.s32 0, %v7553
  %v7555 = vrot.slane %v7518, %v7554
  %v7557 = vmul.f32 %v7549, %v7555
  %v7558 = vmul.f32 %v7550, %v7555
  %v7560 = vlaneseq
  %v7561 = vshrl.u32 %v7560, 7
  %v7562 = vsub.s32 0, %v7561
  %v7563 = vrot.slane %v7520, %v7562
  %v7565 = vadd.f32 %v7557, %v7563
  %v7566 = vadd.f32 %v7558, %v7563
  %v7568 = vrot.slane %v7565, 7
  %v7571 = vrot.slane %v7566, 6
  %vm7573 = vcmask 1040384
  %v7574 = vsel %vm7573, %v7568, %v7571
  %v7575 = vld [vmem:[%s15] sm:$0xff]
  %v7576 = vld [vmem:[%s15 + $0x8] sm:$0xff]
  %v7577 = vld [vmem:[%s15 + $0x10] sm:$0xff]
  %v7578 = vld [vmem:[%s15 + $0x18] sm:$0xff]
  %v7579 = vld [vmem:[%s15 + $0x20] sm:$0xff]
  %v7580 = vld [vmem:[%s15 + $0x28] sm:$0xff]
  %v7581 = vld [vmem:[%s15 + $0x30] sm:$0xff]
  %v7582 = vld [vmem:[%s15 + $0x38] sm:$0xff]
  %v7583 = vld [vmem:[#allocation2] sm:$0x1]
  %v7585 = vlaneseq
  %v7586 = vshrl.u32 %v7585, 7
  %v7587 = vsub.s32 0, %v7586
  %v7588 = vrot.slane %v7583, %v7587
  %v7591 = vsel %vm179, %v7574, 0
  %7593 = vmatprep.subr.mxu0 0.0
  %7594 = vmatpush1.msra.mxu0 %v7575
  %7595 = vmatprep.subr.mxu0 0.0
  %7596 = vmatpush1.msra.mxu0 %v7576
  %7597 = vmatprep.subr.mxu0 0.0
  %7598 = vmatpush1.msra.mxu0 %v7577
  %7599 = vmatprep.subr.mxu0 0.0
  %7600 = vmatpush1.msra.mxu0 %v7578
  %7601 = vmatprep.subr.mxu0 0.0
  %7602 = vmatpush1.msra.mxu0 %v7579
  %7603 = vmatprep.subr.mxu0 0.0
  %7604 = vmatpush1.msra.mxu0 %v7580
  %7605 = vmatprep.subr.mxu0 0.0
  %7606 = vmatpush1.msra.mxu0 %v7581
  %7607 = vmatprep.subr.mxu0 0.0
  %7608 = vmatpush1.msra.mxu0 %v7582
  %7609 = vmatprep.subr.mxu0 0.0
  %7610 = vmatpush1.msra.mxu0 0.0
  %7611 = vmatprep.subr.mxu0 0.0
  %7612 = vmatpush1.msra.mxu0 0.0
  %7613 = vmatprep.subr.mxu0 0.0
  %7614 = vmatpush1.msra.mxu0 0.0
  %7615 = vmatprep.subr.mxu0 0.0
  %7616 = vmatpush1.msra.mxu0 0.0
  %7617 = vmatprep.subr.mxu0 0.0
  %7618 = vmatpush1.msra.mxu0 0.0
  %7619 = vmatprep.subr.mxu0 0.0
  %7620 = vmatpush1.msra.mxu0 0.0
  %7621 = vmatprep.subr.mxu0 0.0
  %7622 = vmatpush1.msra.mxu0 0.0
  %7623 = vmatprep.subr.mxu0 0.0
  %7624 = vmatpush1.msra.mxu0 0.0
  %7625 = vmatprep.subr.mxu0 0.0
  %7626 = vmatpush1.msra.mxu0 0.0
  %7627 = vmatprep.subr.mxu0 0.0
  %7628 = vmatpush1.msra.mxu0 0.0
  %7629 = vmatprep.subr.mxu0 0.0
  %7630 = vmatpush1.msra.mxu0 0.0
  %7631 = vmatprep.subr.mxu0 0.0
  %7632 = vmatpush1.msra.mxu0 0.0
  %7633 = vmatprep.subr.mxu0 0.0
  %7634 = vmatpush1.msra.mxu0 0.0
  %7635 = vmatprep.subr.mxu0 0.0
  %7636 = vmatpush1.msra.mxu0 0.0
  %7637 = vmatprep.subr.mxu0 0.0
  %7638 = vmatpush1.msra.mxu0 0.0
  %7639 = vmatprep.subr.mxu0 0.0
  %7640 = vmatpush1.msra.mxu0 0.0
  %7641 = vmatprep.subr.mxu0 0.0
  %7642 = vmatpush1.msra.mxu0 0.0
  %7643 = vmatprep.subr.mxu0 0.0
  %7644 = vmatpush1.msra.mxu0 0.0
  %7645 = vmatprep.subr.mxu0 0.0
  %7646 = vmatpush1.msra.mxu0 0.0
  %7647 = vmatprep.subr.mxu0 0.0
  %7648 = vmatpush1.msra.mxu0 0.0
  %7649 = vmatprep.subr.mxu0 0.0
  %7650 = vmatpush1.msra.mxu0 0.0
  %7651 = vmatprep.subr.mxu0 0.0
  %7652 = vmatpush1.msra.mxu0 0.0
  %7653 = vmatprep.subr.mxu0 0.0
  %7654 = vmatpush1.msra.mxu0 0.0
  %7655 = vmatprep.subr.mxu0 0.0
  %7656 = vmatpush1.msra.mxu0 0.0
  %7657 = vmatprep.mubr.f32.mxu0 0.0
  %7658 = vmatmul.mubr.f32.gmra.mrb[0].mxu0 %v7591
  %v7659 = vpop.f32.mrb[0].mxu0
  %v7660 = vadd.f32 %v7588, %v7659
  %v7661 = vpop.f32.mrb[0].mxu0
  %7662 = vdwg.mxu0
  %vm7663 = vcmask 1024
  %7664 = vst.msk [vmem:[%s17] sm:$0x3] %vm7663, %v7660
  // Predicated region
  $region70: #{tpu_custom_call.1} parent=0 // pred_check
    _
  $region71: #{tpu_custom_call.1} parent=0 // pred_check_branch
    %7666 = sbr.rel (0) target = $region73
  $region72: #{tpu_custom_call.1} parent=0 // pred_region
    _
  $region73: #{tpu_custom_call.1} parent=0 // pred_fallthru
    _
  // Predicated region
  $region74: #{tpu_custom_call.1} parent=0 // pred_check
    _
  $region75: #{tpu_custom_call.1} parent=0 // pred_check_branch
    %7668 = sbr.rel (0) target = $region77
  $region76: #{tpu_custom_call.1} parent=0 // pred_region
    _
  $region77: #{tpu_custom_call.1} parent=0 // pred_fallthru
    _

</llo_original>
